<compile_context>
chip_gen: v7x
topology: tpu7x:2x2x1
jax: 0.10.0
libtpu: 0.0.40
codegen_flags: <defaults>
</compile_context>

<pallas_src>
import functools

import jax
import jax.numpy as jnp
from jax.experimental import pallas as pl
from jax.experimental.pallas import tpu as pltpu


def _log_sigmoid(x):
    # Numerically stable: logsigmoid(x) = min(x, 0) - log(1 + exp(-|x|)).
    return jnp.minimum(x, 0.0) - jnp.log(1.0 + jnp.exp(-jnp.abs(x)))


def skipgram_kernel(tgt_ref, ctx_ref, negf_ref,     # SMEM int32 index refs (scalar prefetch)
                    u_hbm, v_hbm,                   # HBM (V, D) embedding tables
                    out_ref,                        # (1, 1) f32 VMEM output (resident)
                    tgt_rows, ctx_rows, neg_rows,   # VMEM gather scratch
                    sems,                           # DMA semaphores, shape (3,)
                    *, true_batch):
    TB, D = tgt_rows.shape
    K = neg_rows.shape[0] // TB
    step = pl.program_id(0)
    base = step * TB

    # ---- Init the loss accumulator on the first tile. -----------------------
    @pl.when(step == 0)
    def _():
        out_ref[...] = jnp.zeros_like(out_ref)

    # ---- Issue all row-gather DMAs for this tile up-front (they overlap). ---
    # Scalar index reads (SMEM) all happen before any .wait(), keeping the
    # scalar pipeline clean.
    copies = []
    for b in range(TB):
        t_idx = tgt_ref[base + b]                 # row of u_embedding.weight
        c_idx = ctx_ref[base + b]                 # row of v_embedding.weight
        cp = pltpu.make_async_copy(
            u_hbm.at[pl.ds(t_idx, 1)], tgt_rows.at[pl.ds(b, 1)], sems.at[0])
        cp.start()
        copies.append(cp)
        cp = pltpu.make_async_copy(
            v_hbm.at[pl.ds(c_idx, 1)], ctx_rows.at[pl.ds(b, 1)], sems.at[1])
        cp.start()
        copies.append(cp)
        for k in range(K):
            n_idx = negf_ref[(base + b) * K + k]  # row of v_embedding.weight
            cp = pltpu.make_async_copy(
                v_hbm.at[pl.ds(n_idx, 1)],
                neg_rows.at[pl.ds(k * TB + b, 1)],
                sems.at[2])
            cp.start()
            copies.append(cp)
    for cp in copies:
        cp.wait()

    # ---- Compute: a few tiny (TB, D) vector ops. -----------------------------
    v_embedd = tgt_rows[...].astype(jnp.float32)    # (TB, D) = u_embedding(target)
    u_embedd = ctx_rows[...].astype(jnp.float32)    # (TB, D) = v_embedding(context)

    # sum_k v_embedding(neg[b, k]) — K static (TB, D) slabs added together.
    neg_mat = neg_rows[...].astype(jnp.float32)     # (K*TB, D)
    u_hat_sum = jnp.zeros((TB, D), dtype=jnp.float32)
    for k in range(K):
        u_hat_sum = u_hat_sum + neg_mat[k * TB:(k + 1) * TB, :]

    pos_score = jnp.sum(u_embedd * v_embedd, axis=1, keepdims=True)   # (TB, 1)
    # sum_{k,d} v_embedd[b,d]*u_hat[b,k,d] == sum_d v_embedd[b,d]*u_hat_sum[b,d]
    neg_score = jnp.sum(v_embedd * u_hat_sum, axis=1, keepdims=True)  # (TB, 1)

    loss = _log_sigmoid(pos_score) + _log_sigmoid(-neg_score)         # (TB, 1)

    # Mask out padded rows (batch padded up to a multiple of TB).
    row_ids = base + jax.lax.broadcasted_iota(jnp.int32, (TB, 1), 0)
    loss = jnp.where(row_ids < true_batch, loss, 0.0)

    out_ref[...] += jnp.sum(loss, axis=0, keepdims=True)

    # ---- Finalize: negated mean over the true batch size. -------------------
    @pl.when(step == pl.num_programs(0) - 1)
    def _():
        out_ref[...] = out_ref[...] * (-1.0 / true_batch)


def skipgram_loss(target, context, neg, u_weight, v_weight, *, tile_b=128):
    """Glue: pad/flatten indices, prefetch them to SMEM, gather rows per tile."""
    B = target.shape[0]
    K = neg.shape[1]
    V, D = u_weight.shape
    assert v_weight.shape == (V, D)
    assert u_weight.dtype == v_weight.dtype

    TB = max(1, min(int(tile_b), B))
    n_tiles = -(-B // TB)          # ceil div
    Bp = n_tiles * TB
    pad = Bp - B

    tgt1 = jnp.pad(target.reshape(B).astype(jnp.int32), (0, pad))
    ctx1 = jnp.pad(context.reshape(B).astype(jnp.int32), (0, pad))
    negp = jnp.pad(neg.reshape(B, K).astype(jnp.int32), ((0, pad), (0, 0)))
    neg_flat = negp.reshape(Bp * K)

    kernel = functools.partial(skipgram_kernel, true_batch=B)

    out = pl.pallas_call(
        kernel,
        out_shape=jax.ShapeDtypeStruct((1, 1), jnp.float32),
        grid_spec=pltpu.PrefetchScalarGridSpec(
            num_scalar_prefetch=3,                       # target, context, neg -> SMEM
            grid=(n_tiles,),
            in_specs=[
                pl.BlockSpec(memory_space=pl.ANY),       # u table (stays in HBM)
                pl.BlockSpec(memory_space=pl.ANY),       # v table (stays in HBM)
            ],
            out_specs=pl.BlockSpec((1, 1), lambda i, *_: (0, 0)),  # resident accumulator
            scratch_shapes=[
                pltpu.VMEM((TB, D), u_weight.dtype),     # u_embedding(target) rows
                pltpu.VMEM((TB, D), v_weight.dtype),     # v_embedding(context) rows
                pltpu.VMEM((K * TB, D), v_weight.dtype), # v_embedding(neg) rows
                pltpu.SemaphoreType.DMA((3,)),           # one sem per gather stream
            ]),
        compiler_params=pltpu.CompilerParams(
            dimension_semantics=("arbitrary",)),         # output accumulates over tiles
    )(tgt1, ctx1, neg_flat, u_weight, v_weight)
    return out[0, 0]


def skipgram_ref(target, context, neg, u_weight, v_weight):
    """Pure-JAX reference mirroring the PyTorch forward exactly."""
    v_embedd = u_weight[target]                                   # (B, D)
    u_embedd = v_weight[context]                                  # (B, D)
    positive = jax.nn.log_sigmoid(jnp.sum(u_embedd * v_embedd, axis=1))
    u_hat = v_weight[neg]                                         # (B, K, D)
    negative_ = (v_embedd[:, None, :] * u_hat).sum(2)             # (B, K)
    negative = jax.nn.log_sigmoid(-negative_.sum(1))
    loss = positive + negative
    return -loss.mean()


if __name__ == "__main__":
    VOCAB = 64
    EMB_DIM = 32
    BATCH = 8
    NEG_K = 5

    key = jax.random.PRNGKey(0)
    k_u, k_v, k_t, k_c, k_n = jax.random.split(key, 5)

    # Parameter init per the module's __init__:
    #   u_embedding ~ U(-0.5/emb_dim, 0.5/emb_dim), v_embedding = 0
    init_range = 0.5 / EMB_DIM
    u_weight = jax.random.uniform(
        k_u, (VOCAB, EMB_DIM), minval=-init_range, maxval=init_range,
        dtype=jnp.float32)
    v_weight = jnp.zeros((VOCAB, EMB_DIM), dtype=jnp.float32)

    target = jax.random.randint(k_t, (BATCH,), 0, VOCAB, dtype=jnp.int32)
    context = jax.random.randint(k_c, (BATCH,), 0, VOCAB, dtype=jnp.int32)
    neg = jax.random.randint(k_n, (BATCH, NEG_K), 0, VOCAB, dtype=jnp.int32)

    fn = jax.jit(skipgram_loss, static_argnames=("tile_b",))

    # 1) Faithful-init run (v_embedding zero, as in the module), single tile.
    loss_kernel = jax.block_until_ready(fn(target, context, neg, u_weight, v_weight))
    loss_ref = skipgram_ref(target, context, neg, u_weight, v_weight)
    assert jnp.allclose(loss_kernel, loss_ref, atol=1e-5), (loss_kernel, loss_ref)

    # 2) Non-degenerate v weights to exercise the gathers numerically.
    v_weight2 = jax.random.uniform(
        k_v, (VOCAB, EMB_DIM), minval=-init_range, maxval=init_range,
        dtype=jnp.float32)
    loss_kernel2 = jax.block_until_ready(fn(target, context, neg, u_weight, v_weight2))
    loss_ref2 = skipgram_ref(target, context, neg, u_weight, v_weight2)
    assert jnp.allclose(loss_kernel2, loss_ref2, atol=1e-5), (loss_kernel2, loss_ref2)

    # 3) Multi-tile path with padding (B=8, TB=3 -> 3 tiles, 1 padded row):
    #    exercises cross-step accumulation and the padded-row mask.
    loss_kernel3 = jax.block_until_ready(
        fn(target, context, neg, u_weight, v_weight2, tile_b=3))
    assert jnp.allclose(loss_kernel3, loss_ref2, atol=1e-5), (loss_kernel3, loss_ref2)

    print("KERNEL_OK")
</pallas_src>

<mosaic_0001>
module attributes {stable_mosaic.version = 11 : i64} {
  func.func @skipgram_kernel(%arg0: i32, %arg1: memref<8xi32, #tpu.memory_space<smem>>, %arg2: memref<8xi32, #tpu.memory_space<smem>>, %arg3: memref<40xi32, #tpu.memory_space<smem>>, %arg4: memref<64x32xf32, #tpu.memory_space<any>>, %arg5: memref<64x32xf32, #tpu.memory_space<any>>, %arg6: memref<1x1xf32, #tpu.memory_space<vmem>>, %arg7: memref<8x32xf32, #tpu.memory_space<vmem>>, %arg8: memref<8x32xf32, #tpu.memory_space<vmem>>, %arg9: memref<40x32xf32, #tpu.memory_space<vmem>>, %arg10: memref<3x!tpu.dma_semaphore, #tpu.memory_space<semaphore_mem>>) attributes {dimension_semantics = [#tpu.dimension_semantics<arbitrary>], iteration_bounds = array<i64: 1>, scalar_prefetch = 3 : i64, scratch_operands = 4 : i64, tpu.core_type = #tpu.core_type<tc>, window_params = [{}, {}, {pipeline_mode = #tpu.pipeline_mode<synchronous>, transform_indices = @transform_2, window_bounds = array<i64: 1, 1>}]} {
    %c8_i32 = arith.constant 8 : i32
    %0 = arith.muli %arg0, %c8_i32 : i32
    %c0_i32 = arith.constant 0 : i32
    %1 = arith.cmpi eq, %arg0, %c0_i32 : i32
    %2 = arith.extui %1 : i1 to i32
    %c0_i32_0 = arith.constant 0 : i32
    %3 = arith.cmpi ne, %2, %c0_i32_0 : i32
    scf.if %3 {
      %cst_570 = arith.constant 0.000000e+00 : f32
      %758 = vector.broadcast %cst_570 : f32 to vector<1x1xf32>
      %c0_571 = arith.constant 0 : index
      %c0_572 = arith.constant 0 : index
      %759 = vector.load %arg6[%c0_571, %c0_572] : memref<1x1xf32, #tpu.memory_space<vmem>>, vector<1x1xf32>
      tpu.vector_store %arg6[%c0_571, %c0_572], %758 {strides = array<i32>} : memref<1x1xf32, #tpu.memory_space<vmem>>, vector<1x1xf32>,
    } else {
    }
    %c0_i32_1 = arith.constant 0 : i32
    %4 = arith.addi %0, %c0_i32_1 : i32
    %5 = arith.index_cast %4 : i32 to index
    %6 = memref.load %arg1[%5] : memref<8xi32, #tpu.memory_space<smem>>
    %c0_i32_2 = arith.constant 0 : i32
    %7 = arith.addi %0, %c0_i32_2 : i32
    %8 = arith.index_cast %7 : i32 to index
    %9 = memref.load %arg2[%8] : memref<8xi32, #tpu.memory_space<smem>>
    %c0_i32_3 = arith.constant 0 : i32
    %c0_i32_4 = arith.constant 0 : i32
    %10 = tpu.memref_slice %arg4[%6, %c0_i32_4] : memref<64x32xf32, #tpu.memory_space<any>> -> memref<1x32xf32, #tpu.memory_space<any>>
    %c0_i32_5 = arith.constant 0 : i32
    %c0_i32_6 = arith.constant 0 : i32
    %11 = tpu.memref_slice %arg7[%c0_i32_5, %c0_i32_6] : memref<8x32xf32, #tpu.memory_space<vmem>> -> memref<1x32xf32, #tpu.memory_space<vmem>>
    %12 = tpu.memref_slice %arg10[%c0_i32_3] : memref<3x!tpu.dma_semaphore, #tpu.memory_space<semaphore_mem>> -> memref<1x!tpu.dma_semaphore, #tpu.memory_space<semaphore_mem>>
    %13 = tpu.memref_squeeze %12 : memref<1x!tpu.dma_semaphore, #tpu.memory_space<semaphore_mem>> -> memref<!tpu.dma_semaphore, #tpu.memory_space<semaphore_mem>>
    tpu.enqueue_dma source(%10 : memref<1x32xf32, #tpu.memory_space<any>>) target(%11 : memref<1x32xf32, #tpu.memory_space<vmem>>) target_semaphore(%13 : memref<!tpu.dma_semaphore, #tpu.memory_space<semaphore_mem>>)
    %c1_i32 = arith.constant 1 : i32
    %c0_i32_7 = arith.constant 0 : i32
    %14 = tpu.memref_slice %arg5[%9, %c0_i32_7] : memref<64x32xf32, #tpu.memory_space<any>> -> memref<1x32xf32, #tpu.memory_space<any>>
    %c0_i32_8 = arith.constant 0 : i32
    %c0_i32_9 = arith.constant 0 : i32
    %15 = tpu.memref_slice %arg8[%c0_i32_8, %c0_i32_9] : memref<8x32xf32, #tpu.memory_space<vmem>> -> memref<1x32xf32, #tpu.memory_space<vmem>>
    %16 = tpu.memref_slice %arg10[%c1_i32] : memref<3x!tpu.dma_semaphore, #tpu.memory_space<semaphore_mem>> -> memref<1x!tpu.dma_semaphore, #tpu.memory_space<semaphore_mem>>
    %17 = tpu.memref_squeeze %16 : memref<1x!tpu.dma_semaphore, #tpu.memory_space<semaphore_mem>> -> memref<!tpu.dma_semaphore, #tpu.memory_space<semaphore_mem>>
    tpu.enqueue_dma source(%14 : memref<1x32xf32, #tpu.memory_space<any>>) target(%15 : memref<1x32xf32, #tpu.memory_space<vmem>>) target_semaphore(%17 : memref<!tpu.dma_semaphore, #tpu.memory_space<semaphore_mem>>)
    %c0_i32_10 = arith.constant 0 : i32
    %18 = arith.addi %0, %c0_i32_10 : i32
    %c5_i32 = arith.constant 5 : i32
    %19 = arith.muli %18, %c5_i32 : i32
    %c0_i32_11 = arith.constant 0 : i32
    %20 = arith.addi %19, %c0_i32_11 : i32
    %21 = arith.index_cast %20 : i32 to index
    %22 = memref.load %arg3[%21] : memref<40xi32, #tpu.memory_space<smem>>
    %c2_i32 = arith.constant 2 : i32
    %c0_i32_12 = arith.constant 0 : i32
    %23 = tpu.memref_slice %arg5[%22, %c0_i32_12] : memref<64x32xf32, #tpu.memory_space<any>> -> memref<1x32xf32, #tpu.memory_space<any>>
    %c0_i32_13 = arith.constant 0 : i32
    %c0_i32_14 = arith.constant 0 : i32
    %24 = tpu.memref_slice %arg9[%c0_i32_13, %c0_i32_14] : memref<40x32xf32, #tpu.memory_space<vmem>> -> memref<1x32xf32, #tpu.memory_space<vmem>>
    %25 = tpu.memref_slice %arg10[%c2_i32] : memref<3x!tpu.dma_semaphore, #tpu.memory_space<semaphore_mem>> -> memref<1x!tpu.dma_semaphore, #tpu.memory_space<semaphore_mem>>
    %26 = tpu.memref_squeeze %25 : memref<1x!tpu.dma_semaphore, #tpu.memory_space<semaphore_mem>> -> memref<!tpu.dma_semaphore, #tpu.memory_space<semaphore_mem>>
    tpu.enqueue_dma source(%23 : memref<1x32xf32, #tpu.memory_space<any>>) target(%24 : memref<1x32xf32, #tpu.memory_space<vmem>>) target_semaphore(%26 : memref<!tpu.dma_semaphore, #tpu.memory_space<semaphore_mem>>)
    %c0_i32_15 = arith.constant 0 : i32
    %27 = arith.addi %0, %c0_i32_15 : i32
    %c5_i32_16 = arith.constant 5 : i32
    %28 = arith.muli %27, %c5_i32_16 : i32
    %c1_i32_17 = arith.constant 1 : i32
    %29 = arith.addi %28, %c1_i32_17 : i32
    %30 = arith.index_cast %29 : i32 to index
    %31 = memref.load %arg3[%30] : memref<40xi32, #tpu.memory_space<smem>>
    %c2_i32_18 = arith.constant 2 : i32
    %c0_i32_19 = arith.constant 0 : i32
    %32 = tpu.memref_slice %arg5[%31, %c0_i32_19] : memref<64x32xf32, #tpu.memory_space<any>> -> memref<1x32xf32, #tpu.memory_space<any>>
    %c8_i32_20 = arith.constant 8 : i32
    %c0_i32_21 = arith.constant 0 : i32
    %33 = tpu.memref_slice %arg9[%c8_i32_20, %c0_i32_21] : memref<40x32xf32, #tpu.memory_space<vmem>> -> memref<1x32xf32, #tpu.memory_space<vmem>>
    %34 = tpu.memref_slice %arg10[%c2_i32_18] : memref<3x!tpu.dma_semaphore, #tpu.memory_space<semaphore_mem>> -> memref<1x!tpu.dma_semaphore, #tpu.memory_space<semaphore_mem>>
    %35 = tpu.memref_squeeze %34 : memref<1x!tpu.dma_semaphore, #tpu.memory_space<semaphore_mem>> -> memref<!tpu.dma_semaphore, #tpu.memory_space<semaphore_mem>>
    tpu.enqueue_dma source(%32 : memref<1x32xf32, #tpu.memory_space<any>>) target(%33 : memref<1x32xf32, #tpu.memory_space<vmem>>) target_semaphore(%35 : memref<!tpu.dma_semaphore, #tpu.memory_space<semaphore_mem>>)
    %c0_i32_22 = arith.constant 0 : i32
    %36 = arith.addi %0, %c0_i32_22 : i32
    %c5_i32_23 = arith.constant 5 : i32
    %37 = arith.muli %36, %c5_i32_23 : i32
    %c2_i32_24 = arith.constant 2 : i32
    %38 = arith.addi %37, %c2_i32_24 : i32
    %39 = arith.index_cast %38 : i32 to index
    %40 = memref.load %arg3[%39] : memref<40xi32, #tpu.memory_space<smem>>
    %c2_i32_25 = arith.constant 2 : i32
    %c0_i32_26 = arith.constant 0 : i32
    %41 = tpu.memref_slice %arg5[%40, %c0_i32_26] : memref<64x32xf32, #tpu.memory_space<any>> -> memref<1x32xf32, #tpu.memory_space<any>>
    %c16_i32 = arith.constant 16 : i32
    %c0_i32_27 = arith.constant 0 : i32
    %42 = tpu.memref_slice %arg9[%c16_i32, %c0_i32_27] : memref<40x32xf32, #tpu.memory_space<vmem>> -> memref<1x32xf32, #tpu.memory_space<vmem>>
    %43 = tpu.memref_slice %arg10[%c2_i32_25] : memref<3x!tpu.dma_semaphore, #tpu.memory_space<semaphore_mem>> -> memref<1x!tpu.dma_semaphore, #tpu.memory_space<semaphore_mem>>
    %44 = tpu.memref_squeeze %43 : memref<1x!tpu.dma_semaphore, #tpu.memory_space<semaphore_mem>> -> memref<!tpu.dma_semaphore, #tpu.memory_space<semaphore_mem>>
    tpu.enqueue_dma source(%41 : memref<1x32xf32, #tpu.memory_space<any>>) target(%42 : memref<1x32xf32, #tpu.memory_space<vmem>>) target_semaphore(%44 : memref<!tpu.dma_semaphore, #tpu.memory_space<semaphore_mem>>)
    %c0_i32_28 = arith.constant 0 : i32
    %45 = arith.addi %0, %c0_i32_28 : i32
    %c5_i32_29 = arith.constant 5 : i32
    %46 = arith.muli %45, %c5_i32_29 : i32
    %c3_i32 = arith.constant 3 : i32
    %47 = arith.addi %46, %c3_i32 : i32
    %48 = arith.index_cast %47 : i32 to index
    %49 = memref.load %arg3[%48] : memref<40xi32, #tpu.memory_space<smem>>
    %c2_i32_30 = arith.constant 2 : i32
    %c0_i32_31 = arith.constant 0 : i32
    %50 = tpu.memref_slice %arg5[%49, %c0_i32_31] : memref<64x32xf32, #tpu.memory_space<any>> -> memref<1x32xf32, #tpu.memory_space<any>>
    %c24_i32 = arith.constant 24 : i32
    %c0_i32_32 = arith.constant 0 : i32
    %51 = tpu.memref_slice %arg9[%c24_i32, %c0_i32_32] : memref<40x32xf32, #tpu.memory_space<vmem>> -> memref<1x32xf32, #tpu.memory_space<vmem>>
    %52 = tpu.memref_slice %arg10[%c2_i32_30] : memref<3x!tpu.dma_semaphore, #tpu.memory_space<semaphore_mem>> -> memref<1x!tpu.dma_semaphore, #tpu.memory_space<semaphore_mem>>
    %53 = tpu.memref_squeeze %52 : memref<1x!tpu.dma_semaphore, #tpu.memory_space<semaphore_mem>> -> memref<!tpu.dma_semaphore, #tpu.memory_space<semaphore_mem>>
    tpu.enqueue_dma source(%50 : memref<1x32xf32, #tpu.memory_space<any>>) target(%51 : memref<1x32xf32, #tpu.memory_space<vmem>>) target_semaphore(%53 : memref<!tpu.dma_semaphore, #tpu.memory_space<semaphore_mem>>)
    %c0_i32_33 = arith.constant 0 : i32
    %54 = arith.addi %0, %c0_i32_33 : i32
    %c5_i32_34 = arith.constant 5 : i32
    %55 = arith.muli %54, %c5_i32_34 : i32
    %c4_i32 = arith.constant 4 : i32
    %56 = arith.addi %55, %c4_i32 : i32
    %57 = arith.index_cast %56 : i32 to index
    %58 = memref.load %arg3[%57] : memref<40xi32, #tpu.memory_space<smem>>
    %c2_i32_35 = arith.constant 2 : i32
    %c0_i32_36 = arith.constant 0 : i32
    %59 = tpu.memref_slice %arg5[%58, %c0_i32_36] : memref<64x32xf32, #tpu.memory_space<any>> -> memref<1x32xf32, #tpu.memory_space<any>>
    %c32_i32 = arith.constant 32 : i32
    %c0_i32_37 = arith.constant 0 : i32
    %60 = tpu.memref_slice %arg9[%c32_i32, %c0_i32_37] : memref<40x32xf32, #tpu.memory_space<vmem>> -> memref<1x32xf32, #tpu.memory_space<vmem>>
    %61 = tpu.memref_slice %arg10[%c2_i32_35] : memref<3x!tpu.dma_semaphore, #tpu.memory_space<semaphore_mem>> -> memref<1x!tpu.dma_semaphore, #tpu.memory_space<semaphore_mem>>
    %62 = tpu.memref_squeeze %61 : memref<1x!tpu.dma_semaphore, #tpu.memory_space<semaphore_mem>> -> memref<!tpu.dma_semaphore, #tpu.memory_space<semaphore_mem>>
    tpu.enqueue_dma source(%59 : memref<1x32xf32, #tpu.memory_space<any>>) target(%60 : memref<1x32xf32, #tpu.memory_space<vmem>>) target_semaphore(%62 : memref<!tpu.dma_semaphore, #tpu.memory_space<semaphore_mem>>)
    %c1_i32_38 = arith.constant 1 : i32
    %63 = arith.addi %0, %c1_i32_38 : i32
    %64 = arith.index_cast %63 : i32 to index
    %65 = memref.load %arg1[%64] : memref<8xi32, #tpu.memory_space<smem>>
    %c1_i32_39 = arith.constant 1 : i32
    %66 = arith.addi %0, %c1_i32_39 : i32
    %67 = arith.index_cast %66 : i32 to index
    %68 = memref.load %arg2[%67] : memref<8xi32, #tpu.memory_space<smem>>
    %c0_i32_40 = arith.constant 0 : i32
    %c0_i32_41 = arith.constant 0 : i32
    %69 = tpu.memref_slice %arg4[%65, %c0_i32_41] : memref<64x32xf32, #tpu.memory_space<any>> -> memref<1x32xf32, #tpu.memory_space<any>>
    %c1_i32_42 = arith.constant 1 : i32
    %c0_i32_43 = arith.constant 0 : i32
    %70 = tpu.memref_slice %arg7[%c1_i32_42, %c0_i32_43] : memref<8x32xf32, #tpu.memory_space<vmem>> -> memref<1x32xf32, #tpu.memory_space<vmem>>
    %71 = tpu.memref_slice %arg10[%c0_i32_40] : memref<3x!tpu.dma_semaphore, #tpu.memory_space<semaphore_mem>> -> memref<1x!tpu.dma_semaphore, #tpu.memory_space<semaphore_mem>>
    %72 = tpu.memref_squeeze %71 : memref<1x!tpu.dma_semaphore, #tpu.memory_space<semaphore_mem>> -> memref<!tpu.dma_semaphore, #tpu.memory_space<semaphore_mem>>
    tpu.enqueue_dma source(%69 : memref<1x32xf32, #tpu.memory_space<any>>) target(%70 : memref<1x32xf32, #tpu.memory_space<vmem>>) target_semaphore(%72 : memref<!tpu.dma_semaphore, #tpu.memory_space<semaphore_mem>>)
    %c1_i32_44 = arith.constant 1 : i32
    %c0_i32_45 = arith.constant 0 : i32
    %73 = tpu.memref_slice %arg5[%68, %c0_i32_45] : memref<64x32xf32, #tpu.memory_space<any>> -> memref<1x32xf32, #tpu.memory_space<any>>
    %c1_i32_46 = arith.constant 1 : i32
    %c0_i32_47 = arith.constant 0 : i32
    %74 = tpu.memref_slice %arg8[%c1_i32_46, %c0_i32_47] : memref<8x32xf32, #tpu.memory_space<vmem>> -> memref<1x32xf32, #tpu.memory_space<vmem>>
    %75 = tpu.memref_slice %arg10[%c1_i32_44] : memref<3x!tpu.dma_semaphore, #tpu.memory_space<semaphore_mem>> -> memref<1x!tpu.dma_semaphore, #tpu.memory_space<semaphore_mem>>
    %76 = tpu.memref_squeeze %75 : memref<1x!tpu.dma_semaphore, #tpu.memory_space<semaphore_mem>> -> memref<!tpu.dma_semaphore, #tpu.memory_space<semaphore_mem>>
    tpu.enqueue_dma source(%73 : memref<1x32xf32, #tpu.memory_space<any>>) target(%74 : memref<1x32xf32, #tpu.memory_space<vmem>>) target_semaphore(%76 : memref<!tpu.dma_semaphore, #tpu.memory_space<semaphore_mem>>)
    %c1_i32_48 = arith.constant 1 : i32
    %77 = arith.addi %0, %c1_i32_48 : i32
    %c5_i32_49 = arith.constant 5 : i32
    %78 = arith.muli %77, %c5_i32_49 : i32
    %c0_i32_50 = arith.constant 0 : i32
    %79 = arith.addi %78, %c0_i32_50 : i32
    %80 = arith.index_cast %79 : i32 to index
    %81 = memref.load %arg3[%80] : memref<40xi32, #tpu.memory_space<smem>>
    %c2_i32_51 = arith.constant 2 : i32
    %c0_i32_52 = arith.constant 0 : i32
    %82 = tpu.memref_slice %arg5[%81, %c0_i32_52] : memref<64x32xf32, #tpu.memory_space<any>> -> memref<1x32xf32, #tpu.memory_space<any>>
    %c1_i32_53 = arith.constant 1 : i32
    %c0_i32_54 = arith.constant 0 : i32
    %83 = tpu.memref_slice %arg9[%c1_i32_53, %c0_i32_54] : memref<40x32xf32, #tpu.memory_space<vmem>> -> memref<1x32xf32, #tpu.memory_space<vmem>>
    %84 = tpu.memref_slice %arg10[%c2_i32_51] : memref<3x!tpu.dma_semaphore, #tpu.memory_space<semaphore_mem>> -> memref<1x!tpu.dma_semaphore, #tpu.memory_space<semaphore_mem>>
    %85 = tpu.memref_squeeze %84 : memref<1x!tpu.dma_semaphore, #tpu.memory_space<semaphore_mem>> -> memref<!tpu.dma_semaphore, #tpu.memory_space<semaphore_mem>>
    tpu.enqueue_dma source(%82 : memref<1x32xf32, #tpu.memory_space<any>>) target(%83 : memref<1x32xf32, #tpu.memory_space<vmem>>) target_semaphore(%85 : memref<!tpu.dma_semaphore, #tpu.memory_space<semaphore_mem>>)
    %c1_i32_55 = arith.constant 1 : i32
    %86 = arith.addi %0, %c1_i32_55 : i32
    %c5_i32_56 = arith.constant 5 : i32
    %87 = arith.muli %86, %c5_i32_56 : i32
    %c1_i32_57 = arith.constant 1 : i32
    %88 = arith.addi %87, %c1_i32_57 : i32
    %89 = arith.index_cast %88 : i32 to index
    %90 = memref.load %arg3[%89] : memref<40xi32, #tpu.memory_space<smem>>
    %c2_i32_58 = arith.constant 2 : i32
    %c0_i32_59 = arith.constant 0 : i32
    %91 = tpu.memref_slice %arg5[%90, %c0_i32_59] : memref<64x32xf32, #tpu.memory_space<any>> -> memref<1x32xf32, #tpu.memory_space<any>>
    %c9_i32 = arith.constant 9 : i32
    %c0_i32_60 = arith.constant 0 : i32
    %92 = tpu.memref_slice %arg9[%c9_i32, %c0_i32_60] : memref<40x32xf32, #tpu.memory_space<vmem>> -> memref<1x32xf32, #tpu.memory_space<vmem>>
    %93 = tpu.memref_slice %arg10[%c2_i32_58] : memref<3x!tpu.dma_semaphore, #tpu.memory_space<semaphore_mem>> -> memref<1x!tpu.dma_semaphore, #tpu.memory_space<semaphore_mem>>
    %94 = tpu.memref_squeeze %93 : memref<1x!tpu.dma_semaphore, #tpu.memory_space<semaphore_mem>> -> memref<!tpu.dma_semaphore, #tpu.memory_space<semaphore_mem>>
    tpu.enqueue_dma source(%91 : memref<1x32xf32, #tpu.memory_space<any>>) target(%92 : memref<1x32xf32, #tpu.memory_space<vmem>>) target_semaphore(%94 : memref<!tpu.dma_semaphore, #tpu.memory_space<semaphore_mem>>)
    %c1_i32_61 = arith.constant 1 : i32
    %95 = arith.addi %0, %c1_i32_61 : i32
    %c5_i32_62 = arith.constant 5 : i32
    %96 = arith.muli %95, %c5_i32_62 : i32
    %c2_i32_63 = arith.constant 2 : i32
    %97 = arith.addi %96, %c2_i32_63 : i32
    %98 = arith.index_cast %97 : i32 to index
    %99 = memref.load %arg3[%98] : memref<40xi32, #tpu.memory_space<smem>>
    %c2_i32_64 = arith.constant 2 : i32
    %c0_i32_65 = arith.constant 0 : i32
    %100 = tpu.memref_slice %arg5[%99, %c0_i32_65] : memref<64x32xf32, #tpu.memory_space<any>> -> memref<1x32xf32, #tpu.memory_space<any>>
    %c17_i32 = arith.constant 17 : i32
    %c0_i32_66 = arith.constant 0 : i32
    %101 = tpu.memref_slice %arg9[%c17_i32, %c0_i32_66] : memref<40x32xf32, #tpu.memory_space<vmem>> -> memref<1x32xf32, #tpu.memory_space<vmem>>
    %102 = tpu.memref_slice %arg10[%c2_i32_64] : memref<3x!tpu.dma_semaphore, #tpu.memory_space<semaphore_mem>> -> memref<1x!tpu.dma_semaphore, #tpu.memory_space<semaphore_mem>>
    %103 = tpu.memref_squeeze %102 : memref<1x!tpu.dma_semaphore, #tpu.memory_space<semaphore_mem>> -> memref<!tpu.dma_semaphore, #tpu.memory_space<semaphore_mem>>
    tpu.enqueue_dma source(%100 : memref<1x32xf32, #tpu.memory_space<any>>) target(%101 : memref<1x32xf32, #tpu.memory_space<vmem>>) target_semaphore(%103 : memref<!tpu.dma_semaphore, #tpu.memory_space<semaphore_mem>>)
    %c1_i32_67 = arith.constant 1 : i32
    %104 = arith.addi %0, %c1_i32_67 : i32
    %c5_i32_68 = arith.constant 5 : i32
    %105 = arith.muli %104, %c5_i32_68 : i32
    %c3_i32_69 = arith.constant 3 : i32
    %106 = arith.addi %105, %c3_i32_69 : i32
    %107 = arith.index_cast %106 : i32 to index
    %108 = memref.load %arg3[%107] : memref<40xi32, #tpu.memory_space<smem>>
    %c2_i32_70 = arith.constant 2 : i32
    %c0_i32_71 = arith.constant 0 : i32
    %109 = tpu.memref_slice %arg5[%108, %c0_i32_71] : memref<64x32xf32, #tpu.memory_space<any>> -> memref<1x32xf32, #tpu.memory_space<any>>
    %c25_i32 = arith.constant 25 : i32
    %c0_i32_72 = arith.constant 0 : i32
    %110 = tpu.memref_slice %arg9[%c25_i32, %c0_i32_72] : memref<40x32xf32, #tpu.memory_space<vmem>> -> memref<1x32xf32, #tpu.memory_space<vmem>>
    %111 = tpu.memref_slice %arg10[%c2_i32_70] : memref<3x!tpu.dma_semaphore, #tpu.memory_space<semaphore_mem>> -> memref<1x!tpu.dma_semaphore, #tpu.memory_space<semaphore_mem>>
    %112 = tpu.memref_squeeze %111 : memref<1x!tpu.dma_semaphore, #tpu.memory_space<semaphore_mem>> -> memref<!tpu.dma_semaphore, #tpu.memory_space<semaphore_mem>>
    tpu.enqueue_dma source(%109 : memref<1x32xf32, #tpu.memory_space<any>>) target(%110 : memref<1x32xf32, #tpu.memory_space<vmem>>) target_semaphore(%112 : memref<!tpu.dma_semaphore, #tpu.memory_space<semaphore_mem>>)
    %c1_i32_73 = arith.constant 1 : i32
    %113 = arith.addi %0, %c1_i32_73 : i32
    %c5_i32_74 = arith.constant 5 : i32
    %114 = arith.muli %113, %c5_i32_74 : i32
    %c4_i32_75 = arith.constant 4 : i32
    %115 = arith.addi %114, %c4_i32_75 : i32
    %116 = arith.index_cast %115 : i32 to index
    %117 = memref.load %arg3[%116] : memref<40xi32, #tpu.memory_space<smem>>
    %c2_i32_76 = arith.constant 2 : i32
    %c0_i32_77 = arith.constant 0 : i32
    %118 = tpu.memref_slice %arg5[%117, %c0_i32_77] : memref<64x32xf32, #tpu.memory_space<any>> -> memref<1x32xf32, #tpu.memory_space<any>>
    %c33_i32 = arith.constant 33 : i32
    %c0_i32_78 = arith.constant 0 : i32
    %119 = tpu.memref_slice %arg9[%c33_i32, %c0_i32_78] : memref<40x32xf32, #tpu.memory_space<vmem>> -> memref<1x32xf32, #tpu.memory_space<vmem>>
    %120 = tpu.memref_slice %arg10[%c2_i32_76] : memref<3x!tpu.dma_semaphore, #tpu.memory_space<semaphore_mem>> -> memref<1x!tpu.dma_semaphore, #tpu.memory_space<semaphore_mem>>
    %121 = tpu.memref_squeeze %120 : memref<1x!tpu.dma_semaphore, #tpu.memory_space<semaphore_mem>> -> memref<!tpu.dma_semaphore, #tpu.memory_space<semaphore_mem>>
    tpu.enqueue_dma source(%118 : memref<1x32xf32, #tpu.memory_space<any>>) target(%119 : memref<1x32xf32, #tpu.memory_space<vmem>>) target_semaphore(%121 : memref<!tpu.dma_semaphore, #tpu.memory_space<semaphore_mem>>)
    %c2_i32_79 = arith.constant 2 : i32
    %122 = arith.addi %0, %c2_i32_79 : i32
    %123 = arith.index_cast %122 : i32 to index
    %124 = memref.load %arg1[%123] : memref<8xi32, #tpu.memory_space<smem>>
    %c2_i32_80 = arith.constant 2 : i32
    %125 = arith.addi %0, %c2_i32_80 : i32
    %126 = arith.index_cast %125 : i32 to index
    %127 = memref.load %arg2[%126] : memref<8xi32, #tpu.memory_space<smem>>
    %c0_i32_81 = arith.constant 0 : i32
    %c0_i32_82 = arith.constant 0 : i32
    %128 = tpu.memref_slice %arg4[%124, %c0_i32_82] : memref<64x32xf32, #tpu.memory_space<any>> -> memref<1x32xf32, #tpu.memory_space<any>>
    %c2_i32_83 = arith.constant 2 : i32
    %c0_i32_84 = arith.constant 0 : i32
    %129 = tpu.memref_slice %arg7[%c2_i32_83, %c0_i32_84] : memref<8x32xf32, #tpu.memory_space<vmem>> -> memref<1x32xf32, #tpu.memory_space<vmem>>
    %130 = tpu.memref_slice %arg10[%c0_i32_81] : memref<3x!tpu.dma_semaphore, #tpu.memory_space<semaphore_mem>> -> memref<1x!tpu.dma_semaphore, #tpu.memory_space<semaphore_mem>>
    %131 = tpu.memref_squeeze %130 : memref<1x!tpu.dma_semaphore, #tpu.memory_space<semaphore_mem>> -> memref<!tpu.dma_semaphore, #tpu.memory_space<semaphore_mem>>
    tpu.enqueue_dma source(%128 : memref<1x32xf32, #tpu.memory_space<any>>) target(%129 : memref<1x32xf32, #tpu.memory_space<vmem>>) target_semaphore(%131 : memref<!tpu.dma_semaphore, #tpu.memory_space<semaphore_mem>>)
    %c1_i32_85 = arith.constant 1 : i32
    %c0_i32_86 = arith.constant 0 : i32
    %132 = tpu.memref_slice %arg5[%127, %c0_i32_86] : memref<64x32xf32, #tpu.memory_space<any>> -> memref<1x32xf32, #tpu.memory_space<any>>
    %c2_i32_87 = arith.constant 2 : i32
    %c0_i32_88 = arith.constant 0 : i32
    %133 = tpu.memref_slice %arg8[%c2_i32_87, %c0_i32_88] : memref<8x32xf32, #tpu.memory_space<vmem>> -> memref<1x32xf32, #tpu.memory_space<vmem>>
    %134 = tpu.memref_slice %arg10[%c1_i32_85] : memref<3x!tpu.dma_semaphore, #tpu.memory_space<semaphore_mem>> -> memref<1x!tpu.dma_semaphore, #tpu.memory_space<semaphore_mem>>
    %135 = tpu.memref_squeeze %134 : memref<1x!tpu.dma_semaphore, #tpu.memory_space<semaphore_mem>> -> memref<!tpu.dma_semaphore, #tpu.memory_space<semaphore_mem>>
    tpu.enqueue_dma source(%132 : memref<1x32xf32, #tpu.memory_space<any>>) target(%133 : memref<1x32xf32, #tpu.memory_space<vmem>>) target_semaphore(%135 : memref<!tpu.dma_semaphore, #tpu.memory_space<semaphore_mem>>)
    %c2_i32_89 = arith.constant 2 : i32
    %136 = arith.addi %0, %c2_i32_89 : i32
    %c5_i32_90 = arith.constant 5 : i32
    %137 = arith.muli %136, %c5_i32_90 : i32
    %c0_i32_91 = arith.constant 0 : i32
    %138 = arith.addi %137, %c0_i32_91 : i32
    %139 = arith.index_cast %138 : i32 to index
    %140 = memref.load %arg3[%139] : memref<40xi32, #tpu.memory_space<smem>>
    %c2_i32_92 = arith.constant 2 : i32
    %c0_i32_93 = arith.constant 0 : i32
    %141 = tpu.memref_slice %arg5[%140, %c0_i32_93] : memref<64x32xf32, #tpu.memory_space<any>> -> memref<1x32xf32, #tpu.memory_space<any>>
    %c2_i32_94 = arith.constant 2 : i32
    %c0_i32_95 = arith.constant 0 : i32
    %142 = tpu.memref_slice %arg9[%c2_i32_94, %c0_i32_95] : memref<40x32xf32, #tpu.memory_space<vmem>> -> memref<1x32xf32, #tpu.memory_space<vmem>>
    %143 = tpu.memref_slice %arg10[%c2_i32_92] : memref<3x!tpu.dma_semaphore, #tpu.memory_space<semaphore_mem>> -> memref<1x!tpu.dma_semaphore, #tpu.memory_space<semaphore_mem>>
    %144 = tpu.memref_squeeze %143 : memref<1x!tpu.dma_semaphore, #tpu.memory_space<semaphore_mem>> -> memref<!tpu.dma_semaphore, #tpu.memory_space<semaphore_mem>>
    tpu.enqueue_dma source(%141 : memref<1x32xf32, #tpu.memory_space<any>>) target(%142 : memref<1x32xf32, #tpu.memory_space<vmem>>) target_semaphore(%144 : memref<!tpu.dma_semaphore, #tpu.memory_space<semaphore_mem>>)
    %c2_i32_96 = arith.constant 2 : i32
    %145 = arith.addi %0, %c2_i32_96 : i32
    %c5_i32_97 = arith.constant 5 : i32
    %146 = arith.muli %145, %c5_i32_97 : i32
    %c1_i32_98 = arith.constant 1 : i32
    %147 = arith.addi %146, %c1_i32_98 : i32
    %148 = arith.index_cast %147 : i32 to index
    %149 = memref.load %arg3[%148] : memref<40xi32, #tpu.memory_space<smem>>
    %c2_i32_99 = arith.constant 2 : i32
    %c0_i32_100 = arith.constant 0 : i32
    %150 = tpu.memref_slice %arg5[%149, %c0_i32_100] : memref<64x32xf32, #tpu.memory_space<any>> -> memref<1x32xf32, #tpu.memory_space<any>>
    %c10_i32 = arith.constant 10 : i32
    %c0_i32_101 = arith.constant 0 : i32
    %151 = tpu.memref_slice %arg9[%c10_i32, %c0_i32_101] : memref<40x32xf32, #tpu.memory_space<vmem>> -> memref<1x32xf32, #tpu.memory_space<vmem>>
    %152 = tpu.memref_slice %arg10[%c2_i32_99] : memref<3x!tpu.dma_semaphore, #tpu.memory_space<semaphore_mem>> -> memref<1x!tpu.dma_semaphore, #tpu.memory_space<semaphore_mem>>
    %153 = tpu.memref_squeeze %152 : memref<1x!tpu.dma_semaphore, #tpu.memory_space<semaphore_mem>> -> memref<!tpu.dma_semaphore, #tpu.memory_space<semaphore_mem>>
    tpu.enqueue_dma source(%150 : memref<1x32xf32, #tpu.memory_space<any>>) target(%151 : memref<1x32xf32, #tpu.memory_space<vmem>>) target_semaphore(%153 : memref<!tpu.dma_semaphore, #tpu.memory_space<semaphore_mem>>)
    %c2_i32_102 = arith.constant 2 : i32
    %154 = arith.addi %0, %c2_i32_102 : i32
    %c5_i32_103 = arith.constant 5 : i32
    %155 = arith.muli %154, %c5_i32_103 : i32
    %c2_i32_104 = arith.constant 2 : i32
    %156 = arith.addi %155, %c2_i32_104 : i32
    %157 = arith.index_cast %156 : i32 to index
    %158 = memref.load %arg3[%157] : memref<40xi32, #tpu.memory_space<smem>>
    %c2_i32_105 = arith.constant 2 : i32
    %c0_i32_106 = arith.constant 0 : i32
    %159 = tpu.memref_slice %arg5[%158, %c0_i32_106] : memref<64x32xf32, #tpu.memory_space<any>> -> memref<1x32xf32, #tpu.memory_space<any>>
    %c18_i32 = arith.constant 18 : i32
    %c0_i32_107 = arith.constant 0 : i32
    %160 = tpu.memref_slice %arg9[%c18_i32, %c0_i32_107] : memref<40x32xf32, #tpu.memory_space<vmem>> -> memref<1x32xf32, #tpu.memory_space<vmem>>
    %161 = tpu.memref_slice %arg10[%c2_i32_105] : memref<3x!tpu.dma_semaphore, #tpu.memory_space<semaphore_mem>> -> memref<1x!tpu.dma_semaphore, #tpu.memory_space<semaphore_mem>>
    %162 = tpu.memref_squeeze %161 : memref<1x!tpu.dma_semaphore, #tpu.memory_space<semaphore_mem>> -> memref<!tpu.dma_semaphore, #tpu.memory_space<semaphore_mem>>
    tpu.enqueue_dma source(%159 : memref<1x32xf32, #tpu.memory_space<any>>) target(%160 : memref<1x32xf32, #tpu.memory_space<vmem>>) target_semaphore(%162 : memref<!tpu.dma_semaphore, #tpu.memory_space<semaphore_mem>>)
    %c2_i32_108 = arith.constant 2 : i32
    %163 = arith.addi %0, %c2_i32_108 : i32
    %c5_i32_109 = arith.constant 5 : i32
    %164 = arith.muli %163, %c5_i32_109 : i32
    %c3_i32_110 = arith.constant 3 : i32
    %165 = arith.addi %164, %c3_i32_110 : i32
    %166 = arith.index_cast %165 : i32 to index
    %167 = memref.load %arg3[%166] : memref<40xi32, #tpu.memory_space<smem>>
    %c2_i32_111 = arith.constant 2 : i32
    %c0_i32_112 = arith.constant 0 : i32
    %168 = tpu.memref_slice %arg5[%167, %c0_i32_112] : memref<64x32xf32, #tpu.memory_space<any>> -> memref<1x32xf32, #tpu.memory_space<any>>
    %c26_i32 = arith.constant 26 : i32
    %c0_i32_113 = arith.constant 0 : i32
    %169 = tpu.memref_slice %arg9[%c26_i32, %c0_i32_113] : memref<40x32xf32, #tpu.memory_space<vmem>> -> memref<1x32xf32, #tpu.memory_space<vmem>>
    %170 = tpu.memref_slice %arg10[%c2_i32_111] : memref<3x!tpu.dma_semaphore, #tpu.memory_space<semaphore_mem>> -> memref<1x!tpu.dma_semaphore, #tpu.memory_space<semaphore_mem>>
    %171 = tpu.memref_squeeze %170 : memref<1x!tpu.dma_semaphore, #tpu.memory_space<semaphore_mem>> -> memref<!tpu.dma_semaphore, #tpu.memory_space<semaphore_mem>>
    tpu.enqueue_dma source(%168 : memref<1x32xf32, #tpu.memory_space<any>>) target(%169 : memref<1x32xf32, #tpu.memory_space<vmem>>) target_semaphore(%171 : memref<!tpu.dma_semaphore, #tpu.memory_space<semaphore_mem>>)
    %c2_i32_114 = arith.constant 2 : i32
    %172 = arith.addi %0, %c2_i32_114 : i32
    %c5_i32_115 = arith.constant 5 : i32
    %173 = arith.muli %172, %c5_i32_115 : i32
    %c4_i32_116 = arith.constant 4 : i32
    %174 = arith.addi %173, %c4_i32_116 : i32
    %175 = arith.index_cast %174 : i32 to index
    %176 = memref.load %arg3[%175] : memref<40xi32, #tpu.memory_space<smem>>
    %c2_i32_117 = arith.constant 2 : i32
    %c0_i32_118 = arith.constant 0 : i32
    %177 = tpu.memref_slice %arg5[%176, %c0_i32_118] : memref<64x32xf32, #tpu.memory_space<any>> -> memref<1x32xf32, #tpu.memory_space<any>>
    %c34_i32 = arith.constant 34 : i32
    %c0_i32_119 = arith.constant 0 : i32
    %178 = tpu.memref_slice %arg9[%c34_i32, %c0_i32_119] : memref<40x32xf32, #tpu.memory_space<vmem>> -> memref<1x32xf32, #tpu.memory_space<vmem>>
    %179 = tpu.memref_slice %arg10[%c2_i32_117] : memref<3x!tpu.dma_semaphore, #tpu.memory_space<semaphore_mem>> -> memref<1x!tpu.dma_semaphore, #tpu.memory_space<semaphore_mem>>
    %180 = tpu.memref_squeeze %179 : memref<1x!tpu.dma_semaphore, #tpu.memory_space<semaphore_mem>> -> memref<!tpu.dma_semaphore, #tpu.memory_space<semaphore_mem>>
    tpu.enqueue_dma source(%177 : memref<1x32xf32, #tpu.memory_space<any>>) target(%178 : memref<1x32xf32, #tpu.memory_space<vmem>>) target_semaphore(%180 : memref<!tpu.dma_semaphore, #tpu.memory_space<semaphore_mem>>)
    %c3_i32_120 = arith.constant 3 : i32
    %181 = arith.addi %0, %c3_i32_120 : i32
    %182 = arith.index_cast %181 : i32 to index
    %183 = memref.load %arg1[%182] : memref<8xi32, #tpu.memory_space<smem>>
    %c3_i32_121 = arith.constant 3 : i32
    %184 = arith.addi %0, %c3_i32_121 : i32
    %185 = arith.index_cast %184 : i32 to index
    %186 = memref.load %arg2[%185] : memref<8xi32, #tpu.memory_space<smem>>
    %c0_i32_122 = arith.constant 0 : i32
    %c0_i32_123 = arith.constant 0 : i32
    %187 = tpu.memref_slice %arg4[%183, %c0_i32_123] : memref<64x32xf32, #tpu.memory_space<any>> -> memref<1x32xf32, #tpu.memory_space<any>>
    %c3_i32_124 = arith.constant 3 : i32
    %c0_i32_125 = arith.constant 0 : i32
    %188 = tpu.memref_slice %arg7[%c3_i32_124, %c0_i32_125] : memref<8x32xf32, #tpu.memory_space<vmem>> -> memref<1x32xf32, #tpu.memory_space<vmem>>
    %189 = tpu.memref_slice %arg10[%c0_i32_122] : memref<3x!tpu.dma_semaphore, #tpu.memory_space<semaphore_mem>> -> memref<1x!tpu.dma_semaphore, #tpu.memory_space<semaphore_mem>>
    %190 = tpu.memref_squeeze %189 : memref<1x!tpu.dma_semaphore, #tpu.memory_space<semaphore_mem>> -> memref<!tpu.dma_semaphore, #tpu.memory_space<semaphore_mem>>
    tpu.enqueue_dma source(%187 : memref<1x32xf32, #tpu.memory_space<any>>) target(%188 : memref<1x32xf32, #tpu.memory_space<vmem>>) target_semaphore(%190 : memref<!tpu.dma_semaphore, #tpu.memory_space<semaphore_mem>>)
    %c1_i32_126 = arith.constant 1 : i32
    %c0_i32_127 = arith.constant 0 : i32
    %191 = tpu.memref_slice %arg5[%186, %c0_i32_127] : memref<64x32xf32, #tpu.memory_space<any>> -> memref<1x32xf32, #tpu.memory_space<any>>
    %c3_i32_128 = arith.constant 3 : i32
    %c0_i32_129 = arith.constant 0 : i32
    %192 = tpu.memref_slice %arg8[%c3_i32_128, %c0_i32_129] : memref<8x32xf32, #tpu.memory_space<vmem>> -> memref<1x32xf32, #tpu.memory_space<vmem>>
    %193 = tpu.memref_slice %arg10[%c1_i32_126] : memref<3x!tpu.dma_semaphore, #tpu.memory_space<semaphore_mem>> -> memref<1x!tpu.dma_semaphore, #tpu.memory_space<semaphore_mem>>
    %194 = tpu.memref_squeeze %193 : memref<1x!tpu.dma_semaphore, #tpu.memory_space<semaphore_mem>> -> memref<!tpu.dma_semaphore, #tpu.memory_space<semaphore_mem>>
    tpu.enqueue_dma source(%191 : memref<1x32xf32, #tpu.memory_space<any>>) target(%192 : memref<1x32xf32, #tpu.memory_space<vmem>>) target_semaphore(%194 : memref<!tpu.dma_semaphore, #tpu.memory_space<semaphore_mem>>)
    %c3_i32_130 = arith.constant 3 : i32
    %195 = arith.addi %0, %c3_i32_130 : i32
    %c5_i32_131 = arith.constant 5 : i32
    %196 = arith.muli %195, %c5_i32_131 : i32
    %c0_i32_132 = arith.constant 0 : i32
    %197 = arith.addi %196, %c0_i32_132 : i32
    %198 = arith.index_cast %197 : i32 to index
    %199 = memref.load %arg3[%198] : memref<40xi32, #tpu.memory_space<smem>>
    %c2_i32_133 = arith.constant 2 : i32
    %c0_i32_134 = arith.constant 0 : i32
    %200 = tpu.memref_slice %arg5[%199, %c0_i32_134] : memref<64x32xf32, #tpu.memory_space<any>> -> memref<1x32xf32, #tpu.memory_space<any>>
    %c3_i32_135 = arith.constant 3 : i32
    %c0_i32_136 = arith.constant 0 : i32
    %201 = tpu.memref_slice %arg9[%c3_i32_135, %c0_i32_136] : memref<40x32xf32, #tpu.memory_space<vmem>> -> memref<1x32xf32, #tpu.memory_space<vmem>>
    %202 = tpu.memref_slice %arg10[%c2_i32_133] : memref<3x!tpu.dma_semaphore, #tpu.memory_space<semaphore_mem>> -> memref<1x!tpu.dma_semaphore, #tpu.memory_space<semaphore_mem>>
    %203 = tpu.memref_squeeze %202 : memref<1x!tpu.dma_semaphore, #tpu.memory_space<semaphore_mem>> -> memref<!tpu.dma_semaphore, #tpu.memory_space<semaphore_mem>>
    tpu.enqueue_dma source(%200 : memref<1x32xf32, #tpu.memory_space<any>>) target(%201 : memref<1x32xf32, #tpu.memory_space<vmem>>) target_semaphore(%203 : memref<!tpu.dma_semaphore, #tpu.memory_space<semaphore_mem>>)
    %c3_i32_137 = arith.constant 3 : i32
    %204 = arith.addi %0, %c3_i32_137 : i32
    %c5_i32_138 = arith.constant 5 : i32
    %205 = arith.muli %204, %c5_i32_138 : i32
    %c1_i32_139 = arith.constant 1 : i32
    %206 = arith.addi %205, %c1_i32_139 : i32
    %207 = arith.index_cast %206 : i32 to index
    %208 = memref.load %arg3[%207] : memref<40xi32, #tpu.memory_space<smem>>
    %c2_i32_140 = arith.constant 2 : i32
    %c0_i32_141 = arith.constant 0 : i32
    %209 = tpu.memref_slice %arg5[%208, %c0_i32_141] : memref<64x32xf32, #tpu.memory_space<any>> -> memref<1x32xf32, #tpu.memory_space<any>>
    %c11_i32 = arith.constant 11 : i32
    %c0_i32_142 = arith.constant 0 : i32
    %210 = tpu.memref_slice %arg9[%c11_i32, %c0_i32_142] : memref<40x32xf32, #tpu.memory_space<vmem>> -> memref<1x32xf32, #tpu.memory_space<vmem>>
    %211 = tpu.memref_slice %arg10[%c2_i32_140] : memref<3x!tpu.dma_semaphore, #tpu.memory_space<semaphore_mem>> -> memref<1x!tpu.dma_semaphore, #tpu.memory_space<semaphore_mem>>
    %212 = tpu.memref_squeeze %211 : memref<1x!tpu.dma_semaphore, #tpu.memory_space<semaphore_mem>> -> memref<!tpu.dma_semaphore, #tpu.memory_space<semaphore_mem>>
    tpu.enqueue_dma source(%209 : memref<1x32xf32, #tpu.memory_space<any>>) target(%210 : memref<1x32xf32, #tpu.memory_space<vmem>>) target_semaphore(%212 : memref<!tpu.dma_semaphore, #tpu.memory_space<semaphore_mem>>)
    %c3_i32_143 = arith.constant 3 : i32
    %213 = arith.addi %0, %c3_i32_143 : i32
    %c5_i32_144 = arith.constant 5 : i32
    %214 = arith.muli %213, %c5_i32_144 : i32
    %c2_i32_145 = arith.constant 2 : i32
    %215 = arith.addi %214, %c2_i32_145 : i32
    %216 = arith.index_cast %215 : i32 to index
    %217 = memref.load %arg3[%216] : memref<40xi32, #tpu.memory_space<smem>>
    %c2_i32_146 = arith.constant 2 : i32
    %c0_i32_147 = arith.constant 0 : i32
    %218 = tpu.memref_slice %arg5[%217, %c0_i32_147] : memref<64x32xf32, #tpu.memory_space<any>> -> memref<1x32xf32, #tpu.memory_space<any>>
    %c19_i32 = arith.constant 19 : i32
    %c0_i32_148 = arith.constant 0 : i32
    %219 = tpu.memref_slice %arg9[%c19_i32, %c0_i32_148] : memref<40x32xf32, #tpu.memory_space<vmem>> -> memref<1x32xf32, #tpu.memory_space<vmem>>
    %220 = tpu.memref_slice %arg10[%c2_i32_146] : memref<3x!tpu.dma_semaphore, #tpu.memory_space<semaphore_mem>> -> memref<1x!tpu.dma_semaphore, #tpu.memory_space<semaphore_mem>>
    %221 = tpu.memref_squeeze %220 : memref<1x!tpu.dma_semaphore, #tpu.memory_space<semaphore_mem>> -> memref<!tpu.dma_semaphore, #tpu.memory_space<semaphore_mem>>
    tpu.enqueue_dma source(%218 : memref<1x32xf32, #tpu.memory_space<any>>) target(%219 : memref<1x32xf32, #tpu.memory_space<vmem>>) target_semaphore(%221 : memref<!tpu.dma_semaphore, #tpu.memory_space<semaphore_mem>>)
    %c3_i32_149 = arith.constant 3 : i32
    %222 = arith.addi %0, %c3_i32_149 : i32
    %c5_i32_150 = arith.constant 5 : i32
    %223 = arith.muli %222, %c5_i32_150 : i32
    %c3_i32_151 = arith.constant 3 : i32
    %224 = arith.addi %223, %c3_i32_151 : i32
    %225 = arith.index_cast %224 : i32 to index
    %226 = memref.load %arg3[%225] : memref<40xi32, #tpu.memory_space<smem>>
    %c2_i32_152 = arith.constant 2 : i32
    %c0_i32_153 = arith.constant 0 : i32
    %227 = tpu.memref_slice %arg5[%226, %c0_i32_153] : memref<64x32xf32, #tpu.memory_space<any>> -> memref<1x32xf32, #tpu.memory_space<any>>
    %c27_i32 = arith.constant 27 : i32
    %c0_i32_154 = arith.constant 0 : i32
    %228 = tpu.memref_slice %arg9[%c27_i32, %c0_i32_154] : memref<40x32xf32, #tpu.memory_space<vmem>> -> memref<1x32xf32, #tpu.memory_space<vmem>>
    %229 = tpu.memref_slice %arg10[%c2_i32_152] : memref<3x!tpu.dma_semaphore, #tpu.memory_space<semaphore_mem>> -> memref<1x!tpu.dma_semaphore, #tpu.memory_space<semaphore_mem>>
    %230 = tpu.memref_squeeze %229 : memref<1x!tpu.dma_semaphore, #tpu.memory_space<semaphore_mem>> -> memref<!tpu.dma_semaphore, #tpu.memory_space<semaphore_mem>>
    tpu.enqueue_dma source(%227 : memref<1x32xf32, #tpu.memory_space<any>>) target(%228 : memref<1x32xf32, #tpu.memory_space<vmem>>) target_semaphore(%230 : memref<!tpu.dma_semaphore, #tpu.memory_space<semaphore_mem>>)
    %c3_i32_155 = arith.constant 3 : i32
    %231 = arith.addi %0, %c3_i32_155 : i32
    %c5_i32_156 = arith.constant 5 : i32
    %232 = arith.muli %231, %c5_i32_156 : i32
    %c4_i32_157 = arith.constant 4 : i32
    %233 = arith.addi %232, %c4_i32_157 : i32
    %234 = arith.index_cast %233 : i32 to index
    %235 = memref.load %arg3[%234] : memref<40xi32, #tpu.memory_space<smem>>
    %c2_i32_158 = arith.constant 2 : i32
    %c0_i32_159 = arith.constant 0 : i32
    %236 = tpu.memref_slice %arg5[%235, %c0_i32_159] : memref<64x32xf32, #tpu.memory_space<any>> -> memref<1x32xf32, #tpu.memory_space<any>>
    %c35_i32 = arith.constant 35 : i32
    %c0_i32_160 = arith.constant 0 : i32
    %237 = tpu.memref_slice %arg9[%c35_i32, %c0_i32_160] : memref<40x32xf32, #tpu.memory_space<vmem>> -> memref<1x32xf32, #tpu.memory_space<vmem>>
    %238 = tpu.memref_slice %arg10[%c2_i32_158] : memref<3x!tpu.dma_semaphore, #tpu.memory_space<semaphore_mem>> -> memref<1x!tpu.dma_semaphore, #tpu.memory_space<semaphore_mem>>
    %239 = tpu.memref_squeeze %238 : memref<1x!tpu.dma_semaphore, #tpu.memory_space<semaphore_mem>> -> memref<!tpu.dma_semaphore, #tpu.memory_space<semaphore_mem>>
    tpu.enqueue_dma source(%236 : memref<1x32xf32, #tpu.memory_space<any>>) target(%237 : memref<1x32xf32, #tpu.memory_space<vmem>>) target_semaphore(%239 : memref<!tpu.dma_semaphore, #tpu.memory_space<semaphore_mem>>)
    %c4_i32_161 = arith.constant 4 : i32
    %240 = arith.addi %0, %c4_i32_161 : i32
    %241 = arith.index_cast %240 : i32 to index
    %242 = memref.load %arg1[%241] : memref<8xi32, #tpu.memory_space<smem>>
    %c4_i32_162 = arith.constant 4 : i32
    %243 = arith.addi %0, %c4_i32_162 : i32
    %244 = arith.index_cast %243 : i32 to index
    %245 = memref.load %arg2[%244] : memref<8xi32, #tpu.memory_space<smem>>
    %c0_i32_163 = arith.constant 0 : i32
    %c0_i32_164 = arith.constant 0 : i32
    %246 = tpu.memref_slice %arg4[%242, %c0_i32_164] : memref<64x32xf32, #tpu.memory_space<any>> -> memref<1x32xf32, #tpu.memory_space<any>>
    %c4_i32_165 = arith.constant 4 : i32
    %c0_i32_166 = arith.constant 0 : i32
    %247 = tpu.memref_slice %arg7[%c4_i32_165, %c0_i32_166] : memref<8x32xf32, #tpu.memory_space<vmem>> -> memref<1x32xf32, #tpu.memory_space<vmem>>
    %248 = tpu.memref_slice %arg10[%c0_i32_163] : memref<3x!tpu.dma_semaphore, #tpu.memory_space<semaphore_mem>> -> memref<1x!tpu.dma_semaphore, #tpu.memory_space<semaphore_mem>>
    %249 = tpu.memref_squeeze %248 : memref<1x!tpu.dma_semaphore, #tpu.memory_space<semaphore_mem>> -> memref<!tpu.dma_semaphore, #tpu.memory_space<semaphore_mem>>
    tpu.enqueue_dma source(%246 : memref<1x32xf32, #tpu.memory_space<any>>) target(%247 : memref<1x32xf32, #tpu.memory_space<vmem>>) target_semaphore(%249 : memref<!tpu.dma_semaphore, #tpu.memory_space<semaphore_mem>>)
    %c1_i32_167 = arith.constant 1 : i32
    %c0_i32_168 = arith.constant 0 : i32
    %250 = tpu.memref_slice %arg5[%245, %c0_i32_168] : memref<64x32xf32, #tpu.memory_space<any>> -> memref<1x32xf32, #tpu.memory_space<any>>
    %c4_i32_169 = arith.constant 4 : i32
    %c0_i32_170 = arith.constant 0 : i32
    %251 = tpu.memref_slice %arg8[%c4_i32_169, %c0_i32_170] : memref<8x32xf32, #tpu.memory_space<vmem>> -> memref<1x32xf32, #tpu.memory_space<vmem>>
    %252 = tpu.memref_slice %arg10[%c1_i32_167] : memref<3x!tpu.dma_semaphore, #tpu.memory_space<semaphore_mem>> -> memref<1x!tpu.dma_semaphore, #tpu.memory_space<semaphore_mem>>
    %253 = tpu.memref_squeeze %252 : memref<1x!tpu.dma_semaphore, #tpu.memory_space<semaphore_mem>> -> memref<!tpu.dma_semaphore, #tpu.memory_space<semaphore_mem>>
    tpu.enqueue_dma source(%250 : memref<1x32xf32, #tpu.memory_space<any>>) target(%251 : memref<1x32xf32, #tpu.memory_space<vmem>>) target_semaphore(%253 : memref<!tpu.dma_semaphore, #tpu.memory_space<semaphore_mem>>)
    %c4_i32_171 = arith.constant 4 : i32
    %254 = arith.addi %0, %c4_i32_171 : i32
    %c5_i32_172 = arith.constant 5 : i32
    %255 = arith.muli %254, %c5_i32_172 : i32
    %c0_i32_173 = arith.constant 0 : i32
    %256 = arith.addi %255, %c0_i32_173 : i32
    %257 = arith.index_cast %256 : i32 to index
    %258 = memref.load %arg3[%257] : memref<40xi32, #tpu.memory_space<smem>>
    %c2_i32_174 = arith.constant 2 : i32
    %c0_i32_175 = arith.constant 0 : i32
    %259 = tpu.memref_slice %arg5[%258, %c0_i32_175] : memref<64x32xf32, #tpu.memory_space<any>> -> memref<1x32xf32, #tpu.memory_space<any>>
    %c4_i32_176 = arith.constant 4 : i32
    %c0_i32_177 = arith.constant 0 : i32
    %260 = tpu.memref_slice %arg9[%c4_i32_176, %c0_i32_177] : memref<40x32xf32, #tpu.memory_space<vmem>> -> memref<1x32xf32, #tpu.memory_space<vmem>>
    %261 = tpu.memref_slice %arg10[%c2_i32_174] : memref<3x!tpu.dma_semaphore, #tpu.memory_space<semaphore_mem>> -> memref<1x!tpu.dma_semaphore, #tpu.memory_space<semaphore_mem>>
    %262 = tpu.memref_squeeze %261 : memref<1x!tpu.dma_semaphore, #tpu.memory_space<semaphore_mem>> -> memref<!tpu.dma_semaphore, #tpu.memory_space<semaphore_mem>>
    tpu.enqueue_dma source(%259 : memref<1x32xf32, #tpu.memory_space<any>>) target(%260 : memref<1x32xf32, #tpu.memory_space<vmem>>) target_semaphore(%262 : memref<!tpu.dma_semaphore, #tpu.memory_space<semaphore_mem>>)
    %c4_i32_178 = arith.constant 4 : i32
    %263 = arith.addi %0, %c4_i32_178 : i32
    %c5_i32_179 = arith.constant 5 : i32
    %264 = arith.muli %263, %c5_i32_179 : i32
    %c1_i32_180 = arith.constant 1 : i32
    %265 = arith.addi %264, %c1_i32_180 : i32
    %266 = arith.index_cast %265 : i32 to index
    %267 = memref.load %arg3[%266] : memref<40xi32, #tpu.memory_space<smem>>
    %c2_i32_181 = arith.constant 2 : i32
    %c0_i32_182 = arith.constant 0 : i32
    %268 = tpu.memref_slice %arg5[%267, %c0_i32_182] : memref<64x32xf32, #tpu.memory_space<any>> -> memref<1x32xf32, #tpu.memory_space<any>>
    %c12_i32 = arith.constant 12 : i32
    %c0_i32_183 = arith.constant 0 : i32
    %269 = tpu.memref_slice %arg9[%c12_i32, %c0_i32_183] : memref<40x32xf32, #tpu.memory_space<vmem>> -> memref<1x32xf32, #tpu.memory_space<vmem>>
    %270 = tpu.memref_slice %arg10[%c2_i32_181] : memref<3x!tpu.dma_semaphore, #tpu.memory_space<semaphore_mem>> -> memref<1x!tpu.dma_semaphore, #tpu.memory_space<semaphore_mem>>
    %271 = tpu.memref_squeeze %270 : memref<1x!tpu.dma_semaphore, #tpu.memory_space<semaphore_mem>> -> memref<!tpu.dma_semaphore, #tpu.memory_space<semaphore_mem>>
    tpu.enqueue_dma source(%268 : memref<1x32xf32, #tpu.memory_space<any>>) target(%269 : memref<1x32xf32, #tpu.memory_space<vmem>>) target_semaphore(%271 : memref<!tpu.dma_semaphore, #tpu.memory_space<semaphore_mem>>)
    %c4_i32_184 = arith.constant 4 : i32
    %272 = arith.addi %0, %c4_i32_184 : i32
    %c5_i32_185 = arith.constant 5 : i32
    %273 = arith.muli %272, %c5_i32_185 : i32
    %c2_i32_186 = arith.constant 2 : i32
    %274 = arith.addi %273, %c2_i32_186 : i32
    %275 = arith.index_cast %274 : i32 to index
    %276 = memref.load %arg3[%275] : memref<40xi32, #tpu.memory_space<smem>>
    %c2_i32_187 = arith.constant 2 : i32
    %c0_i32_188 = arith.constant 0 : i32
    %277 = tpu.memref_slice %arg5[%276, %c0_i32_188] : memref<64x32xf32, #tpu.memory_space<any>> -> memref<1x32xf32, #tpu.memory_space<any>>
    %c20_i32 = arith.constant 20 : i32
    %c0_i32_189 = arith.constant 0 : i32
    %278 = tpu.memref_slice %arg9[%c20_i32, %c0_i32_189] : memref<40x32xf32, #tpu.memory_space<vmem>> -> memref<1x32xf32, #tpu.memory_space<vmem>>
    %279 = tpu.memref_slice %arg10[%c2_i32_187] : memref<3x!tpu.dma_semaphore, #tpu.memory_space<semaphore_mem>> -> memref<1x!tpu.dma_semaphore, #tpu.memory_space<semaphore_mem>>
    %280 = tpu.memref_squeeze %279 : memref<1x!tpu.dma_semaphore, #tpu.memory_space<semaphore_mem>> -> memref<!tpu.dma_semaphore, #tpu.memory_space<semaphore_mem>>
    tpu.enqueue_dma source(%277 : memref<1x32xf32, #tpu.memory_space<any>>) target(%278 : memref<1x32xf32, #tpu.memory_space<vmem>>) target_semaphore(%280 : memref<!tpu.dma_semaphore, #tpu.memory_space<semaphore_mem>>)
    %c4_i32_190 = arith.constant 4 : i32
    %281 = arith.addi %0, %c4_i32_190 : i32
    %c5_i32_191 = arith.constant 5 : i32
    %282 = arith.muli %281, %c5_i32_191 : i32
    %c3_i32_192 = arith.constant 3 : i32
    %283 = arith.addi %282, %c3_i32_192 : i32
    %284 = arith.index_cast %283 : i32 to index
    %285 = memref.load %arg3[%284] : memref<40xi32, #tpu.memory_space<smem>>
    %c2_i32_193 = arith.constant 2 : i32
    %c0_i32_194 = arith.constant 0 : i32
    %286 = tpu.memref_slice %arg5[%285, %c0_i32_194] : memref<64x32xf32, #tpu.memory_space<any>> -> memref<1x32xf32, #tpu.memory_space<any>>
    %c28_i32 = arith.constant 28 : i32
    %c0_i32_195 = arith.constant 0 : i32
    %287 = tpu.memref_slice %arg9[%c28_i32, %c0_i32_195] : memref<40x32xf32, #tpu.memory_space<vmem>> -> memref<1x32xf32, #tpu.memory_space<vmem>>
    %288 = tpu.memref_slice %arg10[%c2_i32_193] : memref<3x!tpu.dma_semaphore, #tpu.memory_space<semaphore_mem>> -> memref<1x!tpu.dma_semaphore, #tpu.memory_space<semaphore_mem>>
    %289 = tpu.memref_squeeze %288 : memref<1x!tpu.dma_semaphore, #tpu.memory_space<semaphore_mem>> -> memref<!tpu.dma_semaphore, #tpu.memory_space<semaphore_mem>>
    tpu.enqueue_dma source(%286 : memref<1x32xf32, #tpu.memory_space<any>>) target(%287 : memref<1x32xf32, #tpu.memory_space<vmem>>) target_semaphore(%289 : memref<!tpu.dma_semaphore, #tpu.memory_space<semaphore_mem>>)
    %c4_i32_196 = arith.constant 4 : i32
    %290 = arith.addi %0, %c4_i32_196 : i32
    %c5_i32_197 = arith.constant 5 : i32
    %291 = arith.muli %290, %c5_i32_197 : i32
    %c4_i32_198 = arith.constant 4 : i32
    %292 = arith.addi %291, %c4_i32_198 : i32
    %293 = arith.index_cast %292 : i32 to index
    %294 = memref.load %arg3[%293] : memref<40xi32, #tpu.memory_space<smem>>
    %c2_i32_199 = arith.constant 2 : i32
    %c0_i32_200 = arith.constant 0 : i32
    %295 = tpu.memref_slice %arg5[%294, %c0_i32_200] : memref<64x32xf32, #tpu.memory_space<any>> -> memref<1x32xf32, #tpu.memory_space<any>>
    %c36_i32 = arith.constant 36 : i32
    %c0_i32_201 = arith.constant 0 : i32
    %296 = tpu.memref_slice %arg9[%c36_i32, %c0_i32_201] : memref<40x32xf32, #tpu.memory_space<vmem>> -> memref<1x32xf32, #tpu.memory_space<vmem>>
    %297 = tpu.memref_slice %arg10[%c2_i32_199] : memref<3x!tpu.dma_semaphore, #tpu.memory_space<semaphore_mem>> -> memref<1x!tpu.dma_semaphore, #tpu.memory_space<semaphore_mem>>
    %298 = tpu.memref_squeeze %297 : memref<1x!tpu.dma_semaphore, #tpu.memory_space<semaphore_mem>> -> memref<!tpu.dma_semaphore, #tpu.memory_space<semaphore_mem>>
    tpu.enqueue_dma source(%295 : memref<1x32xf32, #tpu.memory_space<any>>) target(%296 : memref<1x32xf32, #tpu.memory_space<vmem>>) target_semaphore(%298 : memref<!tpu.dma_semaphore, #tpu.memory_space<semaphore_mem>>)
    %c5_i32_202 = arith.constant 5 : i32
    %299 = arith.addi %0, %c5_i32_202 : i32
    %300 = arith.index_cast %299 : i32 to index
    %301 = memref.load %arg1[%300] : memref<8xi32, #tpu.memory_space<smem>>
    %c5_i32_203 = arith.constant 5 : i32
    %302 = arith.addi %0, %c5_i32_203 : i32
    %303 = arith.index_cast %302 : i32 to index
    %304 = memref.load %arg2[%303] : memref<8xi32, #tpu.memory_space<smem>>
    %c0_i32_204 = arith.constant 0 : i32
    %c0_i32_205 = arith.constant 0 : i32
    %305 = tpu.memref_slice %arg4[%301, %c0_i32_205] : memref<64x32xf32, #tpu.memory_space<any>> -> memref<1x32xf32, #tpu.memory_space<any>>
    %c5_i32_206 = arith.constant 5 : i32
    %c0_i32_207 = arith.constant 0 : i32
    %306 = tpu.memref_slice %arg7[%c5_i32_206, %c0_i32_207] : memref<8x32xf32, #tpu.memory_space<vmem>> -> memref<1x32xf32, #tpu.memory_space<vmem>>
    %307 = tpu.memref_slice %arg10[%c0_i32_204] : memref<3x!tpu.dma_semaphore, #tpu.memory_space<semaphore_mem>> -> memref<1x!tpu.dma_semaphore, #tpu.memory_space<semaphore_mem>>
    %308 = tpu.memref_squeeze %307 : memref<1x!tpu.dma_semaphore, #tpu.memory_space<semaphore_mem>> -> memref<!tpu.dma_semaphore, #tpu.memory_space<semaphore_mem>>
    tpu.enqueue_dma source(%305 : memref<1x32xf32, #tpu.memory_space<any>>) target(%306 : memref<1x32xf32, #tpu.memory_space<vmem>>) target_semaphore(%308 : memref<!tpu.dma_semaphore, #tpu.memory_space<semaphore_mem>>)
    %c1_i32_208 = arith.constant 1 : i32
    %c0_i32_209 = arith.constant 0 : i32
    %309 = tpu.memref_slice %arg5[%304, %c0_i32_209] : memref<64x32xf32, #tpu.memory_space<any>> -> memref<1x32xf32, #tpu.memory_space<any>>
    %c5_i32_210 = arith.constant 5 : i32
    %c0_i32_211 = arith.constant 0 : i32
    %310 = tpu.memref_slice %arg8[%c5_i32_210, %c0_i32_211] : memref<8x32xf32, #tpu.memory_space<vmem>> -> memref<1x32xf32, #tpu.memory_space<vmem>>
    %311 = tpu.memref_slice %arg10[%c1_i32_208] : memref<3x!tpu.dma_semaphore, #tpu.memory_space<semaphore_mem>> -> memref<1x!tpu.dma_semaphore, #tpu.memory_space<semaphore_mem>>
    %312 = tpu.memref_squeeze %311 : memref<1x!tpu.dma_semaphore, #tpu.memory_space<semaphore_mem>> -> memref<!tpu.dma_semaphore, #tpu.memory_space<semaphore_mem>>
    tpu.enqueue_dma source(%309 : memref<1x32xf32, #tpu.memory_space<any>>) target(%310 : memref<1x32xf32, #tpu.memory_space<vmem>>) target_semaphore(%312 : memref<!tpu.dma_semaphore, #tpu.memory_space<semaphore_mem>>)
    %c5_i32_212 = arith.constant 5 : i32
    %313 = arith.addi %0, %c5_i32_212 : i32
    %c5_i32_213 = arith.constant 5 : i32
    %314 = arith.muli %313, %c5_i32_213 : i32
    %c0_i32_214 = arith.constant 0 : i32
    %315 = arith.addi %314, %c0_i32_214 : i32
    %316 = arith.index_cast %315 : i32 to index
    %317 = memref.load %arg3[%316] : memref<40xi32, #tpu.memory_space<smem>>
    %c2_i32_215 = arith.constant 2 : i32
    %c0_i32_216 = arith.constant 0 : i32
    %318 = tpu.memref_slice %arg5[%317, %c0_i32_216] : memref<64x32xf32, #tpu.memory_space<any>> -> memref<1x32xf32, #tpu.memory_space<any>>
    %c5_i32_217 = arith.constant 5 : i32
    %c0_i32_218 = arith.constant 0 : i32
    %319 = tpu.memref_slice %arg9[%c5_i32_217, %c0_i32_218] : memref<40x32xf32, #tpu.memory_space<vmem>> -> memref<1x32xf32, #tpu.memory_space<vmem>>
    %320 = tpu.memref_slice %arg10[%c2_i32_215] : memref<3x!tpu.dma_semaphore, #tpu.memory_space<semaphore_mem>> -> memref<1x!tpu.dma_semaphore, #tpu.memory_space<semaphore_mem>>
    %321 = tpu.memref_squeeze %320 : memref<1x!tpu.dma_semaphore, #tpu.memory_space<semaphore_mem>> -> memref<!tpu.dma_semaphore, #tpu.memory_space<semaphore_mem>>
    tpu.enqueue_dma source(%318 : memref<1x32xf32, #tpu.memory_space<any>>) target(%319 : memref<1x32xf32, #tpu.memory_space<vmem>>) target_semaphore(%321 : memref<!tpu.dma_semaphore, #tpu.memory_space<semaphore_mem>>)
    %c5_i32_219 = arith.constant 5 : i32
    %322 = arith.addi %0, %c5_i32_219 : i32
    %c5_i32_220 = arith.constant 5 : i32
    %323 = arith.muli %322, %c5_i32_220 : i32
    %c1_i32_221 = arith.constant 1 : i32
    %324 = arith.addi %323, %c1_i32_221 : i32
    %325 = arith.index_cast %324 : i32 to index
    %326 = memref.load %arg3[%325] : memref<40xi32, #tpu.memory_space<smem>>
    %c2_i32_222 = arith.constant 2 : i32
    %c0_i32_223 = arith.constant 0 : i32
    %327 = tpu.memref_slice %arg5[%326, %c0_i32_223] : memref<64x32xf32, #tpu.memory_space<any>> -> memref<1x32xf32, #tpu.memory_space<any>>
    %c13_i32 = arith.constant 13 : i32
    %c0_i32_224 = arith.constant 0 : i32
    %328 = tpu.memref_slice %arg9[%c13_i32, %c0_i32_224] : memref<40x32xf32, #tpu.memory_space<vmem>> -> memref<1x32xf32, #tpu.memory_space<vmem>>
    %329 = tpu.memref_slice %arg10[%c2_i32_222] : memref<3x!tpu.dma_semaphore, #tpu.memory_space<semaphore_mem>> -> memref<1x!tpu.dma_semaphore, #tpu.memory_space<semaphore_mem>>
    %330 = tpu.memref_squeeze %329 : memref<1x!tpu.dma_semaphore, #tpu.memory_space<semaphore_mem>> -> memref<!tpu.dma_semaphore, #tpu.memory_space<semaphore_mem>>
    tpu.enqueue_dma source(%327 : memref<1x32xf32, #tpu.memory_space<any>>) target(%328 : memref<1x32xf32, #tpu.memory_space<vmem>>) target_semaphore(%330 : memref<!tpu.dma_semaphore, #tpu.memory_space<semaphore_mem>>)
    %c5_i32_225 = arith.constant 5 : i32
    %331 = arith.addi %0, %c5_i32_225 : i32
    %c5_i32_226 = arith.constant 5 : i32
    %332 = arith.muli %331, %c5_i32_226 : i32
    %c2_i32_227 = arith.constant 2 : i32
    %333 = arith.addi %332, %c2_i32_227 : i32
    %334 = arith.index_cast %333 : i32 to index
    %335 = memref.load %arg3[%334] : memref<40xi32, #tpu.memory_space<smem>>
    %c2_i32_228 = arith.constant 2 : i32
    %c0_i32_229 = arith.constant 0 : i32
    %336 = tpu.memref_slice %arg5[%335, %c0_i32_229] : memref<64x32xf32, #tpu.memory_space<any>> -> memref<1x32xf32, #tpu.memory_space<any>>
    %c21_i32 = arith.constant 21 : i32
    %c0_i32_230 = arith.constant 0 : i32
    %337 = tpu.memref_slice %arg9[%c21_i32, %c0_i32_230] : memref<40x32xf32, #tpu.memory_space<vmem>> -> memref<1x32xf32, #tpu.memory_space<vmem>>
    %338 = tpu.memref_slice %arg10[%c2_i32_228] : memref<3x!tpu.dma_semaphore, #tpu.memory_space<semaphore_mem>> -> memref<1x!tpu.dma_semaphore, #tpu.memory_space<semaphore_mem>>
    %339 = tpu.memref_squeeze %338 : memref<1x!tpu.dma_semaphore, #tpu.memory_space<semaphore_mem>> -> memref<!tpu.dma_semaphore, #tpu.memory_space<semaphore_mem>>
    tpu.enqueue_dma source(%336 : memref<1x32xf32, #tpu.memory_space<any>>) target(%337 : memref<1x32xf32, #tpu.memory_space<vmem>>) target_semaphore(%339 : memref<!tpu.dma_semaphore, #tpu.memory_space<semaphore_mem>>)
    %c5_i32_231 = arith.constant 5 : i32
    %340 = arith.addi %0, %c5_i32_231 : i32
    %c5_i32_232 = arith.constant 5 : i32
    %341 = arith.muli %340, %c5_i32_232 : i32
    %c3_i32_233 = arith.constant 3 : i32
    %342 = arith.addi %341, %c3_i32_233 : i32
    %343 = arith.index_cast %342 : i32 to index
    %344 = memref.load %arg3[%343] : memref<40xi32, #tpu.memory_space<smem>>
    %c2_i32_234 = arith.constant 2 : i32
    %c0_i32_235 = arith.constant 0 : i32
    %345 = tpu.memref_slice %arg5[%344, %c0_i32_235] : memref<64x32xf32, #tpu.memory_space<any>> -> memref<1x32xf32, #tpu.memory_space<any>>
    %c29_i32 = arith.constant 29 : i32
    %c0_i32_236 = arith.constant 0 : i32
    %346 = tpu.memref_slice %arg9[%c29_i32, %c0_i32_236] : memref<40x32xf32, #tpu.memory_space<vmem>> -> memref<1x32xf32, #tpu.memory_space<vmem>>
    %347 = tpu.memref_slice %arg10[%c2_i32_234] : memref<3x!tpu.dma_semaphore, #tpu.memory_space<semaphore_mem>> -> memref<1x!tpu.dma_semaphore, #tpu.memory_space<semaphore_mem>>
    %348 = tpu.memref_squeeze %347 : memref<1x!tpu.dma_semaphore, #tpu.memory_space<semaphore_mem>> -> memref<!tpu.dma_semaphore, #tpu.memory_space<semaphore_mem>>
    tpu.enqueue_dma source(%345 : memref<1x32xf32, #tpu.memory_space<any>>) target(%346 : memref<1x32xf32, #tpu.memory_space<vmem>>) target_semaphore(%348 : memref<!tpu.dma_semaphore, #tpu.memory_space<semaphore_mem>>)
    %c5_i32_237 = arith.constant 5 : i32
    %349 = arith.addi %0, %c5_i32_237 : i32
    %c5_i32_238 = arith.constant 5 : i32
    %350 = arith.muli %349, %c5_i32_238 : i32
    %c4_i32_239 = arith.constant 4 : i32
    %351 = arith.addi %350, %c4_i32_239 : i32
    %352 = arith.index_cast %351 : i32 to index
    %353 = memref.load %arg3[%352] : memref<40xi32, #tpu.memory_space<smem>>
    %c2_i32_240 = arith.constant 2 : i32
    %c0_i32_241 = arith.constant 0 : i32
    %354 = tpu.memref_slice %arg5[%353, %c0_i32_241] : memref<64x32xf32, #tpu.memory_space<any>> -> memref<1x32xf32, #tpu.memory_space<any>>
    %c37_i32 = arith.constant 37 : i32
    %c0_i32_242 = arith.constant 0 : i32
    %355 = tpu.memref_slice %arg9[%c37_i32, %c0_i32_242] : memref<40x32xf32, #tpu.memory_space<vmem>> -> memref<1x32xf32, #tpu.memory_space<vmem>>
    %356 = tpu.memref_slice %arg10[%c2_i32_240] : memref<3x!tpu.dma_semaphore, #tpu.memory_space<semaphore_mem>> -> memref<1x!tpu.dma_semaphore, #tpu.memory_space<semaphore_mem>>
    %357 = tpu.memref_squeeze %356 : memref<1x!tpu.dma_semaphore, #tpu.memory_space<semaphore_mem>> -> memref<!tpu.dma_semaphore, #tpu.memory_space<semaphore_mem>>
    tpu.enqueue_dma source(%354 : memref<1x32xf32, #tpu.memory_space<any>>) target(%355 : memref<1x32xf32, #tpu.memory_space<vmem>>) target_semaphore(%357 : memref<!tpu.dma_semaphore, #tpu.memory_space<semaphore_mem>>)
    %c6_i32 = arith.constant 6 : i32
    %358 = arith.addi %0, %c6_i32 : i32
    %359 = arith.index_cast %358 : i32 to index
    %360 = memref.load %arg1[%359] : memref<8xi32, #tpu.memory_space<smem>>
    %c6_i32_243 = arith.constant 6 : i32
    %361 = arith.addi %0, %c6_i32_243 : i32
    %362 = arith.index_cast %361 : i32 to index
    %363 = memref.load %arg2[%362] : memref<8xi32, #tpu.memory_space<smem>>
    %c0_i32_244 = arith.constant 0 : i32
    %c0_i32_245 = arith.constant 0 : i32
    %364 = tpu.memref_slice %arg4[%360, %c0_i32_245] : memref<64x32xf32, #tpu.memory_space<any>> -> memref<1x32xf32, #tpu.memory_space<any>>
    %c6_i32_246 = arith.constant 6 : i32
    %c0_i32_247 = arith.constant 0 : i32
    %365 = tpu.memref_slice %arg7[%c6_i32_246, %c0_i32_247] : memref<8x32xf32, #tpu.memory_space<vmem>> -> memref<1x32xf32, #tpu.memory_space<vmem>>
    %366 = tpu.memref_slice %arg10[%c0_i32_244] : memref<3x!tpu.dma_semaphore, #tpu.memory_space<semaphore_mem>> -> memref<1x!tpu.dma_semaphore, #tpu.memory_space<semaphore_mem>>
    %367 = tpu.memref_squeeze %366 : memref<1x!tpu.dma_semaphore, #tpu.memory_space<semaphore_mem>> -> memref<!tpu.dma_semaphore, #tpu.memory_space<semaphore_mem>>
    tpu.enqueue_dma source(%364 : memref<1x32xf32, #tpu.memory_space<any>>) target(%365 : memref<1x32xf32, #tpu.memory_space<vmem>>) target_semaphore(%367 : memref<!tpu.dma_semaphore, #tpu.memory_space<semaphore_mem>>)
    %c1_i32_248 = arith.constant 1 : i32
    %c0_i32_249 = arith.constant 0 : i32
    %368 = tpu.memref_slice %arg5[%363, %c0_i32_249] : memref<64x32xf32, #tpu.memory_space<any>> -> memref<1x32xf32, #tpu.memory_space<any>>
    %c6_i32_250 = arith.constant 6 : i32
    %c0_i32_251 = arith.constant 0 : i32
    %369 = tpu.memref_slice %arg8[%c6_i32_250, %c0_i32_251] : memref<8x32xf32, #tpu.memory_space<vmem>> -> memref<1x32xf32, #tpu.memory_space<vmem>>
    %370 = tpu.memref_slice %arg10[%c1_i32_248] : memref<3x!tpu.dma_semaphore, #tpu.memory_space<semaphore_mem>> -> memref<1x!tpu.dma_semaphore, #tpu.memory_space<semaphore_mem>>
    %371 = tpu.memref_squeeze %370 : memref<1x!tpu.dma_semaphore, #tpu.memory_space<semaphore_mem>> -> memref<!tpu.dma_semaphore, #tpu.memory_space<semaphore_mem>>
    tpu.enqueue_dma source(%368 : memref<1x32xf32, #tpu.memory_space<any>>) target(%369 : memref<1x32xf32, #tpu.memory_space<vmem>>) target_semaphore(%371 : memref<!tpu.dma_semaphore, #tpu.memory_space<semaphore_mem>>)
    %c6_i32_252 = arith.constant 6 : i32
    %372 = arith.addi %0, %c6_i32_252 : i32
    %c5_i32_253 = arith.constant 5 : i32
    %373 = arith.muli %372, %c5_i32_253 : i32
    %c0_i32_254 = arith.constant 0 : i32
    %374 = arith.addi %373, %c0_i32_254 : i32
    %375 = arith.index_cast %374 : i32 to index
    %376 = memref.load %arg3[%375] : memref<40xi32, #tpu.memory_space<smem>>
    %c2_i32_255 = arith.constant 2 : i32
    %c0_i32_256 = arith.constant 0 : i32
    %377 = tpu.memref_slice %arg5[%376, %c0_i32_256] : memref<64x32xf32, #tpu.memory_space<any>> -> memref<1x32xf32, #tpu.memory_space<any>>
    %c6_i32_257 = arith.constant 6 : i32
    %c0_i32_258 = arith.constant 0 : i32
    %378 = tpu.memref_slice %arg9[%c6_i32_257, %c0_i32_258] : memref<40x32xf32, #tpu.memory_space<vmem>> -> memref<1x32xf32, #tpu.memory_space<vmem>>
    %379 = tpu.memref_slice %arg10[%c2_i32_255] : memref<3x!tpu.dma_semaphore, #tpu.memory_space<semaphore_mem>> -> memref<1x!tpu.dma_semaphore, #tpu.memory_space<semaphore_mem>>
    %380 = tpu.memref_squeeze %379 : memref<1x!tpu.dma_semaphore, #tpu.memory_space<semaphore_mem>> -> memref<!tpu.dma_semaphore, #tpu.memory_space<semaphore_mem>>
    tpu.enqueue_dma source(%377 : memref<1x32xf32, #tpu.memory_space<any>>) target(%378 : memref<1x32xf32, #tpu.memory_space<vmem>>) target_semaphore(%380 : memref<!tpu.dma_semaphore, #tpu.memory_space<semaphore_mem>>)
    %c6_i32_259 = arith.constant 6 : i32
    %381 = arith.addi %0, %c6_i32_259 : i32
    %c5_i32_260 = arith.constant 5 : i32
    %382 = arith.muli %381, %c5_i32_260 : i32
    %c1_i32_261 = arith.constant 1 : i32
    %383 = arith.addi %382, %c1_i32_261 : i32
    %384 = arith.index_cast %383 : i32 to index
    %385 = memref.load %arg3[%384] : memref<40xi32, #tpu.memory_space<smem>>
    %c2_i32_262 = arith.constant 2 : i32
    %c0_i32_263 = arith.constant 0 : i32
    %386 = tpu.memref_slice %arg5[%385, %c0_i32_263] : memref<64x32xf32, #tpu.memory_space<any>> -> memref<1x32xf32, #tpu.memory_space<any>>
    %c14_i32 = arith.constant 14 : i32
    %c0_i32_264 = arith.constant 0 : i32
    %387 = tpu.memref_slice %arg9[%c14_i32, %c0_i32_264] : memref<40x32xf32, #tpu.memory_space<vmem>> -> memref<1x32xf32, #tpu.memory_space<vmem>>
    %388 = tpu.memref_slice %arg10[%c2_i32_262] : memref<3x!tpu.dma_semaphore, #tpu.memory_space<semaphore_mem>> -> memref<1x!tpu.dma_semaphore, #tpu.memory_space<semaphore_mem>>
    %389 = tpu.memref_squeeze %388 : memref<1x!tpu.dma_semaphore, #tpu.memory_space<semaphore_mem>> -> memref<!tpu.dma_semaphore, #tpu.memory_space<semaphore_mem>>
    tpu.enqueue_dma source(%386 : memref<1x32xf32, #tpu.memory_space<any>>) target(%387 : memref<1x32xf32, #tpu.memory_space<vmem>>) target_semaphore(%389 : memref<!tpu.dma_semaphore, #tpu.memory_space<semaphore_mem>>)
    %c6_i32_265 = arith.constant 6 : i32
    %390 = arith.addi %0, %c6_i32_265 : i32
    %c5_i32_266 = arith.constant 5 : i32
    %391 = arith.muli %390, %c5_i32_266 : i32
    %c2_i32_267 = arith.constant 2 : i32
    %392 = arith.addi %391, %c2_i32_267 : i32
    %393 = arith.index_cast %392 : i32 to index
    %394 = memref.load %arg3[%393] : memref<40xi32, #tpu.memory_space<smem>>
    %c2_i32_268 = arith.constant 2 : i32
    %c0_i32_269 = arith.constant 0 : i32
    %395 = tpu.memref_slice %arg5[%394, %c0_i32_269] : memref<64x32xf32, #tpu.memory_space<any>> -> memref<1x32xf32, #tpu.memory_space<any>>
    %c22_i32 = arith.constant 22 : i32
    %c0_i32_270 = arith.constant 0 : i32
    %396 = tpu.memref_slice %arg9[%c22_i32, %c0_i32_270] : memref<40x32xf32, #tpu.memory_space<vmem>> -> memref<1x32xf32, #tpu.memory_space<vmem>>
    %397 = tpu.memref_slice %arg10[%c2_i32_268] : memref<3x!tpu.dma_semaphore, #tpu.memory_space<semaphore_mem>> -> memref<1x!tpu.dma_semaphore, #tpu.memory_space<semaphore_mem>>
    %398 = tpu.memref_squeeze %397 : memref<1x!tpu.dma_semaphore, #tpu.memory_space<semaphore_mem>> -> memref<!tpu.dma_semaphore, #tpu.memory_space<semaphore_mem>>
    tpu.enqueue_dma source(%395 : memref<1x32xf32, #tpu.memory_space<any>>) target(%396 : memref<1x32xf32, #tpu.memory_space<vmem>>) target_semaphore(%398 : memref<!tpu.dma_semaphore, #tpu.memory_space<semaphore_mem>>)
    %c6_i32_271 = arith.constant 6 : i32
    %399 = arith.addi %0, %c6_i32_271 : i32
    %c5_i32_272 = arith.constant 5 : i32
    %400 = arith.muli %399, %c5_i32_272 : i32
    %c3_i32_273 = arith.constant 3 : i32
    %401 = arith.addi %400, %c3_i32_273 : i32
    %402 = arith.index_cast %401 : i32 to index
    %403 = memref.load %arg3[%402] : memref<40xi32, #tpu.memory_space<smem>>
    %c2_i32_274 = arith.constant 2 : i32
    %c0_i32_275 = arith.constant 0 : i32
    %404 = tpu.memref_slice %arg5[%403, %c0_i32_275] : memref<64x32xf32, #tpu.memory_space<any>> -> memref<1x32xf32, #tpu.memory_space<any>>
    %c30_i32 = arith.constant 30 : i32
    %c0_i32_276 = arith.constant 0 : i32
    %405 = tpu.memref_slice %arg9[%c30_i32, %c0_i32_276] : memref<40x32xf32, #tpu.memory_space<vmem>> -> memref<1x32xf32, #tpu.memory_space<vmem>>
    %406 = tpu.memref_slice %arg10[%c2_i32_274] : memref<3x!tpu.dma_semaphore, #tpu.memory_space<semaphore_mem>> -> memref<1x!tpu.dma_semaphore, #tpu.memory_space<semaphore_mem>>
    %407 = tpu.memref_squeeze %406 : memref<1x!tpu.dma_semaphore, #tpu.memory_space<semaphore_mem>> -> memref<!tpu.dma_semaphore, #tpu.memory_space<semaphore_mem>>
    tpu.enqueue_dma source(%404 : memref<1x32xf32, #tpu.memory_space<any>>) target(%405 : memref<1x32xf32, #tpu.memory_space<vmem>>) target_semaphore(%407 : memref<!tpu.dma_semaphore, #tpu.memory_space<semaphore_mem>>)
    %c6_i32_277 = arith.constant 6 : i32
    %408 = arith.addi %0, %c6_i32_277 : i32
    %c5_i32_278 = arith.constant 5 : i32
    %409 = arith.muli %408, %c5_i32_278 : i32
    %c4_i32_279 = arith.constant 4 : i32
    %410 = arith.addi %409, %c4_i32_279 : i32
    %411 = arith.index_cast %410 : i32 to index
    %412 = memref.load %arg3[%411] : memref<40xi32, #tpu.memory_space<smem>>
    %c2_i32_280 = arith.constant 2 : i32
    %c0_i32_281 = arith.constant 0 : i32
    %413 = tpu.memref_slice %arg5[%412, %c0_i32_281] : memref<64x32xf32, #tpu.memory_space<any>> -> memref<1x32xf32, #tpu.memory_space<any>>
    %c38_i32 = arith.constant 38 : i32
    %c0_i32_282 = arith.constant 0 : i32
    %414 = tpu.memref_slice %arg9[%c38_i32, %c0_i32_282] : memref<40x32xf32, #tpu.memory_space<vmem>> -> memref<1x32xf32, #tpu.memory_space<vmem>>
    %415 = tpu.memref_slice %arg10[%c2_i32_280] : memref<3x!tpu.dma_semaphore, #tpu.memory_space<semaphore_mem>> -> memref<1x!tpu.dma_semaphore, #tpu.memory_space<semaphore_mem>>
    %416 = tpu.memref_squeeze %415 : memref<1x!tpu.dma_semaphore, #tpu.memory_space<semaphore_mem>> -> memref<!tpu.dma_semaphore, #tpu.memory_space<semaphore_mem>>
    tpu.enqueue_dma source(%413 : memref<1x32xf32, #tpu.memory_space<any>>) target(%414 : memref<1x32xf32, #tpu.memory_space<vmem>>) target_semaphore(%416 : memref<!tpu.dma_semaphore, #tpu.memory_space<semaphore_mem>>)
    %c7_i32 = arith.constant 7 : i32
    %417 = arith.addi %0, %c7_i32 : i32
    %418 = arith.index_cast %417 : i32 to index
    %419 = memref.load %arg1[%418] : memref<8xi32, #tpu.memory_space<smem>>
    %c7_i32_283 = arith.constant 7 : i32
    %420 = arith.addi %0, %c7_i32_283 : i32
    %421 = arith.index_cast %420 : i32 to index
    %422 = memref.load %arg2[%421] : memref<8xi32, #tpu.memory_space<smem>>
    %c0_i32_284 = arith.constant 0 : i32
    %c0_i32_285 = arith.constant 0 : i32
    %423 = tpu.memref_slice %arg4[%419, %c0_i32_285] : memref<64x32xf32, #tpu.memory_space<any>> -> memref<1x32xf32, #tpu.memory_space<any>>
    %c7_i32_286 = arith.constant 7 : i32
    %c0_i32_287 = arith.constant 0 : i32
    %424 = tpu.memref_slice %arg7[%c7_i32_286, %c0_i32_287] : memref<8x32xf32, #tpu.memory_space<vmem>> -> memref<1x32xf32, #tpu.memory_space<vmem>>
    %425 = tpu.memref_slice %arg10[%c0_i32_284] : memref<3x!tpu.dma_semaphore, #tpu.memory_space<semaphore_mem>> -> memref<1x!tpu.dma_semaphore, #tpu.memory_space<semaphore_mem>>
    %426 = tpu.memref_squeeze %425 : memref<1x!tpu.dma_semaphore, #tpu.memory_space<semaphore_mem>> -> memref<!tpu.dma_semaphore, #tpu.memory_space<semaphore_mem>>
    tpu.enqueue_dma source(%423 : memref<1x32xf32, #tpu.memory_space<any>>) target(%424 : memref<1x32xf32, #tpu.memory_space<vmem>>) target_semaphore(%426 : memref<!tpu.dma_semaphore, #tpu.memory_space<semaphore_mem>>)
    %c1_i32_288 = arith.constant 1 : i32
    %c0_i32_289 = arith.constant 0 : i32
    %427 = tpu.memref_slice %arg5[%422, %c0_i32_289] : memref<64x32xf32, #tpu.memory_space<any>> -> memref<1x32xf32, #tpu.memory_space<any>>
    %c7_i32_290 = arith.constant 7 : i32
    %c0_i32_291 = arith.constant 0 : i32
    %428 = tpu.memref_slice %arg8[%c7_i32_290, %c0_i32_291] : memref<8x32xf32, #tpu.memory_space<vmem>> -> memref<1x32xf32, #tpu.memory_space<vmem>>
    %429 = tpu.memref_slice %arg10[%c1_i32_288] : memref<3x!tpu.dma_semaphore, #tpu.memory_space<semaphore_mem>> -> memref<1x!tpu.dma_semaphore, #tpu.memory_space<semaphore_mem>>
    %430 = tpu.memref_squeeze %429 : memref<1x!tpu.dma_semaphore, #tpu.memory_space<semaphore_mem>> -> memref<!tpu.dma_semaphore, #tpu.memory_space<semaphore_mem>>
    tpu.enqueue_dma source(%427 : memref<1x32xf32, #tpu.memory_space<any>>) target(%428 : memref<1x32xf32, #tpu.memory_space<vmem>>) target_semaphore(%430 : memref<!tpu.dma_semaphore, #tpu.memory_space<semaphore_mem>>)
    %c7_i32_292 = arith.constant 7 : i32
    %431 = arith.addi %0, %c7_i32_292 : i32
    %c5_i32_293 = arith.constant 5 : i32
    %432 = arith.muli %431, %c5_i32_293 : i32
    %c0_i32_294 = arith.constant 0 : i32
    %433 = arith.addi %432, %c0_i32_294 : i32
    %434 = arith.index_cast %433 : i32 to index
    %435 = memref.load %arg3[%434] : memref<40xi32, #tpu.memory_space<smem>>
    %c2_i32_295 = arith.constant 2 : i32
    %c0_i32_296 = arith.constant 0 : i32
    %436 = tpu.memref_slice %arg5[%435, %c0_i32_296] : memref<64x32xf32, #tpu.memory_space<any>> -> memref<1x32xf32, #tpu.memory_space<any>>
    %c7_i32_297 = arith.constant 7 : i32
    %c0_i32_298 = arith.constant 0 : i32
    %437 = tpu.memref_slice %arg9[%c7_i32_297, %c0_i32_298] : memref<40x32xf32, #tpu.memory_space<vmem>> -> memref<1x32xf32, #tpu.memory_space<vmem>>
    %438 = tpu.memref_slice %arg10[%c2_i32_295] : memref<3x!tpu.dma_semaphore, #tpu.memory_space<semaphore_mem>> -> memref<1x!tpu.dma_semaphore, #tpu.memory_space<semaphore_mem>>
    %439 = tpu.memref_squeeze %438 : memref<1x!tpu.dma_semaphore, #tpu.memory_space<semaphore_mem>> -> memref<!tpu.dma_semaphore, #tpu.memory_space<semaphore_mem>>
    tpu.enqueue_dma source(%436 : memref<1x32xf32, #tpu.memory_space<any>>) target(%437 : memref<1x32xf32, #tpu.memory_space<vmem>>) target_semaphore(%439 : memref<!tpu.dma_semaphore, #tpu.memory_space<semaphore_mem>>)
    %c7_i32_299 = arith.constant 7 : i32
    %440 = arith.addi %0, %c7_i32_299 : i32
    %c5_i32_300 = arith.constant 5 : i32
    %441 = arith.muli %440, %c5_i32_300 : i32
    %c1_i32_301 = arith.constant 1 : i32
    %442 = arith.addi %441, %c1_i32_301 : i32
    %443 = arith.index_cast %442 : i32 to index
    %444 = memref.load %arg3[%443] : memref<40xi32, #tpu.memory_space<smem>>
    %c2_i32_302 = arith.constant 2 : i32
    %c0_i32_303 = arith.constant 0 : i32
    %445 = tpu.memref_slice %arg5[%444, %c0_i32_303] : memref<64x32xf32, #tpu.memory_space<any>> -> memref<1x32xf32, #tpu.memory_space<any>>
    %c15_i32 = arith.constant 15 : i32
    %c0_i32_304 = arith.constant 0 : i32
    %446 = tpu.memref_slice %arg9[%c15_i32, %c0_i32_304] : memref<40x32xf32, #tpu.memory_space<vmem>> -> memref<1x32xf32, #tpu.memory_space<vmem>>
    %447 = tpu.memref_slice %arg10[%c2_i32_302] : memref<3x!tpu.dma_semaphore, #tpu.memory_space<semaphore_mem>> -> memref<1x!tpu.dma_semaphore, #tpu.memory_space<semaphore_mem>>
    %448 = tpu.memref_squeeze %447 : memref<1x!tpu.dma_semaphore, #tpu.memory_space<semaphore_mem>> -> memref<!tpu.dma_semaphore, #tpu.memory_space<semaphore_mem>>
    tpu.enqueue_dma source(%445 : memref<1x32xf32, #tpu.memory_space<any>>) target(%446 : memref<1x32xf32, #tpu.memory_space<vmem>>) target_semaphore(%448 : memref<!tpu.dma_semaphore, #tpu.memory_space<semaphore_mem>>)
    %c7_i32_305 = arith.constant 7 : i32
    %449 = arith.addi %0, %c7_i32_305 : i32
    %c5_i32_306 = arith.constant 5 : i32
    %450 = arith.muli %449, %c5_i32_306 : i32
    %c2_i32_307 = arith.constant 2 : i32
    %451 = arith.addi %450, %c2_i32_307 : i32
    %452 = arith.index_cast %451 : i32 to index
    %453 = memref.load %arg3[%452] : memref<40xi32, #tpu.memory_space<smem>>
    %c2_i32_308 = arith.constant 2 : i32
    %c0_i32_309 = arith.constant 0 : i32
    %454 = tpu.memref_slice %arg5[%453, %c0_i32_309] : memref<64x32xf32, #tpu.memory_space<any>> -> memref<1x32xf32, #tpu.memory_space<any>>
    %c23_i32 = arith.constant 23 : i32
    %c0_i32_310 = arith.constant 0 : i32
    %455 = tpu.memref_slice %arg9[%c23_i32, %c0_i32_310] : memref<40x32xf32, #tpu.memory_space<vmem>> -> memref<1x32xf32, #tpu.memory_space<vmem>>
    %456 = tpu.memref_slice %arg10[%c2_i32_308] : memref<3x!tpu.dma_semaphore, #tpu.memory_space<semaphore_mem>> -> memref<1x!tpu.dma_semaphore, #tpu.memory_space<semaphore_mem>>
    %457 = tpu.memref_squeeze %456 : memref<1x!tpu.dma_semaphore, #tpu.memory_space<semaphore_mem>> -> memref<!tpu.dma_semaphore, #tpu.memory_space<semaphore_mem>>
    tpu.enqueue_dma source(%454 : memref<1x32xf32, #tpu.memory_space<any>>) target(%455 : memref<1x32xf32, #tpu.memory_space<vmem>>) target_semaphore(%457 : memref<!tpu.dma_semaphore, #tpu.memory_space<semaphore_mem>>)
    %c7_i32_311 = arith.constant 7 : i32
    %458 = arith.addi %0, %c7_i32_311 : i32
    %c5_i32_312 = arith.constant 5 : i32
    %459 = arith.muli %458, %c5_i32_312 : i32
    %c3_i32_313 = arith.constant 3 : i32
    %460 = arith.addi %459, %c3_i32_313 : i32
    %461 = arith.index_cast %460 : i32 to index
    %462 = memref.load %arg3[%461] : memref<40xi32, #tpu.memory_space<smem>>
    %c2_i32_314 = arith.constant 2 : i32
    %c0_i32_315 = arith.constant 0 : i32
    %463 = tpu.memref_slice %arg5[%462, %c0_i32_315] : memref<64x32xf32, #tpu.memory_space<any>> -> memref<1x32xf32, #tpu.memory_space<any>>
    %c31_i32 = arith.constant 31 : i32
    %c0_i32_316 = arith.constant 0 : i32
    %464 = tpu.memref_slice %arg9[%c31_i32, %c0_i32_316] : memref<40x32xf32, #tpu.memory_space<vmem>> -> memref<1x32xf32, #tpu.memory_space<vmem>>
    %465 = tpu.memref_slice %arg10[%c2_i32_314] : memref<3x!tpu.dma_semaphore, #tpu.memory_space<semaphore_mem>> -> memref<1x!tpu.dma_semaphore, #tpu.memory_space<semaphore_mem>>
    %466 = tpu.memref_squeeze %465 : memref<1x!tpu.dma_semaphore, #tpu.memory_space<semaphore_mem>> -> memref<!tpu.dma_semaphore, #tpu.memory_space<semaphore_mem>>
    tpu.enqueue_dma source(%463 : memref<1x32xf32, #tpu.memory_space<any>>) target(%464 : memref<1x32xf32, #tpu.memory_space<vmem>>) target_semaphore(%466 : memref<!tpu.dma_semaphore, #tpu.memory_space<semaphore_mem>>)
    %c7_i32_317 = arith.constant 7 : i32
    %467 = arith.addi %0, %c7_i32_317 : i32
    %c5_i32_318 = arith.constant 5 : i32
    %468 = arith.muli %467, %c5_i32_318 : i32
    %c4_i32_319 = arith.constant 4 : i32
    %469 = arith.addi %468, %c4_i32_319 : i32
    %470 = arith.index_cast %469 : i32 to index
    %471 = memref.load %arg3[%470] : memref<40xi32, #tpu.memory_space<smem>>
    %c2_i32_320 = arith.constant 2 : i32
    %c0_i32_321 = arith.constant 0 : i32
    %472 = tpu.memref_slice %arg5[%471, %c0_i32_321] : memref<64x32xf32, #tpu.memory_space<any>> -> memref<1x32xf32, #tpu.memory_space<any>>
    %c39_i32 = arith.constant 39 : i32
    %c0_i32_322 = arith.constant 0 : i32
    %473 = tpu.memref_slice %arg9[%c39_i32, %c0_i32_322] : memref<40x32xf32, #tpu.memory_space<vmem>> -> memref<1x32xf32, #tpu.memory_space<vmem>>
    %474 = tpu.memref_slice %arg10[%c2_i32_320] : memref<3x!tpu.dma_semaphore, #tpu.memory_space<semaphore_mem>> -> memref<1x!tpu.dma_semaphore, #tpu.memory_space<semaphore_mem>>
    %475 = tpu.memref_squeeze %474 : memref<1x!tpu.dma_semaphore, #tpu.memory_space<semaphore_mem>> -> memref<!tpu.dma_semaphore, #tpu.memory_space<semaphore_mem>>
    tpu.enqueue_dma source(%472 : memref<1x32xf32, #tpu.memory_space<any>>) target(%473 : memref<1x32xf32, #tpu.memory_space<vmem>>) target_semaphore(%475 : memref<!tpu.dma_semaphore, #tpu.memory_space<semaphore_mem>>)
    %c0_i32_323 = arith.constant 0 : i32
    %c0_i32_324 = arith.constant 0 : i32
    %476 = tpu.memref_slice %arg4[%6, %c0_i32_324] : memref<64x32xf32, #tpu.memory_space<any>> -> memref<1x32xf32, #tpu.memory_space<any>>
    %c0_i32_325 = arith.constant 0 : i32
    %c0_i32_326 = arith.constant 0 : i32
    %477 = tpu.memref_slice %arg7[%c0_i32_325, %c0_i32_326] : memref<8x32xf32, #tpu.memory_space<vmem>> -> memref<1x32xf32, #tpu.memory_space<vmem>>
    %478 = tpu.memref_slice %arg10[%c0_i32_323] : memref<3x!tpu.dma_semaphore, #tpu.memory_space<semaphore_mem>> -> memref<1x!tpu.dma_semaphore, #tpu.memory_space<semaphore_mem>>
    %479 = tpu.memref_squeeze %478 : memref<1x!tpu.dma_semaphore, #tpu.memory_space<semaphore_mem>> -> memref<!tpu.dma_semaphore, #tpu.memory_space<semaphore_mem>>
    tpu.wait_dma2 semaphore(%479 : memref<!tpu.dma_semaphore, #tpu.memory_space<semaphore_mem>>) src(%476 : memref<1x32xf32, #tpu.memory_space<any>>) dst(%477 : memref<1x32xf32, #tpu.memory_space<vmem>>)
    %c1_i32_327 = arith.constant 1 : i32
    %c0_i32_328 = arith.constant 0 : i32
    %480 = tpu.memref_slice %arg5[%9, %c0_i32_328] : memref<64x32xf32, #tpu.memory_space<any>> -> memref<1x32xf32, #tpu.memory_space<any>>
    %c0_i32_329 = arith.constant 0 : i32
    %c0_i32_330 = arith.constant 0 : i32
    %481 = tpu.memref_slice %arg8[%c0_i32_329, %c0_i32_330] : memref<8x32xf32, #tpu.memory_space<vmem>> -> memref<1x32xf32, #tpu.memory_space<vmem>>
    %482 = tpu.memref_slice %arg10[%c1_i32_327] : memref<3x!tpu.dma_semaphore, #tpu.memory_space<semaphore_mem>> -> memref<1x!tpu.dma_semaphore, #tpu.memory_space<semaphore_mem>>
    %483 = tpu.memref_squeeze %482 : memref<1x!tpu.dma_semaphore, #tpu.memory_space<semaphore_mem>> -> memref<!tpu.dma_semaphore, #tpu.memory_space<semaphore_mem>>
    tpu.wait_dma2 semaphore(%483 : memref<!tpu.dma_semaphore, #tpu.memory_space<semaphore_mem>>) src(%480 : memref<1x32xf32, #tpu.memory_space<any>>) dst(%481 : memref<1x32xf32, #tpu.memory_space<vmem>>)
    %c2_i32_331 = arith.constant 2 : i32
    %c0_i32_332 = arith.constant 0 : i32
    %484 = tpu.memref_slice %arg5[%22, %c0_i32_332] : memref<64x32xf32, #tpu.memory_space<any>> -> memref<1x32xf32, #tpu.memory_space<any>>
    %c0_i32_333 = arith.constant 0 : i32
    %c0_i32_334 = arith.constant 0 : i32
    %485 = tpu.memref_slice %arg9[%c0_i32_333, %c0_i32_334] : memref<40x32xf32, #tpu.memory_space<vmem>> -> memref<1x32xf32, #tpu.memory_space<vmem>>
    %486 = tpu.memref_slice %arg10[%c2_i32_331] : memref<3x!tpu.dma_semaphore, #tpu.memory_space<semaphore_mem>> -> memref<1x!tpu.dma_semaphore, #tpu.memory_space<semaphore_mem>>
    %487 = tpu.memref_squeeze %486 : memref<1x!tpu.dma_semaphore, #tpu.memory_space<semaphore_mem>> -> memref<!tpu.dma_semaphore, #tpu.memory_space<semaphore_mem>>
    tpu.wait_dma2 semaphore(%487 : memref<!tpu.dma_semaphore, #tpu.memory_space<semaphore_mem>>) src(%484 : memref<1x32xf32, #tpu.memory_space<any>>) dst(%485 : memref<1x32xf32, #tpu.memory_space<vmem>>)
    %c2_i32_335 = arith.constant 2 : i32
    %c0_i32_336 = arith.constant 0 : i32
    %488 = tpu.memref_slice %arg5[%31, %c0_i32_336] : memref<64x32xf32, #tpu.memory_space<any>> -> memref<1x32xf32, #tpu.memory_space<any>>
    %c8_i32_337 = arith.constant 8 : i32
    %c0_i32_338 = arith.constant 0 : i32
    %489 = tpu.memref_slice %arg9[%c8_i32_337, %c0_i32_338] : memref<40x32xf32, #tpu.memory_space<vmem>> -> memref<1x32xf32, #tpu.memory_space<vmem>>
    %490 = tpu.memref_slice %arg10[%c2_i32_335] : memref<3x!tpu.dma_semaphore, #tpu.memory_space<semaphore_mem>> -> memref<1x!tpu.dma_semaphore, #tpu.memory_space<semaphore_mem>>
    %491 = tpu.memref_squeeze %490 : memref<1x!tpu.dma_semaphore, #tpu.memory_space<semaphore_mem>> -> memref<!tpu.dma_semaphore, #tpu.memory_space<semaphore_mem>>
    tpu.wait_dma2 semaphore(%491 : memref<!tpu.dma_semaphore, #tpu.memory_space<semaphore_mem>>) src(%488 : memref<1x32xf32, #tpu.memory_space<any>>) dst(%489 : memref<1x32xf32, #tpu.memory_space<vmem>>)
    %c2_i32_339 = arith.constant 2 : i32
    %c0_i32_340 = arith.constant 0 : i32
    %492 = tpu.memref_slice %arg5[%40, %c0_i32_340] : memref<64x32xf32, #tpu.memory_space<any>> -> memref<1x32xf32, #tpu.memory_space<any>>
    %c16_i32_341 = arith.constant 16 : i32
    %c0_i32_342 = arith.constant 0 : i32
    %493 = tpu.memref_slice %arg9[%c16_i32_341, %c0_i32_342] : memref<40x32xf32, #tpu.memory_space<vmem>> -> memref<1x32xf32, #tpu.memory_space<vmem>>
    %494 = tpu.memref_slice %arg10[%c2_i32_339] : memref<3x!tpu.dma_semaphore, #tpu.memory_space<semaphore_mem>> -> memref<1x!tpu.dma_semaphore, #tpu.memory_space<semaphore_mem>>
    %495 = tpu.memref_squeeze %494 : memref<1x!tpu.dma_semaphore, #tpu.memory_space<semaphore_mem>> -> memref<!tpu.dma_semaphore, #tpu.memory_space<semaphore_mem>>
    tpu.wait_dma2 semaphore(%495 : memref<!tpu.dma_semaphore, #tpu.memory_space<semaphore_mem>>) src(%492 : memref<1x32xf32, #tpu.memory_space<any>>) dst(%493 : memref<1x32xf32, #tpu.memory_space<vmem>>)
    %c2_i32_343 = arith.constant 2 : i32
    %c0_i32_344 = arith.constant 0 : i32
    %496 = tpu.memref_slice %arg5[%49, %c0_i32_344] : memref<64x32xf32, #tpu.memory_space<any>> -> memref<1x32xf32, #tpu.memory_space<any>>
    %c24_i32_345 = arith.constant 24 : i32
    %c0_i32_346 = arith.constant 0 : i32
    %497 = tpu.memref_slice %arg9[%c24_i32_345, %c0_i32_346] : memref<40x32xf32, #tpu.memory_space<vmem>> -> memref<1x32xf32, #tpu.memory_space<vmem>>
    %498 = tpu.memref_slice %arg10[%c2_i32_343] : memref<3x!tpu.dma_semaphore, #tpu.memory_space<semaphore_mem>> -> memref<1x!tpu.dma_semaphore, #tpu.memory_space<semaphore_mem>>
    %499 = tpu.memref_squeeze %498 : memref<1x!tpu.dma_semaphore, #tpu.memory_space<semaphore_mem>> -> memref<!tpu.dma_semaphore, #tpu.memory_space<semaphore_mem>>
    tpu.wait_dma2 semaphore(%499 : memref<!tpu.dma_semaphore, #tpu.memory_space<semaphore_mem>>) src(%496 : memref<1x32xf32, #tpu.memory_space<any>>) dst(%497 : memref<1x32xf32, #tpu.memory_space<vmem>>)
    %c2_i32_347 = arith.constant 2 : i32
    %c0_i32_348 = arith.constant 0 : i32
    %500 = tpu.memref_slice %arg5[%58, %c0_i32_348] : memref<64x32xf32, #tpu.memory_space<any>> -> memref<1x32xf32, #tpu.memory_space<any>>
    %c32_i32_349 = arith.constant 32 : i32
    %c0_i32_350 = arith.constant 0 : i32
    %501 = tpu.memref_slice %arg9[%c32_i32_349, %c0_i32_350] : memref<40x32xf32, #tpu.memory_space<vmem>> -> memref<1x32xf32, #tpu.memory_space<vmem>>
    %502 = tpu.memref_slice %arg10[%c2_i32_347] : memref<3x!tpu.dma_semaphore, #tpu.memory_space<semaphore_mem>> -> memref<1x!tpu.dma_semaphore, #tpu.memory_space<semaphore_mem>>
    %503 = tpu.memref_squeeze %502 : memref<1x!tpu.dma_semaphore, #tpu.memory_space<semaphore_mem>> -> memref<!tpu.dma_semaphore, #tpu.memory_space<semaphore_mem>>
    tpu.wait_dma2 semaphore(%503 : memref<!tpu.dma_semaphore, #tpu.memory_space<semaphore_mem>>) src(%500 : memref<1x32xf32, #tpu.memory_space<any>>) dst(%501 : memref<1x32xf32, #tpu.memory_space<vmem>>)
    %c0_i32_351 = arith.constant 0 : i32
    %c0_i32_352 = arith.constant 0 : i32
    %504 = tpu.memref_slice %arg4[%65, %c0_i32_352] : memref<64x32xf32, #tpu.memory_space<any>> -> memref<1x32xf32, #tpu.memory_space<any>>
    %c1_i32_353 = arith.constant 1 : i32
    %c0_i32_354 = arith.constant 0 : i32
    %505 = tpu.memref_slice %arg7[%c1_i32_353, %c0_i32_354] : memref<8x32xf32, #tpu.memory_space<vmem>> -> memref<1x32xf32, #tpu.memory_space<vmem>>
    %506 = tpu.memref_slice %arg10[%c0_i32_351] : memref<3x!tpu.dma_semaphore, #tpu.memory_space<semaphore_mem>> -> memref<1x!tpu.dma_semaphore, #tpu.memory_space<semaphore_mem>>
    %507 = tpu.memref_squeeze %506 : memref<1x!tpu.dma_semaphore, #tpu.memory_space<semaphore_mem>> -> memref<!tpu.dma_semaphore, #tpu.memory_space<semaphore_mem>>
    tpu.wait_dma2 semaphore(%507 : memref<!tpu.dma_semaphore, #tpu.memory_space<semaphore_mem>>) src(%504 : memref<1x32xf32, #tpu.memory_space<any>>) dst(%505 : memref<1x32xf32, #tpu.memory_space<vmem>>)
    %c1_i32_355 = arith.constant 1 : i32
    %c0_i32_356 = arith.constant 0 : i32
    %508 = tpu.memref_slice %arg5[%68, %c0_i32_356] : memref<64x32xf32, #tpu.memory_space<any>> -> memref<1x32xf32, #tpu.memory_space<any>>
    %c1_i32_357 = arith.constant 1 : i32
    %c0_i32_358 = arith.constant 0 : i32
    %509 = tpu.memref_slice %arg8[%c1_i32_357, %c0_i32_358] : memref<8x32xf32, #tpu.memory_space<vmem>> -> memref<1x32xf32, #tpu.memory_space<vmem>>
    %510 = tpu.memref_slice %arg10[%c1_i32_355] : memref<3x!tpu.dma_semaphore, #tpu.memory_space<semaphore_mem>> -> memref<1x!tpu.dma_semaphore, #tpu.memory_space<semaphore_mem>>
    %511 = tpu.memref_squeeze %510 : memref<1x!tpu.dma_semaphore, #tpu.memory_space<semaphore_mem>> -> memref<!tpu.dma_semaphore, #tpu.memory_space<semaphore_mem>>
    tpu.wait_dma2 semaphore(%511 : memref<!tpu.dma_semaphore, #tpu.memory_space<semaphore_mem>>) src(%508 : memref<1x32xf32, #tpu.memory_space<any>>) dst(%509 : memref<1x32xf32, #tpu.memory_space<vmem>>)
    %c2_i32_359 = arith.constant 2 : i32
    %c0_i32_360 = arith.constant 0 : i32
    %512 = tpu.memref_slice %arg5[%81, %c0_i32_360] : memref<64x32xf32, #tpu.memory_space<any>> -> memref<1x32xf32, #tpu.memory_space<any>>
    %c1_i32_361 = arith.constant 1 : i32
    %c0_i32_362 = arith.constant 0 : i32
    %513 = tpu.memref_slice %arg9[%c1_i32_361, %c0_i32_362] : memref<40x32xf32, #tpu.memory_space<vmem>> -> memref<1x32xf32, #tpu.memory_space<vmem>>
    %514 = tpu.memref_slice %arg10[%c2_i32_359] : memref<3x!tpu.dma_semaphore, #tpu.memory_space<semaphore_mem>> -> memref<1x!tpu.dma_semaphore, #tpu.memory_space<semaphore_mem>>
    %515 = tpu.memref_squeeze %514 : memref<1x!tpu.dma_semaphore, #tpu.memory_space<semaphore_mem>> -> memref<!tpu.dma_semaphore, #tpu.memory_space<semaphore_mem>>
    tpu.wait_dma2 semaphore(%515 : memref<!tpu.dma_semaphore, #tpu.memory_space<semaphore_mem>>) src(%512 : memref<1x32xf32, #tpu.memory_space<any>>) dst(%513 : memref<1x32xf32, #tpu.memory_space<vmem>>)
    %c2_i32_363 = arith.constant 2 : i32
    %c0_i32_364 = arith.constant 0 : i32
    %516 = tpu.memref_slice %arg5[%90, %c0_i32_364] : memref<64x32xf32, #tpu.memory_space<any>> -> memref<1x32xf32, #tpu.memory_space<any>>
    %c9_i32_365 = arith.constant 9 : i32
    %c0_i32_366 = arith.constant 0 : i32
    %517 = tpu.memref_slice %arg9[%c9_i32_365, %c0_i32_366] : memref<40x32xf32, #tpu.memory_space<vmem>> -> memref<1x32xf32, #tpu.memory_space<vmem>>
    %518 = tpu.memref_slice %arg10[%c2_i32_363] : memref<3x!tpu.dma_semaphore, #tpu.memory_space<semaphore_mem>> -> memref<1x!tpu.dma_semaphore, #tpu.memory_space<semaphore_mem>>
    %519 = tpu.memref_squeeze %518 : memref<1x!tpu.dma_semaphore, #tpu.memory_space<semaphore_mem>> -> memref<!tpu.dma_semaphore, #tpu.memory_space<semaphore_mem>>
    tpu.wait_dma2 semaphore(%519 : memref<!tpu.dma_semaphore, #tpu.memory_space<semaphore_mem>>) src(%516 : memref<1x32xf32, #tpu.memory_space<any>>) dst(%517 : memref<1x32xf32, #tpu.memory_space<vmem>>)
    %c2_i32_367 = arith.constant 2 : i32
    %c0_i32_368 = arith.constant 0 : i32
    %520 = tpu.memref_slice %arg5[%99, %c0_i32_368] : memref<64x32xf32, #tpu.memory_space<any>> -> memref<1x32xf32, #tpu.memory_space<any>>
    %c17_i32_369 = arith.constant 17 : i32
    %c0_i32_370 = arith.constant 0 : i32
    %521 = tpu.memref_slice %arg9[%c17_i32_369, %c0_i32_370] : memref<40x32xf32, #tpu.memory_space<vmem>> -> memref<1x32xf32, #tpu.memory_space<vmem>>
    %522 = tpu.memref_slice %arg10[%c2_i32_367] : memref<3x!tpu.dma_semaphore, #tpu.memory_space<semaphore_mem>> -> memref<1x!tpu.dma_semaphore, #tpu.memory_space<semaphore_mem>>
    %523 = tpu.memref_squeeze %522 : memref<1x!tpu.dma_semaphore, #tpu.memory_space<semaphore_mem>> -> memref<!tpu.dma_semaphore, #tpu.memory_space<semaphore_mem>>
    tpu.wait_dma2 semaphore(%523 : memref<!tpu.dma_semaphore, #tpu.memory_space<semaphore_mem>>) src(%520 : memref<1x32xf32, #tpu.memory_space<any>>) dst(%521 : memref<1x32xf32, #tpu.memory_space<vmem>>)
    %c2_i32_371 = arith.constant 2 : i32
    %c0_i32_372 = arith.constant 0 : i32
    %524 = tpu.memref_slice %arg5[%108, %c0_i32_372] : memref<64x32xf32, #tpu.memory_space<any>> -> memref<1x32xf32, #tpu.memory_space<any>>
    %c25_i32_373 = arith.constant 25 : i32
    %c0_i32_374 = arith.constant 0 : i32
    %525 = tpu.memref_slice %arg9[%c25_i32_373, %c0_i32_374] : memref<40x32xf32, #tpu.memory_space<vmem>> -> memref<1x32xf32, #tpu.memory_space<vmem>>
    %526 = tpu.memref_slice %arg10[%c2_i32_371] : memref<3x!tpu.dma_semaphore, #tpu.memory_space<semaphore_mem>> -> memref<1x!tpu.dma_semaphore, #tpu.memory_space<semaphore_mem>>
    %527 = tpu.memref_squeeze %526 : memref<1x!tpu.dma_semaphore, #tpu.memory_space<semaphore_mem>> -> memref<!tpu.dma_semaphore, #tpu.memory_space<semaphore_mem>>
    tpu.wait_dma2 semaphore(%527 : memref<!tpu.dma_semaphore, #tpu.memory_space<semaphore_mem>>) src(%524 : memref<1x32xf32, #tpu.memory_space<any>>) dst(%525 : memref<1x32xf32, #tpu.memory_space<vmem>>)
    %c2_i32_375 = arith.constant 2 : i32
    %c0_i32_376 = arith.constant 0 : i32
    %528 = tpu.memref_slice %arg5[%117, %c0_i32_376] : memref<64x32xf32, #tpu.memory_space<any>> -> memref<1x32xf32, #tpu.memory_space<any>>
    %c33_i32_377 = arith.constant 33 : i32
    %c0_i32_378 = arith.constant 0 : i32
    %529 = tpu.memref_slice %arg9[%c33_i32_377, %c0_i32_378] : memref<40x32xf32, #tpu.memory_space<vmem>> -> memref<1x32xf32, #tpu.memory_space<vmem>>
    %530 = tpu.memref_slice %arg10[%c2_i32_375] : memref<3x!tpu.dma_semaphore, #tpu.memory_space<semaphore_mem>> -> memref<1x!tpu.dma_semaphore, #tpu.memory_space<semaphore_mem>>
    %531 = tpu.memref_squeeze %530 : memref<1x!tpu.dma_semaphore, #tpu.memory_space<semaphore_mem>> -> memref<!tpu.dma_semaphore, #tpu.memory_space<semaphore_mem>>
    tpu.wait_dma2 semaphore(%531 : memref<!tpu.dma_semaphore, #tpu.memory_space<semaphore_mem>>) src(%528 : memref<1x32xf32, #tpu.memory_space<any>>) dst(%529 : memref<1x32xf32, #tpu.memory_space<vmem>>)
    %c0_i32_379 = arith.constant 0 : i32
    %c0_i32_380 = arith.constant 0 : i32
    %532 = tpu.memref_slice %arg4[%124, %c0_i32_380] : memref<64x32xf32, #tpu.memory_space<any>> -> memref<1x32xf32, #tpu.memory_space<any>>
    %c2_i32_381 = arith.constant 2 : i32
    %c0_i32_382 = arith.constant 0 : i32
    %533 = tpu.memref_slice %arg7[%c2_i32_381, %c0_i32_382] : memref<8x32xf32, #tpu.memory_space<vmem>> -> memref<1x32xf32, #tpu.memory_space<vmem>>
    %534 = tpu.memref_slice %arg10[%c0_i32_379] : memref<3x!tpu.dma_semaphore, #tpu.memory_space<semaphore_mem>> -> memref<1x!tpu.dma_semaphore, #tpu.memory_space<semaphore_mem>>
    %535 = tpu.memref_squeeze %534 : memref<1x!tpu.dma_semaphore, #tpu.memory_space<semaphore_mem>> -> memref<!tpu.dma_semaphore, #tpu.memory_space<semaphore_mem>>
    tpu.wait_dma2 semaphore(%535 : memref<!tpu.dma_semaphore, #tpu.memory_space<semaphore_mem>>) src(%532 : memref<1x32xf32, #tpu.memory_space<any>>) dst(%533 : memref<1x32xf32, #tpu.memory_space<vmem>>)
    %c1_i32_383 = arith.constant 1 : i32
    %c0_i32_384 = arith.constant 0 : i32
    %536 = tpu.memref_slice %arg5[%127, %c0_i32_384] : memref<64x32xf32, #tpu.memory_space<any>> -> memref<1x32xf32, #tpu.memory_space<any>>
    %c2_i32_385 = arith.constant 2 : i32
    %c0_i32_386 = arith.constant 0 : i32
    %537 = tpu.memref_slice %arg8[%c2_i32_385, %c0_i32_386] : memref<8x32xf32, #tpu.memory_space<vmem>> -> memref<1x32xf32, #tpu.memory_space<vmem>>
    %538 = tpu.memref_slice %arg10[%c1_i32_383] : memref<3x!tpu.dma_semaphore, #tpu.memory_space<semaphore_mem>> -> memref<1x!tpu.dma_semaphore, #tpu.memory_space<semaphore_mem>>
    %539 = tpu.memref_squeeze %538 : memref<1x!tpu.dma_semaphore, #tpu.memory_space<semaphore_mem>> -> memref<!tpu.dma_semaphore, #tpu.memory_space<semaphore_mem>>
    tpu.wait_dma2 semaphore(%539 : memref<!tpu.dma_semaphore, #tpu.memory_space<semaphore_mem>>) src(%536 : memref<1x32xf32, #tpu.memory_space<any>>) dst(%537 : memref<1x32xf32, #tpu.memory_space<vmem>>)
    %c2_i32_387 = arith.constant 2 : i32
    %c0_i32_388 = arith.constant 0 : i32
    %540 = tpu.memref_slice %arg5[%140, %c0_i32_388] : memref<64x32xf32, #tpu.memory_space<any>> -> memref<1x32xf32, #tpu.memory_space<any>>
    %c2_i32_389 = arith.constant 2 : i32
    %c0_i32_390 = arith.constant 0 : i32
    %541 = tpu.memref_slice %arg9[%c2_i32_389, %c0_i32_390] : memref<40x32xf32, #tpu.memory_space<vmem>> -> memref<1x32xf32, #tpu.memory_space<vmem>>
    %542 = tpu.memref_slice %arg10[%c2_i32_387] : memref<3x!tpu.dma_semaphore, #tpu.memory_space<semaphore_mem>> -> memref<1x!tpu.dma_semaphore, #tpu.memory_space<semaphore_mem>>
    %543 = tpu.memref_squeeze %542 : memref<1x!tpu.dma_semaphore, #tpu.memory_space<semaphore_mem>> -> memref<!tpu.dma_semaphore, #tpu.memory_space<semaphore_mem>>
    tpu.wait_dma2 semaphore(%543 : memref<!tpu.dma_semaphore, #tpu.memory_space<semaphore_mem>>) src(%540 : memref<1x32xf32, #tpu.memory_space<any>>) dst(%541 : memref<1x32xf32, #tpu.memory_space<vmem>>)
    %c2_i32_391 = arith.constant 2 : i32
    %c0_i32_392 = arith.constant 0 : i32
    %544 = tpu.memref_slice %arg5[%149, %c0_i32_392] : memref<64x32xf32, #tpu.memory_space<any>> -> memref<1x32xf32, #tpu.memory_space<any>>
    %c10_i32_393 = arith.constant 10 : i32
    %c0_i32_394 = arith.constant 0 : i32
    %545 = tpu.memref_slice %arg9[%c10_i32_393, %c0_i32_394] : memref<40x32xf32, #tpu.memory_space<vmem>> -> memref<1x32xf32, #tpu.memory_space<vmem>>
    %546 = tpu.memref_slice %arg10[%c2_i32_391] : memref<3x!tpu.dma_semaphore, #tpu.memory_space<semaphore_mem>> -> memref<1x!tpu.dma_semaphore, #tpu.memory_space<semaphore_mem>>
    %547 = tpu.memref_squeeze %546 : memref<1x!tpu.dma_semaphore, #tpu.memory_space<semaphore_mem>> -> memref<!tpu.dma_semaphore, #tpu.memory_space<semaphore_mem>>
    tpu.wait_dma2 semaphore(%547 : memref<!tpu.dma_semaphore, #tpu.memory_space<semaphore_mem>>) src(%544 : memref<1x32xf32, #tpu.memory_space<any>>) dst(%545 : memref<1x32xf32, #tpu.memory_space<vmem>>)
    %c2_i32_395 = arith.constant 2 : i32
    %c0_i32_396 = arith.constant 0 : i32
    %548 = tpu.memref_slice %arg5[%158, %c0_i32_396] : memref<64x32xf32, #tpu.memory_space<any>> -> memref<1x32xf32, #tpu.memory_space<any>>
    %c18_i32_397 = arith.constant 18 : i32
    %c0_i32_398 = arith.constant 0 : i32
    %549 = tpu.memref_slice %arg9[%c18_i32_397, %c0_i32_398] : memref<40x32xf32, #tpu.memory_space<vmem>> -> memref<1x32xf32, #tpu.memory_space<vmem>>
    %550 = tpu.memref_slice %arg10[%c2_i32_395] : memref<3x!tpu.dma_semaphore, #tpu.memory_space<semaphore_mem>> -> memref<1x!tpu.dma_semaphore, #tpu.memory_space<semaphore_mem>>
    %551 = tpu.memref_squeeze %550 : memref<1x!tpu.dma_semaphore, #tpu.memory_space<semaphore_mem>> -> memref<!tpu.dma_semaphore, #tpu.memory_space<semaphore_mem>>
    tpu.wait_dma2 semaphore(%551 : memref<!tpu.dma_semaphore, #tpu.memory_space<semaphore_mem>>) src(%548 : memref<1x32xf32, #tpu.memory_space<any>>) dst(%549 : memref<1x32xf32, #tpu.memory_space<vmem>>)
    %c2_i32_399 = arith.constant 2 : i32
    %c0_i32_400 = arith.constant 0 : i32
    %552 = tpu.memref_slice %arg5[%167, %c0_i32_400] : memref<64x32xf32, #tpu.memory_space<any>> -> memref<1x32xf32, #tpu.memory_space<any>>
    %c26_i32_401 = arith.constant 26 : i32
    %c0_i32_402 = arith.constant 0 : i32
    %553 = tpu.memref_slice %arg9[%c26_i32_401, %c0_i32_402] : memref<40x32xf32, #tpu.memory_space<vmem>> -> memref<1x32xf32, #tpu.memory_space<vmem>>
    %554 = tpu.memref_slice %arg10[%c2_i32_399] : memref<3x!tpu.dma_semaphore, #tpu.memory_space<semaphore_mem>> -> memref<1x!tpu.dma_semaphore, #tpu.memory_space<semaphore_mem>>
    %555 = tpu.memref_squeeze %554 : memref<1x!tpu.dma_semaphore, #tpu.memory_space<semaphore_mem>> -> memref<!tpu.dma_semaphore, #tpu.memory_space<semaphore_mem>>
    tpu.wait_dma2 semaphore(%555 : memref<!tpu.dma_semaphore, #tpu.memory_space<semaphore_mem>>) src(%552 : memref<1x32xf32, #tpu.memory_space<any>>) dst(%553 : memref<1x32xf32, #tpu.memory_space<vmem>>)
    %c2_i32_403 = arith.constant 2 : i32
    %c0_i32_404 = arith.constant 0 : i32
    %556 = tpu.memref_slice %arg5[%176, %c0_i32_404] : memref<64x32xf32, #tpu.memory_space<any>> -> memref<1x32xf32, #tpu.memory_space<any>>
    %c34_i32_405 = arith.constant 34 : i32
    %c0_i32_406 = arith.constant 0 : i32
    %557 = tpu.memref_slice %arg9[%c34_i32_405, %c0_i32_406] : memref<40x32xf32, #tpu.memory_space<vmem>> -> memref<1x32xf32, #tpu.memory_space<vmem>>
    %558 = tpu.memref_slice %arg10[%c2_i32_403] : memref<3x!tpu.dma_semaphore, #tpu.memory_space<semaphore_mem>> -> memref<1x!tpu.dma_semaphore, #tpu.memory_space<semaphore_mem>>
    %559 = tpu.memref_squeeze %558 : memref<1x!tpu.dma_semaphore, #tpu.memory_space<semaphore_mem>> -> memref<!tpu.dma_semaphore, #tpu.memory_space<semaphore_mem>>
    tpu.wait_dma2 semaphore(%559 : memref<!tpu.dma_semaphore, #tpu.memory_space<semaphore_mem>>) src(%556 : memref<1x32xf32, #tpu.memory_space<any>>) dst(%557 : memref<1x32xf32, #tpu.memory_space<vmem>>)
    %c0_i32_407 = arith.constant 0 : i32
    %c0_i32_408 = arith.constant 0 : i32
    %560 = tpu.memref_slice %arg4[%183, %c0_i32_408] : memref<64x32xf32, #tpu.memory_space<any>> -> memref<1x32xf32, #tpu.memory_space<any>>
    %c3_i32_409 = arith.constant 3 : i32
    %c0_i32_410 = arith.constant 0 : i32
    %561 = tpu.memref_slice %arg7[%c3_i32_409, %c0_i32_410] : memref<8x32xf32, #tpu.memory_space<vmem>> -> memref<1x32xf32, #tpu.memory_space<vmem>>
    %562 = tpu.memref_slice %arg10[%c0_i32_407] : memref<3x!tpu.dma_semaphore, #tpu.memory_space<semaphore_mem>> -> memref<1x!tpu.dma_semaphore, #tpu.memory_space<semaphore_mem>>
    %563 = tpu.memref_squeeze %562 : memref<1x!tpu.dma_semaphore, #tpu.memory_space<semaphore_mem>> -> memref<!tpu.dma_semaphore, #tpu.memory_space<semaphore_mem>>
    tpu.wait_dma2 semaphore(%563 : memref<!tpu.dma_semaphore, #tpu.memory_space<semaphore_mem>>) src(%560 : memref<1x32xf32, #tpu.memory_space<any>>) dst(%561 : memref<1x32xf32, #tpu.memory_space<vmem>>)
    %c1_i32_411 = arith.constant 1 : i32
    %c0_i32_412 = arith.constant 0 : i32
    %564 = tpu.memref_slice %arg5[%186, %c0_i32_412] : memref<64x32xf32, #tpu.memory_space<any>> -> memref<1x32xf32, #tpu.memory_space<any>>
    %c3_i32_413 = arith.constant 3 : i32
    %c0_i32_414 = arith.constant 0 : i32
    %565 = tpu.memref_slice %arg8[%c3_i32_413, %c0_i32_414] : memref<8x32xf32, #tpu.memory_space<vmem>> -> memref<1x32xf32, #tpu.memory_space<vmem>>
    %566 = tpu.memref_slice %arg10[%c1_i32_411] : memref<3x!tpu.dma_semaphore, #tpu.memory_space<semaphore_mem>> -> memref<1x!tpu.dma_semaphore, #tpu.memory_space<semaphore_mem>>
    %567 = tpu.memref_squeeze %566 : memref<1x!tpu.dma_semaphore, #tpu.memory_space<semaphore_mem>> -> memref<!tpu.dma_semaphore, #tpu.memory_space<semaphore_mem>>
    tpu.wait_dma2 semaphore(%567 : memref<!tpu.dma_semaphore, #tpu.memory_space<semaphore_mem>>) src(%564 : memref<1x32xf32, #tpu.memory_space<any>>) dst(%565 : memref<1x32xf32, #tpu.memory_space<vmem>>)
    %c2_i32_415 = arith.constant 2 : i32
    %c0_i32_416 = arith.constant 0 : i32
    %568 = tpu.memref_slice %arg5[%199, %c0_i32_416] : memref<64x32xf32, #tpu.memory_space<any>> -> memref<1x32xf32, #tpu.memory_space<any>>
    %c3_i32_417 = arith.constant 3 : i32
    %c0_i32_418 = arith.constant 0 : i32
    %569 = tpu.memref_slice %arg9[%c3_i32_417, %c0_i32_418] : memref<40x32xf32, #tpu.memory_space<vmem>> -> memref<1x32xf32, #tpu.memory_space<vmem>>
    %570 = tpu.memref_slice %arg10[%c2_i32_415] : memref<3x!tpu.dma_semaphore, #tpu.memory_space<semaphore_mem>> -> memref<1x!tpu.dma_semaphore, #tpu.memory_space<semaphore_mem>>
    %571 = tpu.memref_squeeze %570 : memref<1x!tpu.dma_semaphore, #tpu.memory_space<semaphore_mem>> -> memref<!tpu.dma_semaphore, #tpu.memory_space<semaphore_mem>>
    tpu.wait_dma2 semaphore(%571 : memref<!tpu.dma_semaphore, #tpu.memory_space<semaphore_mem>>) src(%568 : memref<1x32xf32, #tpu.memory_space<any>>) dst(%569 : memref<1x32xf32, #tpu.memory_space<vmem>>)
    %c2_i32_419 = arith.constant 2 : i32
    %c0_i32_420 = arith.constant 0 : i32
    %572 = tpu.memref_slice %arg5[%208, %c0_i32_420] : memref<64x32xf32, #tpu.memory_space<any>> -> memref<1x32xf32, #tpu.memory_space<any>>
    %c11_i32_421 = arith.constant 11 : i32
    %c0_i32_422 = arith.constant 0 : i32
    %573 = tpu.memref_slice %arg9[%c11_i32_421, %c0_i32_422] : memref<40x32xf32, #tpu.memory_space<vmem>> -> memref<1x32xf32, #tpu.memory_space<vmem>>
    %574 = tpu.memref_slice %arg10[%c2_i32_419] : memref<3x!tpu.dma_semaphore, #tpu.memory_space<semaphore_mem>> -> memref<1x!tpu.dma_semaphore, #tpu.memory_space<semaphore_mem>>
    %575 = tpu.memref_squeeze %574 : memref<1x!tpu.dma_semaphore, #tpu.memory_space<semaphore_mem>> -> memref<!tpu.dma_semaphore, #tpu.memory_space<semaphore_mem>>
    tpu.wait_dma2 semaphore(%575 : memref<!tpu.dma_semaphore, #tpu.memory_space<semaphore_mem>>) src(%572 : memref<1x32xf32, #tpu.memory_space<any>>) dst(%573 : memref<1x32xf32, #tpu.memory_space<vmem>>)
    %c2_i32_423 = arith.constant 2 : i32
    %c0_i32_424 = arith.constant 0 : i32
    %576 = tpu.memref_slice %arg5[%217, %c0_i32_424] : memref<64x32xf32, #tpu.memory_space<any>> -> memref<1x32xf32, #tpu.memory_space<any>>
    %c19_i32_425 = arith.constant 19 : i32
    %c0_i32_426 = arith.constant 0 : i32
    %577 = tpu.memref_slice %arg9[%c19_i32_425, %c0_i32_426] : memref<40x32xf32, #tpu.memory_space<vmem>> -> memref<1x32xf32, #tpu.memory_space<vmem>>
    %578 = tpu.memref_slice %arg10[%c2_i32_423] : memref<3x!tpu.dma_semaphore, #tpu.memory_space<semaphore_mem>> -> memref<1x!tpu.dma_semaphore, #tpu.memory_space<semaphore_mem>>
    %579 = tpu.memref_squeeze %578 : memref<1x!tpu.dma_semaphore, #tpu.memory_space<semaphore_mem>> -> memref<!tpu.dma_semaphore, #tpu.memory_space<semaphore_mem>>
    tpu.wait_dma2 semaphore(%579 : memref<!tpu.dma_semaphore, #tpu.memory_space<semaphore_mem>>) src(%576 : memref<1x32xf32, #tpu.memory_space<any>>) dst(%577 : memref<1x32xf32, #tpu.memory_space<vmem>>)
    %c2_i32_427 = arith.constant 2 : i32
    %c0_i32_428 = arith.constant 0 : i32
    %580 = tpu.memref_slice %arg5[%226, %c0_i32_428] : memref<64x32xf32, #tpu.memory_space<any>> -> memref<1x32xf32, #tpu.memory_space<any>>
    %c27_i32_429 = arith.constant 27 : i32
    %c0_i32_430 = arith.constant 0 : i32
    %581 = tpu.memref_slice %arg9[%c27_i32_429, %c0_i32_430] : memref<40x32xf32, #tpu.memory_space<vmem>> -> memref<1x32xf32, #tpu.memory_space<vmem>>
    %582 = tpu.memref_slice %arg10[%c2_i32_427] : memref<3x!tpu.dma_semaphore, #tpu.memory_space<semaphore_mem>> -> memref<1x!tpu.dma_semaphore, #tpu.memory_space<semaphore_mem>>
    %583 = tpu.memref_squeeze %582 : memref<1x!tpu.dma_semaphore, #tpu.memory_space<semaphore_mem>> -> memref<!tpu.dma_semaphore, #tpu.memory_space<semaphore_mem>>
    tpu.wait_dma2 semaphore(%583 : memref<!tpu.dma_semaphore, #tpu.memory_space<semaphore_mem>>) src(%580 : memref<1x32xf32, #tpu.memory_space<any>>) dst(%581 : memref<1x32xf32, #tpu.memory_space<vmem>>)
    %c2_i32_431 = arith.constant 2 : i32
    %c0_i32_432 = arith.constant 0 : i32
    %584 = tpu.memref_slice %arg5[%235, %c0_i32_432] : memref<64x32xf32, #tpu.memory_space<any>> -> memref<1x32xf32, #tpu.memory_space<any>>
    %c35_i32_433 = arith.constant 35 : i32
    %c0_i32_434 = arith.constant 0 : i32
    %585 = tpu.memref_slice %arg9[%c35_i32_433, %c0_i32_434] : memref<40x32xf32, #tpu.memory_space<vmem>> -> memref<1x32xf32, #tpu.memory_space<vmem>>
    %586 = tpu.memref_slice %arg10[%c2_i32_431] : memref<3x!tpu.dma_semaphore, #tpu.memory_space<semaphore_mem>> -> memref<1x!tpu.dma_semaphore, #tpu.memory_space<semaphore_mem>>
    %587 = tpu.memref_squeeze %586 : memref<1x!tpu.dma_semaphore, #tpu.memory_space<semaphore_mem>> -> memref<!tpu.dma_semaphore, #tpu.memory_space<semaphore_mem>>
    tpu.wait_dma2 semaphore(%587 : memref<!tpu.dma_semaphore, #tpu.memory_space<semaphore_mem>>) src(%584 : memref<1x32xf32, #tpu.memory_space<any>>) dst(%585 : memref<1x32xf32, #tpu.memory_space<vmem>>)
    %c0_i32_435 = arith.constant 0 : i32
    %c0_i32_436 = arith.constant 0 : i32
    %588 = tpu.memref_slice %arg4[%242, %c0_i32_436] : memref<64x32xf32, #tpu.memory_space<any>> -> memref<1x32xf32, #tpu.memory_space<any>>
    %c4_i32_437 = arith.constant 4 : i32
    %c0_i32_438 = arith.constant 0 : i32
    %589 = tpu.memref_slice %arg7[%c4_i32_437, %c0_i32_438] : memref<8x32xf32, #tpu.memory_space<vmem>> -> memref<1x32xf32, #tpu.memory_space<vmem>>
    %590 = tpu.memref_slice %arg10[%c0_i32_435] : memref<3x!tpu.dma_semaphore, #tpu.memory_space<semaphore_mem>> -> memref<1x!tpu.dma_semaphore, #tpu.memory_space<semaphore_mem>>
    %591 = tpu.memref_squeeze %590 : memref<1x!tpu.dma_semaphore, #tpu.memory_space<semaphore_mem>> -> memref<!tpu.dma_semaphore, #tpu.memory_space<semaphore_mem>>
    tpu.wait_dma2 semaphore(%591 : memref<!tpu.dma_semaphore, #tpu.memory_space<semaphore_mem>>) src(%588 : memref<1x32xf32, #tpu.memory_space<any>>) dst(%589 : memref<1x32xf32, #tpu.memory_space<vmem>>)
    %c1_i32_439 = arith.constant 1 : i32
    %c0_i32_440 = arith.constant 0 : i32
    %592 = tpu.memref_slice %arg5[%245, %c0_i32_440] : memref<64x32xf32, #tpu.memory_space<any>> -> memref<1x32xf32, #tpu.memory_space<any>>
    %c4_i32_441 = arith.constant 4 : i32
    %c0_i32_442 = arith.constant 0 : i32
    %593 = tpu.memref_slice %arg8[%c4_i32_441, %c0_i32_442] : memref<8x32xf32, #tpu.memory_space<vmem>> -> memref<1x32xf32, #tpu.memory_space<vmem>>
    %594 = tpu.memref_slice %arg10[%c1_i32_439] : memref<3x!tpu.dma_semaphore, #tpu.memory_space<semaphore_mem>> -> memref<1x!tpu.dma_semaphore, #tpu.memory_space<semaphore_mem>>
    %595 = tpu.memref_squeeze %594 : memref<1x!tpu.dma_semaphore, #tpu.memory_space<semaphore_mem>> -> memref<!tpu.dma_semaphore, #tpu.memory_space<semaphore_mem>>
    tpu.wait_dma2 semaphore(%595 : memref<!tpu.dma_semaphore, #tpu.memory_space<semaphore_mem>>) src(%592 : memref<1x32xf32, #tpu.memory_space<any>>) dst(%593 : memref<1x32xf32, #tpu.memory_space<vmem>>)
    %c2_i32_443 = arith.constant 2 : i32
    %c0_i32_444 = arith.constant 0 : i32
    %596 = tpu.memref_slice %arg5[%258, %c0_i32_444] : memref<64x32xf32, #tpu.memory_space<any>> -> memref<1x32xf32, #tpu.memory_space<any>>
    %c4_i32_445 = arith.constant 4 : i32
    %c0_i32_446 = arith.constant 0 : i32
    %597 = tpu.memref_slice %arg9[%c4_i32_445, %c0_i32_446] : memref<40x32xf32, #tpu.memory_space<vmem>> -> memref<1x32xf32, #tpu.memory_space<vmem>>
    %598 = tpu.memref_slice %arg10[%c2_i32_443] : memref<3x!tpu.dma_semaphore, #tpu.memory_space<semaphore_mem>> -> memref<1x!tpu.dma_semaphore, #tpu.memory_space<semaphore_mem>>
    %599 = tpu.memref_squeeze %598 : memref<1x!tpu.dma_semaphore, #tpu.memory_space<semaphore_mem>> -> memref<!tpu.dma_semaphore, #tpu.memory_space<semaphore_mem>>
    tpu.wait_dma2 semaphore(%599 : memref<!tpu.dma_semaphore, #tpu.memory_space<semaphore_mem>>) src(%596 : memref<1x32xf32, #tpu.memory_space<any>>) dst(%597 : memref<1x32xf32, #tpu.memory_space<vmem>>)
    %c2_i32_447 = arith.constant 2 : i32
    %c0_i32_448 = arith.constant 0 : i32
    %600 = tpu.memref_slice %arg5[%267, %c0_i32_448] : memref<64x32xf32, #tpu.memory_space<any>> -> memref<1x32xf32, #tpu.memory_space<any>>
    %c12_i32_449 = arith.constant 12 : i32
    %c0_i32_450 = arith.constant 0 : i32
    %601 = tpu.memref_slice %arg9[%c12_i32_449, %c0_i32_450] : memref<40x32xf32, #tpu.memory_space<vmem>> -> memref<1x32xf32, #tpu.memory_space<vmem>>
    %602 = tpu.memref_slice %arg10[%c2_i32_447] : memref<3x!tpu.dma_semaphore, #tpu.memory_space<semaphore_mem>> -> memref<1x!tpu.dma_semaphore, #tpu.memory_space<semaphore_mem>>
    %603 = tpu.memref_squeeze %602 : memref<1x!tpu.dma_semaphore, #tpu.memory_space<semaphore_mem>> -> memref<!tpu.dma_semaphore, #tpu.memory_space<semaphore_mem>>
    tpu.wait_dma2 semaphore(%603 : memref<!tpu.dma_semaphore, #tpu.memory_space<semaphore_mem>>) src(%600 : memref<1x32xf32, #tpu.memory_space<any>>) dst(%601 : memref<1x32xf32, #tpu.memory_space<vmem>>)
    %c2_i32_451 = arith.constant 2 : i32
    %c0_i32_452 = arith.constant 0 : i32
    %604 = tpu.memref_slice %arg5[%276, %c0_i32_452] : memref<64x32xf32, #tpu.memory_space<any>> -> memref<1x32xf32, #tpu.memory_space<any>>
    %c20_i32_453 = arith.constant 20 : i32
    %c0_i32_454 = arith.constant 0 : i32
    %605 = tpu.memref_slice %arg9[%c20_i32_453, %c0_i32_454] : memref<40x32xf32, #tpu.memory_space<vmem>> -> memref<1x32xf32, #tpu.memory_space<vmem>>
    %606 = tpu.memref_slice %arg10[%c2_i32_451] : memref<3x!tpu.dma_semaphore, #tpu.memory_space<semaphore_mem>> -> memref<1x!tpu.dma_semaphore, #tpu.memory_space<semaphore_mem>>
    %607 = tpu.memref_squeeze %606 : memref<1x!tpu.dma_semaphore, #tpu.memory_space<semaphore_mem>> -> memref<!tpu.dma_semaphore, #tpu.memory_space<semaphore_mem>>
    tpu.wait_dma2 semaphore(%607 : memref<!tpu.dma_semaphore, #tpu.memory_space<semaphore_mem>>) src(%604 : memref<1x32xf32, #tpu.memory_space<any>>) dst(%605 : memref<1x32xf32, #tpu.memory_space<vmem>>)
    %c2_i32_455 = arith.constant 2 : i32
    %c0_i32_456 = arith.constant 0 : i32
    %608 = tpu.memref_slice %arg5[%285, %c0_i32_456] : memref<64x32xf32, #tpu.memory_space<any>> -> memref<1x32xf32, #tpu.memory_space<any>>
    %c28_i32_457 = arith.constant 28 : i32
    %c0_i32_458 = arith.constant 0 : i32
    %609 = tpu.memref_slice %arg9[%c28_i32_457, %c0_i32_458] : memref<40x32xf32, #tpu.memory_space<vmem>> -> memref<1x32xf32, #tpu.memory_space<vmem>>
    %610 = tpu.memref_slice %arg10[%c2_i32_455] : memref<3x!tpu.dma_semaphore, #tpu.memory_space<semaphore_mem>> -> memref<1x!tpu.dma_semaphore, #tpu.memory_space<semaphore_mem>>
    %611 = tpu.memref_squeeze %610 : memref<1x!tpu.dma_semaphore, #tpu.memory_space<semaphore_mem>> -> memref<!tpu.dma_semaphore, #tpu.memory_space<semaphore_mem>>
    tpu.wait_dma2 semaphore(%611 : memref<!tpu.dma_semaphore, #tpu.memory_space<semaphore_mem>>) src(%608 : memref<1x32xf32, #tpu.memory_space<any>>) dst(%609 : memref<1x32xf32, #tpu.memory_space<vmem>>)
    %c2_i32_459 = arith.constant 2 : i32
    %c0_i32_460 = arith.constant 0 : i32
    %612 = tpu.memref_slice %arg5[%294, %c0_i32_460] : memref<64x32xf32, #tpu.memory_space<any>> -> memref<1x32xf32, #tpu.memory_space<any>>
    %c36_i32_461 = arith.constant 36 : i32
    %c0_i32_462 = arith.constant 0 : i32
    %613 = tpu.memref_slice %arg9[%c36_i32_461, %c0_i32_462] : memref<40x32xf32, #tpu.memory_space<vmem>> -> memref<1x32xf32, #tpu.memory_space<vmem>>
    %614 = tpu.memref_slice %arg10[%c2_i32_459] : memref<3x!tpu.dma_semaphore, #tpu.memory_space<semaphore_mem>> -> memref<1x!tpu.dma_semaphore, #tpu.memory_space<semaphore_mem>>
    %615 = tpu.memref_squeeze %614 : memref<1x!tpu.dma_semaphore, #tpu.memory_space<semaphore_mem>> -> memref<!tpu.dma_semaphore, #tpu.memory_space<semaphore_mem>>
    tpu.wait_dma2 semaphore(%615 : memref<!tpu.dma_semaphore, #tpu.memory_space<semaphore_mem>>) src(%612 : memref<1x32xf32, #tpu.memory_space<any>>) dst(%613 : memref<1x32xf32, #tpu.memory_space<vmem>>)
    %c0_i32_463 = arith.constant 0 : i32
    %c0_i32_464 = arith.constant 0 : i32
    %616 = tpu.memref_slice %arg4[%301, %c0_i32_464] : memref<64x32xf32, #tpu.memory_space<any>> -> memref<1x32xf32, #tpu.memory_space<any>>
    %c5_i32_465 = arith.constant 5 : i32
    %c0_i32_466 = arith.constant 0 : i32
    %617 = tpu.memref_slice %arg7[%c5_i32_465, %c0_i32_466] : memref<8x32xf32, #tpu.memory_space<vmem>> -> memref<1x32xf32, #tpu.memory_space<vmem>>
    %618 = tpu.memref_slice %arg10[%c0_i32_463] : memref<3x!tpu.dma_semaphore, #tpu.memory_space<semaphore_mem>> -> memref<1x!tpu.dma_semaphore, #tpu.memory_space<semaphore_mem>>
    %619 = tpu.memref_squeeze %618 : memref<1x!tpu.dma_semaphore, #tpu.memory_space<semaphore_mem>> -> memref<!tpu.dma_semaphore, #tpu.memory_space<semaphore_mem>>
    tpu.wait_dma2 semaphore(%619 : memref<!tpu.dma_semaphore, #tpu.memory_space<semaphore_mem>>) src(%616 : memref<1x32xf32, #tpu.memory_space<any>>) dst(%617 : memref<1x32xf32, #tpu.memory_space<vmem>>)
    %c1_i32_467 = arith.constant 1 : i32
    %c0_i32_468 = arith.constant 0 : i32
    %620 = tpu.memref_slice %arg5[%304, %c0_i32_468] : memref<64x32xf32, #tpu.memory_space<any>> -> memref<1x32xf32, #tpu.memory_space<any>>
    %c5_i32_469 = arith.constant 5 : i32
    %c0_i32_470 = arith.constant 0 : i32
    %621 = tpu.memref_slice %arg8[%c5_i32_469, %c0_i32_470] : memref<8x32xf32, #tpu.memory_space<vmem>> -> memref<1x32xf32, #tpu.memory_space<vmem>>
    %622 = tpu.memref_slice %arg10[%c1_i32_467] : memref<3x!tpu.dma_semaphore, #tpu.memory_space<semaphore_mem>> -> memref<1x!tpu.dma_semaphore, #tpu.memory_space<semaphore_mem>>
    %623 = tpu.memref_squeeze %622 : memref<1x!tpu.dma_semaphore, #tpu.memory_space<semaphore_mem>> -> memref<!tpu.dma_semaphore, #tpu.memory_space<semaphore_mem>>
    tpu.wait_dma2 semaphore(%623 : memref<!tpu.dma_semaphore, #tpu.memory_space<semaphore_mem>>) src(%620 : memref<1x32xf32, #tpu.memory_space<any>>) dst(%621 : memref<1x32xf32, #tpu.memory_space<vmem>>)
    %c2_i32_471 = arith.constant 2 : i32
    %c0_i32_472 = arith.constant 0 : i32
    %624 = tpu.memref_slice %arg5[%317, %c0_i32_472] : memref<64x32xf32, #tpu.memory_space<any>> -> memref<1x32xf32, #tpu.memory_space<any>>
    %c5_i32_473 = arith.constant 5 : i32
    %c0_i32_474 = arith.constant 0 : i32
    %625 = tpu.memref_slice %arg9[%c5_i32_473, %c0_i32_474] : memref<40x32xf32, #tpu.memory_space<vmem>> -> memref<1x32xf32, #tpu.memory_space<vmem>>
    %626 = tpu.memref_slice %arg10[%c2_i32_471] : memref<3x!tpu.dma_semaphore, #tpu.memory_space<semaphore_mem>> -> memref<1x!tpu.dma_semaphore, #tpu.memory_space<semaphore_mem>>
    %627 = tpu.memref_squeeze %626 : memref<1x!tpu.dma_semaphore, #tpu.memory_space<semaphore_mem>> -> memref<!tpu.dma_semaphore, #tpu.memory_space<semaphore_mem>>
    tpu.wait_dma2 semaphore(%627 : memref<!tpu.dma_semaphore, #tpu.memory_space<semaphore_mem>>) src(%624 : memref<1x32xf32, #tpu.memory_space<any>>) dst(%625 : memref<1x32xf32, #tpu.memory_space<vmem>>)
    %c2_i32_475 = arith.constant 2 : i32
    %c0_i32_476 = arith.constant 0 : i32
    %628 = tpu.memref_slice %arg5[%326, %c0_i32_476] : memref<64x32xf32, #tpu.memory_space<any>> -> memref<1x32xf32, #tpu.memory_space<any>>
    %c13_i32_477 = arith.constant 13 : i32
    %c0_i32_478 = arith.constant 0 : i32
    %629 = tpu.memref_slice %arg9[%c13_i32_477, %c0_i32_478] : memref<40x32xf32, #tpu.memory_space<vmem>> -> memref<1x32xf32, #tpu.memory_space<vmem>>
    %630 = tpu.memref_slice %arg10[%c2_i32_475] : memref<3x!tpu.dma_semaphore, #tpu.memory_space<semaphore_mem>> -> memref<1x!tpu.dma_semaphore, #tpu.memory_space<semaphore_mem>>
    %631 = tpu.memref_squeeze %630 : memref<1x!tpu.dma_semaphore, #tpu.memory_space<semaphore_mem>> -> memref<!tpu.dma_semaphore, #tpu.memory_space<semaphore_mem>>
    tpu.wait_dma2 semaphore(%631 : memref<!tpu.dma_semaphore, #tpu.memory_space<semaphore_mem>>) src(%628 : memref<1x32xf32, #tpu.memory_space<any>>) dst(%629 : memref<1x32xf32, #tpu.memory_space<vmem>>)
    %c2_i32_479 = arith.constant 2 : i32
    %c0_i32_480 = arith.constant 0 : i32
    %632 = tpu.memref_slice %arg5[%335, %c0_i32_480] : memref<64x32xf32, #tpu.memory_space<any>> -> memref<1x32xf32, #tpu.memory_space<any>>
    %c21_i32_481 = arith.constant 21 : i32
    %c0_i32_482 = arith.constant 0 : i32
    %633 = tpu.memref_slice %arg9[%c21_i32_481, %c0_i32_482] : memref<40x32xf32, #tpu.memory_space<vmem>> -> memref<1x32xf32, #tpu.memory_space<vmem>>
    %634 = tpu.memref_slice %arg10[%c2_i32_479] : memref<3x!tpu.dma_semaphore, #tpu.memory_space<semaphore_mem>> -> memref<1x!tpu.dma_semaphore, #tpu.memory_space<semaphore_mem>>
    %635 = tpu.memref_squeeze %634 : memref<1x!tpu.dma_semaphore, #tpu.memory_space<semaphore_mem>> -> memref<!tpu.dma_semaphore, #tpu.memory_space<semaphore_mem>>
    tpu.wait_dma2 semaphore(%635 : memref<!tpu.dma_semaphore, #tpu.memory_space<semaphore_mem>>) src(%632 : memref<1x32xf32, #tpu.memory_space<any>>) dst(%633 : memref<1x32xf32, #tpu.memory_space<vmem>>)
    %c2_i32_483 = arith.constant 2 : i32
    %c0_i32_484 = arith.constant 0 : i32
    %636 = tpu.memref_slice %arg5[%344, %c0_i32_484] : memref<64x32xf32, #tpu.memory_space<any>> -> memref<1x32xf32, #tpu.memory_space<any>>
    %c29_i32_485 = arith.constant 29 : i32
    %c0_i32_486 = arith.constant 0 : i32
    %637 = tpu.memref_slice %arg9[%c29_i32_485, %c0_i32_486] : memref<40x32xf32, #tpu.memory_space<vmem>> -> memref<1x32xf32, #tpu.memory_space<vmem>>
    %638 = tpu.memref_slice %arg10[%c2_i32_483] : memref<3x!tpu.dma_semaphore, #tpu.memory_space<semaphore_mem>> -> memref<1x!tpu.dma_semaphore, #tpu.memory_space<semaphore_mem>>
    %639 = tpu.memref_squeeze %638 : memref<1x!tpu.dma_semaphore, #tpu.memory_space<semaphore_mem>> -> memref<!tpu.dma_semaphore, #tpu.memory_space<semaphore_mem>>
    tpu.wait_dma2 semaphore(%639 : memref<!tpu.dma_semaphore, #tpu.memory_space<semaphore_mem>>) src(%636 : memref<1x32xf32, #tpu.memory_space<any>>) dst(%637 : memref<1x32xf32, #tpu.memory_space<vmem>>)
    %c2_i32_487 = arith.constant 2 : i32
    %c0_i32_488 = arith.constant 0 : i32
    %640 = tpu.memref_slice %arg5[%353, %c0_i32_488] : memref<64x32xf32, #tpu.memory_space<any>> -> memref<1x32xf32, #tpu.memory_space<any>>
    %c37_i32_489 = arith.constant 37 : i32
    %c0_i32_490 = arith.constant 0 : i32
    %641 = tpu.memref_slice %arg9[%c37_i32_489, %c0_i32_490] : memref<40x32xf32, #tpu.memory_space<vmem>> -> memref<1x32xf32, #tpu.memory_space<vmem>>
    %642 = tpu.memref_slice %arg10[%c2_i32_487] : memref<3x!tpu.dma_semaphore, #tpu.memory_space<semaphore_mem>> -> memref<1x!tpu.dma_semaphore, #tpu.memory_space<semaphore_mem>>
    %643 = tpu.memref_squeeze %642 : memref<1x!tpu.dma_semaphore, #tpu.memory_space<semaphore_mem>> -> memref<!tpu.dma_semaphore, #tpu.memory_space<semaphore_mem>>
    tpu.wait_dma2 semaphore(%643 : memref<!tpu.dma_semaphore, #tpu.memory_space<semaphore_mem>>) src(%640 : memref<1x32xf32, #tpu.memory_space<any>>) dst(%641 : memref<1x32xf32, #tpu.memory_space<vmem>>)
    %c0_i32_491 = arith.constant 0 : i32
    %c0_i32_492 = arith.constant 0 : i32
    %644 = tpu.memref_slice %arg4[%360, %c0_i32_492] : memref<64x32xf32, #tpu.memory_space<any>> -> memref<1x32xf32, #tpu.memory_space<any>>
    %c6_i32_493 = arith.constant 6 : i32
    %c0_i32_494 = arith.constant 0 : i32
    %645 = tpu.memref_slice %arg7[%c6_i32_493, %c0_i32_494] : memref<8x32xf32, #tpu.memory_space<vmem>> -> memref<1x32xf32, #tpu.memory_space<vmem>>
    %646 = tpu.memref_slice %arg10[%c0_i32_491] : memref<3x!tpu.dma_semaphore, #tpu.memory_space<semaphore_mem>> -> memref<1x!tpu.dma_semaphore, #tpu.memory_space<semaphore_mem>>
    %647 = tpu.memref_squeeze %646 : memref<1x!tpu.dma_semaphore, #tpu.memory_space<semaphore_mem>> -> memref<!tpu.dma_semaphore, #tpu.memory_space<semaphore_mem>>
    tpu.wait_dma2 semaphore(%647 : memref<!tpu.dma_semaphore, #tpu.memory_space<semaphore_mem>>) src(%644 : memref<1x32xf32, #tpu.memory_space<any>>) dst(%645 : memref<1x32xf32, #tpu.memory_space<vmem>>)
    %c1_i32_495 = arith.constant 1 : i32
    %c0_i32_496 = arith.constant 0 : i32
    %648 = tpu.memref_slice %arg5[%363, %c0_i32_496] : memref<64x32xf32, #tpu.memory_space<any>> -> memref<1x32xf32, #tpu.memory_space<any>>
    %c6_i32_497 = arith.constant 6 : i32
    %c0_i32_498 = arith.constant 0 : i32
    %649 = tpu.memref_slice %arg8[%c6_i32_497, %c0_i32_498] : memref<8x32xf32, #tpu.memory_space<vmem>> -> memref<1x32xf32, #tpu.memory_space<vmem>>
    %650 = tpu.memref_slice %arg10[%c1_i32_495] : memref<3x!tpu.dma_semaphore, #tpu.memory_space<semaphore_mem>> -> memref<1x!tpu.dma_semaphore, #tpu.memory_space<semaphore_mem>>
    %651 = tpu.memref_squeeze %650 : memref<1x!tpu.dma_semaphore, #tpu.memory_space<semaphore_mem>> -> memref<!tpu.dma_semaphore, #tpu.memory_space<semaphore_mem>>
    tpu.wait_dma2 semaphore(%651 : memref<!tpu.dma_semaphore, #tpu.memory_space<semaphore_mem>>) src(%648 : memref<1x32xf32, #tpu.memory_space<any>>) dst(%649 : memref<1x32xf32, #tpu.memory_space<vmem>>)
    %c2_i32_499 = arith.constant 2 : i32
    %c0_i32_500 = arith.constant 0 : i32
    %652 = tpu.memref_slice %arg5[%376, %c0_i32_500] : memref<64x32xf32, #tpu.memory_space<any>> -> memref<1x32xf32, #tpu.memory_space<any>>
    %c6_i32_501 = arith.constant 6 : i32
    %c0_i32_502 = arith.constant 0 : i32
    %653 = tpu.memref_slice %arg9[%c6_i32_501, %c0_i32_502] : memref<40x32xf32, #tpu.memory_space<vmem>> -> memref<1x32xf32, #tpu.memory_space<vmem>>
    %654 = tpu.memref_slice %arg10[%c2_i32_499] : memref<3x!tpu.dma_semaphore, #tpu.memory_space<semaphore_mem>> -> memref<1x!tpu.dma_semaphore, #tpu.memory_space<semaphore_mem>>
    %655 = tpu.memref_squeeze %654 : memref<1x!tpu.dma_semaphore, #tpu.memory_space<semaphore_mem>> -> memref<!tpu.dma_semaphore, #tpu.memory_space<semaphore_mem>>
    tpu.wait_dma2 semaphore(%655 : memref<!tpu.dma_semaphore, #tpu.memory_space<semaphore_mem>>) src(%652 : memref<1x32xf32, #tpu.memory_space<any>>) dst(%653 : memref<1x32xf32, #tpu.memory_space<vmem>>)
    %c2_i32_503 = arith.constant 2 : i32
    %c0_i32_504 = arith.constant 0 : i32
    %656 = tpu.memref_slice %arg5[%385, %c0_i32_504] : memref<64x32xf32, #tpu.memory_space<any>> -> memref<1x32xf32, #tpu.memory_space<any>>
    %c14_i32_505 = arith.constant 14 : i32
    %c0_i32_506 = arith.constant 0 : i32
    %657 = tpu.memref_slice %arg9[%c14_i32_505, %c0_i32_506] : memref<40x32xf32, #tpu.memory_space<vmem>> -> memref<1x32xf32, #tpu.memory_space<vmem>>
    %658 = tpu.memref_slice %arg10[%c2_i32_503] : memref<3x!tpu.dma_semaphore, #tpu.memory_space<semaphore_mem>> -> memref<1x!tpu.dma_semaphore, #tpu.memory_space<semaphore_mem>>
    %659 = tpu.memref_squeeze %658 : memref<1x!tpu.dma_semaphore, #tpu.memory_space<semaphore_mem>> -> memref<!tpu.dma_semaphore, #tpu.memory_space<semaphore_mem>>
    tpu.wait_dma2 semaphore(%659 : memref<!tpu.dma_semaphore, #tpu.memory_space<semaphore_mem>>) src(%656 : memref<1x32xf32, #tpu.memory_space<any>>) dst(%657 : memref<1x32xf32, #tpu.memory_space<vmem>>)
    %c2_i32_507 = arith.constant 2 : i32
    %c0_i32_508 = arith.constant 0 : i32
    %660 = tpu.memref_slice %arg5[%394, %c0_i32_508] : memref<64x32xf32, #tpu.memory_space<any>> -> memref<1x32xf32, #tpu.memory_space<any>>
    %c22_i32_509 = arith.constant 22 : i32
    %c0_i32_510 = arith.constant 0 : i32
    %661 = tpu.memref_slice %arg9[%c22_i32_509, %c0_i32_510] : memref<40x32xf32, #tpu.memory_space<vmem>> -> memref<1x32xf32, #tpu.memory_space<vmem>>
    %662 = tpu.memref_slice %arg10[%c2_i32_507] : memref<3x!tpu.dma_semaphore, #tpu.memory_space<semaphore_mem>> -> memref<1x!tpu.dma_semaphore, #tpu.memory_space<semaphore_mem>>
    %663 = tpu.memref_squeeze %662 : memref<1x!tpu.dma_semaphore, #tpu.memory_space<semaphore_mem>> -> memref<!tpu.dma_semaphore, #tpu.memory_space<semaphore_mem>>
    tpu.wait_dma2 semaphore(%663 : memref<!tpu.dma_semaphore, #tpu.memory_space<semaphore_mem>>) src(%660 : memref<1x32xf32, #tpu.memory_space<any>>) dst(%661 : memref<1x32xf32, #tpu.memory_space<vmem>>)
    %c2_i32_511 = arith.constant 2 : i32
    %c0_i32_512 = arith.constant 0 : i32
    %664 = tpu.memref_slice %arg5[%403, %c0_i32_512] : memref<64x32xf32, #tpu.memory_space<any>> -> memref<1x32xf32, #tpu.memory_space<any>>
    %c30_i32_513 = arith.constant 30 : i32
    %c0_i32_514 = arith.constant 0 : i32
    %665 = tpu.memref_slice %arg9[%c30_i32_513, %c0_i32_514] : memref<40x32xf32, #tpu.memory_space<vmem>> -> memref<1x32xf32, #tpu.memory_space<vmem>>
    %666 = tpu.memref_slice %arg10[%c2_i32_511] : memref<3x!tpu.dma_semaphore, #tpu.memory_space<semaphore_mem>> -> memref<1x!tpu.dma_semaphore, #tpu.memory_space<semaphore_mem>>
    %667 = tpu.memref_squeeze %666 : memref<1x!tpu.dma_semaphore, #tpu.memory_space<semaphore_mem>> -> memref<!tpu.dma_semaphore, #tpu.memory_space<semaphore_mem>>
    tpu.wait_dma2 semaphore(%667 : memref<!tpu.dma_semaphore, #tpu.memory_space<semaphore_mem>>) src(%664 : memref<1x32xf32, #tpu.memory_space<any>>) dst(%665 : memref<1x32xf32, #tpu.memory_space<vmem>>)
    %c2_i32_515 = arith.constant 2 : i32
    %c0_i32_516 = arith.constant 0 : i32
    %668 = tpu.memref_slice %arg5[%412, %c0_i32_516] : memref<64x32xf32, #tpu.memory_space<any>> -> memref<1x32xf32, #tpu.memory_space<any>>
    %c38_i32_517 = arith.constant 38 : i32
    %c0_i32_518 = arith.constant 0 : i32
    %669 = tpu.memref_slice %arg9[%c38_i32_517, %c0_i32_518] : memref<40x32xf32, #tpu.memory_space<vmem>> -> memref<1x32xf32, #tpu.memory_space<vmem>>
    %670 = tpu.memref_slice %arg10[%c2_i32_515] : memref<3x!tpu.dma_semaphore, #tpu.memory_space<semaphore_mem>> -> memref<1x!tpu.dma_semaphore, #tpu.memory_space<semaphore_mem>>
    %671 = tpu.memref_squeeze %670 : memref<1x!tpu.dma_semaphore, #tpu.memory_space<semaphore_mem>> -> memref<!tpu.dma_semaphore, #tpu.memory_space<semaphore_mem>>
    tpu.wait_dma2 semaphore(%671 : memref<!tpu.dma_semaphore, #tpu.memory_space<semaphore_mem>>) src(%668 : memref<1x32xf32, #tpu.memory_space<any>>) dst(%669 : memref<1x32xf32, #tpu.memory_space<vmem>>)
    %c0_i32_519 = arith.constant 0 : i32
    %c0_i32_520 = arith.constant 0 : i32
    %672 = tpu.memref_slice %arg4[%419, %c0_i32_520] : memref<64x32xf32, #tpu.memory_space<any>> -> memref<1x32xf32, #tpu.memory_space<any>>
    %c7_i32_521 = arith.constant 7 : i32
    %c0_i32_522 = arith.constant 0 : i32
    %673 = tpu.memref_slice %arg7[%c7_i32_521, %c0_i32_522] : memref<8x32xf32, #tpu.memory_space<vmem>> -> memref<1x32xf32, #tpu.memory_space<vmem>>
    %674 = tpu.memref_slice %arg10[%c0_i32_519] : memref<3x!tpu.dma_semaphore, #tpu.memory_space<semaphore_mem>> -> memref<1x!tpu.dma_semaphore, #tpu.memory_space<semaphore_mem>>
    %675 = tpu.memref_squeeze %674 : memref<1x!tpu.dma_semaphore, #tpu.memory_space<semaphore_mem>> -> memref<!tpu.dma_semaphore, #tpu.memory_space<semaphore_mem>>
    tpu.wait_dma2 semaphore(%675 : memref<!tpu.dma_semaphore, #tpu.memory_space<semaphore_mem>>) src(%672 : memref<1x32xf32, #tpu.memory_space<any>>) dst(%673 : memref<1x32xf32, #tpu.memory_space<vmem>>)
    %c1_i32_523 = arith.constant 1 : i32
    %c0_i32_524 = arith.constant 0 : i32
    %676 = tpu.memref_slice %arg5[%422, %c0_i32_524] : memref<64x32xf32, #tpu.memory_space<any>> -> memref<1x32xf32, #tpu.memory_space<any>>
    %c7_i32_525 = arith.constant 7 : i32
    %c0_i32_526 = arith.constant 0 : i32
    %677 = tpu.memref_slice %arg8[%c7_i32_525, %c0_i32_526] : memref<8x32xf32, #tpu.memory_space<vmem>> -> memref<1x32xf32, #tpu.memory_space<vmem>>
    %678 = tpu.memref_slice %arg10[%c1_i32_523] : memref<3x!tpu.dma_semaphore, #tpu.memory_space<semaphore_mem>> -> memref<1x!tpu.dma_semaphore, #tpu.memory_space<semaphore_mem>>
    %679 = tpu.memref_squeeze %678 : memref<1x!tpu.dma_semaphore, #tpu.memory_space<semaphore_mem>> -> memref<!tpu.dma_semaphore, #tpu.memory_space<semaphore_mem>>
    tpu.wait_dma2 semaphore(%679 : memref<!tpu.dma_semaphore, #tpu.memory_space<semaphore_mem>>) src(%676 : memref<1x32xf32, #tpu.memory_space<any>>) dst(%677 : memref<1x32xf32, #tpu.memory_space<vmem>>)
    %c2_i32_527 = arith.constant 2 : i32
    %c0_i32_528 = arith.constant 0 : i32
    %680 = tpu.memref_slice %arg5[%435, %c0_i32_528] : memref<64x32xf32, #tpu.memory_space<any>> -> memref<1x32xf32, #tpu.memory_space<any>>
    %c7_i32_529 = arith.constant 7 : i32
    %c0_i32_530 = arith.constant 0 : i32
    %681 = tpu.memref_slice %arg9[%c7_i32_529, %c0_i32_530] : memref<40x32xf32, #tpu.memory_space<vmem>> -> memref<1x32xf32, #tpu.memory_space<vmem>>
    %682 = tpu.memref_slice %arg10[%c2_i32_527] : memref<3x!tpu.dma_semaphore, #tpu.memory_space<semaphore_mem>> -> memref<1x!tpu.dma_semaphore, #tpu.memory_space<semaphore_mem>>
    %683 = tpu.memref_squeeze %682 : memref<1x!tpu.dma_semaphore, #tpu.memory_space<semaphore_mem>> -> memref<!tpu.dma_semaphore, #tpu.memory_space<semaphore_mem>>
    tpu.wait_dma2 semaphore(%683 : memref<!tpu.dma_semaphore, #tpu.memory_space<semaphore_mem>>) src(%680 : memref<1x32xf32, #tpu.memory_space<any>>) dst(%681 : memref<1x32xf32, #tpu.memory_space<vmem>>)
    %c2_i32_531 = arith.constant 2 : i32
    %c0_i32_532 = arith.constant 0 : i32
    %684 = tpu.memref_slice %arg5[%444, %c0_i32_532] : memref<64x32xf32, #tpu.memory_space<any>> -> memref<1x32xf32, #tpu.memory_space<any>>
    %c15_i32_533 = arith.constant 15 : i32
    %c0_i32_534 = arith.constant 0 : i32
    %685 = tpu.memref_slice %arg9[%c15_i32_533, %c0_i32_534] : memref<40x32xf32, #tpu.memory_space<vmem>> -> memref<1x32xf32, #tpu.memory_space<vmem>>
    %686 = tpu.memref_slice %arg10[%c2_i32_531] : memref<3x!tpu.dma_semaphore, #tpu.memory_space<semaphore_mem>> -> memref<1x!tpu.dma_semaphore, #tpu.memory_space<semaphore_mem>>
    %687 = tpu.memref_squeeze %686 : memref<1x!tpu.dma_semaphore, #tpu.memory_space<semaphore_mem>> -> memref<!tpu.dma_semaphore, #tpu.memory_space<semaphore_mem>>
    tpu.wait_dma2 semaphore(%687 : memref<!tpu.dma_semaphore, #tpu.memory_space<semaphore_mem>>) src(%684 : memref<1x32xf32, #tpu.memory_space<any>>) dst(%685 : memref<1x32xf32, #tpu.memory_space<vmem>>)
    %c2_i32_535 = arith.constant 2 : i32
    %c0_i32_536 = arith.constant 0 : i32
    %688 = tpu.memref_slice %arg5[%453, %c0_i32_536] : memref<64x32xf32, #tpu.memory_space<any>> -> memref<1x32xf32, #tpu.memory_space<any>>
    %c23_i32_537 = arith.constant 23 : i32
    %c0_i32_538 = arith.constant 0 : i32
    %689 = tpu.memref_slice %arg9[%c23_i32_537, %c0_i32_538] : memref<40x32xf32, #tpu.memory_space<vmem>> -> memref<1x32xf32, #tpu.memory_space<vmem>>
    %690 = tpu.memref_slice %arg10[%c2_i32_535] : memref<3x!tpu.dma_semaphore, #tpu.memory_space<semaphore_mem>> -> memref<1x!tpu.dma_semaphore, #tpu.memory_space<semaphore_mem>>
    %691 = tpu.memref_squeeze %690 : memref<1x!tpu.dma_semaphore, #tpu.memory_space<semaphore_mem>> -> memref<!tpu.dma_semaphore, #tpu.memory_space<semaphore_mem>>
    tpu.wait_dma2 semaphore(%691 : memref<!tpu.dma_semaphore, #tpu.memory_space<semaphore_mem>>) src(%688 : memref<1x32xf32, #tpu.memory_space<any>>) dst(%689 : memref<1x32xf32, #tpu.memory_space<vmem>>)
    %c2_i32_539 = arith.constant 2 : i32
    %c0_i32_540 = arith.constant 0 : i32
    %692 = tpu.memref_slice %arg5[%462, %c0_i32_540] : memref<64x32xf32, #tpu.memory_space<any>> -> memref<1x32xf32, #tpu.memory_space<any>>
    %c31_i32_541 = arith.constant 31 : i32
    %c0_i32_542 = arith.constant 0 : i32
    %693 = tpu.memref_slice %arg9[%c31_i32_541, %c0_i32_542] : memref<40x32xf32, #tpu.memory_space<vmem>> -> memref<1x32xf32, #tpu.memory_space<vmem>>
    %694 = tpu.memref_slice %arg10[%c2_i32_539] : memref<3x!tpu.dma_semaphore, #tpu.memory_space<semaphore_mem>> -> memref<1x!tpu.dma_semaphore, #tpu.memory_space<semaphore_mem>>
    %695 = tpu.memref_squeeze %694 : memref<1x!tpu.dma_semaphore, #tpu.memory_space<semaphore_mem>> -> memref<!tpu.dma_semaphore, #tpu.memory_space<semaphore_mem>>
    tpu.wait_dma2 semaphore(%695 : memref<!tpu.dma_semaphore, #tpu.memory_space<semaphore_mem>>) src(%692 : memref<1x32xf32, #tpu.memory_space<any>>) dst(%693 : memref<1x32xf32, #tpu.memory_space<vmem>>)
    %c2_i32_543 = arith.constant 2 : i32
    %c0_i32_544 = arith.constant 0 : i32
    %696 = tpu.memref_slice %arg5[%471, %c0_i32_544] : memref<64x32xf32, #tpu.memory_space<any>> -> memref<1x32xf32, #tpu.memory_space<any>>
    %c39_i32_545 = arith.constant 39 : i32
    %c0_i32_546 = arith.constant 0 : i32
    %697 = tpu.memref_slice %arg9[%c39_i32_545, %c0_i32_546] : memref<40x32xf32, #tpu.memory_space<vmem>> -> memref<1x32xf32, #tpu.memory_space<vmem>>
    %698 = tpu.memref_slice %arg10[%c2_i32_543] : memref<3x!tpu.dma_semaphore, #tpu.memory_space<semaphore_mem>> -> memref<1x!tpu.dma_semaphore, #tpu.memory_space<semaphore_mem>>
    %699 = tpu.memref_squeeze %698 : memref<1x!tpu.dma_semaphore, #tpu.memory_space<semaphore_mem>> -> memref<!tpu.dma_semaphore, #tpu.memory_space<semaphore_mem>>
    tpu.wait_dma2 semaphore(%699 : memref<!tpu.dma_semaphore, #tpu.memory_space<semaphore_mem>>) src(%696 : memref<1x32xf32, #tpu.memory_space<any>>) dst(%697 : memref<1x32xf32, #tpu.memory_space<vmem>>)
    %c0 = arith.constant 0 : index
    %c0_547 = arith.constant 0 : index
    %700 = vector.load %arg7[%c0, %c0_547] : memref<8x32xf32, #tpu.memory_space<vmem>>, vector<8x32xf32>
    %c0_548 = arith.constant 0 : index
    %c0_549 = arith.constant 0 : index
    %701 = vector.load %arg8[%c0_548, %c0_549] : memref<8x32xf32, #tpu.memory_space<vmem>>, vector<8x32xf32>
    %c0_550 = arith.constant 0 : index
    %c0_551 = arith.constant 0 : index
    %702 = vector.load %arg9[%c0_550, %c0_551] : memref<40x32xf32, #tpu.memory_space<vmem>>, vector<40x32xf32>
    %cst = arith.constant 0.000000e+00 : f32
    %703 = vector.broadcast %cst : f32 to vector<8x32xf32>
    %704 = vector.extract_strided_slice %702 {offsets = [0, 0], sizes = [8, 32], strides = [1, 1]} : vector<40x32xf32> to vector<8x32xf32>
    %705 = arith.addf %703, %704 : vector<8x32xf32>
    %706 = vector.extract_strided_slice %702 {offsets = [8, 0], sizes = [8, 32], strides = [1, 1]} : vector<40x32xf32> to vector<8x32xf32>
    %707 = arith.addf %705, %706 : vector<8x32xf32>
    %708 = vector.extract_strided_slice %702 {offsets = [16, 0], sizes = [8, 32], strides = [1, 1]} : vector<40x32xf32> to vector<8x32xf32>
    %709 = arith.addf %707, %708 : vector<8x32xf32>
    %710 = vector.extract_strided_slice %702 {offsets = [24, 0], sizes = [8, 32], strides = [1, 1]} : vector<40x32xf32> to vector<8x32xf32>
    %711 = arith.addf %709, %710 : vector<8x32xf32>
    %712 = vector.extract_strided_slice %702 {offsets = [32, 0], sizes = [8, 32], strides = [1, 1]} : vector<40x32xf32> to vector<8x32xf32>
    %713 = arith.addf %711, %712 : vector<8x32xf32>
    %714 = arith.mulf %701, %700 : vector<8x32xf32>
    %cst_552 = arith.constant dense<0.000000e+00> : vector<8xf32>
    %715 = vector.multi_reduction <add>, %714, %cst_552 [1] : vector<8x32xf32> to vector<8xf32>
    %716 = vector.shape_cast %715 : vector<8xf32> to vector<8x1xf32>
    %717 = arith.mulf %700, %713 : vector<8x32xf32>
    %cst_553 = arith.constant dense<0.000000e+00> : vector<8xf32>
    %718 = vector.multi_reduction <add>, %717, %cst_553 [1] : vector<8x32xf32> to vector<8xf32>
    %719 = vector.shape_cast %718 : vector<8xf32> to vector<8x1xf32>
    %cst_554 = arith.constant 0.000000e+00 : f32
    %720 = vector.broadcast %cst_554 : f32 to vector<8x1xf32>
    %721 = arith.minimumf %716, %720 : vector<8x1xf32>
    %722 = math.absf %716 : vector<8x1xf32>
    %cst_555 = arith.constant 0.000000e+00 : f32
    %723 = vector.broadcast %cst_555 : f32 to vector<8x1xf32>
    %724 = arith.subf %723, %722 : vector<8x1xf32>
    %725 = math.exp %724 : vector<8x1xf32>
    %cst_556 = arith.constant 1.000000e+00 : f32
    %726 = vector.broadcast %cst_556 : f32 to vector<8x1xf32>
    %727 = arith.addf %726, %725 : vector<8x1xf32>
    %728 = math.log %727 : vector<8x1xf32>
    %729 = arith.subf %721, %728 : vector<8x1xf32>
    %cst_557 = arith.constant 0.000000e+00 : f32
    %730 = vector.broadcast %cst_557 : f32 to vector<8x1xf32>
    %731 = arith.subf %730, %719 : vector<8x1xf32>
    %cst_558 = arith.constant 0.000000e+00 : f32
    %732 = vector.broadcast %cst_558 : f32 to vector<8x1xf32>
    %733 = arith.minimumf %731, %732 : vector<8x1xf32>
    %734 = math.absf %731 : vector<8x1xf32>
    %cst_559 = arith.constant 0.000000e+00 : f32
    %735 = vector.broadcast %cst_559 : f32 to vector<8x1xf32>
    %736 = arith.subf %735, %734 : vector<8x1xf32>
    %737 = math.exp %736 : vector<8x1xf32>
    %cst_560 = arith.constant 1.000000e+00 : f32
    %738 = vector.broadcast %cst_560 : f32 to vector<8x1xf32>
    %739 = arith.addf %738, %737 : vector<8x1xf32>
    %740 = math.log %739 : vector<8x1xf32>
    %741 = arith.subf %733, %740 : vector<8x1xf32>
    %742 = arith.addf %729, %741 : vector<8x1xf32>
    %743 = tpu.iota {dimensions = array<i32: 0>} : vector<8x1xi32>
    %744 = vector.broadcast %0 : i32 to vector<8x1xi32>
    %745 = arith.addi %744, %743 : vector<8x1xi32>
    %c8_i32_561 = arith.constant 8 : i32
    %746 = vector.broadcast %c8_i32_561 : i32 to vector<8x1xi32>
    %747 = arith.cmpi slt, %745, %746 : vector<8x1xi32>
    %cst_562 = arith.constant 0.000000e+00 : f32
    %748 = vector.broadcast %cst_562 : f32 to vector<8x1xf32>
    %749 = arith.select %747, %742, %748 : vector<8x1xi1>, vector<8x1xf32>
    %c0_563 = arith.constant 0 : index
    %c0_564 = arith.constant 0 : index
    %750 = vector.load %arg6[%c0_563, %c0_564] : memref<1x1xf32, #tpu.memory_space<vmem>>, vector<1x1xf32>
    %cst_565 = arith.constant dense<0.000000e+00> : vector<1xf32>
    %751 = vector.multi_reduction <add>, %749, %cst_565 [0] : vector<8x1xf32> to vector<1xf32>
    %752 = vector.shape_cast %751 : vector<1xf32> to vector<1x1xf32>
    %753 = arith.addf %750, %752 : vector<1x1xf32>
    %c0_566 = arith.constant 0 : index
    %c0_567 = arith.constant 0 : index
    %754 = vector.load %arg6[%c0_566, %c0_567] : memref<1x1xf32, #tpu.memory_space<vmem>>, vector<1x1xf32>
    tpu.vector_store %arg6[%c0_566, %c0_567], %753 {strides = array<i32>} : memref<1x1xf32, #tpu.memory_space<vmem>>, vector<1x1xf32>,
    %c0_i32_568 = arith.constant 0 : i32
    %755 = arith.cmpi eq, %arg0, %c0_i32_568 : i32
    %756 = arith.extui %755 : i1 to i32
    %c0_i32_569 = arith.constant 0 : i32
    %757 = arith.cmpi ne, %756, %c0_i32_569 : i32
    scf.if %757 {
      %c0_570 = arith.constant 0 : index
      %c0_571 = arith.constant 0 : index
      %758 = vector.load %arg6[%c0_570, %c0_571] : memref<1x1xf32, #tpu.memory_space<vmem>>, vector<1x1xf32>
      %cst_572 = arith.constant -1.250000e-01 : f32
      %759 = vector.broadcast %cst_572 : f32 to vector<1x1xf32>
      %760 = arith.mulf %758, %759 : vector<1x1xf32>
      %c0_573 = arith.constant 0 : index
      %c0_574 = arith.constant 0 : index
      %761 = vector.load %arg6[%c0_573, %c0_574] : memref<1x1xf32, #tpu.memory_space<vmem>>, vector<1x1xf32>
      tpu.vector_store %arg6[%c0_573, %c0_574], %760 {strides = array<i32>} : memref<1x1xf32, #tpu.memory_space<vmem>>, vector<1x1xf32>,
    } else {
    }
    return
  }
  func.func @transform_2(%arg0: i32, %arg1: memref<8xi32, #tpu.memory_space<smem>>, %arg2: memref<8xi32, #tpu.memory_space<smem>>, %arg3: memref<40xi32, #tpu.memory_space<smem>>) -> (i32, i32) {
    %c0_i32 = arith.constant 0 : i32
    %c0_i32_0 = arith.constant 0 : i32
    %c0_i32_1 = arith.constant 0 : i32
    return %c0_i32, %c0_i32_0 : i32, i32
  }
}

</mosaic_0001>

<llo_original>
// kernel: skipgram_loss.1
$region0: #{skipgram_loss.1}
  #allocation0 [shape = 'u32[]', space=smem, size = 0x4, offset = 0x4, fixed_abs, tag = 'smem constant byte address 0x4 - core index']
  #allocation1 [shape = 'u32[144,128]{1,0:T(1,128)}', space=vmem, size = 0x12000, scoped, tag = 'internal scratch']
  #allocation2 [shape = 'f32[8,32]{1,0:T(8,128)}', space=vmem, size = 0x1000, scoped, tag = 'scratch operand']
  #allocation3 [shape = 'f32[8,32]{1,0:T(8,128)}', space=vmem, size = 0x1000, scoped, tag = 'scratch operand']
  #allocation4 [shape = 'f32[40,32]{1,0:T(8,128)}', space=vmem, size = 0x5000, scoped, tag = 'scratch operand']
  #allocation5 [shape = 's32[3]{0}', space=sflag, size = 0xc, scoped, tag = 'scratch operand']
  #allocation6 [shape = 's32[1]{0}', space=sflag, size = 0x4, scoped, tag = 'scoped memory for skipgram_loss.1']
  #allocation7 [shape = 'u8[512]{0}', space=smem, size = 0x200, scoped, tag = 'prefetched SMEM operand 0']
  #allocation8 [shape = 'u8[512]{0}', space=smem, size = 0x200, scoped, tag = 'prefetched SMEM operand 1']
  #allocation9 [shape = 'u8[512]{0}', space=smem, size = 0x200, scoped, tag = 'prefetched SMEM operand 2']
  #allocation12 [shape = 's32[]', space=sflag, size = 0x4, offset = 0, fixed_abs, tag = 'sflag constant byte address 0x0 - dummy sync flag']
  #allocation13 [shape = 's32[]', space=sflag, size = 0x4, offset = 0, fixed_abs, tag = 'sflag constant byte address 0x0 - dummy sync flag']
  #allocation14 [shape = 's32[]', space=sflag, size = 0x4, offset = 0, fixed_abs, tag = 'sflag constant byte address 0x0 - dummy sync flag']
  #allocation15 [shape = 's32[]', space=sflag, size = 0x4, offset = 0, fixed_abs, tag = 'sflag constant byte address 0x0 - dummy sync flag']
  #allocation16 [shape = 's32[]', space=sflag, size = 0x4, offset = 0, fixed_abs, tag = 'sflag constant byte address 0x0 - dummy sync flag']
  #allocation17 [shape = 's32[]', space=sflag, size = 0x4, offset = 0, fixed_abs, tag = 'sflag constant byte address 0x0 - dummy sync flag']
  #allocation18 [shape = 's32[]', space=sflag, size = 0x4, offset = 0, fixed_abs, tag = 'sflag constant byte address 0x0 - dummy sync flag']
  #allocation19 [shape = 's32[]', space=sflag, size = 0x4, offset = 0, fixed_abs, tag = 'sflag constant byte address 0x0 - dummy sync flag']
  #allocation20 [shape = 's32[]', space=sflag, size = 0x4, offset = 0, fixed_abs, tag = 'sflag constant byte address 0x0 - dummy sync flag']
  #allocation21 [shape = 's32[]', space=sflag, size = 0x4, offset = 0, fixed_abs, tag = 'sflag constant byte address 0x0 - dummy sync flag']
  #allocation22 [shape = 's32[]', space=sflag, size = 0x4, offset = 0, fixed_abs, tag = 'sflag constant byte address 0x0 - dummy sync flag']
  #allocation23 [shape = 's32[]', space=sflag, size = 0x4, offset = 0, fixed_abs, tag = 'sflag constant byte address 0x0 - dummy sync flag']
  #allocation24 [shape = 's32[]', space=sflag, size = 0x4, offset = 0, fixed_abs, tag = 'sflag constant byte address 0x0 - dummy sync flag']
  #allocation25 [shape = 's32[]', space=sflag, size = 0x4, offset = 0, fixed_abs, tag = 'sflag constant byte address 0x0 - dummy sync flag']
  #allocation26 [shape = 's32[]', space=sflag, size = 0x4, offset = 0, fixed_abs, tag = 'sflag constant byte address 0x0 - dummy sync flag']
  #allocation27 [shape = 's32[]', space=sflag, size = 0x4, offset = 0, fixed_abs, tag = 'sflag constant byte address 0x0 - dummy sync flag']
  #allocation28 [shape = 's32[]', space=sflag, size = 0x4, offset = 0, fixed_abs, tag = 'sflag constant byte address 0x0 - dummy sync flag']
  #allocation29 [shape = 's32[]', space=sflag, size = 0x4, offset = 0, fixed_abs, tag = 'sflag constant byte address 0x0 - dummy sync flag']
  #allocation30 [shape = 's32[]', space=sflag, size = 0x4, offset = 0, fixed_abs, tag = 'sflag constant byte address 0x0 - dummy sync flag']
  #allocation31 [shape = 's32[]', space=sflag, size = 0x4, offset = 0, fixed_abs, tag = 'sflag constant byte address 0x0 - dummy sync flag']
  #allocation32 [shape = 's32[]', space=sflag, size = 0x4, offset = 0, fixed_abs, tag = 'sflag constant byte address 0x0 - dummy sync flag']
  #allocation33 [shape = 's32[]', space=sflag, size = 0x4, offset = 0, fixed_abs, tag = 'sflag constant byte address 0x0 - dummy sync flag']
  #allocation34 [shape = 's32[]', space=sflag, size = 0x4, offset = 0, fixed_abs, tag = 'sflag constant byte address 0x0 - dummy sync flag']
  #allocation35 [shape = 's32[]', space=sflag, size = 0x4, offset = 0, fixed_abs, tag = 'sflag constant byte address 0x0 - dummy sync flag']
  #allocation36 [shape = 's32[]', space=sflag, size = 0x4, offset = 0, fixed_abs, tag = 'sflag constant byte address 0x0 - dummy sync flag']
  #allocation37 [shape = 's32[]', space=sflag, size = 0x4, offset = 0, fixed_abs, tag = 'sflag constant byte address 0x0 - dummy sync flag']
  #allocation38 [shape = 's32[]', space=sflag, size = 0x4, offset = 0, fixed_abs, tag = 'sflag constant byte address 0x0 - dummy sync flag']
  #allocation39 [shape = 's32[]', space=sflag, size = 0x4, offset = 0, fixed_abs, tag = 'sflag constant byte address 0x0 - dummy sync flag']
  #allocation40 [shape = 's32[]', space=sflag, size = 0x4, offset = 0, fixed_abs, tag = 'sflag constant byte address 0x0 - dummy sync flag']
  #allocation41 [shape = 's32[]', space=sflag, size = 0x4, offset = 0, fixed_abs, tag = 'sflag constant byte address 0x0 - dummy sync flag']
  #allocation42 [shape = 's32[]', space=sflag, size = 0x4, offset = 0, fixed_abs, tag = 'sflag constant byte address 0x0 - dummy sync flag']
  #allocation43 [shape = 's32[]', space=sflag, size = 0x4, offset = 0, fixed_abs, tag = 'sflag constant byte address 0x0 - dummy sync flag']
  #allocation44 [shape = 's32[]', space=sflag, size = 0x4, offset = 0, fixed_abs, tag = 'sflag constant byte address 0x0 - dummy sync flag']
  #allocation45 [shape = 's32[]', space=sflag, size = 0x4, offset = 0, fixed_abs, tag = 'sflag constant byte address 0x0 - dummy sync flag']
  #allocation46 [shape = 's32[]', space=sflag, size = 0x4, offset = 0, fixed_abs, tag = 'sflag constant byte address 0x0 - dummy sync flag']
  #allocation47 [shape = 's32[]', space=sflag, size = 0x4, offset = 0, fixed_abs, tag = 'sflag constant byte address 0x0 - dummy sync flag']
  #allocation48 [shape = 's32[]', space=sflag, size = 0x4, offset = 0, fixed_abs, tag = 'sflag constant byte address 0x0 - dummy sync flag']
  #allocation49 [shape = 's32[]', space=sflag, size = 0x4, offset = 0, fixed_abs, tag = 'sflag constant byte address 0x0 - dummy sync flag']
  #allocation50 [shape = 's32[]', space=sflag, size = 0x4, offset = 0, fixed_abs, tag = 'sflag constant byte address 0x0 - dummy sync flag']
  #allocation51 [shape = 's32[]', space=sflag, size = 0x4, offset = 0, fixed_abs, tag = 'sflag constant byte address 0x0 - dummy sync flag']
  #allocation52 [shape = 's32[]', space=sflag, size = 0x4, offset = 0, fixed_abs, tag = 'sflag constant byte address 0x0 - dummy sync flag']
  #allocation53 [shape = 's32[]', space=sflag, size = 0x4, offset = 0, fixed_abs, tag = 'sflag constant byte address 0x0 - dummy sync flag']
  #allocation54 [shape = 's32[]', space=sflag, size = 0x4, offset = 0, fixed_abs, tag = 'sflag constant byte address 0x0 - dummy sync flag']
  #allocation55 [shape = 's32[]', space=sflag, size = 0x4, offset = 0, fixed_abs, tag = 'sflag constant byte address 0x0 - dummy sync flag']
  #allocation56 [shape = 's32[]', space=sflag, size = 0x4, offset = 0, fixed_abs, tag = 'sflag constant byte address 0x0 - dummy sync flag']
  #allocation57 [shape = 's32[]', space=sflag, size = 0x4, offset = 0, fixed_abs, tag = 'sflag constant byte address 0x0 - dummy sync flag']
  #allocation58 [shape = 's32[]', space=sflag, size = 0x4, offset = 0, fixed_abs, tag = 'sflag constant byte address 0x0 - dummy sync flag']
  #allocation59 [shape = 's32[]', space=sflag, size = 0x4, offset = 0, fixed_abs, tag = 'sflag constant byte address 0x0 - dummy sync flag']
  #allocation60 [shape = 's32[]', space=sflag, size = 0x4, offset = 0, fixed_abs, tag = 'sflag constant byte address 0x0 - dummy sync flag']
  #allocation61 [shape = 's32[]', space=sflag, size = 0x4, offset = 0, fixed_abs, tag = 'sflag constant byte address 0x0 - dummy sync flag']
  #allocation62 [shape = 's32[]', space=sflag, size = 0x4, offset = 0, fixed_abs, tag = 'sflag constant byte address 0x0 - dummy sync flag']
  #allocation63 [shape = 's32[]', space=sflag, size = 0x4, offset = 0, fixed_abs, tag = 'sflag constant byte address 0x0 - dummy sync flag']
  #allocation64 [shape = 's32[]', space=sflag, size = 0x4, offset = 0, fixed_abs, tag = 'sflag constant byte address 0x0 - dummy sync flag']
  #allocation65 [shape = 's32[]', space=sflag, size = 0x4, offset = 0, fixed_abs, tag = 'sflag constant byte address 0x0 - dummy sync flag']
  #allocation66 [shape = 's32[]', space=sflag, size = 0x4, offset = 0, fixed_abs, tag = 'sflag constant byte address 0x0 - dummy sync flag']
  #allocation67 [shape = 's32[]', space=sflag, size = 0x4, offset = 0, fixed_abs, tag = 'sflag constant byte address 0x0 - dummy sync flag']
  %s0 = inlined_call_operand.vmem [shape: s32[8], index: 0, kind: input, shape index: {}]
  %s1 = inlined_call_operand.vmem [shape: s32[8], index: 1, kind: input, shape index: {}]
  %s2 = inlined_call_operand.vmem [shape: s32[40], index: 2, kind: input, shape index: {}]
  %s3 = inlined_call_operand.vmem [shape: f32[64,32], index: 3, kind: input, shape index: {}]
  %s4 = inlined_call_operand.vmem [shape: f32[64,32], index: 4, kind: input, shape index: {}]
  %s5 = inlined_call_operand.hbm [shape: f32[1,1], index: 5, kind: output, shape index: {}]
  %s6 = sld [smem:[#allocation0]]
  $region1698: #{skipgram_loss.1} parent=0
    _
  %s8 = ssub.s32 1, %s6
  %s9 = scalar_select 0, %s8, %s6
  %s10 = sshll.u32 %s0, 4
  %s11 = int_to_ptr.vmem [resolvable:$true] %s10
  %13 = dma.vmem_to_smem %s11, 16, [#allocation7], [#allocation6]
  %s14 = sshll.u32 %s1, 4
  %s15 = int_to_ptr.vmem [resolvable:$true] %s14
  %17 = dma.vmem_to_smem %s15, 16, [#allocation8], [#allocation6]
  %s18 = sshll.u32 %s2, 4
  %s19 = int_to_ptr.vmem [resolvable:$true] %s18
  %21 = dma.vmem_to_smem %s19, 16, [#allocation9], [#allocation6]
  %22 = dma.done [#allocation6], 48
  %23 = sfence
  $region1: #{skipgram_loss.1} parent=0
    #allocation10 [shape = 'u8[512]{0}', space=vmem, size = 0x400, scoped, tag = 'output window, operand 0, single buffered']
    #allocation11 [shape = 's32[1]{0}', space=sflag, size = 0x4, scoped, tag = 'scoped memory for skipgram_loss.1']
    %24 = vsyncpa [#allocation11], 0
    %s25 = smul.u32 0, 8
    %p26 = scmp.eq.s32.totalorder 0, 0
    // Predicated region
    $region2: #{skipgram_loss.1} parent=1 // pred_check
      %p27 = pneg %p26
    $region3: #{skipgram_loss.1} parent=1 // pred_check_branch
      %29 = sbr.rel (%p27) target = $region5
    $region4: #{skipgram_loss.1} parent=1 // pred_region
      %vm30 = vcmask 0
      %31 = vst.msk [vmem:[#allocation10] sm:$0x1] %vm30, 0.0
    $region5: #{skipgram_loss.1} parent=1 // pred_fallthru
      _
    %s32 = sld [smem:[#allocation7 + %s25]]
    %s33 = sld [smem:[#allocation8 + %s25]]
    %s34 = scalar_lea.vmem %s3, %s32
    %p36 = scmp.lt.u32.totalorder 1, 8
    %p37 = pneg %p36
    // Predicated region
    $region6: #{skipgram_loss.1} parent=1 // pred_check
      _
    $region7: #{skipgram_loss.1} parent=1 // pred_check_branch
      %39 = sbr.rel (%p36) target = $region9
    $region8: #{skipgram_loss.1} parent=1 // pred_region
      %s54 = sand.u32 1, 7
      %p55 = scmp.eq.s32.totalorder %s54, 0
      %p56 = pneg %p55
      // Predicated region
      $region21: #{skipgram_loss.1} parent=8 // pred_check
        _
      $region22: #{skipgram_loss.1} parent=8 // pred_check_branch
        %58 = sbr.rel (%p55) target = $region24
      $region23: #{skipgram_loss.1} parent=8 // pred_region
        %s59 = sand.u32 1, 7
        %s60 = ssub.s32 1, %s59
        %s61 = scalar_lea.vmem %s34, %s60
        %s62 = ssub.s32 1, %s59
        %s63 = scalar_lea.vmem [#allocation2], %s62
        %s64 = sshllo.u32 0, %s59
        loop: start=0, step=1, limit=1
        $region25: #{skipgram_loss.1} parent=23 // loop_pre_header
          _
        $region26: #{skipgram_loss.1} parent=23 // loop_header
          %s66 = sphi 0, %s70
          %p67 = scmp.ge.s32.totalorder %s66, 1
          %s71 = sphi %s61, %s61
          %s72 = sphi %s63, %s63
        $region27: #{skipgram_loss.1} parent=23 // loop_header_branch
          %69 = sbr.rel (%p67) target = $region31
        $region28: #{skipgram_loss.1} parent=23 // loop_body
          %v73 = vld [vmem:[%s71] sm:%s64]
          %74 = vst [vmem:[%s72] sm:%s64] %v73
        $region29: #{skipgram_loss.1} parent=23 // loop_footer
          %s70 = sadd.s32 1, %s66
        $region30: #{skipgram_loss.1} parent=23 // loop_footer_branch
          %65 = sbr.rel target = $region26
        $region31: #{skipgram_loss.1} parent=23 // loop_exit
          _
      $region24: #{skipgram_loss.1} parent=8 // pred_fallthru
        _
    $region9: #{skipgram_loss.1} parent=1 // pred_fallthru
      _
    // Predicated region
    $region10: #{skipgram_loss.1} parent=1 // pred_check
      %p40 = pneg %p36
    $region11: #{skipgram_loss.1} parent=1 // pred_check_branch
      %42 = sbr.rel (%p40) target = $region13
    $region12: #{skipgram_loss.1} parent=1 // pred_region
      %s43 = sshllo.u32 0, 1
      loop: start=0, step=1, limit=1
      $region14: #{skipgram_loss.1} parent=12 // loop_pre_header
        _
      $region15: #{skipgram_loss.1} parent=12 // loop_header
        %s45 = sphi 0, %s49
        %p46 = scmp.ge.s32.totalorder %s45, 1
        %s50 = sphi %s34, %s34
        %s51 = sphi [#allocation2], [#allocation2]
      $region16: #{skipgram_loss.1} parent=12 // loop_header_branch
        %48 = sbr.rel (%p46) target = $region20
      $region17: #{skipgram_loss.1} parent=12 // loop_body
        %v52 = vld [vmem:[%s50] sm:%s43]
        %53 = vst [vmem:[%s51] sm:%s43] %v52
      $region18: #{skipgram_loss.1} parent=12 // loop_footer
        %s49 = sadd.s32 1, %s45
      $region19: #{skipgram_loss.1} parent=12 // loop_footer_branch
        %44 = sbr.rel target = $region15
      $region20: #{skipgram_loss.1} parent=12 // loop_exit
        _
    $region13: #{skipgram_loss.1} parent=1 // pred_fallthru
      _
    // Predicated region
    $region32: #{skipgram_loss.1} parent=1 // pred_check
      _
    $region33: #{skipgram_loss.1} parent=1 // pred_check_branch
      %77 = sbr.rel (0) target = $region35
    $region34: #{skipgram_loss.1} parent=1 // pred_region
      %78 = vsyncadd [#allocation5], 16
    $region35: #{skipgram_loss.1} parent=1 // pred_fallthru
      _
    %s79 = scalar_lea.vmem %s4, %s33
    %s80 = scalar_lea.sflag [#allocation5], 1
    %p82 = scmp.lt.u32.totalorder 1, 8
    %p83 = pneg %p82
    // Predicated region
    $region36: #{skipgram_loss.1} parent=1 // pred_check
      _
    $region37: #{skipgram_loss.1} parent=1 // pred_check_branch
      %85 = sbr.rel (%p82) target = $region39
    $region38: #{skipgram_loss.1} parent=1 // pred_region
      %s100 = sand.u32 1, 7
      %p101 = scmp.eq.s32.totalorder %s100, 0
      %p102 = pneg %p101
      // Predicated region
      $region51: #{skipgram_loss.1} parent=38 // pred_check
        _
      $region52: #{skipgram_loss.1} parent=38 // pred_check_branch
        %104 = sbr.rel (%p101) target = $region54
      $region53: #{skipgram_loss.1} parent=38 // pred_region
        %s105 = sand.u32 1, 7
        %s106 = ssub.s32 1, %s105
        %s107 = scalar_lea.vmem %s79, %s106
        %s108 = ssub.s32 1, %s105
        %s109 = scalar_lea.vmem [#allocation3], %s108
        %s110 = sshllo.u32 0, %s105
        loop: start=0, step=1, limit=1
        $region55: #{skipgram_loss.1} parent=53 // loop_pre_header
          _
        $region56: #{skipgram_loss.1} parent=53 // loop_header
          %s112 = sphi 0, %s116
          %p113 = scmp.ge.s32.totalorder %s112, 1
          %s117 = sphi %s107, %s107
          %s118 = sphi %s109, %s109
        $region57: #{skipgram_loss.1} parent=53 // loop_header_branch
          %115 = sbr.rel (%p113) target = $region61
        $region58: #{skipgram_loss.1} parent=53 // loop_body
          %v119 = vld [vmem:[%s117] sm:%s110]
          %120 = vst [vmem:[%s118] sm:%s110] %v119
        $region59: #{skipgram_loss.1} parent=53 // loop_footer
          %s116 = sadd.s32 1, %s112
        $region60: #{skipgram_loss.1} parent=53 // loop_footer_branch
          %111 = sbr.rel target = $region56
        $region61: #{skipgram_loss.1} parent=53 // loop_exit
          _
      $region54: #{skipgram_loss.1} parent=38 // pred_fallthru
        _
    $region39: #{skipgram_loss.1} parent=1 // pred_fallthru
      _
    // Predicated region
    $region40: #{skipgram_loss.1} parent=1 // pred_check
      %p86 = pneg %p82
    $region41: #{skipgram_loss.1} parent=1 // pred_check_branch
      %88 = sbr.rel (%p86) target = $region43
    $region42: #{skipgram_loss.1} parent=1 // pred_region
      %s89 = sshllo.u32 0, 1
      loop: start=0, step=1, limit=1
      $region44: #{skipgram_loss.1} parent=42 // loop_pre_header
        _
      $region45: #{skipgram_loss.1} parent=42 // loop_header
        %s91 = sphi 0, %s95
        %p92 = scmp.ge.s32.totalorder %s91, 1
        %s96 = sphi %s79, %s79
        %s97 = sphi [#allocation3], [#allocation3]
      $region46: #{skipgram_loss.1} parent=42 // loop_header_branch
        %94 = sbr.rel (%p92) target = $region50
      $region47: #{skipgram_loss.1} parent=42 // loop_body
        %v98 = vld [vmem:[%s96] sm:%s89]
        %99 = vst [vmem:[%s97] sm:%s89] %v98
      $region48: #{skipgram_loss.1} parent=42 // loop_footer
        %s95 = sadd.s32 1, %s91
      $region49: #{skipgram_loss.1} parent=42 // loop_footer_branch
        %90 = sbr.rel target = $region45
      $region50: #{skipgram_loss.1} parent=42 // loop_exit
        _
    $region43: #{skipgram_loss.1} parent=1 // pred_fallthru
      _
    // Predicated region
    $region62: #{skipgram_loss.1} parent=1 // pred_check
      _
    $region63: #{skipgram_loss.1} parent=1 // pred_check_branch
      %123 = sbr.rel (0) target = $region65
    $region64: #{skipgram_loss.1} parent=1 // pred_region
      %124 = vsyncadd %s80, 16
    $region65: #{skipgram_loss.1} parent=1 // pred_fallthru
      _
    %s125 = smul.u32 0, 40
    %s126 = sld [smem:[#allocation9 + %s125]]
    %s127 = scalar_lea.vmem %s4, %s126
    %s128 = scalar_lea.sflag [#allocation5], 2
    %p130 = scmp.lt.u32.totalorder 1, 8
    %p131 = pneg %p130
    // Predicated region
    $region66: #{skipgram_loss.1} parent=1 // pred_check
      _
    $region67: #{skipgram_loss.1} parent=1 // pred_check_branch
      %133 = sbr.rel (%p130) target = $region69
    $region68: #{skipgram_loss.1} parent=1 // pred_region
      %s148 = sand.u32 1, 7
      %p149 = scmp.eq.s32.totalorder %s148, 0
      %p150 = pneg %p149
      // Predicated region
      $region81: #{skipgram_loss.1} parent=68 // pred_check
        _
      $region82: #{skipgram_loss.1} parent=68 // pred_check_branch
        %152 = sbr.rel (%p149) target = $region84
      $region83: #{skipgram_loss.1} parent=68 // pred_region
        %s153 = sand.u32 1, 7
        %s154 = ssub.s32 1, %s153
        %s155 = scalar_lea.vmem %s127, %s154
        %s156 = ssub.s32 1, %s153
        %s157 = scalar_lea.vmem [#allocation4], %s156
        %s158 = sshllo.u32 0, %s153
        loop: start=0, step=1, limit=1
        $region85: #{skipgram_loss.1} parent=83 // loop_pre_header
          _
        $region86: #{skipgram_loss.1} parent=83 // loop_header
          %s160 = sphi 0, %s164
          %p161 = scmp.ge.s32.totalorder %s160, 1
          %s165 = sphi %s155, %s155
          %s166 = sphi %s157, %s157
        $region87: #{skipgram_loss.1} parent=83 // loop_header_branch
          %163 = sbr.rel (%p161) target = $region91
        $region88: #{skipgram_loss.1} parent=83 // loop_body
          %v167 = vld [vmem:[%s165] sm:%s158]
          %168 = vst [vmem:[%s166] sm:%s158] %v167
        $region89: #{skipgram_loss.1} parent=83 // loop_footer
          %s164 = sadd.s32 1, %s160
        $region90: #{skipgram_loss.1} parent=83 // loop_footer_branch
          %159 = sbr.rel target = $region86
        $region91: #{skipgram_loss.1} parent=83 // loop_exit
          _
      $region84: #{skipgram_loss.1} parent=68 // pred_fallthru
        _
    $region69: #{skipgram_loss.1} parent=1 // pred_fallthru
      _
    // Predicated region
    $region70: #{skipgram_loss.1} parent=1 // pred_check
      %p134 = pneg %p130
    $region71: #{skipgram_loss.1} parent=1 // pred_check_branch
      %136 = sbr.rel (%p134) target = $region73
    $region72: #{skipgram_loss.1} parent=1 // pred_region
      %s137 = sshllo.u32 0, 1
      loop: start=0, step=1, limit=1
      $region74: #{skipgram_loss.1} parent=72 // loop_pre_header
        _
      $region75: #{skipgram_loss.1} parent=72 // loop_header
        %s139 = sphi 0, %s143
        %p140 = scmp.ge.s32.totalorder %s139, 1
        %s144 = sphi %s127, %s127
        %s145 = sphi [#allocation4], [#allocation4]
      $region76: #{skipgram_loss.1} parent=72 // loop_header_branch
        %142 = sbr.rel (%p140) target = $region80
      $region77: #{skipgram_loss.1} parent=72 // loop_body
        %v146 = vld [vmem:[%s144] sm:%s137]
        %147 = vst [vmem:[%s145] sm:%s137] %v146
      $region78: #{skipgram_loss.1} parent=72 // loop_footer
        %s143 = sadd.s32 1, %s139
      $region79: #{skipgram_loss.1} parent=72 // loop_footer_branch
        %138 = sbr.rel target = $region75
      $region80: #{skipgram_loss.1} parent=72 // loop_exit
        _
    $region73: #{skipgram_loss.1} parent=1 // pred_fallthru
      _
    // Predicated region
    $region92: #{skipgram_loss.1} parent=1 // pred_check
      _
    $region93: #{skipgram_loss.1} parent=1 // pred_check_branch
      %171 = sbr.rel (0) target = $region95
    $region94: #{skipgram_loss.1} parent=1 // pred_region
      %172 = vsyncadd %s128, 16
    $region95: #{skipgram_loss.1} parent=1 // pred_fallthru
      _
    %s173 = sadd.s32 %s125, 1
    %s174 = sld [smem:[#allocation9 + %s173]]
    %s175 = scalar_lea.vmem %s4, %s174
    %s176 = scalar_lea.vmem [#allocation4], 8
    %p178 = scmp.lt.u32.totalorder 1, 8
    %p179 = pneg %p178
    // Predicated region
    $region96: #{skipgram_loss.1} parent=1 // pred_check
      _
    $region97: #{skipgram_loss.1} parent=1 // pred_check_branch
      %181 = sbr.rel (%p178) target = $region99
    $region98: #{skipgram_loss.1} parent=1 // pred_region
      %s196 = sand.u32 1, 7
      %p197 = scmp.eq.s32.totalorder %s196, 0
      %p198 = pneg %p197
      // Predicated region
      $region111: #{skipgram_loss.1} parent=98 // pred_check
        _
      $region112: #{skipgram_loss.1} parent=98 // pred_check_branch
        %200 = sbr.rel (%p197) target = $region114
      $region113: #{skipgram_loss.1} parent=98 // pred_region
        %s201 = sand.u32 1, 7
        %s202 = ssub.s32 1, %s201
        %s203 = scalar_lea.vmem %s175, %s202
        %s204 = ssub.s32 1, %s201
        %s205 = scalar_lea.vmem %s176, %s204 [#allocation4]
        %s206 = sshllo.u32 0, %s201
        loop: start=0, step=1, limit=1
        $region115: #{skipgram_loss.1} parent=113 // loop_pre_header
          _
        $region116: #{skipgram_loss.1} parent=113 // loop_header
          %s208 = sphi 0, %s212
          %p209 = scmp.ge.s32.totalorder %s208, 1
          %s213 = sphi %s203, %s203
          %s214 = sphi %s205, %s205
        $region117: #{skipgram_loss.1} parent=113 // loop_header_branch
          %211 = sbr.rel (%p209) target = $region121
        $region118: #{skipgram_loss.1} parent=113 // loop_body
          %v215 = vld [vmem:[%s213] sm:%s206]
          %216 = vst [vmem:[%s214] sm:%s206] %v215
        $region119: #{skipgram_loss.1} parent=113 // loop_footer
          %s212 = sadd.s32 1, %s208
        $region120: #{skipgram_loss.1} parent=113 // loop_footer_branch
          %207 = sbr.rel target = $region116
        $region121: #{skipgram_loss.1} parent=113 // loop_exit
          _
      $region114: #{skipgram_loss.1} parent=98 // pred_fallthru
        _
    $region99: #{skipgram_loss.1} parent=1 // pred_fallthru
      _
    // Predicated region
    $region100: #{skipgram_loss.1} parent=1 // pred_check
      %p182 = pneg %p178
    $region101: #{skipgram_loss.1} parent=1 // pred_check_branch
      %184 = sbr.rel (%p182) target = $region103
    $region102: #{skipgram_loss.1} parent=1 // pred_region
      %s185 = sshllo.u32 0, 1
      loop: start=0, step=1, limit=1
      $region104: #{skipgram_loss.1} parent=102 // loop_pre_header
        _
      $region105: #{skipgram_loss.1} parent=102 // loop_header
        %s187 = sphi 0, %s191
        %p188 = scmp.ge.s32.totalorder %s187, 1
        %s192 = sphi %s175, %s175
        %s193 = sphi %s176, %s176
      $region106: #{skipgram_loss.1} parent=102 // loop_header_branch
        %190 = sbr.rel (%p188) target = $region110
      $region107: #{skipgram_loss.1} parent=102 // loop_body
        %v194 = vld [vmem:[%s192] sm:%s185]
        %195 = vst [vmem:[%s193] sm:%s185] %v194
      $region108: #{skipgram_loss.1} parent=102 // loop_footer
        %s191 = sadd.s32 1, %s187
      $region109: #{skipgram_loss.1} parent=102 // loop_footer_branch
        %186 = sbr.rel target = $region105
      $region110: #{skipgram_loss.1} parent=102 // loop_exit
        _
    $region103: #{skipgram_loss.1} parent=1 // pred_fallthru
      _
    // Predicated region
    $region122: #{skipgram_loss.1} parent=1 // pred_check
      _
    $region123: #{skipgram_loss.1} parent=1 // pred_check_branch
      %219 = sbr.rel (0) target = $region125
    $region124: #{skipgram_loss.1} parent=1 // pred_region
      %220 = vsyncadd %s128, 16
    $region125: #{skipgram_loss.1} parent=1 // pred_fallthru
      _
    %s221 = sadd.s32 %s125, 2
    %s222 = sld [smem:[#allocation9 + %s221]]
    %s223 = scalar_lea.vmem %s4, %s222
    %s224 = scalar_lea.vmem [#allocation4], 16
    %p226 = scmp.lt.u32.totalorder 1, 8
    %p227 = pneg %p226
    // Predicated region
    $region126: #{skipgram_loss.1} parent=1 // pred_check
      _
    $region127: #{skipgram_loss.1} parent=1 // pred_check_branch
      %229 = sbr.rel (%p226) target = $region129
    $region128: #{skipgram_loss.1} parent=1 // pred_region
      %s244 = sand.u32 1, 7
      %p245 = scmp.eq.s32.totalorder %s244, 0
      %p246 = pneg %p245
      // Predicated region
      $region141: #{skipgram_loss.1} parent=128 // pred_check
        _
      $region142: #{skipgram_loss.1} parent=128 // pred_check_branch
        %248 = sbr.rel (%p245) target = $region144
      $region143: #{skipgram_loss.1} parent=128 // pred_region
        %s249 = sand.u32 1, 7
        %s250 = ssub.s32 1, %s249
        %s251 = scalar_lea.vmem %s223, %s250
        %s252 = ssub.s32 1, %s249
        %s253 = scalar_lea.vmem %s224, %s252 [#allocation4]
        %s254 = sshllo.u32 0, %s249
        loop: start=0, step=1, limit=1
        $region145: #{skipgram_loss.1} parent=143 // loop_pre_header
          _
        $region146: #{skipgram_loss.1} parent=143 // loop_header
          %s256 = sphi 0, %s260
          %p257 = scmp.ge.s32.totalorder %s256, 1
          %s261 = sphi %s251, %s251
          %s262 = sphi %s253, %s253
        $region147: #{skipgram_loss.1} parent=143 // loop_header_branch
          %259 = sbr.rel (%p257) target = $region151
        $region148: #{skipgram_loss.1} parent=143 // loop_body
          %v263 = vld [vmem:[%s261] sm:%s254]
          %264 = vst [vmem:[%s262] sm:%s254] %v263
        $region149: #{skipgram_loss.1} parent=143 // loop_footer
          %s260 = sadd.s32 1, %s256
        $region150: #{skipgram_loss.1} parent=143 // loop_footer_branch
          %255 = sbr.rel target = $region146
        $region151: #{skipgram_loss.1} parent=143 // loop_exit
          _
      $region144: #{skipgram_loss.1} parent=128 // pred_fallthru
        _
    $region129: #{skipgram_loss.1} parent=1 // pred_fallthru
      _
    // Predicated region
    $region130: #{skipgram_loss.1} parent=1 // pred_check
      %p230 = pneg %p226
    $region131: #{skipgram_loss.1} parent=1 // pred_check_branch
      %232 = sbr.rel (%p230) target = $region133
    $region132: #{skipgram_loss.1} parent=1 // pred_region
      %s233 = sshllo.u32 0, 1
      loop: start=0, step=1, limit=1
      $region134: #{skipgram_loss.1} parent=132 // loop_pre_header
        _
      $region135: #{skipgram_loss.1} parent=132 // loop_header
        %s235 = sphi 0, %s239
        %p236 = scmp.ge.s32.totalorder %s235, 1
        %s240 = sphi %s223, %s223
        %s241 = sphi %s224, %s224
      $region136: #{skipgram_loss.1} parent=132 // loop_header_branch
        %238 = sbr.rel (%p236) target = $region140
      $region137: #{skipgram_loss.1} parent=132 // loop_body
        %v242 = vld [vmem:[%s240] sm:%s233]
        %243 = vst [vmem:[%s241] sm:%s233] %v242
      $region138: #{skipgram_loss.1} parent=132 // loop_footer
        %s239 = sadd.s32 1, %s235
      $region139: #{skipgram_loss.1} parent=132 // loop_footer_branch
        %234 = sbr.rel target = $region135
      $region140: #{skipgram_loss.1} parent=132 // loop_exit
        _
    $region133: #{skipgram_loss.1} parent=1 // pred_fallthru
      _
    // Predicated region
    $region152: #{skipgram_loss.1} parent=1 // pred_check
      _
    $region153: #{skipgram_loss.1} parent=1 // pred_check_branch
      %267 = sbr.rel (0) target = $region155
    $region154: #{skipgram_loss.1} parent=1 // pred_region
      %268 = vsyncadd %s128, 16
    $region155: #{skipgram_loss.1} parent=1 // pred_fallthru
      _
    %s269 = sadd.s32 %s125, 3
    %s270 = sld [smem:[#allocation9 + %s269]]
    %s271 = scalar_lea.vmem %s4, %s270
    %s272 = scalar_lea.vmem [#allocation4], 24
    %p274 = scmp.lt.u32.totalorder 1, 8
    %p275 = pneg %p274
    // Predicated region
    $region156: #{skipgram_loss.1} parent=1 // pred_check
      _
    $region157: #{skipgram_loss.1} parent=1 // pred_check_branch
      %277 = sbr.rel (%p274) target = $region159
    $region158: #{skipgram_loss.1} parent=1 // pred_region
      %s292 = sand.u32 1, 7
      %p293 = scmp.eq.s32.totalorder %s292, 0
      %p294 = pneg %p293
      // Predicated region
      $region171: #{skipgram_loss.1} parent=158 // pred_check
        _
      $region172: #{skipgram_loss.1} parent=158 // pred_check_branch
        %296 = sbr.rel (%p293) target = $region174
      $region173: #{skipgram_loss.1} parent=158 // pred_region
        %s297 = sand.u32 1, 7
        %s298 = ssub.s32 1, %s297
        %s299 = scalar_lea.vmem %s271, %s298
        %s300 = ssub.s32 1, %s297
        %s301 = scalar_lea.vmem %s272, %s300 [#allocation4]
        %s302 = sshllo.u32 0, %s297
        loop: start=0, step=1, limit=1
        $region175: #{skipgram_loss.1} parent=173 // loop_pre_header
          _
        $region176: #{skipgram_loss.1} parent=173 // loop_header
          %s304 = sphi 0, %s308
          %p305 = scmp.ge.s32.totalorder %s304, 1
          %s309 = sphi %s299, %s299
          %s310 = sphi %s301, %s301
        $region177: #{skipgram_loss.1} parent=173 // loop_header_branch
          %307 = sbr.rel (%p305) target = $region181
        $region178: #{skipgram_loss.1} parent=173 // loop_body
          %v311 = vld [vmem:[%s309] sm:%s302]
          %312 = vst [vmem:[%s310] sm:%s302] %v311
        $region179: #{skipgram_loss.1} parent=173 // loop_footer
          %s308 = sadd.s32 1, %s304
        $region180: #{skipgram_loss.1} parent=173 // loop_footer_branch
          %303 = sbr.rel target = $region176
        $region181: #{skipgram_loss.1} parent=173 // loop_exit
          _
      $region174: #{skipgram_loss.1} parent=158 // pred_fallthru
        _
    $region159: #{skipgram_loss.1} parent=1 // pred_fallthru
      _
    // Predicated region
    $region160: #{skipgram_loss.1} parent=1 // pred_check
      %p278 = pneg %p274
    $region161: #{skipgram_loss.1} parent=1 // pred_check_branch
      %280 = sbr.rel (%p278) target = $region163
    $region162: #{skipgram_loss.1} parent=1 // pred_region
      %s281 = sshllo.u32 0, 1
      loop: start=0, step=1, limit=1
      $region164: #{skipgram_loss.1} parent=162 // loop_pre_header
        _
      $region165: #{skipgram_loss.1} parent=162 // loop_header
        %s283 = sphi 0, %s287
        %p284 = scmp.ge.s32.totalorder %s283, 1
        %s288 = sphi %s271, %s271
        %s289 = sphi %s272, %s272
      $region166: #{skipgram_loss.1} parent=162 // loop_header_branch
        %286 = sbr.rel (%p284) target = $region170
      $region167: #{skipgram_loss.1} parent=162 // loop_body
        %v290 = vld [vmem:[%s288] sm:%s281]
        %291 = vst [vmem:[%s289] sm:%s281] %v290
      $region168: #{skipgram_loss.1} parent=162 // loop_footer
        %s287 = sadd.s32 1, %s283
      $region169: #{skipgram_loss.1} parent=162 // loop_footer_branch
        %282 = sbr.rel target = $region165
      $region170: #{skipgram_loss.1} parent=162 // loop_exit
        _
    $region163: #{skipgram_loss.1} parent=1 // pred_fallthru
      _
    // Predicated region
    $region182: #{skipgram_loss.1} parent=1 // pred_check
      _
    $region183: #{skipgram_loss.1} parent=1 // pred_check_branch
      %315 = sbr.rel (0) target = $region185
    $region184: #{skipgram_loss.1} parent=1 // pred_region
      %316 = vsyncadd %s128, 16
    $region185: #{skipgram_loss.1} parent=1 // pred_fallthru
      _
    %s317 = sadd.s32 %s125, 4
    %s318 = sld [smem:[#allocation9 + %s317]]
    %s319 = scalar_lea.vmem %s4, %s318
    %s320 = scalar_lea.vmem [#allocation4], 32
    %p322 = scmp.lt.u32.totalorder 1, 8
    %p323 = pneg %p322
    // Predicated region
    $region186: #{skipgram_loss.1} parent=1 // pred_check
      _
    $region187: #{skipgram_loss.1} parent=1 // pred_check_branch
      %325 = sbr.rel (%p322) target = $region189
    $region188: #{skipgram_loss.1} parent=1 // pred_region
      %s340 = sand.u32 1, 7
      %p341 = scmp.eq.s32.totalorder %s340, 0
      %p342 = pneg %p341
      // Predicated region
      $region201: #{skipgram_loss.1} parent=188 // pred_check
        _
      $region202: #{skipgram_loss.1} parent=188 // pred_check_branch
        %344 = sbr.rel (%p341) target = $region204
      $region203: #{skipgram_loss.1} parent=188 // pred_region
        %s345 = sand.u32 1, 7
        %s346 = ssub.s32 1, %s345
        %s347 = scalar_lea.vmem %s319, %s346
        %s348 = ssub.s32 1, %s345
        %s349 = scalar_lea.vmem %s320, %s348 [#allocation4]
        %s350 = sshllo.u32 0, %s345
        loop: start=0, step=1, limit=1
        $region205: #{skipgram_loss.1} parent=203 // loop_pre_header
          _
        $region206: #{skipgram_loss.1} parent=203 // loop_header
          %s352 = sphi 0, %s356
          %p353 = scmp.ge.s32.totalorder %s352, 1
          %s357 = sphi %s347, %s347
          %s358 = sphi %s349, %s349
        $region207: #{skipgram_loss.1} parent=203 // loop_header_branch
          %355 = sbr.rel (%p353) target = $region211
        $region208: #{skipgram_loss.1} parent=203 // loop_body
          %v359 = vld [vmem:[%s357] sm:%s350]
          %360 = vst [vmem:[%s358] sm:%s350] %v359
        $region209: #{skipgram_loss.1} parent=203 // loop_footer
          %s356 = sadd.s32 1, %s352
        $region210: #{skipgram_loss.1} parent=203 // loop_footer_branch
          %351 = sbr.rel target = $region206
        $region211: #{skipgram_loss.1} parent=203 // loop_exit
          _
      $region204: #{skipgram_loss.1} parent=188 // pred_fallthru
        _
    $region189: #{skipgram_loss.1} parent=1 // pred_fallthru
      _
    // Predicated region
    $region190: #{skipgram_loss.1} parent=1 // pred_check
      %p326 = pneg %p322
    $region191: #{skipgram_loss.1} parent=1 // pred_check_branch
      %328 = sbr.rel (%p326) target = $region193
    $region192: #{skipgram_loss.1} parent=1 // pred_region
      %s329 = sshllo.u32 0, 1
      loop: start=0, step=1, limit=1
      $region194: #{skipgram_loss.1} parent=192 // loop_pre_header
        _
      $region195: #{skipgram_loss.1} parent=192 // loop_header
        %s331 = sphi 0, %s335
        %p332 = scmp.ge.s32.totalorder %s331, 1
        %s336 = sphi %s319, %s319
        %s337 = sphi %s320, %s320
      $region196: #{skipgram_loss.1} parent=192 // loop_header_branch
        %334 = sbr.rel (%p332) target = $region200
      $region197: #{skipgram_loss.1} parent=192 // loop_body
        %v338 = vld [vmem:[%s336] sm:%s329]
        %339 = vst [vmem:[%s337] sm:%s329] %v338
      $region198: #{skipgram_loss.1} parent=192 // loop_footer
        %s335 = sadd.s32 1, %s331
      $region199: #{skipgram_loss.1} parent=192 // loop_footer_branch
        %330 = sbr.rel target = $region195
      $region200: #{skipgram_loss.1} parent=192 // loop_exit
        _
    $region193: #{skipgram_loss.1} parent=1 // pred_fallthru
      _
    // Predicated region
    $region212: #{skipgram_loss.1} parent=1 // pred_check
      _
    $region213: #{skipgram_loss.1} parent=1 // pred_check_branch
      %363 = sbr.rel (0) target = $region215
    $region214: #{skipgram_loss.1} parent=1 // pred_region
      %364 = vsyncadd %s128, 16
    $region215: #{skipgram_loss.1} parent=1 // pred_fallthru
      _
    %s365 = sadd.s32 %s25, 1
    %s366 = sld [smem:[#allocation7 + %s365]]
    %s367 = sld [smem:[#allocation8 + %s365]]
    %s368 = scalar_lea.vmem %s3, %s366
    %s369 = scalar_lea.vmem [#allocation2], 1
    %p371 = scmp.lt.u32.totalorder 1, 8
    %p372 = pneg %p371
    // Predicated region
    $region216: #{skipgram_loss.1} parent=1 // pred_check
      _
    $region217: #{skipgram_loss.1} parent=1 // pred_check_branch
      %374 = sbr.rel (%p371) target = $region219
    $region218: #{skipgram_loss.1} parent=1 // pred_region
      %s389 = sand.u32 1, 7
      %p390 = scmp.eq.s32.totalorder %s389, 0
      %p391 = pneg %p390
      // Predicated region
      $region231: #{skipgram_loss.1} parent=218 // pred_check
        _
      $region232: #{skipgram_loss.1} parent=218 // pred_check_branch
        %393 = sbr.rel (%p390) target = $region234
      $region233: #{skipgram_loss.1} parent=218 // pred_region
        %s394 = sand.u32 1, 7
        %s395 = ssub.s32 1, %s394
        %s396 = scalar_lea.vmem %s368, %s395
        %s397 = ssub.s32 1, %s394
        %s398 = scalar_lea.vmem %s369, %s397 [#allocation2]
        %s399 = sshllo.u32 0, %s394
        loop: start=0, step=1, limit=1
        $region235: #{skipgram_loss.1} parent=233 // loop_pre_header
          _
        $region236: #{skipgram_loss.1} parent=233 // loop_header
          %s401 = sphi 0, %s405
          %p402 = scmp.ge.s32.totalorder %s401, 1
          %s406 = sphi %s396, %s396
          %s407 = sphi %s398, %s398
        $region237: #{skipgram_loss.1} parent=233 // loop_header_branch
          %404 = sbr.rel (%p402) target = $region241
        $region238: #{skipgram_loss.1} parent=233 // loop_body
          %v408 = vld [vmem:[%s406] sm:%s399]
          %409 = vst [vmem:[%s407] sm:%s399] %v408
        $region239: #{skipgram_loss.1} parent=233 // loop_footer
          %s405 = sadd.s32 1, %s401
        $region240: #{skipgram_loss.1} parent=233 // loop_footer_branch
          %400 = sbr.rel target = $region236
        $region241: #{skipgram_loss.1} parent=233 // loop_exit
          _
      $region234: #{skipgram_loss.1} parent=218 // pred_fallthru
        _
    $region219: #{skipgram_loss.1} parent=1 // pred_fallthru
      _
    // Predicated region
    $region220: #{skipgram_loss.1} parent=1 // pred_check
      %p375 = pneg %p371
    $region221: #{skipgram_loss.1} parent=1 // pred_check_branch
      %377 = sbr.rel (%p375) target = $region223
    $region222: #{skipgram_loss.1} parent=1 // pred_region
      %s378 = sshllo.u32 0, 1
      loop: start=0, step=1, limit=1
      $region224: #{skipgram_loss.1} parent=222 // loop_pre_header
        _
      $region225: #{skipgram_loss.1} parent=222 // loop_header
        %s380 = sphi 0, %s384
        %p381 = scmp.ge.s32.totalorder %s380, 1
        %s385 = sphi %s368, %s368
        %s386 = sphi %s369, %s369
      $region226: #{skipgram_loss.1} parent=222 // loop_header_branch
        %383 = sbr.rel (%p381) target = $region230
      $region227: #{skipgram_loss.1} parent=222 // loop_body
        %v387 = vld [vmem:[%s385] sm:%s378]
        %388 = vst [vmem:[%s386] sm:%s378] %v387
      $region228: #{skipgram_loss.1} parent=222 // loop_footer
        %s384 = sadd.s32 1, %s380
      $region229: #{skipgram_loss.1} parent=222 // loop_footer_branch
        %379 = sbr.rel target = $region225
      $region230: #{skipgram_loss.1} parent=222 // loop_exit
        _
    $region223: #{skipgram_loss.1} parent=1 // pred_fallthru
      _
    // Predicated region
    $region242: #{skipgram_loss.1} parent=1 // pred_check
      _
    $region243: #{skipgram_loss.1} parent=1 // pred_check_branch
      %412 = sbr.rel (0) target = $region245
    $region244: #{skipgram_loss.1} parent=1 // pred_region
      %413 = vsyncadd [#allocation5], 16
    $region245: #{skipgram_loss.1} parent=1 // pred_fallthru
      _
    %s414 = scalar_lea.vmem %s4, %s367
    %s415 = scalar_lea.vmem [#allocation3], 1
    %p417 = scmp.lt.u32.totalorder 1, 8
    %p418 = pneg %p417
    // Predicated region
    $region246: #{skipgram_loss.1} parent=1 // pred_check
      _
    $region247: #{skipgram_loss.1} parent=1 // pred_check_branch
      %420 = sbr.rel (%p417) target = $region249
    $region248: #{skipgram_loss.1} parent=1 // pred_region
      %s435 = sand.u32 1, 7
      %p436 = scmp.eq.s32.totalorder %s435, 0
      %p437 = pneg %p436
      // Predicated region
      $region261: #{skipgram_loss.1} parent=248 // pred_check
        _
      $region262: #{skipgram_loss.1} parent=248 // pred_check_branch
        %439 = sbr.rel (%p436) target = $region264
      $region263: #{skipgram_loss.1} parent=248 // pred_region
        %s440 = sand.u32 1, 7
        %s441 = ssub.s32 1, %s440
        %s442 = scalar_lea.vmem %s414, %s441
        %s443 = ssub.s32 1, %s440
        %s444 = scalar_lea.vmem %s415, %s443 [#allocation3]
        %s445 = sshllo.u32 0, %s440
        loop: start=0, step=1, limit=1
        $region265: #{skipgram_loss.1} parent=263 // loop_pre_header
          _
        $region266: #{skipgram_loss.1} parent=263 // loop_header
          %s447 = sphi 0, %s451
          %p448 = scmp.ge.s32.totalorder %s447, 1
          %s452 = sphi %s442, %s442
          %s453 = sphi %s444, %s444
        $region267: #{skipgram_loss.1} parent=263 // loop_header_branch
          %450 = sbr.rel (%p448) target = $region271
        $region268: #{skipgram_loss.1} parent=263 // loop_body
          %v454 = vld [vmem:[%s452] sm:%s445]
          %455 = vst [vmem:[%s453] sm:%s445] %v454
        $region269: #{skipgram_loss.1} parent=263 // loop_footer
          %s451 = sadd.s32 1, %s447
        $region270: #{skipgram_loss.1} parent=263 // loop_footer_branch
          %446 = sbr.rel target = $region266
        $region271: #{skipgram_loss.1} parent=263 // loop_exit
          _
      $region264: #{skipgram_loss.1} parent=248 // pred_fallthru
        _
    $region249: #{skipgram_loss.1} parent=1 // pred_fallthru
      _
    // Predicated region
    $region250: #{skipgram_loss.1} parent=1 // pred_check
      %p421 = pneg %p417
    $region251: #{skipgram_loss.1} parent=1 // pred_check_branch
      %423 = sbr.rel (%p421) target = $region253
    $region252: #{skipgram_loss.1} parent=1 // pred_region
      %s424 = sshllo.u32 0, 1
      loop: start=0, step=1, limit=1
      $region254: #{skipgram_loss.1} parent=252 // loop_pre_header
        _
      $region255: #{skipgram_loss.1} parent=252 // loop_header
        %s426 = sphi 0, %s430
        %p427 = scmp.ge.s32.totalorder %s426, 1
        %s431 = sphi %s414, %s414
        %s432 = sphi %s415, %s415
      $region256: #{skipgram_loss.1} parent=252 // loop_header_branch
        %429 = sbr.rel (%p427) target = $region260
      $region257: #{skipgram_loss.1} parent=252 // loop_body
        %v433 = vld [vmem:[%s431] sm:%s424]
        %434 = vst [vmem:[%s432] sm:%s424] %v433
      $region258: #{skipgram_loss.1} parent=252 // loop_footer
        %s430 = sadd.s32 1, %s426
      $region259: #{skipgram_loss.1} parent=252 // loop_footer_branch
        %425 = sbr.rel target = $region255
      $region260: #{skipgram_loss.1} parent=252 // loop_exit
        _
    $region253: #{skipgram_loss.1} parent=1 // pred_fallthru
      _
    // Predicated region
    $region272: #{skipgram_loss.1} parent=1 // pred_check
      _
    $region273: #{skipgram_loss.1} parent=1 // pred_check_branch
      %458 = sbr.rel (0) target = $region275
    $region274: #{skipgram_loss.1} parent=1 // pred_region
      %459 = vsyncadd %s80, 16
    $region275: #{skipgram_loss.1} parent=1 // pred_fallthru
      _
    %s460 = smul.u32 %s365, 5
    %s461 = sld [smem:[#allocation9 + %s460]]
    %s462 = scalar_lea.vmem %s4, %s461
    %s463 = scalar_lea.vmem [#allocation4], 1
    %p465 = scmp.lt.u32.totalorder 1, 8
    %p466 = pneg %p465
    // Predicated region
    $region276: #{skipgram_loss.1} parent=1 // pred_check
      _
    $region277: #{skipgram_loss.1} parent=1 // pred_check_branch
      %468 = sbr.rel (%p465) target = $region279
    $region278: #{skipgram_loss.1} parent=1 // pred_region
      %s483 = sand.u32 1, 7
      %p484 = scmp.eq.s32.totalorder %s483, 0
      %p485 = pneg %p484
      // Predicated region
      $region291: #{skipgram_loss.1} parent=278 // pred_check
        _
      $region292: #{skipgram_loss.1} parent=278 // pred_check_branch
        %487 = sbr.rel (%p484) target = $region294
      $region293: #{skipgram_loss.1} parent=278 // pred_region
        %s488 = sand.u32 1, 7
        %s489 = ssub.s32 1, %s488
        %s490 = scalar_lea.vmem %s462, %s489
        %s491 = ssub.s32 1, %s488
        %s492 = scalar_lea.vmem %s463, %s491 [#allocation4]
        %s493 = sshllo.u32 0, %s488
        loop: start=0, step=1, limit=1
        $region295: #{skipgram_loss.1} parent=293 // loop_pre_header
          _
        $region296: #{skipgram_loss.1} parent=293 // loop_header
          %s495 = sphi 0, %s499
          %p496 = scmp.ge.s32.totalorder %s495, 1
          %s500 = sphi %s490, %s490
          %s501 = sphi %s492, %s492
        $region297: #{skipgram_loss.1} parent=293 // loop_header_branch
          %498 = sbr.rel (%p496) target = $region301
        $region298: #{skipgram_loss.1} parent=293 // loop_body
          %v502 = vld [vmem:[%s500] sm:%s493]
          %503 = vst [vmem:[%s501] sm:%s493] %v502
        $region299: #{skipgram_loss.1} parent=293 // loop_footer
          %s499 = sadd.s32 1, %s495
        $region300: #{skipgram_loss.1} parent=293 // loop_footer_branch
          %494 = sbr.rel target = $region296
        $region301: #{skipgram_loss.1} parent=293 // loop_exit
          _
      $region294: #{skipgram_loss.1} parent=278 // pred_fallthru
        _
    $region279: #{skipgram_loss.1} parent=1 // pred_fallthru
      _
    // Predicated region
    $region280: #{skipgram_loss.1} parent=1 // pred_check
      %p469 = pneg %p465
    $region281: #{skipgram_loss.1} parent=1 // pred_check_branch
      %471 = sbr.rel (%p469) target = $region283
    $region282: #{skipgram_loss.1} parent=1 // pred_region
      %s472 = sshllo.u32 0, 1
      loop: start=0, step=1, limit=1
      $region284: #{skipgram_loss.1} parent=282 // loop_pre_header
        _
      $region285: #{skipgram_loss.1} parent=282 // loop_header
        %s474 = sphi 0, %s478
        %p475 = scmp.ge.s32.totalorder %s474, 1
        %s479 = sphi %s462, %s462
        %s480 = sphi %s463, %s463
      $region286: #{skipgram_loss.1} parent=282 // loop_header_branch
        %477 = sbr.rel (%p475) target = $region290
      $region287: #{skipgram_loss.1} parent=282 // loop_body
        %v481 = vld [vmem:[%s479] sm:%s472]
        %482 = vst [vmem:[%s480] sm:%s472] %v481
      $region288: #{skipgram_loss.1} parent=282 // loop_footer
        %s478 = sadd.s32 1, %s474
      $region289: #{skipgram_loss.1} parent=282 // loop_footer_branch
        %473 = sbr.rel target = $region285
      $region290: #{skipgram_loss.1} parent=282 // loop_exit
        _
    $region283: #{skipgram_loss.1} parent=1 // pred_fallthru
      _
    // Predicated region
    $region302: #{skipgram_loss.1} parent=1 // pred_check
      _
    $region303: #{skipgram_loss.1} parent=1 // pred_check_branch
      %506 = sbr.rel (0) target = $region305
    $region304: #{skipgram_loss.1} parent=1 // pred_region
      %507 = vsyncadd %s128, 16
    $region305: #{skipgram_loss.1} parent=1 // pred_fallthru
      _
    %s508 = sadd.s32 %s460, 1
    %s509 = sld [smem:[#allocation9 + %s508]]
    %s510 = scalar_lea.vmem %s4, %s509
    %s511 = scalar_lea.vmem [#allocation4], 9
    %p513 = scmp.lt.u32.totalorder 1, 8
    %p514 = pneg %p513
    // Predicated region
    $region306: #{skipgram_loss.1} parent=1 // pred_check
      _
    $region307: #{skipgram_loss.1} parent=1 // pred_check_branch
      %516 = sbr.rel (%p513) target = $region309
    $region308: #{skipgram_loss.1} parent=1 // pred_region
      %s531 = sand.u32 1, 7
      %p532 = scmp.eq.s32.totalorder %s531, 0
      %p533 = pneg %p532
      // Predicated region
      $region321: #{skipgram_loss.1} parent=308 // pred_check
        _
      $region322: #{skipgram_loss.1} parent=308 // pred_check_branch
        %535 = sbr.rel (%p532) target = $region324
      $region323: #{skipgram_loss.1} parent=308 // pred_region
        %s536 = sand.u32 1, 7
        %s537 = ssub.s32 1, %s536
        %s538 = scalar_lea.vmem %s510, %s537
        %s539 = ssub.s32 1, %s536
        %s540 = scalar_lea.vmem %s511, %s539 [#allocation4]
        %s541 = sshllo.u32 0, %s536
        loop: start=0, step=1, limit=1
        $region325: #{skipgram_loss.1} parent=323 // loop_pre_header
          _
        $region326: #{skipgram_loss.1} parent=323 // loop_header
          %s543 = sphi 0, %s547
          %p544 = scmp.ge.s32.totalorder %s543, 1
          %s548 = sphi %s538, %s538
          %s549 = sphi %s540, %s540
        $region327: #{skipgram_loss.1} parent=323 // loop_header_branch
          %546 = sbr.rel (%p544) target = $region331
        $region328: #{skipgram_loss.1} parent=323 // loop_body
          %v550 = vld [vmem:[%s548] sm:%s541]
          %551 = vst [vmem:[%s549] sm:%s541] %v550
        $region329: #{skipgram_loss.1} parent=323 // loop_footer
          %s547 = sadd.s32 1, %s543
        $region330: #{skipgram_loss.1} parent=323 // loop_footer_branch
          %542 = sbr.rel target = $region326
        $region331: #{skipgram_loss.1} parent=323 // loop_exit
          _
      $region324: #{skipgram_loss.1} parent=308 // pred_fallthru
        _
    $region309: #{skipgram_loss.1} parent=1 // pred_fallthru
      _
    // Predicated region
    $region310: #{skipgram_loss.1} parent=1 // pred_check
      %p517 = pneg %p513
    $region311: #{skipgram_loss.1} parent=1 // pred_check_branch
      %519 = sbr.rel (%p517) target = $region313
    $region312: #{skipgram_loss.1} parent=1 // pred_region
      %s520 = sshllo.u32 0, 1
      loop: start=0, step=1, limit=1
      $region314: #{skipgram_loss.1} parent=312 // loop_pre_header
        _
      $region315: #{skipgram_loss.1} parent=312 // loop_header
        %s522 = sphi 0, %s526
        %p523 = scmp.ge.s32.totalorder %s522, 1
        %s527 = sphi %s510, %s510
        %s528 = sphi %s511, %s511
      $region316: #{skipgram_loss.1} parent=312 // loop_header_branch
        %525 = sbr.rel (%p523) target = $region320
      $region317: #{skipgram_loss.1} parent=312 // loop_body
        %v529 = vld [vmem:[%s527] sm:%s520]
        %530 = vst [vmem:[%s528] sm:%s520] %v529
      $region318: #{skipgram_loss.1} parent=312 // loop_footer
        %s526 = sadd.s32 1, %s522
      $region319: #{skipgram_loss.1} parent=312 // loop_footer_branch
        %521 = sbr.rel target = $region315
      $region320: #{skipgram_loss.1} parent=312 // loop_exit
        _
    $region313: #{skipgram_loss.1} parent=1 // pred_fallthru
      _
    // Predicated region
    $region332: #{skipgram_loss.1} parent=1 // pred_check
      _
    $region333: #{skipgram_loss.1} parent=1 // pred_check_branch
      %554 = sbr.rel (0) target = $region335
    $region334: #{skipgram_loss.1} parent=1 // pred_region
      %555 = vsyncadd %s128, 16
    $region335: #{skipgram_loss.1} parent=1 // pred_fallthru
      _
    %s556 = sadd.s32 %s460, 2
    %s557 = sld [smem:[#allocation9 + %s556]]
    %s558 = scalar_lea.vmem %s4, %s557
    %s559 = scalar_lea.vmem [#allocation4], 17
    %p561 = scmp.lt.u32.totalorder 1, 8
    %p562 = pneg %p561
    // Predicated region
    $region336: #{skipgram_loss.1} parent=1 // pred_check
      _
    $region337: #{skipgram_loss.1} parent=1 // pred_check_branch
      %564 = sbr.rel (%p561) target = $region339
    $region338: #{skipgram_loss.1} parent=1 // pred_region
      %s579 = sand.u32 1, 7
      %p580 = scmp.eq.s32.totalorder %s579, 0
      %p581 = pneg %p580
      // Predicated region
      $region351: #{skipgram_loss.1} parent=338 // pred_check
        _
      $region352: #{skipgram_loss.1} parent=338 // pred_check_branch
        %583 = sbr.rel (%p580) target = $region354
      $region353: #{skipgram_loss.1} parent=338 // pred_region
        %s584 = sand.u32 1, 7
        %s585 = ssub.s32 1, %s584
        %s586 = scalar_lea.vmem %s558, %s585
        %s587 = ssub.s32 1, %s584
        %s588 = scalar_lea.vmem %s559, %s587 [#allocation4]
        %s589 = sshllo.u32 0, %s584
        loop: start=0, step=1, limit=1
        $region355: #{skipgram_loss.1} parent=353 // loop_pre_header
          _
        $region356: #{skipgram_loss.1} parent=353 // loop_header
          %s591 = sphi 0, %s595
          %p592 = scmp.ge.s32.totalorder %s591, 1
          %s596 = sphi %s586, %s586
          %s597 = sphi %s588, %s588
        $region357: #{skipgram_loss.1} parent=353 // loop_header_branch
          %594 = sbr.rel (%p592) target = $region361
        $region358: #{skipgram_loss.1} parent=353 // loop_body
          %v598 = vld [vmem:[%s596] sm:%s589]
          %599 = vst [vmem:[%s597] sm:%s589] %v598
        $region359: #{skipgram_loss.1} parent=353 // loop_footer
          %s595 = sadd.s32 1, %s591
        $region360: #{skipgram_loss.1} parent=353 // loop_footer_branch
          %590 = sbr.rel target = $region356
        $region361: #{skipgram_loss.1} parent=353 // loop_exit
          _
      $region354: #{skipgram_loss.1} parent=338 // pred_fallthru
        _
    $region339: #{skipgram_loss.1} parent=1 // pred_fallthru
      _
    // Predicated region
    $region340: #{skipgram_loss.1} parent=1 // pred_check
      %p565 = pneg %p561
    $region341: #{skipgram_loss.1} parent=1 // pred_check_branch
      %567 = sbr.rel (%p565) target = $region343
    $region342: #{skipgram_loss.1} parent=1 // pred_region
      %s568 = sshllo.u32 0, 1
      loop: start=0, step=1, limit=1
      $region344: #{skipgram_loss.1} parent=342 // loop_pre_header
        _
      $region345: #{skipgram_loss.1} parent=342 // loop_header
        %s570 = sphi 0, %s574
        %p571 = scmp.ge.s32.totalorder %s570, 1
        %s575 = sphi %s558, %s558
        %s576 = sphi %s559, %s559
      $region346: #{skipgram_loss.1} parent=342 // loop_header_branch
        %573 = sbr.rel (%p571) target = $region350
      $region347: #{skipgram_loss.1} parent=342 // loop_body
        %v577 = vld [vmem:[%s575] sm:%s568]
        %578 = vst [vmem:[%s576] sm:%s568] %v577
      $region348: #{skipgram_loss.1} parent=342 // loop_footer
        %s574 = sadd.s32 1, %s570
      $region349: #{skipgram_loss.1} parent=342 // loop_footer_branch
        %569 = sbr.rel target = $region345
      $region350: #{skipgram_loss.1} parent=342 // loop_exit
        _
    $region343: #{skipgram_loss.1} parent=1 // pred_fallthru
      _
    // Predicated region
    $region362: #{skipgram_loss.1} parent=1 // pred_check
      _
    $region363: #{skipgram_loss.1} parent=1 // pred_check_branch
      %602 = sbr.rel (0) target = $region365
    $region364: #{skipgram_loss.1} parent=1 // pred_region
      %603 = vsyncadd %s128, 16
    $region365: #{skipgram_loss.1} parent=1 // pred_fallthru
      _
    %s604 = sadd.s32 %s460, 3
    %s605 = sld [smem:[#allocation9 + %s604]]
    %s606 = scalar_lea.vmem %s4, %s605
    %s607 = scalar_lea.vmem [#allocation4], 25
    %p609 = scmp.lt.u32.totalorder 1, 8
    %p610 = pneg %p609
    // Predicated region
    $region366: #{skipgram_loss.1} parent=1 // pred_check
      _
    $region367: #{skipgram_loss.1} parent=1 // pred_check_branch
      %612 = sbr.rel (%p609) target = $region369
    $region368: #{skipgram_loss.1} parent=1 // pred_region
      %s627 = sand.u32 1, 7
      %p628 = scmp.eq.s32.totalorder %s627, 0
      %p629 = pneg %p628
      // Predicated region
      $region381: #{skipgram_loss.1} parent=368 // pred_check
        _
      $region382: #{skipgram_loss.1} parent=368 // pred_check_branch
        %631 = sbr.rel (%p628) target = $region384
      $region383: #{skipgram_loss.1} parent=368 // pred_region
        %s632 = sand.u32 1, 7
        %s633 = ssub.s32 1, %s632
        %s634 = scalar_lea.vmem %s606, %s633
        %s635 = ssub.s32 1, %s632
        %s636 = scalar_lea.vmem %s607, %s635 [#allocation4]
        %s637 = sshllo.u32 0, %s632
        loop: start=0, step=1, limit=1
        $region385: #{skipgram_loss.1} parent=383 // loop_pre_header
          _
        $region386: #{skipgram_loss.1} parent=383 // loop_header
          %s639 = sphi 0, %s643
          %p640 = scmp.ge.s32.totalorder %s639, 1
          %s644 = sphi %s634, %s634
          %s645 = sphi %s636, %s636
        $region387: #{skipgram_loss.1} parent=383 // loop_header_branch
          %642 = sbr.rel (%p640) target = $region391
        $region388: #{skipgram_loss.1} parent=383 // loop_body
          %v646 = vld [vmem:[%s644] sm:%s637]
          %647 = vst [vmem:[%s645] sm:%s637] %v646
        $region389: #{skipgram_loss.1} parent=383 // loop_footer
          %s643 = sadd.s32 1, %s639
        $region390: #{skipgram_loss.1} parent=383 // loop_footer_branch
          %638 = sbr.rel target = $region386
        $region391: #{skipgram_loss.1} parent=383 // loop_exit
          _
      $region384: #{skipgram_loss.1} parent=368 // pred_fallthru
        _
    $region369: #{skipgram_loss.1} parent=1 // pred_fallthru
      _
    // Predicated region
    $region370: #{skipgram_loss.1} parent=1 // pred_check
      %p613 = pneg %p609
    $region371: #{skipgram_loss.1} parent=1 // pred_check_branch
      %615 = sbr.rel (%p613) target = $region373
    $region372: #{skipgram_loss.1} parent=1 // pred_region
      %s616 = sshllo.u32 0, 1
      loop: start=0, step=1, limit=1
      $region374: #{skipgram_loss.1} parent=372 // loop_pre_header
        _
      $region375: #{skipgram_loss.1} parent=372 // loop_header
        %s618 = sphi 0, %s622
        %p619 = scmp.ge.s32.totalorder %s618, 1
        %s623 = sphi %s606, %s606
        %s624 = sphi %s607, %s607
      $region376: #{skipgram_loss.1} parent=372 // loop_header_branch
        %621 = sbr.rel (%p619) target = $region380
      $region377: #{skipgram_loss.1} parent=372 // loop_body
        %v625 = vld [vmem:[%s623] sm:%s616]
        %626 = vst [vmem:[%s624] sm:%s616] %v625
      $region378: #{skipgram_loss.1} parent=372 // loop_footer
        %s622 = sadd.s32 1, %s618
      $region379: #{skipgram_loss.1} parent=372 // loop_footer_branch
        %617 = sbr.rel target = $region375
      $region380: #{skipgram_loss.1} parent=372 // loop_exit
        _
    $region373: #{skipgram_loss.1} parent=1 // pred_fallthru
      _
    // Predicated region
    $region392: #{skipgram_loss.1} parent=1 // pred_check
      _
    $region393: #{skipgram_loss.1} parent=1 // pred_check_branch
      %650 = sbr.rel (0) target = $region395
    $region394: #{skipgram_loss.1} parent=1 // pred_region
      %651 = vsyncadd %s128, 16
    $region395: #{skipgram_loss.1} parent=1 // pred_fallthru
      _
    %s652 = sadd.s32 %s460, 4
    %s653 = sld [smem:[#allocation9 + %s652]]
    %s654 = scalar_lea.vmem %s4, %s653
    %s655 = scalar_lea.vmem [#allocation4], 33
    %p657 = scmp.lt.u32.totalorder 1, 8
    %p658 = pneg %p657
    // Predicated region
    $region396: #{skipgram_loss.1} parent=1 // pred_check
      _
    $region397: #{skipgram_loss.1} parent=1 // pred_check_branch
      %660 = sbr.rel (%p657) target = $region399
    $region398: #{skipgram_loss.1} parent=1 // pred_region
      %s675 = sand.u32 1, 7
      %p676 = scmp.eq.s32.totalorder %s675, 0
      %p677 = pneg %p676
      // Predicated region
      $region411: #{skipgram_loss.1} parent=398 // pred_check
        _
      $region412: #{skipgram_loss.1} parent=398 // pred_check_branch
        %679 = sbr.rel (%p676) target = $region414
      $region413: #{skipgram_loss.1} parent=398 // pred_region
        %s680 = sand.u32 1, 7
        %s681 = ssub.s32 1, %s680
        %s682 = scalar_lea.vmem %s654, %s681
        %s683 = ssub.s32 1, %s680
        %s684 = scalar_lea.vmem %s655, %s683 [#allocation4]
        %s685 = sshllo.u32 0, %s680
        loop: start=0, step=1, limit=1
        $region415: #{skipgram_loss.1} parent=413 // loop_pre_header
          _
        $region416: #{skipgram_loss.1} parent=413 // loop_header
          %s687 = sphi 0, %s691
          %p688 = scmp.ge.s32.totalorder %s687, 1
          %s692 = sphi %s682, %s682
          %s693 = sphi %s684, %s684
        $region417: #{skipgram_loss.1} parent=413 // loop_header_branch
          %690 = sbr.rel (%p688) target = $region421
        $region418: #{skipgram_loss.1} parent=413 // loop_body
          %v694 = vld [vmem:[%s692] sm:%s685]
          %695 = vst [vmem:[%s693] sm:%s685] %v694
        $region419: #{skipgram_loss.1} parent=413 // loop_footer
          %s691 = sadd.s32 1, %s687
        $region420: #{skipgram_loss.1} parent=413 // loop_footer_branch
          %686 = sbr.rel target = $region416
        $region421: #{skipgram_loss.1} parent=413 // loop_exit
          _
      $region414: #{skipgram_loss.1} parent=398 // pred_fallthru
        _
    $region399: #{skipgram_loss.1} parent=1 // pred_fallthru
      _
    // Predicated region
    $region400: #{skipgram_loss.1} parent=1 // pred_check
      %p661 = pneg %p657
    $region401: #{skipgram_loss.1} parent=1 // pred_check_branch
      %663 = sbr.rel (%p661) target = $region403
    $region402: #{skipgram_loss.1} parent=1 // pred_region
      %s664 = sshllo.u32 0, 1
      loop: start=0, step=1, limit=1
      $region404: #{skipgram_loss.1} parent=402 // loop_pre_header
        _
      $region405: #{skipgram_loss.1} parent=402 // loop_header
        %s666 = sphi 0, %s670
        %p667 = scmp.ge.s32.totalorder %s666, 1
        %s671 = sphi %s654, %s654
        %s672 = sphi %s655, %s655
      $region406: #{skipgram_loss.1} parent=402 // loop_header_branch
        %669 = sbr.rel (%p667) target = $region410
      $region407: #{skipgram_loss.1} parent=402 // loop_body
        %v673 = vld [vmem:[%s671] sm:%s664]
        %674 = vst [vmem:[%s672] sm:%s664] %v673
      $region408: #{skipgram_loss.1} parent=402 // loop_footer
        %s670 = sadd.s32 1, %s666
      $region409: #{skipgram_loss.1} parent=402 // loop_footer_branch
        %665 = sbr.rel target = $region405
      $region410: #{skipgram_loss.1} parent=402 // loop_exit
        _
    $region403: #{skipgram_loss.1} parent=1 // pred_fallthru
      _
    // Predicated region
    $region422: #{skipgram_loss.1} parent=1 // pred_check
      _
    $region423: #{skipgram_loss.1} parent=1 // pred_check_branch
      %698 = sbr.rel (0) target = $region425
    $region424: #{skipgram_loss.1} parent=1 // pred_region
      %699 = vsyncadd %s128, 16
    $region425: #{skipgram_loss.1} parent=1 // pred_fallthru
      _
    %s700 = sadd.s32 %s25, 2
    %s701 = sld [smem:[#allocation7 + %s700]]
    %s702 = sld [smem:[#allocation8 + %s700]]
    %s703 = scalar_lea.vmem %s3, %s701
    %s704 = scalar_lea.vmem [#allocation2], 2
    %p706 = scmp.lt.u32.totalorder 1, 8
    %p707 = pneg %p706
    // Predicated region
    $region426: #{skipgram_loss.1} parent=1 // pred_check
      _
    $region427: #{skipgram_loss.1} parent=1 // pred_check_branch
      %709 = sbr.rel (%p706) target = $region429
    $region428: #{skipgram_loss.1} parent=1 // pred_region
      %s724 = sand.u32 1, 7
      %p725 = scmp.eq.s32.totalorder %s724, 0
      %p726 = pneg %p725
      // Predicated region
      $region441: #{skipgram_loss.1} parent=428 // pred_check
        _
      $region442: #{skipgram_loss.1} parent=428 // pred_check_branch
        %728 = sbr.rel (%p725) target = $region444
      $region443: #{skipgram_loss.1} parent=428 // pred_region
        %s729 = sand.u32 1, 7
        %s730 = ssub.s32 1, %s729
        %s731 = scalar_lea.vmem %s703, %s730
        %s732 = ssub.s32 1, %s729
        %s733 = scalar_lea.vmem %s704, %s732 [#allocation2]
        %s734 = sshllo.u32 0, %s729
        loop: start=0, step=1, limit=1
        $region445: #{skipgram_loss.1} parent=443 // loop_pre_header
          _
        $region446: #{skipgram_loss.1} parent=443 // loop_header
          %s736 = sphi 0, %s740
          %p737 = scmp.ge.s32.totalorder %s736, 1
          %s741 = sphi %s731, %s731
          %s742 = sphi %s733, %s733
        $region447: #{skipgram_loss.1} parent=443 // loop_header_branch
          %739 = sbr.rel (%p737) target = $region451
        $region448: #{skipgram_loss.1} parent=443 // loop_body
          %v743 = vld [vmem:[%s741] sm:%s734]
          %744 = vst [vmem:[%s742] sm:%s734] %v743
        $region449: #{skipgram_loss.1} parent=443 // loop_footer
          %s740 = sadd.s32 1, %s736
        $region450: #{skipgram_loss.1} parent=443 // loop_footer_branch
          %735 = sbr.rel target = $region446
        $region451: #{skipgram_loss.1} parent=443 // loop_exit
          _
      $region444: #{skipgram_loss.1} parent=428 // pred_fallthru
        _
    $region429: #{skipgram_loss.1} parent=1 // pred_fallthru
      _
    // Predicated region
    $region430: #{skipgram_loss.1} parent=1 // pred_check
      %p710 = pneg %p706
    $region431: #{skipgram_loss.1} parent=1 // pred_check_branch
      %712 = sbr.rel (%p710) target = $region433
    $region432: #{skipgram_loss.1} parent=1 // pred_region
      %s713 = sshllo.u32 0, 1
      loop: start=0, step=1, limit=1
      $region434: #{skipgram_loss.1} parent=432 // loop_pre_header
        _
      $region435: #{skipgram_loss.1} parent=432 // loop_header
        %s715 = sphi 0, %s719
        %p716 = scmp.ge.s32.totalorder %s715, 1
        %s720 = sphi %s703, %s703
        %s721 = sphi %s704, %s704
      $region436: #{skipgram_loss.1} parent=432 // loop_header_branch
        %718 = sbr.rel (%p716) target = $region440
      $region437: #{skipgram_loss.1} parent=432 // loop_body
        %v722 = vld [vmem:[%s720] sm:%s713]
        %723 = vst [vmem:[%s721] sm:%s713] %v722
      $region438: #{skipgram_loss.1} parent=432 // loop_footer
        %s719 = sadd.s32 1, %s715
      $region439: #{skipgram_loss.1} parent=432 // loop_footer_branch
        %714 = sbr.rel target = $region435
      $region440: #{skipgram_loss.1} parent=432 // loop_exit
        _
    $region433: #{skipgram_loss.1} parent=1 // pred_fallthru
      _
    // Predicated region
    $region452: #{skipgram_loss.1} parent=1 // pred_check
      _
    $region453: #{skipgram_loss.1} parent=1 // pred_check_branch
      %747 = sbr.rel (0) target = $region455
    $region454: #{skipgram_loss.1} parent=1 // pred_region
      %748 = vsyncadd [#allocation5], 16
    $region455: #{skipgram_loss.1} parent=1 // pred_fallthru
      _
    %s749 = scalar_lea.vmem %s4, %s702
    %s750 = scalar_lea.vmem [#allocation3], 2
    %p752 = scmp.lt.u32.totalorder 1, 8
    %p753 = pneg %p752
    // Predicated region
    $region456: #{skipgram_loss.1} parent=1 // pred_check
      _
    $region457: #{skipgram_loss.1} parent=1 // pred_check_branch
      %755 = sbr.rel (%p752) target = $region459
    $region458: #{skipgram_loss.1} parent=1 // pred_region
      %s770 = sand.u32 1, 7
      %p771 = scmp.eq.s32.totalorder %s770, 0
      %p772 = pneg %p771
      // Predicated region
      $region471: #{skipgram_loss.1} parent=458 // pred_check
        _
      $region472: #{skipgram_loss.1} parent=458 // pred_check_branch
        %774 = sbr.rel (%p771) target = $region474
      $region473: #{skipgram_loss.1} parent=458 // pred_region
        %s775 = sand.u32 1, 7
        %s776 = ssub.s32 1, %s775
        %s777 = scalar_lea.vmem %s749, %s776
        %s778 = ssub.s32 1, %s775
        %s779 = scalar_lea.vmem %s750, %s778 [#allocation3]
        %s780 = sshllo.u32 0, %s775
        loop: start=0, step=1, limit=1
        $region475: #{skipgram_loss.1} parent=473 // loop_pre_header
          _
        $region476: #{skipgram_loss.1} parent=473 // loop_header
          %s782 = sphi 0, %s786
          %p783 = scmp.ge.s32.totalorder %s782, 1
          %s787 = sphi %s777, %s777
          %s788 = sphi %s779, %s779
        $region477: #{skipgram_loss.1} parent=473 // loop_header_branch
          %785 = sbr.rel (%p783) target = $region481
        $region478: #{skipgram_loss.1} parent=473 // loop_body
          %v789 = vld [vmem:[%s787] sm:%s780]
          %790 = vst [vmem:[%s788] sm:%s780] %v789
        $region479: #{skipgram_loss.1} parent=473 // loop_footer
          %s786 = sadd.s32 1, %s782
        $region480: #{skipgram_loss.1} parent=473 // loop_footer_branch
          %781 = sbr.rel target = $region476
        $region481: #{skipgram_loss.1} parent=473 // loop_exit
          _
      $region474: #{skipgram_loss.1} parent=458 // pred_fallthru
        _
    $region459: #{skipgram_loss.1} parent=1 // pred_fallthru
      _
    // Predicated region
    $region460: #{skipgram_loss.1} parent=1 // pred_check
      %p756 = pneg %p752
    $region461: #{skipgram_loss.1} parent=1 // pred_check_branch
      %758 = sbr.rel (%p756) target = $region463
    $region462: #{skipgram_loss.1} parent=1 // pred_region
      %s759 = sshllo.u32 0, 1
      loop: start=0, step=1, limit=1
      $region464: #{skipgram_loss.1} parent=462 // loop_pre_header
        _
      $region465: #{skipgram_loss.1} parent=462 // loop_header
        %s761 = sphi 0, %s765
        %p762 = scmp.ge.s32.totalorder %s761, 1
        %s766 = sphi %s749, %s749
        %s767 = sphi %s750, %s750
      $region466: #{skipgram_loss.1} parent=462 // loop_header_branch
        %764 = sbr.rel (%p762) target = $region470
      $region467: #{skipgram_loss.1} parent=462 // loop_body
        %v768 = vld [vmem:[%s766] sm:%s759]
        %769 = vst [vmem:[%s767] sm:%s759] %v768
      $region468: #{skipgram_loss.1} parent=462 // loop_footer
        %s765 = sadd.s32 1, %s761
      $region469: #{skipgram_loss.1} parent=462 // loop_footer_branch
        %760 = sbr.rel target = $region465
      $region470: #{skipgram_loss.1} parent=462 // loop_exit
        _
    $region463: #{skipgram_loss.1} parent=1 // pred_fallthru
      _
    // Predicated region
    $region482: #{skipgram_loss.1} parent=1 // pred_check
      _
    $region483: #{skipgram_loss.1} parent=1 // pred_check_branch
      %793 = sbr.rel (0) target = $region485
    $region484: #{skipgram_loss.1} parent=1 // pred_region
      %794 = vsyncadd %s80, 16
    $region485: #{skipgram_loss.1} parent=1 // pred_fallthru
      _
    %s795 = smul.u32 %s700, 5
    %s796 = sld [smem:[#allocation9 + %s795]]
    %s797 = scalar_lea.vmem %s4, %s796
    %s798 = scalar_lea.vmem [#allocation4], 2
    %p800 = scmp.lt.u32.totalorder 1, 8
    %p801 = pneg %p800
    // Predicated region
    $region486: #{skipgram_loss.1} parent=1 // pred_check
      _
    $region487: #{skipgram_loss.1} parent=1 // pred_check_branch
      %803 = sbr.rel (%p800) target = $region489
    $region488: #{skipgram_loss.1} parent=1 // pred_region
      %s818 = sand.u32 1, 7
      %p819 = scmp.eq.s32.totalorder %s818, 0
      %p820 = pneg %p819
      // Predicated region
      $region501: #{skipgram_loss.1} parent=488 // pred_check
        _
      $region502: #{skipgram_loss.1} parent=488 // pred_check_branch
        %822 = sbr.rel (%p819) target = $region504
      $region503: #{skipgram_loss.1} parent=488 // pred_region
        %s823 = sand.u32 1, 7
        %s824 = ssub.s32 1, %s823
        %s825 = scalar_lea.vmem %s797, %s824
        %s826 = ssub.s32 1, %s823
        %s827 = scalar_lea.vmem %s798, %s826 [#allocation4]
        %s828 = sshllo.u32 0, %s823
        loop: start=0, step=1, limit=1
        $region505: #{skipgram_loss.1} parent=503 // loop_pre_header
          _
        $region506: #{skipgram_loss.1} parent=503 // loop_header
          %s830 = sphi 0, %s834
          %p831 = scmp.ge.s32.totalorder %s830, 1
          %s835 = sphi %s825, %s825
          %s836 = sphi %s827, %s827
        $region507: #{skipgram_loss.1} parent=503 // loop_header_branch
          %833 = sbr.rel (%p831) target = $region511
        $region508: #{skipgram_loss.1} parent=503 // loop_body
          %v837 = vld [vmem:[%s835] sm:%s828]
          %838 = vst [vmem:[%s836] sm:%s828] %v837
        $region509: #{skipgram_loss.1} parent=503 // loop_footer
          %s834 = sadd.s32 1, %s830
        $region510: #{skipgram_loss.1} parent=503 // loop_footer_branch
          %829 = sbr.rel target = $region506
        $region511: #{skipgram_loss.1} parent=503 // loop_exit
          _
      $region504: #{skipgram_loss.1} parent=488 // pred_fallthru
        _
    $region489: #{skipgram_loss.1} parent=1 // pred_fallthru
      _
    // Predicated region
    $region490: #{skipgram_loss.1} parent=1 // pred_check
      %p804 = pneg %p800
    $region491: #{skipgram_loss.1} parent=1 // pred_check_branch
      %806 = sbr.rel (%p804) target = $region493
    $region492: #{skipgram_loss.1} parent=1 // pred_region
      %s807 = sshllo.u32 0, 1
      loop: start=0, step=1, limit=1
      $region494: #{skipgram_loss.1} parent=492 // loop_pre_header
        _
      $region495: #{skipgram_loss.1} parent=492 // loop_header
        %s809 = sphi 0, %s813
        %p810 = scmp.ge.s32.totalorder %s809, 1
        %s814 = sphi %s797, %s797
        %s815 = sphi %s798, %s798
      $region496: #{skipgram_loss.1} parent=492 // loop_header_branch
        %812 = sbr.rel (%p810) target = $region500
      $region497: #{skipgram_loss.1} parent=492 // loop_body
        %v816 = vld [vmem:[%s814] sm:%s807]
        %817 = vst [vmem:[%s815] sm:%s807] %v816
      $region498: #{skipgram_loss.1} parent=492 // loop_footer
        %s813 = sadd.s32 1, %s809
      $region499: #{skipgram_loss.1} parent=492 // loop_footer_branch
        %808 = sbr.rel target = $region495
      $region500: #{skipgram_loss.1} parent=492 // loop_exit
        _
    $region493: #{skipgram_loss.1} parent=1 // pred_fallthru
      _
    // Predicated region
    $region512: #{skipgram_loss.1} parent=1 // pred_check
      _
    $region513: #{skipgram_loss.1} parent=1 // pred_check_branch
      %841 = sbr.rel (0) target = $region515
    $region514: #{skipgram_loss.1} parent=1 // pred_region
      %842 = vsyncadd %s128, 16
    $region515: #{skipgram_loss.1} parent=1 // pred_fallthru
      _
    %s843 = sadd.s32 %s795, 1
    %s844 = sld [smem:[#allocation9 + %s843]]
    %s845 = scalar_lea.vmem %s4, %s844
    %s846 = scalar_lea.vmem [#allocation4], 10
    %p848 = scmp.lt.u32.totalorder 1, 8
    %p849 = pneg %p848
    // Predicated region
    $region516: #{skipgram_loss.1} parent=1 // pred_check
      _
    $region517: #{skipgram_loss.1} parent=1 // pred_check_branch
      %851 = sbr.rel (%p848) target = $region519
    $region518: #{skipgram_loss.1} parent=1 // pred_region
      %s866 = sand.u32 1, 7
      %p867 = scmp.eq.s32.totalorder %s866, 0
      %p868 = pneg %p867
      // Predicated region
      $region531: #{skipgram_loss.1} parent=518 // pred_check
        _
      $region532: #{skipgram_loss.1} parent=518 // pred_check_branch
        %870 = sbr.rel (%p867) target = $region534
      $region533: #{skipgram_loss.1} parent=518 // pred_region
        %s871 = sand.u32 1, 7
        %s872 = ssub.s32 1, %s871
        %s873 = scalar_lea.vmem %s845, %s872
        %s874 = ssub.s32 1, %s871
        %s875 = scalar_lea.vmem %s846, %s874 [#allocation4]
        %s876 = sshllo.u32 0, %s871
        loop: start=0, step=1, limit=1
        $region535: #{skipgram_loss.1} parent=533 // loop_pre_header
          _
        $region536: #{skipgram_loss.1} parent=533 // loop_header
          %s878 = sphi 0, %s882
          %p879 = scmp.ge.s32.totalorder %s878, 1
          %s883 = sphi %s873, %s873
          %s884 = sphi %s875, %s875
        $region537: #{skipgram_loss.1} parent=533 // loop_header_branch
          %881 = sbr.rel (%p879) target = $region541
        $region538: #{skipgram_loss.1} parent=533 // loop_body
          %v885 = vld [vmem:[%s883] sm:%s876]
          %886 = vst [vmem:[%s884] sm:%s876] %v885
        $region539: #{skipgram_loss.1} parent=533 // loop_footer
          %s882 = sadd.s32 1, %s878
        $region540: #{skipgram_loss.1} parent=533 // loop_footer_branch
          %877 = sbr.rel target = $region536
        $region541: #{skipgram_loss.1} parent=533 // loop_exit
          _
      $region534: #{skipgram_loss.1} parent=518 // pred_fallthru
        _
    $region519: #{skipgram_loss.1} parent=1 // pred_fallthru
      _
    // Predicated region
    $region520: #{skipgram_loss.1} parent=1 // pred_check
      %p852 = pneg %p848
    $region521: #{skipgram_loss.1} parent=1 // pred_check_branch
      %854 = sbr.rel (%p852) target = $region523
    $region522: #{skipgram_loss.1} parent=1 // pred_region
      %s855 = sshllo.u32 0, 1
      loop: start=0, step=1, limit=1
      $region524: #{skipgram_loss.1} parent=522 // loop_pre_header
        _
      $region525: #{skipgram_loss.1} parent=522 // loop_header
        %s857 = sphi 0, %s861
        %p858 = scmp.ge.s32.totalorder %s857, 1
        %s862 = sphi %s845, %s845
        %s863 = sphi %s846, %s846
      $region526: #{skipgram_loss.1} parent=522 // loop_header_branch
        %860 = sbr.rel (%p858) target = $region530
      $region527: #{skipgram_loss.1} parent=522 // loop_body
        %v864 = vld [vmem:[%s862] sm:%s855]
        %865 = vst [vmem:[%s863] sm:%s855] %v864
      $region528: #{skipgram_loss.1} parent=522 // loop_footer
        %s861 = sadd.s32 1, %s857
      $region529: #{skipgram_loss.1} parent=522 // loop_footer_branch
        %856 = sbr.rel target = $region525
      $region530: #{skipgram_loss.1} parent=522 // loop_exit
        _
    $region523: #{skipgram_loss.1} parent=1 // pred_fallthru
      _
    // Predicated region
    $region542: #{skipgram_loss.1} parent=1 // pred_check
      _
    $region543: #{skipgram_loss.1} parent=1 // pred_check_branch
      %889 = sbr.rel (0) target = $region545
    $region544: #{skipgram_loss.1} parent=1 // pred_region
      %890 = vsyncadd %s128, 16
    $region545: #{skipgram_loss.1} parent=1 // pred_fallthru
      _
    %s891 = sadd.s32 %s795, 2
    %s892 = sld [smem:[#allocation9 + %s891]]
    %s893 = scalar_lea.vmem %s4, %s892
    %s894 = scalar_lea.vmem [#allocation4], 18
    %p896 = scmp.lt.u32.totalorder 1, 8
    %p897 = pneg %p896
    // Predicated region
    $region546: #{skipgram_loss.1} parent=1 // pred_check
      _
    $region547: #{skipgram_loss.1} parent=1 // pred_check_branch
      %899 = sbr.rel (%p896) target = $region549
    $region548: #{skipgram_loss.1} parent=1 // pred_region
      %s914 = sand.u32 1, 7
      %p915 = scmp.eq.s32.totalorder %s914, 0
      %p916 = pneg %p915
      // Predicated region
      $region561: #{skipgram_loss.1} parent=548 // pred_check
        _
      $region562: #{skipgram_loss.1} parent=548 // pred_check_branch
        %918 = sbr.rel (%p915) target = $region564
      $region563: #{skipgram_loss.1} parent=548 // pred_region
        %s919 = sand.u32 1, 7
        %s920 = ssub.s32 1, %s919
        %s921 = scalar_lea.vmem %s893, %s920
        %s922 = ssub.s32 1, %s919
        %s923 = scalar_lea.vmem %s894, %s922 [#allocation4]
        %s924 = sshllo.u32 0, %s919
        loop: start=0, step=1, limit=1
        $region565: #{skipgram_loss.1} parent=563 // loop_pre_header
          _
        $region566: #{skipgram_loss.1} parent=563 // loop_header
          %s926 = sphi 0, %s930
          %p927 = scmp.ge.s32.totalorder %s926, 1
          %s931 = sphi %s921, %s921
          %s932 = sphi %s923, %s923
        $region567: #{skipgram_loss.1} parent=563 // loop_header_branch
          %929 = sbr.rel (%p927) target = $region571
        $region568: #{skipgram_loss.1} parent=563 // loop_body
          %v933 = vld [vmem:[%s931] sm:%s924]
          %934 = vst [vmem:[%s932] sm:%s924] %v933
        $region569: #{skipgram_loss.1} parent=563 // loop_footer
          %s930 = sadd.s32 1, %s926
        $region570: #{skipgram_loss.1} parent=563 // loop_footer_branch
          %925 = sbr.rel target = $region566
        $region571: #{skipgram_loss.1} parent=563 // loop_exit
          _
      $region564: #{skipgram_loss.1} parent=548 // pred_fallthru
        _
    $region549: #{skipgram_loss.1} parent=1 // pred_fallthru
      _
    // Predicated region
    $region550: #{skipgram_loss.1} parent=1 // pred_check
      %p900 = pneg %p896
    $region551: #{skipgram_loss.1} parent=1 // pred_check_branch
      %902 = sbr.rel (%p900) target = $region553
    $region552: #{skipgram_loss.1} parent=1 // pred_region
      %s903 = sshllo.u32 0, 1
      loop: start=0, step=1, limit=1
      $region554: #{skipgram_loss.1} parent=552 // loop_pre_header
        _
      $region555: #{skipgram_loss.1} parent=552 // loop_header
        %s905 = sphi 0, %s909
        %p906 = scmp.ge.s32.totalorder %s905, 1
        %s910 = sphi %s893, %s893
        %s911 = sphi %s894, %s894
      $region556: #{skipgram_loss.1} parent=552 // loop_header_branch
        %908 = sbr.rel (%p906) target = $region560
      $region557: #{skipgram_loss.1} parent=552 // loop_body
        %v912 = vld [vmem:[%s910] sm:%s903]
        %913 = vst [vmem:[%s911] sm:%s903] %v912
      $region558: #{skipgram_loss.1} parent=552 // loop_footer
        %s909 = sadd.s32 1, %s905
      $region559: #{skipgram_loss.1} parent=552 // loop_footer_branch
        %904 = sbr.rel target = $region555
      $region560: #{skipgram_loss.1} parent=552 // loop_exit
        _
    $region553: #{skipgram_loss.1} parent=1 // pred_fallthru
      _
    // Predicated region
    $region572: #{skipgram_loss.1} parent=1 // pred_check
      _
    $region573: #{skipgram_loss.1} parent=1 // pred_check_branch
      %937 = sbr.rel (0) target = $region575
    $region574: #{skipgram_loss.1} parent=1 // pred_region
      %938 = vsyncadd %s128, 16
    $region575: #{skipgram_loss.1} parent=1 // pred_fallthru
      _
    %s939 = sadd.s32 %s795, 3
    %s940 = sld [smem:[#allocation9 + %s939]]
    %s941 = scalar_lea.vmem %s4, %s940
    %s942 = scalar_lea.vmem [#allocation4], 26
    %p944 = scmp.lt.u32.totalorder 1, 8
    %p945 = pneg %p944
    // Predicated region
    $region576: #{skipgram_loss.1} parent=1 // pred_check
      _
    $region577: #{skipgram_loss.1} parent=1 // pred_check_branch
      %947 = sbr.rel (%p944) target = $region579
    $region578: #{skipgram_loss.1} parent=1 // pred_region
      %s962 = sand.u32 1, 7
      %p963 = scmp.eq.s32.totalorder %s962, 0
      %p964 = pneg %p963
      // Predicated region
      $region591: #{skipgram_loss.1} parent=578 // pred_check
        _
      $region592: #{skipgram_loss.1} parent=578 // pred_check_branch
        %966 = sbr.rel (%p963) target = $region594
      $region593: #{skipgram_loss.1} parent=578 // pred_region
        %s967 = sand.u32 1, 7
        %s968 = ssub.s32 1, %s967
        %s969 = scalar_lea.vmem %s941, %s968
        %s970 = ssub.s32 1, %s967
        %s971 = scalar_lea.vmem %s942, %s970 [#allocation4]
        %s972 = sshllo.u32 0, %s967
        loop: start=0, step=1, limit=1
        $region595: #{skipgram_loss.1} parent=593 // loop_pre_header
          _
        $region596: #{skipgram_loss.1} parent=593 // loop_header
          %s974 = sphi 0, %s978
          %p975 = scmp.ge.s32.totalorder %s974, 1
          %s979 = sphi %s969, %s969
          %s980 = sphi %s971, %s971
        $region597: #{skipgram_loss.1} parent=593 // loop_header_branch
          %977 = sbr.rel (%p975) target = $region601
        $region598: #{skipgram_loss.1} parent=593 // loop_body
          %v981 = vld [vmem:[%s979] sm:%s972]
          %982 = vst [vmem:[%s980] sm:%s972] %v981
        $region599: #{skipgram_loss.1} parent=593 // loop_footer
          %s978 = sadd.s32 1, %s974
        $region600: #{skipgram_loss.1} parent=593 // loop_footer_branch
          %973 = sbr.rel target = $region596
        $region601: #{skipgram_loss.1} parent=593 // loop_exit
          _
      $region594: #{skipgram_loss.1} parent=578 // pred_fallthru
        _
    $region579: #{skipgram_loss.1} parent=1 // pred_fallthru
      _
    // Predicated region
    $region580: #{skipgram_loss.1} parent=1 // pred_check
      %p948 = pneg %p944
    $region581: #{skipgram_loss.1} parent=1 // pred_check_branch
      %950 = sbr.rel (%p948) target = $region583
    $region582: #{skipgram_loss.1} parent=1 // pred_region
      %s951 = sshllo.u32 0, 1
      loop: start=0, step=1, limit=1
      $region584: #{skipgram_loss.1} parent=582 // loop_pre_header
        _
      $region585: #{skipgram_loss.1} parent=582 // loop_header
        %s953 = sphi 0, %s957
        %p954 = scmp.ge.s32.totalorder %s953, 1
        %s958 = sphi %s941, %s941
        %s959 = sphi %s942, %s942
      $region586: #{skipgram_loss.1} parent=582 // loop_header_branch
        %956 = sbr.rel (%p954) target = $region590
      $region587: #{skipgram_loss.1} parent=582 // loop_body
        %v960 = vld [vmem:[%s958] sm:%s951]
        %961 = vst [vmem:[%s959] sm:%s951] %v960
      $region588: #{skipgram_loss.1} parent=582 // loop_footer
        %s957 = sadd.s32 1, %s953
      $region589: #{skipgram_loss.1} parent=582 // loop_footer_branch
        %952 = sbr.rel target = $region585
      $region590: #{skipgram_loss.1} parent=582 // loop_exit
        _
    $region583: #{skipgram_loss.1} parent=1 // pred_fallthru
      _
    // Predicated region
    $region602: #{skipgram_loss.1} parent=1 // pred_check
      _
    $region603: #{skipgram_loss.1} parent=1 // pred_check_branch
      %985 = sbr.rel (0) target = $region605
    $region604: #{skipgram_loss.1} parent=1 // pred_region
      %986 = vsyncadd %s128, 16
    $region605: #{skipgram_loss.1} parent=1 // pred_fallthru
      _
    %s987 = sadd.s32 %s795, 4
    %s988 = sld [smem:[#allocation9 + %s987]]
    %s989 = scalar_lea.vmem %s4, %s988
    %s990 = scalar_lea.vmem [#allocation4], 34
    %p992 = scmp.lt.u32.totalorder 1, 8
    %p993 = pneg %p992
    // Predicated region
    $region606: #{skipgram_loss.1} parent=1 // pred_check
      _
    $region607: #{skipgram_loss.1} parent=1 // pred_check_branch
      %995 = sbr.rel (%p992) target = $region609
    $region608: #{skipgram_loss.1} parent=1 // pred_region
      %s1010 = sand.u32 1, 7
      %p1011 = scmp.eq.s32.totalorder %s1010, 0
      %p1012 = pneg %p1011
      // Predicated region
      $region621: #{skipgram_loss.1} parent=608 // pred_check
        _
      $region622: #{skipgram_loss.1} parent=608 // pred_check_branch
        %1014 = sbr.rel (%p1011) target = $region624
      $region623: #{skipgram_loss.1} parent=608 // pred_region
        %s1015 = sand.u32 1, 7
        %s1016 = ssub.s32 1, %s1015
        %s1017 = scalar_lea.vmem %s989, %s1016
        %s1018 = ssub.s32 1, %s1015
        %s1019 = scalar_lea.vmem %s990, %s1018 [#allocation4]
        %s1020 = sshllo.u32 0, %s1015
        loop: start=0, step=1, limit=1
        $region625: #{skipgram_loss.1} parent=623 // loop_pre_header
          _
        $region626: #{skipgram_loss.1} parent=623 // loop_header
          %s1022 = sphi 0, %s1026
          %p1023 = scmp.ge.s32.totalorder %s1022, 1
          %s1027 = sphi %s1017, %s1017
          %s1028 = sphi %s1019, %s1019
        $region627: #{skipgram_loss.1} parent=623 // loop_header_branch
          %1025 = sbr.rel (%p1023) target = $region631
        $region628: #{skipgram_loss.1} parent=623 // loop_body
          %v1029 = vld [vmem:[%s1027] sm:%s1020]
          %1030 = vst [vmem:[%s1028] sm:%s1020] %v1029
        $region629: #{skipgram_loss.1} parent=623 // loop_footer
          %s1026 = sadd.s32 1, %s1022
        $region630: #{skipgram_loss.1} parent=623 // loop_footer_branch
          %1021 = sbr.rel target = $region626
        $region631: #{skipgram_loss.1} parent=623 // loop_exit
          _
      $region624: #{skipgram_loss.1} parent=608 // pred_fallthru
        _
    $region609: #{skipgram_loss.1} parent=1 // pred_fallthru
      _
    // Predicated region
    $region610: #{skipgram_loss.1} parent=1 // pred_check
      %p996 = pneg %p992
    $region611: #{skipgram_loss.1} parent=1 // pred_check_branch
      %998 = sbr.rel (%p996) target = $region613
    $region612: #{skipgram_loss.1} parent=1 // pred_region
      %s999 = sshllo.u32 0, 1
      loop: start=0, step=1, limit=1
      $region614: #{skipgram_loss.1} parent=612 // loop_pre_header
        _
      $region615: #{skipgram_loss.1} parent=612 // loop_header
        %s1001 = sphi 0, %s1005
        %p1002 = scmp.ge.s32.totalorder %s1001, 1
        %s1006 = sphi %s989, %s989
        %s1007 = sphi %s990, %s990
      $region616: #{skipgram_loss.1} parent=612 // loop_header_branch
        %1004 = sbr.rel (%p1002) target = $region620
      $region617: #{skipgram_loss.1} parent=612 // loop_body
        %v1008 = vld [vmem:[%s1006] sm:%s999]
        %1009 = vst [vmem:[%s1007] sm:%s999] %v1008
      $region618: #{skipgram_loss.1} parent=612 // loop_footer
        %s1005 = sadd.s32 1, %s1001
      $region619: #{skipgram_loss.1} parent=612 // loop_footer_branch
        %1000 = sbr.rel target = $region615
      $region620: #{skipgram_loss.1} parent=612 // loop_exit
        _
    $region613: #{skipgram_loss.1} parent=1 // pred_fallthru
      _
    // Predicated region
    $region632: #{skipgram_loss.1} parent=1 // pred_check
      _
    $region633: #{skipgram_loss.1} parent=1 // pred_check_branch
      %1033 = sbr.rel (0) target = $region635
    $region634: #{skipgram_loss.1} parent=1 // pred_region
      %1034 = vsyncadd %s128, 16
    $region635: #{skipgram_loss.1} parent=1 // pred_fallthru
      _
    %s1035 = sadd.s32 %s25, 3
    %s1036 = sld [smem:[#allocation7 + %s1035]]
    %s1037 = sld [smem:[#allocation8 + %s1035]]
    %s1038 = scalar_lea.vmem %s3, %s1036
    %s1039 = scalar_lea.vmem [#allocation2], 3
    %p1041 = scmp.lt.u32.totalorder 1, 8
    %p1042 = pneg %p1041
    // Predicated region
    $region636: #{skipgram_loss.1} parent=1 // pred_check
      _
    $region637: #{skipgram_loss.1} parent=1 // pred_check_branch
      %1044 = sbr.rel (%p1041) target = $region639
    $region638: #{skipgram_loss.1} parent=1 // pred_region
      %s1059 = sand.u32 1, 7
      %p1060 = scmp.eq.s32.totalorder %s1059, 0
      %p1061 = pneg %p1060
      // Predicated region
      $region651: #{skipgram_loss.1} parent=638 // pred_check
        _
      $region652: #{skipgram_loss.1} parent=638 // pred_check_branch
        %1063 = sbr.rel (%p1060) target = $region654
      $region653: #{skipgram_loss.1} parent=638 // pred_region
        %s1064 = sand.u32 1, 7
        %s1065 = ssub.s32 1, %s1064
        %s1066 = scalar_lea.vmem %s1038, %s1065
        %s1067 = ssub.s32 1, %s1064
        %s1068 = scalar_lea.vmem %s1039, %s1067 [#allocation2]
        %s1069 = sshllo.u32 0, %s1064
        loop: start=0, step=1, limit=1
        $region655: #{skipgram_loss.1} parent=653 // loop_pre_header
          _
        $region656: #{skipgram_loss.1} parent=653 // loop_header
          %s1071 = sphi 0, %s1075
          %p1072 = scmp.ge.s32.totalorder %s1071, 1
          %s1076 = sphi %s1066, %s1066
          %s1077 = sphi %s1068, %s1068
        $region657: #{skipgram_loss.1} parent=653 // loop_header_branch
          %1074 = sbr.rel (%p1072) target = $region661
        $region658: #{skipgram_loss.1} parent=653 // loop_body
          %v1078 = vld [vmem:[%s1076] sm:%s1069]
          %1079 = vst [vmem:[%s1077] sm:%s1069] %v1078
        $region659: #{skipgram_loss.1} parent=653 // loop_footer
          %s1075 = sadd.s32 1, %s1071
        $region660: #{skipgram_loss.1} parent=653 // loop_footer_branch
          %1070 = sbr.rel target = $region656
        $region661: #{skipgram_loss.1} parent=653 // loop_exit
          _
      $region654: #{skipgram_loss.1} parent=638 // pred_fallthru
        _
    $region639: #{skipgram_loss.1} parent=1 // pred_fallthru
      _
    // Predicated region
    $region640: #{skipgram_loss.1} parent=1 // pred_check
      %p1045 = pneg %p1041
    $region641: #{skipgram_loss.1} parent=1 // pred_check_branch
      %1047 = sbr.rel (%p1045) target = $region643
    $region642: #{skipgram_loss.1} parent=1 // pred_region
      %s1048 = sshllo.u32 0, 1
      loop: start=0, step=1, limit=1
      $region644: #{skipgram_loss.1} parent=642 // loop_pre_header
        _
      $region645: #{skipgram_loss.1} parent=642 // loop_header
        %s1050 = sphi 0, %s1054
        %p1051 = scmp.ge.s32.totalorder %s1050, 1
        %s1055 = sphi %s1038, %s1038
        %s1056 = sphi %s1039, %s1039
      $region646: #{skipgram_loss.1} parent=642 // loop_header_branch
        %1053 = sbr.rel (%p1051) target = $region650
      $region647: #{skipgram_loss.1} parent=642 // loop_body
        %v1057 = vld [vmem:[%s1055] sm:%s1048]
        %1058 = vst [vmem:[%s1056] sm:%s1048] %v1057
      $region648: #{skipgram_loss.1} parent=642 // loop_footer
        %s1054 = sadd.s32 1, %s1050
      $region649: #{skipgram_loss.1} parent=642 // loop_footer_branch
        %1049 = sbr.rel target = $region645
      $region650: #{skipgram_loss.1} parent=642 // loop_exit
        _
    $region643: #{skipgram_loss.1} parent=1 // pred_fallthru
      _
    // Predicated region
    $region662: #{skipgram_loss.1} parent=1 // pred_check
      _
    $region663: #{skipgram_loss.1} parent=1 // pred_check_branch
      %1082 = sbr.rel (0) target = $region665
    $region664: #{skipgram_loss.1} parent=1 // pred_region
      %1083 = vsyncadd [#allocation5], 16
    $region665: #{skipgram_loss.1} parent=1 // pred_fallthru
      _
    %s1084 = scalar_lea.vmem %s4, %s1037
    %s1085 = scalar_lea.vmem [#allocation3], 3
    %p1087 = scmp.lt.u32.totalorder 1, 8
    %p1088 = pneg %p1087
    // Predicated region
    $region666: #{skipgram_loss.1} parent=1 // pred_check
      _
    $region667: #{skipgram_loss.1} parent=1 // pred_check_branch
      %1090 = sbr.rel (%p1087) target = $region669
    $region668: #{skipgram_loss.1} parent=1 // pred_region
      %s1105 = sand.u32 1, 7
      %p1106 = scmp.eq.s32.totalorder %s1105, 0
      %p1107 = pneg %p1106
      // Predicated region
      $region681: #{skipgram_loss.1} parent=668 // pred_check
        _
      $region682: #{skipgram_loss.1} parent=668 // pred_check_branch
        %1109 = sbr.rel (%p1106) target = $region684
      $region683: #{skipgram_loss.1} parent=668 // pred_region
        %s1110 = sand.u32 1, 7
        %s1111 = ssub.s32 1, %s1110
        %s1112 = scalar_lea.vmem %s1084, %s1111
        %s1113 = ssub.s32 1, %s1110
        %s1114 = scalar_lea.vmem %s1085, %s1113 [#allocation3]
        %s1115 = sshllo.u32 0, %s1110
        loop: start=0, step=1, limit=1
        $region685: #{skipgram_loss.1} parent=683 // loop_pre_header
          _
        $region686: #{skipgram_loss.1} parent=683 // loop_header
          %s1117 = sphi 0, %s1121
          %p1118 = scmp.ge.s32.totalorder %s1117, 1
          %s1122 = sphi %s1112, %s1112
          %s1123 = sphi %s1114, %s1114
        $region687: #{skipgram_loss.1} parent=683 // loop_header_branch
          %1120 = sbr.rel (%p1118) target = $region691
        $region688: #{skipgram_loss.1} parent=683 // loop_body
          %v1124 = vld [vmem:[%s1122] sm:%s1115]
          %1125 = vst [vmem:[%s1123] sm:%s1115] %v1124
        $region689: #{skipgram_loss.1} parent=683 // loop_footer
          %s1121 = sadd.s32 1, %s1117
        $region690: #{skipgram_loss.1} parent=683 // loop_footer_branch
          %1116 = sbr.rel target = $region686
        $region691: #{skipgram_loss.1} parent=683 // loop_exit
          _
      $region684: #{skipgram_loss.1} parent=668 // pred_fallthru
        _
    $region669: #{skipgram_loss.1} parent=1 // pred_fallthru
      _
    // Predicated region
    $region670: #{skipgram_loss.1} parent=1 // pred_check
      %p1091 = pneg %p1087
    $region671: #{skipgram_loss.1} parent=1 // pred_check_branch
      %1093 = sbr.rel (%p1091) target = $region673
    $region672: #{skipgram_loss.1} parent=1 // pred_region
      %s1094 = sshllo.u32 0, 1
      loop: start=0, step=1, limit=1
      $region674: #{skipgram_loss.1} parent=672 // loop_pre_header
        _
      $region675: #{skipgram_loss.1} parent=672 // loop_header
        %s1096 = sphi 0, %s1100
        %p1097 = scmp.ge.s32.totalorder %s1096, 1
        %s1101 = sphi %s1084, %s1084
        %s1102 = sphi %s1085, %s1085
      $region676: #{skipgram_loss.1} parent=672 // loop_header_branch
        %1099 = sbr.rel (%p1097) target = $region680
      $region677: #{skipgram_loss.1} parent=672 // loop_body
        %v1103 = vld [vmem:[%s1101] sm:%s1094]
        %1104 = vst [vmem:[%s1102] sm:%s1094] %v1103
      $region678: #{skipgram_loss.1} parent=672 // loop_footer
        %s1100 = sadd.s32 1, %s1096
      $region679: #{skipgram_loss.1} parent=672 // loop_footer_branch
        %1095 = sbr.rel target = $region675
      $region680: #{skipgram_loss.1} parent=672 // loop_exit
        _
    $region673: #{skipgram_loss.1} parent=1 // pred_fallthru
      _
    // Predicated region
    $region692: #{skipgram_loss.1} parent=1 // pred_check
      _
    $region693: #{skipgram_loss.1} parent=1 // pred_check_branch
      %1128 = sbr.rel (0) target = $region695
    $region694: #{skipgram_loss.1} parent=1 // pred_region
      %1129 = vsyncadd %s80, 16
    $region695: #{skipgram_loss.1} parent=1 // pred_fallthru
      _
    %s1130 = smul.u32 %s1035, 5
    %s1131 = sld [smem:[#allocation9 + %s1130]]
    %s1132 = scalar_lea.vmem %s4, %s1131
    %s1133 = scalar_lea.vmem [#allocation4], 3
    %p1135 = scmp.lt.u32.totalorder 1, 8
    %p1136 = pneg %p1135
    // Predicated region
    $region696: #{skipgram_loss.1} parent=1 // pred_check
      _
    $region697: #{skipgram_loss.1} parent=1 // pred_check_branch
      %1138 = sbr.rel (%p1135) target = $region699
    $region698: #{skipgram_loss.1} parent=1 // pred_region
      %s1153 = sand.u32 1, 7
      %p1154 = scmp.eq.s32.totalorder %s1153, 0
      %p1155 = pneg %p1154
      // Predicated region
      $region711: #{skipgram_loss.1} parent=698 // pred_check
        _
      $region712: #{skipgram_loss.1} parent=698 // pred_check_branch
        %1157 = sbr.rel (%p1154) target = $region714
      $region713: #{skipgram_loss.1} parent=698 // pred_region
        %s1158 = sand.u32 1, 7
        %s1159 = ssub.s32 1, %s1158
        %s1160 = scalar_lea.vmem %s1132, %s1159
        %s1161 = ssub.s32 1, %s1158
        %s1162 = scalar_lea.vmem %s1133, %s1161 [#allocation4]
        %s1163 = sshllo.u32 0, %s1158
        loop: start=0, step=1, limit=1
        $region715: #{skipgram_loss.1} parent=713 // loop_pre_header
          _
        $region716: #{skipgram_loss.1} parent=713 // loop_header
          %s1165 = sphi 0, %s1169
          %p1166 = scmp.ge.s32.totalorder %s1165, 1
          %s1170 = sphi %s1160, %s1160
          %s1171 = sphi %s1162, %s1162
        $region717: #{skipgram_loss.1} parent=713 // loop_header_branch
          %1168 = sbr.rel (%p1166) target = $region721
        $region718: #{skipgram_loss.1} parent=713 // loop_body
          %v1172 = vld [vmem:[%s1170] sm:%s1163]
          %1173 = vst [vmem:[%s1171] sm:%s1163] %v1172
        $region719: #{skipgram_loss.1} parent=713 // loop_footer
          %s1169 = sadd.s32 1, %s1165
        $region720: #{skipgram_loss.1} parent=713 // loop_footer_branch
          %1164 = sbr.rel target = $region716
        $region721: #{skipgram_loss.1} parent=713 // loop_exit
          _
      $region714: #{skipgram_loss.1} parent=698 // pred_fallthru
        _
    $region699: #{skipgram_loss.1} parent=1 // pred_fallthru
      _
    // Predicated region
    $region700: #{skipgram_loss.1} parent=1 // pred_check
      %p1139 = pneg %p1135
    $region701: #{skipgram_loss.1} parent=1 // pred_check_branch
      %1141 = sbr.rel (%p1139) target = $region703
    $region702: #{skipgram_loss.1} parent=1 // pred_region
      %s1142 = sshllo.u32 0, 1
      loop: start=0, step=1, limit=1
      $region704: #{skipgram_loss.1} parent=702 // loop_pre_header
        _
      $region705: #{skipgram_loss.1} parent=702 // loop_header
        %s1144 = sphi 0, %s1148
        %p1145 = scmp.ge.s32.totalorder %s1144, 1
        %s1149 = sphi %s1132, %s1132
        %s1150 = sphi %s1133, %s1133
      $region706: #{skipgram_loss.1} parent=702 // loop_header_branch
        %1147 = sbr.rel (%p1145) target = $region710
      $region707: #{skipgram_loss.1} parent=702 // loop_body
        %v1151 = vld [vmem:[%s1149] sm:%s1142]
        %1152 = vst [vmem:[%s1150] sm:%s1142] %v1151
      $region708: #{skipgram_loss.1} parent=702 // loop_footer
        %s1148 = sadd.s32 1, %s1144
      $region709: #{skipgram_loss.1} parent=702 // loop_footer_branch
        %1143 = sbr.rel target = $region705
      $region710: #{skipgram_loss.1} parent=702 // loop_exit
        _
    $region703: #{skipgram_loss.1} parent=1 // pred_fallthru
      _
    // Predicated region
    $region722: #{skipgram_loss.1} parent=1 // pred_check
      _
    $region723: #{skipgram_loss.1} parent=1 // pred_check_branch
      %1176 = sbr.rel (0) target = $region725
    $region724: #{skipgram_loss.1} parent=1 // pred_region
      %1177 = vsyncadd %s128, 16
    $region725: #{skipgram_loss.1} parent=1 // pred_fallthru
      _
    %s1178 = sadd.s32 %s1130, 1
    %s1179 = sld [smem:[#allocation9 + %s1178]]
    %s1180 = scalar_lea.vmem %s4, %s1179
    %s1181 = scalar_lea.vmem [#allocation4], 11
    %p1183 = scmp.lt.u32.totalorder 1, 8
    %p1184 = pneg %p1183
    // Predicated region
    $region726: #{skipgram_loss.1} parent=1 // pred_check
      _
    $region727: #{skipgram_loss.1} parent=1 // pred_check_branch
      %1186 = sbr.rel (%p1183) target = $region729
    $region728: #{skipgram_loss.1} parent=1 // pred_region
      %s1201 = sand.u32 1, 7
      %p1202 = scmp.eq.s32.totalorder %s1201, 0
      %p1203 = pneg %p1202
      // Predicated region
      $region741: #{skipgram_loss.1} parent=728 // pred_check
        _
      $region742: #{skipgram_loss.1} parent=728 // pred_check_branch
        %1205 = sbr.rel (%p1202) target = $region744
      $region743: #{skipgram_loss.1} parent=728 // pred_region
        %s1206 = sand.u32 1, 7
        %s1207 = ssub.s32 1, %s1206
        %s1208 = scalar_lea.vmem %s1180, %s1207
        %s1209 = ssub.s32 1, %s1206
        %s1210 = scalar_lea.vmem %s1181, %s1209 [#allocation4]
        %s1211 = sshllo.u32 0, %s1206
        loop: start=0, step=1, limit=1
        $region745: #{skipgram_loss.1} parent=743 // loop_pre_header
          _
        $region746: #{skipgram_loss.1} parent=743 // loop_header
          %s1213 = sphi 0, %s1217
          %p1214 = scmp.ge.s32.totalorder %s1213, 1
          %s1218 = sphi %s1208, %s1208
          %s1219 = sphi %s1210, %s1210
        $region747: #{skipgram_loss.1} parent=743 // loop_header_branch
          %1216 = sbr.rel (%p1214) target = $region751
        $region748: #{skipgram_loss.1} parent=743 // loop_body
          %v1220 = vld [vmem:[%s1218] sm:%s1211]
          %1221 = vst [vmem:[%s1219] sm:%s1211] %v1220
        $region749: #{skipgram_loss.1} parent=743 // loop_footer
          %s1217 = sadd.s32 1, %s1213
        $region750: #{skipgram_loss.1} parent=743 // loop_footer_branch
          %1212 = sbr.rel target = $region746
        $region751: #{skipgram_loss.1} parent=743 // loop_exit
          _
      $region744: #{skipgram_loss.1} parent=728 // pred_fallthru
        _
    $region729: #{skipgram_loss.1} parent=1 // pred_fallthru
      _
    // Predicated region
    $region730: #{skipgram_loss.1} parent=1 // pred_check
      %p1187 = pneg %p1183
    $region731: #{skipgram_loss.1} parent=1 // pred_check_branch
      %1189 = sbr.rel (%p1187) target = $region733
    $region732: #{skipgram_loss.1} parent=1 // pred_region
      %s1190 = sshllo.u32 0, 1
      loop: start=0, step=1, limit=1
      $region734: #{skipgram_loss.1} parent=732 // loop_pre_header
        _
      $region735: #{skipgram_loss.1} parent=732 // loop_header
        %s1192 = sphi 0, %s1196
        %p1193 = scmp.ge.s32.totalorder %s1192, 1
        %s1197 = sphi %s1180, %s1180
        %s1198 = sphi %s1181, %s1181
      $region736: #{skipgram_loss.1} parent=732 // loop_header_branch
        %1195 = sbr.rel (%p1193) target = $region740
      $region737: #{skipgram_loss.1} parent=732 // loop_body
        %v1199 = vld [vmem:[%s1197] sm:%s1190]
        %1200 = vst [vmem:[%s1198] sm:%s1190] %v1199
      $region738: #{skipgram_loss.1} parent=732 // loop_footer
        %s1196 = sadd.s32 1, %s1192
      $region739: #{skipgram_loss.1} parent=732 // loop_footer_branch
        %1191 = sbr.rel target = $region735
      $region740: #{skipgram_loss.1} parent=732 // loop_exit
        _
    $region733: #{skipgram_loss.1} parent=1 // pred_fallthru
      _
    // Predicated region
    $region752: #{skipgram_loss.1} parent=1 // pred_check
      _
    $region753: #{skipgram_loss.1} parent=1 // pred_check_branch
      %1224 = sbr.rel (0) target = $region755
    $region754: #{skipgram_loss.1} parent=1 // pred_region
      %1225 = vsyncadd %s128, 16
    $region755: #{skipgram_loss.1} parent=1 // pred_fallthru
      _
    %s1226 = sadd.s32 %s1130, 2
    %s1227 = sld [smem:[#allocation9 + %s1226]]
    %s1228 = scalar_lea.vmem %s4, %s1227
    %s1229 = scalar_lea.vmem [#allocation4], 19
    %p1231 = scmp.lt.u32.totalorder 1, 8
    %p1232 = pneg %p1231
    // Predicated region
    $region756: #{skipgram_loss.1} parent=1 // pred_check
      _
    $region757: #{skipgram_loss.1} parent=1 // pred_check_branch
      %1234 = sbr.rel (%p1231) target = $region759
    $region758: #{skipgram_loss.1} parent=1 // pred_region
      %s1249 = sand.u32 1, 7
      %p1250 = scmp.eq.s32.totalorder %s1249, 0
      %p1251 = pneg %p1250
      // Predicated region
      $region771: #{skipgram_loss.1} parent=758 // pred_check
        _
      $region772: #{skipgram_loss.1} parent=758 // pred_check_branch
        %1253 = sbr.rel (%p1250) target = $region774
      $region773: #{skipgram_loss.1} parent=758 // pred_region
        %s1254 = sand.u32 1, 7
        %s1255 = ssub.s32 1, %s1254
        %s1256 = scalar_lea.vmem %s1228, %s1255
        %s1257 = ssub.s32 1, %s1254
        %s1258 = scalar_lea.vmem %s1229, %s1257 [#allocation4]
        %s1259 = sshllo.u32 0, %s1254
        loop: start=0, step=1, limit=1
        $region775: #{skipgram_loss.1} parent=773 // loop_pre_header
          _
        $region776: #{skipgram_loss.1} parent=773 // loop_header
          %s1261 = sphi 0, %s1265
          %p1262 = scmp.ge.s32.totalorder %s1261, 1
          %s1266 = sphi %s1256, %s1256
          %s1267 = sphi %s1258, %s1258
        $region777: #{skipgram_loss.1} parent=773 // loop_header_branch
          %1264 = sbr.rel (%p1262) target = $region781
        $region778: #{skipgram_loss.1} parent=773 // loop_body
          %v1268 = vld [vmem:[%s1266] sm:%s1259]
          %1269 = vst [vmem:[%s1267] sm:%s1259] %v1268
        $region779: #{skipgram_loss.1} parent=773 // loop_footer
          %s1265 = sadd.s32 1, %s1261
        $region780: #{skipgram_loss.1} parent=773 // loop_footer_branch
          %1260 = sbr.rel target = $region776
        $region781: #{skipgram_loss.1} parent=773 // loop_exit
          _
      $region774: #{skipgram_loss.1} parent=758 // pred_fallthru
        _
    $region759: #{skipgram_loss.1} parent=1 // pred_fallthru
      _
    // Predicated region
    $region760: #{skipgram_loss.1} parent=1 // pred_check
      %p1235 = pneg %p1231
    $region761: #{skipgram_loss.1} parent=1 // pred_check_branch
      %1237 = sbr.rel (%p1235) target = $region763
    $region762: #{skipgram_loss.1} parent=1 // pred_region
      %s1238 = sshllo.u32 0, 1
      loop: start=0, step=1, limit=1
      $region764: #{skipgram_loss.1} parent=762 // loop_pre_header
        _
      $region765: #{skipgram_loss.1} parent=762 // loop_header
        %s1240 = sphi 0, %s1244
        %p1241 = scmp.ge.s32.totalorder %s1240, 1
        %s1245 = sphi %s1228, %s1228
        %s1246 = sphi %s1229, %s1229
      $region766: #{skipgram_loss.1} parent=762 // loop_header_branch
        %1243 = sbr.rel (%p1241) target = $region770
      $region767: #{skipgram_loss.1} parent=762 // loop_body
        %v1247 = vld [vmem:[%s1245] sm:%s1238]
        %1248 = vst [vmem:[%s1246] sm:%s1238] %v1247
      $region768: #{skipgram_loss.1} parent=762 // loop_footer
        %s1244 = sadd.s32 1, %s1240
      $region769: #{skipgram_loss.1} parent=762 // loop_footer_branch
        %1239 = sbr.rel target = $region765
      $region770: #{skipgram_loss.1} parent=762 // loop_exit
        _
    $region763: #{skipgram_loss.1} parent=1 // pred_fallthru
      _
    // Predicated region
    $region782: #{skipgram_loss.1} parent=1 // pred_check
      _
    $region783: #{skipgram_loss.1} parent=1 // pred_check_branch
      %1272 = sbr.rel (0) target = $region785
    $region784: #{skipgram_loss.1} parent=1 // pred_region
      %1273 = vsyncadd %s128, 16
    $region785: #{skipgram_loss.1} parent=1 // pred_fallthru
      _
    %s1274 = sadd.s32 %s1130, 3
    %s1275 = sld [smem:[#allocation9 + %s1274]]
    %s1276 = scalar_lea.vmem %s4, %s1275
    %s1277 = scalar_lea.vmem [#allocation4], 27
    %p1279 = scmp.lt.u32.totalorder 1, 8
    %p1280 = pneg %p1279
    // Predicated region
    $region786: #{skipgram_loss.1} parent=1 // pred_check
      _
    $region787: #{skipgram_loss.1} parent=1 // pred_check_branch
      %1282 = sbr.rel (%p1279) target = $region789
    $region788: #{skipgram_loss.1} parent=1 // pred_region
      %s1297 = sand.u32 1, 7
      %p1298 = scmp.eq.s32.totalorder %s1297, 0
      %p1299 = pneg %p1298
      // Predicated region
      $region801: #{skipgram_loss.1} parent=788 // pred_check
        _
      $region802: #{skipgram_loss.1} parent=788 // pred_check_branch
        %1301 = sbr.rel (%p1298) target = $region804
      $region803: #{skipgram_loss.1} parent=788 // pred_region
        %s1302 = sand.u32 1, 7
        %s1303 = ssub.s32 1, %s1302
        %s1304 = scalar_lea.vmem %s1276, %s1303
        %s1305 = ssub.s32 1, %s1302
        %s1306 = scalar_lea.vmem %s1277, %s1305 [#allocation4]
        %s1307 = sshllo.u32 0, %s1302
        loop: start=0, step=1, limit=1
        $region805: #{skipgram_loss.1} parent=803 // loop_pre_header
          _
        $region806: #{skipgram_loss.1} parent=803 // loop_header
          %s1309 = sphi 0, %s1313
          %p1310 = scmp.ge.s32.totalorder %s1309, 1
          %s1314 = sphi %s1304, %s1304
          %s1315 = sphi %s1306, %s1306
        $region807: #{skipgram_loss.1} parent=803 // loop_header_branch
          %1312 = sbr.rel (%p1310) target = $region811
        $region808: #{skipgram_loss.1} parent=803 // loop_body
          %v1316 = vld [vmem:[%s1314] sm:%s1307]
          %1317 = vst [vmem:[%s1315] sm:%s1307] %v1316
        $region809: #{skipgram_loss.1} parent=803 // loop_footer
          %s1313 = sadd.s32 1, %s1309
        $region810: #{skipgram_loss.1} parent=803 // loop_footer_branch
          %1308 = sbr.rel target = $region806
        $region811: #{skipgram_loss.1} parent=803 // loop_exit
          _
      $region804: #{skipgram_loss.1} parent=788 // pred_fallthru
        _
    $region789: #{skipgram_loss.1} parent=1 // pred_fallthru
      _
    // Predicated region
    $region790: #{skipgram_loss.1} parent=1 // pred_check
      %p1283 = pneg %p1279
    $region791: #{skipgram_loss.1} parent=1 // pred_check_branch
      %1285 = sbr.rel (%p1283) target = $region793
    $region792: #{skipgram_loss.1} parent=1 // pred_region
      %s1286 = sshllo.u32 0, 1
      loop: start=0, step=1, limit=1
      $region794: #{skipgram_loss.1} parent=792 // loop_pre_header
        _
      $region795: #{skipgram_loss.1} parent=792 // loop_header
        %s1288 = sphi 0, %s1292
        %p1289 = scmp.ge.s32.totalorder %s1288, 1
        %s1293 = sphi %s1276, %s1276
        %s1294 = sphi %s1277, %s1277
      $region796: #{skipgram_loss.1} parent=792 // loop_header_branch
        %1291 = sbr.rel (%p1289) target = $region800
      $region797: #{skipgram_loss.1} parent=792 // loop_body
        %v1295 = vld [vmem:[%s1293] sm:%s1286]
        %1296 = vst [vmem:[%s1294] sm:%s1286] %v1295
      $region798: #{skipgram_loss.1} parent=792 // loop_footer
        %s1292 = sadd.s32 1, %s1288
      $region799: #{skipgram_loss.1} parent=792 // loop_footer_branch
        %1287 = sbr.rel target = $region795
      $region800: #{skipgram_loss.1} parent=792 // loop_exit
        _
    $region793: #{skipgram_loss.1} parent=1 // pred_fallthru
      _
    // Predicated region
    $region812: #{skipgram_loss.1} parent=1 // pred_check
      _
    $region813: #{skipgram_loss.1} parent=1 // pred_check_branch
      %1320 = sbr.rel (0) target = $region815
    $region814: #{skipgram_loss.1} parent=1 // pred_region
      %1321 = vsyncadd %s128, 16
    $region815: #{skipgram_loss.1} parent=1 // pred_fallthru
      _
    %s1322 = sadd.s32 %s1130, 4
    %s1323 = sld [smem:[#allocation9 + %s1322]]
    %s1324 = scalar_lea.vmem %s4, %s1323
    %s1325 = scalar_lea.vmem [#allocation4], 35
    %p1327 = scmp.lt.u32.totalorder 1, 8
    %p1328 = pneg %p1327
    // Predicated region
    $region816: #{skipgram_loss.1} parent=1 // pred_check
      _
    $region817: #{skipgram_loss.1} parent=1 // pred_check_branch
      %1330 = sbr.rel (%p1327) target = $region819
    $region818: #{skipgram_loss.1} parent=1 // pred_region
      %s1345 = sand.u32 1, 7
      %p1346 = scmp.eq.s32.totalorder %s1345, 0
      %p1347 = pneg %p1346
      // Predicated region
      $region831: #{skipgram_loss.1} parent=818 // pred_check
        _
      $region832: #{skipgram_loss.1} parent=818 // pred_check_branch
        %1349 = sbr.rel (%p1346) target = $region834
      $region833: #{skipgram_loss.1} parent=818 // pred_region
        %s1350 = sand.u32 1, 7
        %s1351 = ssub.s32 1, %s1350
        %s1352 = scalar_lea.vmem %s1324, %s1351
        %s1353 = ssub.s32 1, %s1350
        %s1354 = scalar_lea.vmem %s1325, %s1353 [#allocation4]
        %s1355 = sshllo.u32 0, %s1350
        loop: start=0, step=1, limit=1
        $region835: #{skipgram_loss.1} parent=833 // loop_pre_header
          _
        $region836: #{skipgram_loss.1} parent=833 // loop_header
          %s1357 = sphi 0, %s1361
          %p1358 = scmp.ge.s32.totalorder %s1357, 1
          %s1362 = sphi %s1352, %s1352
          %s1363 = sphi %s1354, %s1354
        $region837: #{skipgram_loss.1} parent=833 // loop_header_branch
          %1360 = sbr.rel (%p1358) target = $region841
        $region838: #{skipgram_loss.1} parent=833 // loop_body
          %v1364 = vld [vmem:[%s1362] sm:%s1355]
          %1365 = vst [vmem:[%s1363] sm:%s1355] %v1364
        $region839: #{skipgram_loss.1} parent=833 // loop_footer
          %s1361 = sadd.s32 1, %s1357
        $region840: #{skipgram_loss.1} parent=833 // loop_footer_branch
          %1356 = sbr.rel target = $region836
        $region841: #{skipgram_loss.1} parent=833 // loop_exit
          _
      $region834: #{skipgram_loss.1} parent=818 // pred_fallthru
        _
    $region819: #{skipgram_loss.1} parent=1 // pred_fallthru
      _
    // Predicated region
    $region820: #{skipgram_loss.1} parent=1 // pred_check
      %p1331 = pneg %p1327
    $region821: #{skipgram_loss.1} parent=1 // pred_check_branch
      %1333 = sbr.rel (%p1331) target = $region823
    $region822: #{skipgram_loss.1} parent=1 // pred_region
      %s1334 = sshllo.u32 0, 1
      loop: start=0, step=1, limit=1
      $region824: #{skipgram_loss.1} parent=822 // loop_pre_header
        _
      $region825: #{skipgram_loss.1} parent=822 // loop_header
        %s1336 = sphi 0, %s1340
        %p1337 = scmp.ge.s32.totalorder %s1336, 1
        %s1341 = sphi %s1324, %s1324
        %s1342 = sphi %s1325, %s1325
      $region826: #{skipgram_loss.1} parent=822 // loop_header_branch
        %1339 = sbr.rel (%p1337) target = $region830
      $region827: #{skipgram_loss.1} parent=822 // loop_body
        %v1343 = vld [vmem:[%s1341] sm:%s1334]
        %1344 = vst [vmem:[%s1342] sm:%s1334] %v1343
      $region828: #{skipgram_loss.1} parent=822 // loop_footer
        %s1340 = sadd.s32 1, %s1336
      $region829: #{skipgram_loss.1} parent=822 // loop_footer_branch
        %1335 = sbr.rel target = $region825
      $region830: #{skipgram_loss.1} parent=822 // loop_exit
        _
    $region823: #{skipgram_loss.1} parent=1 // pred_fallthru
      _
    // Predicated region
    $region842: #{skipgram_loss.1} parent=1 // pred_check
      _
    $region843: #{skipgram_loss.1} parent=1 // pred_check_branch
      %1368 = sbr.rel (0) target = $region845
    $region844: #{skipgram_loss.1} parent=1 // pred_region
      %1369 = vsyncadd %s128, 16
    $region845: #{skipgram_loss.1} parent=1 // pred_fallthru
      _
    %s1370 = sadd.s32 %s25, 4
    %s1371 = sld [smem:[#allocation7 + %s1370]]
    %s1372 = sld [smem:[#allocation8 + %s1370]]
    %s1373 = scalar_lea.vmem %s3, %s1371
    %s1374 = scalar_lea.vmem [#allocation2], 4
    %p1376 = scmp.lt.u32.totalorder 1, 8
    %p1377 = pneg %p1376
    // Predicated region
    $region846: #{skipgram_loss.1} parent=1 // pred_check
      _
    $region847: #{skipgram_loss.1} parent=1 // pred_check_branch
      %1379 = sbr.rel (%p1376) target = $region849
    $region848: #{skipgram_loss.1} parent=1 // pred_region
      %s1394 = sand.u32 1, 7
      %p1395 = scmp.eq.s32.totalorder %s1394, 0
      %p1396 = pneg %p1395
      // Predicated region
      $region861: #{skipgram_loss.1} parent=848 // pred_check
        _
      $region862: #{skipgram_loss.1} parent=848 // pred_check_branch
        %1398 = sbr.rel (%p1395) target = $region864
      $region863: #{skipgram_loss.1} parent=848 // pred_region
        %s1399 = sand.u32 1, 7
        %s1400 = ssub.s32 1, %s1399
        %s1401 = scalar_lea.vmem %s1373, %s1400
        %s1402 = ssub.s32 1, %s1399
        %s1403 = scalar_lea.vmem %s1374, %s1402 [#allocation2]
        %s1404 = sshllo.u32 0, %s1399
        loop: start=0, step=1, limit=1
        $region865: #{skipgram_loss.1} parent=863 // loop_pre_header
          _
        $region866: #{skipgram_loss.1} parent=863 // loop_header
          %s1406 = sphi 0, %s1410
          %p1407 = scmp.ge.s32.totalorder %s1406, 1
          %s1411 = sphi %s1401, %s1401
          %s1412 = sphi %s1403, %s1403
        $region867: #{skipgram_loss.1} parent=863 // loop_header_branch
          %1409 = sbr.rel (%p1407) target = $region871
        $region868: #{skipgram_loss.1} parent=863 // loop_body
          %v1413 = vld [vmem:[%s1411] sm:%s1404]
          %1414 = vst [vmem:[%s1412] sm:%s1404] %v1413
        $region869: #{skipgram_loss.1} parent=863 // loop_footer
          %s1410 = sadd.s32 1, %s1406
        $region870: #{skipgram_loss.1} parent=863 // loop_footer_branch
          %1405 = sbr.rel target = $region866
        $region871: #{skipgram_loss.1} parent=863 // loop_exit
          _
      $region864: #{skipgram_loss.1} parent=848 // pred_fallthru
        _
    $region849: #{skipgram_loss.1} parent=1 // pred_fallthru
      _
    // Predicated region
    $region850: #{skipgram_loss.1} parent=1 // pred_check
      %p1380 = pneg %p1376
    $region851: #{skipgram_loss.1} parent=1 // pred_check_branch
      %1382 = sbr.rel (%p1380) target = $region853
    $region852: #{skipgram_loss.1} parent=1 // pred_region
      %s1383 = sshllo.u32 0, 1
      loop: start=0, step=1, limit=1
      $region854: #{skipgram_loss.1} parent=852 // loop_pre_header
        _
      $region855: #{skipgram_loss.1} parent=852 // loop_header
        %s1385 = sphi 0, %s1389
        %p1386 = scmp.ge.s32.totalorder %s1385, 1
        %s1390 = sphi %s1373, %s1373
        %s1391 = sphi %s1374, %s1374
      $region856: #{skipgram_loss.1} parent=852 // loop_header_branch
        %1388 = sbr.rel (%p1386) target = $region860
      $region857: #{skipgram_loss.1} parent=852 // loop_body
        %v1392 = vld [vmem:[%s1390] sm:%s1383]
        %1393 = vst [vmem:[%s1391] sm:%s1383] %v1392
      $region858: #{skipgram_loss.1} parent=852 // loop_footer
        %s1389 = sadd.s32 1, %s1385
      $region859: #{skipgram_loss.1} parent=852 // loop_footer_branch
        %1384 = sbr.rel target = $region855
      $region860: #{skipgram_loss.1} parent=852 // loop_exit
        _
    $region853: #{skipgram_loss.1} parent=1 // pred_fallthru
      _
    // Predicated region
    $region872: #{skipgram_loss.1} parent=1 // pred_check
      _
    $region873: #{skipgram_loss.1} parent=1 // pred_check_branch
      %1417 = sbr.rel (0) target = $region875
    $region874: #{skipgram_loss.1} parent=1 // pred_region
      %1418 = vsyncadd [#allocation5], 16
    $region875: #{skipgram_loss.1} parent=1 // pred_fallthru
      _
    %s1419 = scalar_lea.vmem %s4, %s1372
    %s1420 = scalar_lea.vmem [#allocation3], 4
    %p1422 = scmp.lt.u32.totalorder 1, 8
    %p1423 = pneg %p1422
    // Predicated region
    $region876: #{skipgram_loss.1} parent=1 // pred_check
      _
    $region877: #{skipgram_loss.1} parent=1 // pred_check_branch
      %1425 = sbr.rel (%p1422) target = $region879
    $region878: #{skipgram_loss.1} parent=1 // pred_region
      %s1440 = sand.u32 1, 7
      %p1441 = scmp.eq.s32.totalorder %s1440, 0
      %p1442 = pneg %p1441
      // Predicated region
      $region891: #{skipgram_loss.1} parent=878 // pred_check
        _
      $region892: #{skipgram_loss.1} parent=878 // pred_check_branch
        %1444 = sbr.rel (%p1441) target = $region894
      $region893: #{skipgram_loss.1} parent=878 // pred_region
        %s1445 = sand.u32 1, 7
        %s1446 = ssub.s32 1, %s1445
        %s1447 = scalar_lea.vmem %s1419, %s1446
        %s1448 = ssub.s32 1, %s1445
        %s1449 = scalar_lea.vmem %s1420, %s1448 [#allocation3]
        %s1450 = sshllo.u32 0, %s1445
        loop: start=0, step=1, limit=1
        $region895: #{skipgram_loss.1} parent=893 // loop_pre_header
          _
        $region896: #{skipgram_loss.1} parent=893 // loop_header
          %s1452 = sphi 0, %s1456
          %p1453 = scmp.ge.s32.totalorder %s1452, 1
          %s1457 = sphi %s1447, %s1447
          %s1458 = sphi %s1449, %s1449
        $region897: #{skipgram_loss.1} parent=893 // loop_header_branch
          %1455 = sbr.rel (%p1453) target = $region901
        $region898: #{skipgram_loss.1} parent=893 // loop_body
          %v1459 = vld [vmem:[%s1457] sm:%s1450]
          %1460 = vst [vmem:[%s1458] sm:%s1450] %v1459
        $region899: #{skipgram_loss.1} parent=893 // loop_footer
          %s1456 = sadd.s32 1, %s1452
        $region900: #{skipgram_loss.1} parent=893 // loop_footer_branch
          %1451 = sbr.rel target = $region896
        $region901: #{skipgram_loss.1} parent=893 // loop_exit
          _
      $region894: #{skipgram_loss.1} parent=878 // pred_fallthru
        _
    $region879: #{skipgram_loss.1} parent=1 // pred_fallthru
      _
    // Predicated region
    $region880: #{skipgram_loss.1} parent=1 // pred_check
      %p1426 = pneg %p1422
    $region881: #{skipgram_loss.1} parent=1 // pred_check_branch
      %1428 = sbr.rel (%p1426) target = $region883
    $region882: #{skipgram_loss.1} parent=1 // pred_region
      %s1429 = sshllo.u32 0, 1
      loop: start=0, step=1, limit=1
      $region884: #{skipgram_loss.1} parent=882 // loop_pre_header
        _
      $region885: #{skipgram_loss.1} parent=882 // loop_header
        %s1431 = sphi 0, %s1435
        %p1432 = scmp.ge.s32.totalorder %s1431, 1
        %s1436 = sphi %s1419, %s1419
        %s1437 = sphi %s1420, %s1420
      $region886: #{skipgram_loss.1} parent=882 // loop_header_branch
        %1434 = sbr.rel (%p1432) target = $region890
      $region887: #{skipgram_loss.1} parent=882 // loop_body
        %v1438 = vld [vmem:[%s1436] sm:%s1429]
        %1439 = vst [vmem:[%s1437] sm:%s1429] %v1438
      $region888: #{skipgram_loss.1} parent=882 // loop_footer
        %s1435 = sadd.s32 1, %s1431
      $region889: #{skipgram_loss.1} parent=882 // loop_footer_branch
        %1430 = sbr.rel target = $region885
      $region890: #{skipgram_loss.1} parent=882 // loop_exit
        _
    $region883: #{skipgram_loss.1} parent=1 // pred_fallthru
      _
    // Predicated region
    $region902: #{skipgram_loss.1} parent=1 // pred_check
      _
    $region903: #{skipgram_loss.1} parent=1 // pred_check_branch
      %1463 = sbr.rel (0) target = $region905
    $region904: #{skipgram_loss.1} parent=1 // pred_region
      %1464 = vsyncadd %s80, 16
    $region905: #{skipgram_loss.1} parent=1 // pred_fallthru
      _
    %s1465 = smul.u32 %s1370, 5
    %s1466 = sld [smem:[#allocation9 + %s1465]]
    %s1467 = scalar_lea.vmem %s4, %s1466
    %s1468 = scalar_lea.vmem [#allocation4], 4
    %p1470 = scmp.lt.u32.totalorder 1, 8
    %p1471 = pneg %p1470
    // Predicated region
    $region906: #{skipgram_loss.1} parent=1 // pred_check
      _
    $region907: #{skipgram_loss.1} parent=1 // pred_check_branch
      %1473 = sbr.rel (%p1470) target = $region909
    $region908: #{skipgram_loss.1} parent=1 // pred_region
      %s1488 = sand.u32 1, 7
      %p1489 = scmp.eq.s32.totalorder %s1488, 0
      %p1490 = pneg %p1489
      // Predicated region
      $region921: #{skipgram_loss.1} parent=908 // pred_check
        _
      $region922: #{skipgram_loss.1} parent=908 // pred_check_branch
        %1492 = sbr.rel (%p1489) target = $region924
      $region923: #{skipgram_loss.1} parent=908 // pred_region
        %s1493 = sand.u32 1, 7
        %s1494 = ssub.s32 1, %s1493
        %s1495 = scalar_lea.vmem %s1467, %s1494
        %s1496 = ssub.s32 1, %s1493
        %s1497 = scalar_lea.vmem %s1468, %s1496 [#allocation4]
        %s1498 = sshllo.u32 0, %s1493
        loop: start=0, step=1, limit=1
        $region925: #{skipgram_loss.1} parent=923 // loop_pre_header
          _
        $region926: #{skipgram_loss.1} parent=923 // loop_header
          %s1500 = sphi 0, %s1504
          %p1501 = scmp.ge.s32.totalorder %s1500, 1
          %s1505 = sphi %s1495, %s1495
          %s1506 = sphi %s1497, %s1497
        $region927: #{skipgram_loss.1} parent=923 // loop_header_branch
          %1503 = sbr.rel (%p1501) target = $region931
        $region928: #{skipgram_loss.1} parent=923 // loop_body
          %v1507 = vld [vmem:[%s1505] sm:%s1498]
          %1508 = vst [vmem:[%s1506] sm:%s1498] %v1507
        $region929: #{skipgram_loss.1} parent=923 // loop_footer
          %s1504 = sadd.s32 1, %s1500
        $region930: #{skipgram_loss.1} parent=923 // loop_footer_branch
          %1499 = sbr.rel target = $region926
        $region931: #{skipgram_loss.1} parent=923 // loop_exit
          _
      $region924: #{skipgram_loss.1} parent=908 // pred_fallthru
        _
    $region909: #{skipgram_loss.1} parent=1 // pred_fallthru
      _
    // Predicated region
    $region910: #{skipgram_loss.1} parent=1 // pred_check
      %p1474 = pneg %p1470
    $region911: #{skipgram_loss.1} parent=1 // pred_check_branch
      %1476 = sbr.rel (%p1474) target = $region913
    $region912: #{skipgram_loss.1} parent=1 // pred_region
      %s1477 = sshllo.u32 0, 1
      loop: start=0, step=1, limit=1
      $region914: #{skipgram_loss.1} parent=912 // loop_pre_header
        _
      $region915: #{skipgram_loss.1} parent=912 // loop_header
        %s1479 = sphi 0, %s1483
        %p1480 = scmp.ge.s32.totalorder %s1479, 1
        %s1484 = sphi %s1467, %s1467
        %s1485 = sphi %s1468, %s1468
      $region916: #{skipgram_loss.1} parent=912 // loop_header_branch
        %1482 = sbr.rel (%p1480) target = $region920
      $region917: #{skipgram_loss.1} parent=912 // loop_body
        %v1486 = vld [vmem:[%s1484] sm:%s1477]
        %1487 = vst [vmem:[%s1485] sm:%s1477] %v1486
      $region918: #{skipgram_loss.1} parent=912 // loop_footer
        %s1483 = sadd.s32 1, %s1479
      $region919: #{skipgram_loss.1} parent=912 // loop_footer_branch
        %1478 = sbr.rel target = $region915
      $region920: #{skipgram_loss.1} parent=912 // loop_exit
        _
    $region913: #{skipgram_loss.1} parent=1 // pred_fallthru
      _
    // Predicated region
    $region932: #{skipgram_loss.1} parent=1 // pred_check
      _
    $region933: #{skipgram_loss.1} parent=1 // pred_check_branch
      %1511 = sbr.rel (0) target = $region935
    $region934: #{skipgram_loss.1} parent=1 // pred_region
      %1512 = vsyncadd %s128, 16
    $region935: #{skipgram_loss.1} parent=1 // pred_fallthru
      _
    %s1513 = sadd.s32 %s1465, 1
    %s1514 = sld [smem:[#allocation9 + %s1513]]
    %s1515 = scalar_lea.vmem %s4, %s1514
    %s1516 = scalar_lea.vmem [#allocation4], 12
    %p1518 = scmp.lt.u32.totalorder 1, 8
    %p1519 = pneg %p1518
    // Predicated region
    $region936: #{skipgram_loss.1} parent=1 // pred_check
      _
    $region937: #{skipgram_loss.1} parent=1 // pred_check_branch
      %1521 = sbr.rel (%p1518) target = $region939
    $region938: #{skipgram_loss.1} parent=1 // pred_region
      %s1536 = sand.u32 1, 7
      %p1537 = scmp.eq.s32.totalorder %s1536, 0
      %p1538 = pneg %p1537
      // Predicated region
      $region951: #{skipgram_loss.1} parent=938 // pred_check
        _
      $region952: #{skipgram_loss.1} parent=938 // pred_check_branch
        %1540 = sbr.rel (%p1537) target = $region954
      $region953: #{skipgram_loss.1} parent=938 // pred_region
        %s1541 = sand.u32 1, 7
        %s1542 = ssub.s32 1, %s1541
        %s1543 = scalar_lea.vmem %s1515, %s1542
        %s1544 = ssub.s32 1, %s1541
        %s1545 = scalar_lea.vmem %s1516, %s1544 [#allocation4]
        %s1546 = sshllo.u32 0, %s1541
        loop: start=0, step=1, limit=1
        $region955: #{skipgram_loss.1} parent=953 // loop_pre_header
          _
        $region956: #{skipgram_loss.1} parent=953 // loop_header
          %s1548 = sphi 0, %s1552
          %p1549 = scmp.ge.s32.totalorder %s1548, 1
          %s1553 = sphi %s1543, %s1543
          %s1554 = sphi %s1545, %s1545
        $region957: #{skipgram_loss.1} parent=953 // loop_header_branch
          %1551 = sbr.rel (%p1549) target = $region961
        $region958: #{skipgram_loss.1} parent=953 // loop_body
          %v1555 = vld [vmem:[%s1553] sm:%s1546]
          %1556 = vst [vmem:[%s1554] sm:%s1546] %v1555
        $region959: #{skipgram_loss.1} parent=953 // loop_footer
          %s1552 = sadd.s32 1, %s1548
        $region960: #{skipgram_loss.1} parent=953 // loop_footer_branch
          %1547 = sbr.rel target = $region956
        $region961: #{skipgram_loss.1} parent=953 // loop_exit
          _
      $region954: #{skipgram_loss.1} parent=938 // pred_fallthru
        _
    $region939: #{skipgram_loss.1} parent=1 // pred_fallthru
      _
    // Predicated region
    $region940: #{skipgram_loss.1} parent=1 // pred_check
      %p1522 = pneg %p1518
    $region941: #{skipgram_loss.1} parent=1 // pred_check_branch
      %1524 = sbr.rel (%p1522) target = $region943
    $region942: #{skipgram_loss.1} parent=1 // pred_region
      %s1525 = sshllo.u32 0, 1
      loop: start=0, step=1, limit=1
      $region944: #{skipgram_loss.1} parent=942 // loop_pre_header
        _
      $region945: #{skipgram_loss.1} parent=942 // loop_header
        %s1527 = sphi 0, %s1531
        %p1528 = scmp.ge.s32.totalorder %s1527, 1
        %s1532 = sphi %s1515, %s1515
        %s1533 = sphi %s1516, %s1516
      $region946: #{skipgram_loss.1} parent=942 // loop_header_branch
        %1530 = sbr.rel (%p1528) target = $region950
      $region947: #{skipgram_loss.1} parent=942 // loop_body
        %v1534 = vld [vmem:[%s1532] sm:%s1525]
        %1535 = vst [vmem:[%s1533] sm:%s1525] %v1534
      $region948: #{skipgram_loss.1} parent=942 // loop_footer
        %s1531 = sadd.s32 1, %s1527
      $region949: #{skipgram_loss.1} parent=942 // loop_footer_branch
        %1526 = sbr.rel target = $region945
      $region950: #{skipgram_loss.1} parent=942 // loop_exit
        _
    $region943: #{skipgram_loss.1} parent=1 // pred_fallthru
      _
    // Predicated region
    $region962: #{skipgram_loss.1} parent=1 // pred_check
      _
    $region963: #{skipgram_loss.1} parent=1 // pred_check_branch
      %1559 = sbr.rel (0) target = $region965
    $region964: #{skipgram_loss.1} parent=1 // pred_region
      %1560 = vsyncadd %s128, 16
    $region965: #{skipgram_loss.1} parent=1 // pred_fallthru
      _
    %s1561 = sadd.s32 %s1465, 2
    %s1562 = sld [smem:[#allocation9 + %s1561]]
    %s1563 = scalar_lea.vmem %s4, %s1562
    %s1564 = scalar_lea.vmem [#allocation4], 20
    %p1566 = scmp.lt.u32.totalorder 1, 8
    %p1567 = pneg %p1566
    // Predicated region
    $region966: #{skipgram_loss.1} parent=1 // pred_check
      _
    $region967: #{skipgram_loss.1} parent=1 // pred_check_branch
      %1569 = sbr.rel (%p1566) target = $region969
    $region968: #{skipgram_loss.1} parent=1 // pred_region
      %s1584 = sand.u32 1, 7
      %p1585 = scmp.eq.s32.totalorder %s1584, 0
      %p1586 = pneg %p1585
      // Predicated region
      $region981: #{skipgram_loss.1} parent=968 // pred_check
        _
      $region982: #{skipgram_loss.1} parent=968 // pred_check_branch
        %1588 = sbr.rel (%p1585) target = $region984
      $region983: #{skipgram_loss.1} parent=968 // pred_region
        %s1589 = sand.u32 1, 7
        %s1590 = ssub.s32 1, %s1589
        %s1591 = scalar_lea.vmem %s1563, %s1590
        %s1592 = ssub.s32 1, %s1589
        %s1593 = scalar_lea.vmem %s1564, %s1592 [#allocation4]
        %s1594 = sshllo.u32 0, %s1589
        loop: start=0, step=1, limit=1
        $region985: #{skipgram_loss.1} parent=983 // loop_pre_header
          _
        $region986: #{skipgram_loss.1} parent=983 // loop_header
          %s1596 = sphi 0, %s1600
          %p1597 = scmp.ge.s32.totalorder %s1596, 1
          %s1601 = sphi %s1591, %s1591
          %s1602 = sphi %s1593, %s1593
        $region987: #{skipgram_loss.1} parent=983 // loop_header_branch
          %1599 = sbr.rel (%p1597) target = $region991
        $region988: #{skipgram_loss.1} parent=983 // loop_body
          %v1603 = vld [vmem:[%s1601] sm:%s1594]
          %1604 = vst [vmem:[%s1602] sm:%s1594] %v1603
        $region989: #{skipgram_loss.1} parent=983 // loop_footer
          %s1600 = sadd.s32 1, %s1596
        $region990: #{skipgram_loss.1} parent=983 // loop_footer_branch
          %1595 = sbr.rel target = $region986
        $region991: #{skipgram_loss.1} parent=983 // loop_exit
          _
      $region984: #{skipgram_loss.1} parent=968 // pred_fallthru
        _
    $region969: #{skipgram_loss.1} parent=1 // pred_fallthru
      _
    // Predicated region
    $region970: #{skipgram_loss.1} parent=1 // pred_check
      %p1570 = pneg %p1566
    $region971: #{skipgram_loss.1} parent=1 // pred_check_branch
      %1572 = sbr.rel (%p1570) target = $region973
    $region972: #{skipgram_loss.1} parent=1 // pred_region
      %s1573 = sshllo.u32 0, 1
      loop: start=0, step=1, limit=1
      $region974: #{skipgram_loss.1} parent=972 // loop_pre_header
        _
      $region975: #{skipgram_loss.1} parent=972 // loop_header
        %s1575 = sphi 0, %s1579
        %p1576 = scmp.ge.s32.totalorder %s1575, 1
        %s1580 = sphi %s1563, %s1563
        %s1581 = sphi %s1564, %s1564
      $region976: #{skipgram_loss.1} parent=972 // loop_header_branch
        %1578 = sbr.rel (%p1576) target = $region980
      $region977: #{skipgram_loss.1} parent=972 // loop_body
        %v1582 = vld [vmem:[%s1580] sm:%s1573]
        %1583 = vst [vmem:[%s1581] sm:%s1573] %v1582
      $region978: #{skipgram_loss.1} parent=972 // loop_footer
        %s1579 = sadd.s32 1, %s1575
      $region979: #{skipgram_loss.1} parent=972 // loop_footer_branch
        %1574 = sbr.rel target = $region975
      $region980: #{skipgram_loss.1} parent=972 // loop_exit
        _
    $region973: #{skipgram_loss.1} parent=1 // pred_fallthru
      _
    // Predicated region
    $region992: #{skipgram_loss.1} parent=1 // pred_check
      _
    $region993: #{skipgram_loss.1} parent=1 // pred_check_branch
      %1607 = sbr.rel (0) target = $region995
    $region994: #{skipgram_loss.1} parent=1 // pred_region
      %1608 = vsyncadd %s128, 16
    $region995: #{skipgram_loss.1} parent=1 // pred_fallthru
      _
    %s1609 = sadd.s32 %s1465, 3
    %s1610 = sld [smem:[#allocation9 + %s1609]]
    %s1611 = scalar_lea.vmem %s4, %s1610
    %s1612 = scalar_lea.vmem [#allocation4], 28
    %p1614 = scmp.lt.u32.totalorder 1, 8
    %p1615 = pneg %p1614
    // Predicated region
    $region996: #{skipgram_loss.1} parent=1 // pred_check
      _
    $region997: #{skipgram_loss.1} parent=1 // pred_check_branch
      %1617 = sbr.rel (%p1614) target = $region999
    $region998: #{skipgram_loss.1} parent=1 // pred_region
      %s1632 = sand.u32 1, 7
      %p1633 = scmp.eq.s32.totalorder %s1632, 0
      %p1634 = pneg %p1633
      // Predicated region
      $region1011: #{skipgram_loss.1} parent=998 // pred_check
        _
      $region1012: #{skipgram_loss.1} parent=998 // pred_check_branch
        %1636 = sbr.rel (%p1633) target = $region1014
      $region1013: #{skipgram_loss.1} parent=998 // pred_region
        %s1637 = sand.u32 1, 7
        %s1638 = ssub.s32 1, %s1637
        %s1639 = scalar_lea.vmem %s1611, %s1638
        %s1640 = ssub.s32 1, %s1637
        %s1641 = scalar_lea.vmem %s1612, %s1640 [#allocation4]
        %s1642 = sshllo.u32 0, %s1637
        loop: start=0, step=1, limit=1
        $region1015: #{skipgram_loss.1} parent=1013 // loop_pre_header
          _
        $region1016: #{skipgram_loss.1} parent=1013 // loop_header
          %s1644 = sphi 0, %s1648
          %p1645 = scmp.ge.s32.totalorder %s1644, 1
          %s1649 = sphi %s1639, %s1639
          %s1650 = sphi %s1641, %s1641
        $region1017: #{skipgram_loss.1} parent=1013 // loop_header_branch
          %1647 = sbr.rel (%p1645) target = $region1021
        $region1018: #{skipgram_loss.1} parent=1013 // loop_body
          %v1651 = vld [vmem:[%s1649] sm:%s1642]
          %1652 = vst [vmem:[%s1650] sm:%s1642] %v1651
        $region1019: #{skipgram_loss.1} parent=1013 // loop_footer
          %s1648 = sadd.s32 1, %s1644
        $region1020: #{skipgram_loss.1} parent=1013 // loop_footer_branch
          %1643 = sbr.rel target = $region1016
        $region1021: #{skipgram_loss.1} parent=1013 // loop_exit
          _
      $region1014: #{skipgram_loss.1} parent=998 // pred_fallthru
        _
    $region999: #{skipgram_loss.1} parent=1 // pred_fallthru
      _
    // Predicated region
    $region1000: #{skipgram_loss.1} parent=1 // pred_check
      %p1618 = pneg %p1614
    $region1001: #{skipgram_loss.1} parent=1 // pred_check_branch
      %1620 = sbr.rel (%p1618) target = $region1003
    $region1002: #{skipgram_loss.1} parent=1 // pred_region
      %s1621 = sshllo.u32 0, 1
      loop: start=0, step=1, limit=1
      $region1004: #{skipgram_loss.1} parent=1002 // loop_pre_header
        _
      $region1005: #{skipgram_loss.1} parent=1002 // loop_header
        %s1623 = sphi 0, %s1627
        %p1624 = scmp.ge.s32.totalorder %s1623, 1
        %s1628 = sphi %s1611, %s1611
        %s1629 = sphi %s1612, %s1612
      $region1006: #{skipgram_loss.1} parent=1002 // loop_header_branch
        %1626 = sbr.rel (%p1624) target = $region1010
      $region1007: #{skipgram_loss.1} parent=1002 // loop_body
        %v1630 = vld [vmem:[%s1628] sm:%s1621]
        %1631 = vst [vmem:[%s1629] sm:%s1621] %v1630
      $region1008: #{skipgram_loss.1} parent=1002 // loop_footer
        %s1627 = sadd.s32 1, %s1623
      $region1009: #{skipgram_loss.1} parent=1002 // loop_footer_branch
        %1622 = sbr.rel target = $region1005
      $region1010: #{skipgram_loss.1} parent=1002 // loop_exit
        _
    $region1003: #{skipgram_loss.1} parent=1 // pred_fallthru
      _
    // Predicated region
    $region1022: #{skipgram_loss.1} parent=1 // pred_check
      _
    $region1023: #{skipgram_loss.1} parent=1 // pred_check_branch
      %1655 = sbr.rel (0) target = $region1025
    $region1024: #{skipgram_loss.1} parent=1 // pred_region
      %1656 = vsyncadd %s128, 16
    $region1025: #{skipgram_loss.1} parent=1 // pred_fallthru
      _
    %s1657 = sadd.s32 %s1465, 4
    %s1658 = sld [smem:[#allocation9 + %s1657]]
    %s1659 = scalar_lea.vmem %s4, %s1658
    %s1660 = scalar_lea.vmem [#allocation4], 36
    %p1662 = scmp.lt.u32.totalorder 1, 8
    %p1663 = pneg %p1662
    // Predicated region
    $region1026: #{skipgram_loss.1} parent=1 // pred_check
      _
    $region1027: #{skipgram_loss.1} parent=1 // pred_check_branch
      %1665 = sbr.rel (%p1662) target = $region1029
    $region1028: #{skipgram_loss.1} parent=1 // pred_region
      %s1680 = sand.u32 1, 7
      %p1681 = scmp.eq.s32.totalorder %s1680, 0
      %p1682 = pneg %p1681
      // Predicated region
      $region1041: #{skipgram_loss.1} parent=1028 // pred_check
        _
      $region1042: #{skipgram_loss.1} parent=1028 // pred_check_branch
        %1684 = sbr.rel (%p1681) target = $region1044
      $region1043: #{skipgram_loss.1} parent=1028 // pred_region
        %s1685 = sand.u32 1, 7
        %s1686 = ssub.s32 1, %s1685
        %s1687 = scalar_lea.vmem %s1659, %s1686
        %s1688 = ssub.s32 1, %s1685
        %s1689 = scalar_lea.vmem %s1660, %s1688 [#allocation4]
        %s1690 = sshllo.u32 0, %s1685
        loop: start=0, step=1, limit=1
        $region1045: #{skipgram_loss.1} parent=1043 // loop_pre_header
          _
        $region1046: #{skipgram_loss.1} parent=1043 // loop_header
          %s1692 = sphi 0, %s1696
          %p1693 = scmp.ge.s32.totalorder %s1692, 1
          %s1697 = sphi %s1687, %s1687
          %s1698 = sphi %s1689, %s1689
        $region1047: #{skipgram_loss.1} parent=1043 // loop_header_branch
          %1695 = sbr.rel (%p1693) target = $region1051
        $region1048: #{skipgram_loss.1} parent=1043 // loop_body
          %v1699 = vld [vmem:[%s1697] sm:%s1690]
          %1700 = vst [vmem:[%s1698] sm:%s1690] %v1699
        $region1049: #{skipgram_loss.1} parent=1043 // loop_footer
          %s1696 = sadd.s32 1, %s1692
        $region1050: #{skipgram_loss.1} parent=1043 // loop_footer_branch
          %1691 = sbr.rel target = $region1046
        $region1051: #{skipgram_loss.1} parent=1043 // loop_exit
          _
      $region1044: #{skipgram_loss.1} parent=1028 // pred_fallthru
        _
    $region1029: #{skipgram_loss.1} parent=1 // pred_fallthru
      _
    // Predicated region
    $region1030: #{skipgram_loss.1} parent=1 // pred_check
      %p1666 = pneg %p1662
    $region1031: #{skipgram_loss.1} parent=1 // pred_check_branch
      %1668 = sbr.rel (%p1666) target = $region1033
    $region1032: #{skipgram_loss.1} parent=1 // pred_region
      %s1669 = sshllo.u32 0, 1
      loop: start=0, step=1, limit=1
      $region1034: #{skipgram_loss.1} parent=1032 // loop_pre_header
        _
      $region1035: #{skipgram_loss.1} parent=1032 // loop_header
        %s1671 = sphi 0, %s1675
        %p1672 = scmp.ge.s32.totalorder %s1671, 1
        %s1676 = sphi %s1659, %s1659
        %s1677 = sphi %s1660, %s1660
      $region1036: #{skipgram_loss.1} parent=1032 // loop_header_branch
        %1674 = sbr.rel (%p1672) target = $region1040
      $region1037: #{skipgram_loss.1} parent=1032 // loop_body
        %v1678 = vld [vmem:[%s1676] sm:%s1669]
        %1679 = vst [vmem:[%s1677] sm:%s1669] %v1678
      $region1038: #{skipgram_loss.1} parent=1032 // loop_footer
        %s1675 = sadd.s32 1, %s1671
      $region1039: #{skipgram_loss.1} parent=1032 // loop_footer_branch
        %1670 = sbr.rel target = $region1035
      $region1040: #{skipgram_loss.1} parent=1032 // loop_exit
        _
    $region1033: #{skipgram_loss.1} parent=1 // pred_fallthru
      _
    // Predicated region
    $region1052: #{skipgram_loss.1} parent=1 // pred_check
      _
    $region1053: #{skipgram_loss.1} parent=1 // pred_check_branch
      %1703 = sbr.rel (0) target = $region1055
    $region1054: #{skipgram_loss.1} parent=1 // pred_region
      %1704 = vsyncadd %s128, 16
    $region1055: #{skipgram_loss.1} parent=1 // pred_fallthru
      _
    %s1705 = sadd.s32 %s25, 5
    %s1706 = sld [smem:[#allocation7 + %s1705]]
    %s1707 = sld [smem:[#allocation8 + %s1705]]
    %s1708 = scalar_lea.vmem %s3, %s1706
    %s1709 = scalar_lea.vmem [#allocation2], 5
    %p1711 = scmp.lt.u32.totalorder 1, 8
    %p1712 = pneg %p1711
    // Predicated region
    $region1056: #{skipgram_loss.1} parent=1 // pred_check
      _
    $region1057: #{skipgram_loss.1} parent=1 // pred_check_branch
      %1714 = sbr.rel (%p1711) target = $region1059
    $region1058: #{skipgram_loss.1} parent=1 // pred_region
      %s1729 = sand.u32 1, 7
      %p1730 = scmp.eq.s32.totalorder %s1729, 0
      %p1731 = pneg %p1730
      // Predicated region
      $region1071: #{skipgram_loss.1} parent=1058 // pred_check
        _
      $region1072: #{skipgram_loss.1} parent=1058 // pred_check_branch
        %1733 = sbr.rel (%p1730) target = $region1074
      $region1073: #{skipgram_loss.1} parent=1058 // pred_region
        %s1734 = sand.u32 1, 7
        %s1735 = ssub.s32 1, %s1734
        %s1736 = scalar_lea.vmem %s1708, %s1735
        %s1737 = ssub.s32 1, %s1734
        %s1738 = scalar_lea.vmem %s1709, %s1737 [#allocation2]
        %s1739 = sshllo.u32 0, %s1734
        loop: start=0, step=1, limit=1
        $region1075: #{skipgram_loss.1} parent=1073 // loop_pre_header
          _
        $region1076: #{skipgram_loss.1} parent=1073 // loop_header
          %s1741 = sphi 0, %s1745
          %p1742 = scmp.ge.s32.totalorder %s1741, 1
          %s1746 = sphi %s1736, %s1736
          %s1747 = sphi %s1738, %s1738
        $region1077: #{skipgram_loss.1} parent=1073 // loop_header_branch
          %1744 = sbr.rel (%p1742) target = $region1081
        $region1078: #{skipgram_loss.1} parent=1073 // loop_body
          %v1748 = vld [vmem:[%s1746] sm:%s1739]
          %1749 = vst [vmem:[%s1747] sm:%s1739] %v1748
        $region1079: #{skipgram_loss.1} parent=1073 // loop_footer
          %s1745 = sadd.s32 1, %s1741
        $region1080: #{skipgram_loss.1} parent=1073 // loop_footer_branch
          %1740 = sbr.rel target = $region1076
        $region1081: #{skipgram_loss.1} parent=1073 // loop_exit
          _
      $region1074: #{skipgram_loss.1} parent=1058 // pred_fallthru
        _
    $region1059: #{skipgram_loss.1} parent=1 // pred_fallthru
      _
    // Predicated region
    $region1060: #{skipgram_loss.1} parent=1 // pred_check
      %p1715 = pneg %p1711
    $region1061: #{skipgram_loss.1} parent=1 // pred_check_branch
      %1717 = sbr.rel (%p1715) target = $region1063
    $region1062: #{skipgram_loss.1} parent=1 // pred_region
      %s1718 = sshllo.u32 0, 1
      loop: start=0, step=1, limit=1
      $region1064: #{skipgram_loss.1} parent=1062 // loop_pre_header
        _
      $region1065: #{skipgram_loss.1} parent=1062 // loop_header
        %s1720 = sphi 0, %s1724
        %p1721 = scmp.ge.s32.totalorder %s1720, 1
        %s1725 = sphi %s1708, %s1708
        %s1726 = sphi %s1709, %s1709
      $region1066: #{skipgram_loss.1} parent=1062 // loop_header_branch
        %1723 = sbr.rel (%p1721) target = $region1070
      $region1067: #{skipgram_loss.1} parent=1062 // loop_body
        %v1727 = vld [vmem:[%s1725] sm:%s1718]
        %1728 = vst [vmem:[%s1726] sm:%s1718] %v1727
      $region1068: #{skipgram_loss.1} parent=1062 // loop_footer
        %s1724 = sadd.s32 1, %s1720
      $region1069: #{skipgram_loss.1} parent=1062 // loop_footer_branch
        %1719 = sbr.rel target = $region1065
      $region1070: #{skipgram_loss.1} parent=1062 // loop_exit
        _
    $region1063: #{skipgram_loss.1} parent=1 // pred_fallthru
      _
    // Predicated region
    $region1082: #{skipgram_loss.1} parent=1 // pred_check
      _
    $region1083: #{skipgram_loss.1} parent=1 // pred_check_branch
      %1752 = sbr.rel (0) target = $region1085
    $region1084: #{skipgram_loss.1} parent=1 // pred_region
      %1753 = vsyncadd [#allocation5], 16
    $region1085: #{skipgram_loss.1} parent=1 // pred_fallthru
      _
    %s1754 = scalar_lea.vmem %s4, %s1707
    %s1755 = scalar_lea.vmem [#allocation3], 5
    %p1757 = scmp.lt.u32.totalorder 1, 8
    %p1758 = pneg %p1757
    // Predicated region
    $region1086: #{skipgram_loss.1} parent=1 // pred_check
      _
    $region1087: #{skipgram_loss.1} parent=1 // pred_check_branch
      %1760 = sbr.rel (%p1757) target = $region1089
    $region1088: #{skipgram_loss.1} parent=1 // pred_region
      %s1775 = sand.u32 1, 7
      %p1776 = scmp.eq.s32.totalorder %s1775, 0
      %p1777 = pneg %p1776
      // Predicated region
      $region1101: #{skipgram_loss.1} parent=1088 // pred_check
        _
      $region1102: #{skipgram_loss.1} parent=1088 // pred_check_branch
        %1779 = sbr.rel (%p1776) target = $region1104
      $region1103: #{skipgram_loss.1} parent=1088 // pred_region
        %s1780 = sand.u32 1, 7
        %s1781 = ssub.s32 1, %s1780
        %s1782 = scalar_lea.vmem %s1754, %s1781
        %s1783 = ssub.s32 1, %s1780
        %s1784 = scalar_lea.vmem %s1755, %s1783 [#allocation3]
        %s1785 = sshllo.u32 0, %s1780
        loop: start=0, step=1, limit=1
        $region1105: #{skipgram_loss.1} parent=1103 // loop_pre_header
          _
        $region1106: #{skipgram_loss.1} parent=1103 // loop_header
          %s1787 = sphi 0, %s1791
          %p1788 = scmp.ge.s32.totalorder %s1787, 1
          %s1792 = sphi %s1782, %s1782
          %s1793 = sphi %s1784, %s1784
        $region1107: #{skipgram_loss.1} parent=1103 // loop_header_branch
          %1790 = sbr.rel (%p1788) target = $region1111
        $region1108: #{skipgram_loss.1} parent=1103 // loop_body
          %v1794 = vld [vmem:[%s1792] sm:%s1785]
          %1795 = vst [vmem:[%s1793] sm:%s1785] %v1794
        $region1109: #{skipgram_loss.1} parent=1103 // loop_footer
          %s1791 = sadd.s32 1, %s1787
        $region1110: #{skipgram_loss.1} parent=1103 // loop_footer_branch
          %1786 = sbr.rel target = $region1106
        $region1111: #{skipgram_loss.1} parent=1103 // loop_exit
          _
      $region1104: #{skipgram_loss.1} parent=1088 // pred_fallthru
        _
    $region1089: #{skipgram_loss.1} parent=1 // pred_fallthru
      _
    // Predicated region
    $region1090: #{skipgram_loss.1} parent=1 // pred_check
      %p1761 = pneg %p1757
    $region1091: #{skipgram_loss.1} parent=1 // pred_check_branch
      %1763 = sbr.rel (%p1761) target = $region1093
    $region1092: #{skipgram_loss.1} parent=1 // pred_region
      %s1764 = sshllo.u32 0, 1
      loop: start=0, step=1, limit=1
      $region1094: #{skipgram_loss.1} parent=1092 // loop_pre_header
        _
      $region1095: #{skipgram_loss.1} parent=1092 // loop_header
        %s1766 = sphi 0, %s1770
        %p1767 = scmp.ge.s32.totalorder %s1766, 1
        %s1771 = sphi %s1754, %s1754
        %s1772 = sphi %s1755, %s1755
      $region1096: #{skipgram_loss.1} parent=1092 // loop_header_branch
        %1769 = sbr.rel (%p1767) target = $region1100
      $region1097: #{skipgram_loss.1} parent=1092 // loop_body
        %v1773 = vld [vmem:[%s1771] sm:%s1764]
        %1774 = vst [vmem:[%s1772] sm:%s1764] %v1773
      $region1098: #{skipgram_loss.1} parent=1092 // loop_footer
        %s1770 = sadd.s32 1, %s1766
      $region1099: #{skipgram_loss.1} parent=1092 // loop_footer_branch
        %1765 = sbr.rel target = $region1095
      $region1100: #{skipgram_loss.1} parent=1092 // loop_exit
        _
    $region1093: #{skipgram_loss.1} parent=1 // pred_fallthru
      _
    // Predicated region
    $region1112: #{skipgram_loss.1} parent=1 // pred_check
      _
    $region1113: #{skipgram_loss.1} parent=1 // pred_check_branch
      %1798 = sbr.rel (0) target = $region1115
    $region1114: #{skipgram_loss.1} parent=1 // pred_region
      %1799 = vsyncadd %s80, 16
    $region1115: #{skipgram_loss.1} parent=1 // pred_fallthru
      _
    %s1800 = smul.u32 %s1705, 5
    %s1801 = sld [smem:[#allocation9 + %s1800]]
    %s1802 = scalar_lea.vmem %s4, %s1801
    %s1803 = scalar_lea.vmem [#allocation4], 5
    %p1805 = scmp.lt.u32.totalorder 1, 8
    %p1806 = pneg %p1805
    // Predicated region
    $region1116: #{skipgram_loss.1} parent=1 // pred_check
      _
    $region1117: #{skipgram_loss.1} parent=1 // pred_check_branch
      %1808 = sbr.rel (%p1805) target = $region1119
    $region1118: #{skipgram_loss.1} parent=1 // pred_region
      %s1823 = sand.u32 1, 7
      %p1824 = scmp.eq.s32.totalorder %s1823, 0
      %p1825 = pneg %p1824
      // Predicated region
      $region1131: #{skipgram_loss.1} parent=1118 // pred_check
        _
      $region1132: #{skipgram_loss.1} parent=1118 // pred_check_branch
        %1827 = sbr.rel (%p1824) target = $region1134
      $region1133: #{skipgram_loss.1} parent=1118 // pred_region
        %s1828 = sand.u32 1, 7
        %s1829 = ssub.s32 1, %s1828
        %s1830 = scalar_lea.vmem %s1802, %s1829
        %s1831 = ssub.s32 1, %s1828
        %s1832 = scalar_lea.vmem %s1803, %s1831 [#allocation4]
        %s1833 = sshllo.u32 0, %s1828
        loop: start=0, step=1, limit=1
        $region1135: #{skipgram_loss.1} parent=1133 // loop_pre_header
          _
        $region1136: #{skipgram_loss.1} parent=1133 // loop_header
          %s1835 = sphi 0, %s1839
          %p1836 = scmp.ge.s32.totalorder %s1835, 1
          %s1840 = sphi %s1830, %s1830
          %s1841 = sphi %s1832, %s1832
        $region1137: #{skipgram_loss.1} parent=1133 // loop_header_branch
          %1838 = sbr.rel (%p1836) target = $region1141
        $region1138: #{skipgram_loss.1} parent=1133 // loop_body
          %v1842 = vld [vmem:[%s1840] sm:%s1833]
          %1843 = vst [vmem:[%s1841] sm:%s1833] %v1842
        $region1139: #{skipgram_loss.1} parent=1133 // loop_footer
          %s1839 = sadd.s32 1, %s1835
        $region1140: #{skipgram_loss.1} parent=1133 // loop_footer_branch
          %1834 = sbr.rel target = $region1136
        $region1141: #{skipgram_loss.1} parent=1133 // loop_exit
          _
      $region1134: #{skipgram_loss.1} parent=1118 // pred_fallthru
        _
    $region1119: #{skipgram_loss.1} parent=1 // pred_fallthru
      _
    // Predicated region
    $region1120: #{skipgram_loss.1} parent=1 // pred_check
      %p1809 = pneg %p1805
    $region1121: #{skipgram_loss.1} parent=1 // pred_check_branch
      %1811 = sbr.rel (%p1809) target = $region1123
    $region1122: #{skipgram_loss.1} parent=1 // pred_region
      %s1812 = sshllo.u32 0, 1
      loop: start=0, step=1, limit=1
      $region1124: #{skipgram_loss.1} parent=1122 // loop_pre_header
        _
      $region1125: #{skipgram_loss.1} parent=1122 // loop_header
        %s1814 = sphi 0, %s1818
        %p1815 = scmp.ge.s32.totalorder %s1814, 1
        %s1819 = sphi %s1802, %s1802
        %s1820 = sphi %s1803, %s1803
      $region1126: #{skipgram_loss.1} parent=1122 // loop_header_branch
        %1817 = sbr.rel (%p1815) target = $region1130
      $region1127: #{skipgram_loss.1} parent=1122 // loop_body
        %v1821 = vld [vmem:[%s1819] sm:%s1812]
        %1822 = vst [vmem:[%s1820] sm:%s1812] %v1821
      $region1128: #{skipgram_loss.1} parent=1122 // loop_footer
        %s1818 = sadd.s32 1, %s1814
      $region1129: #{skipgram_loss.1} parent=1122 // loop_footer_branch
        %1813 = sbr.rel target = $region1125
      $region1130: #{skipgram_loss.1} parent=1122 // loop_exit
        _
    $region1123: #{skipgram_loss.1} parent=1 // pred_fallthru
      _
    // Predicated region
    $region1142: #{skipgram_loss.1} parent=1 // pred_check
      _
    $region1143: #{skipgram_loss.1} parent=1 // pred_check_branch
      %1846 = sbr.rel (0) target = $region1145
    $region1144: #{skipgram_loss.1} parent=1 // pred_region
      %1847 = vsyncadd %s128, 16
    $region1145: #{skipgram_loss.1} parent=1 // pred_fallthru
      _
    %s1848 = sadd.s32 %s1800, 1
    %s1849 = sld [smem:[#allocation9 + %s1848]]
    %s1850 = scalar_lea.vmem %s4, %s1849
    %s1851 = scalar_lea.vmem [#allocation4], 13
    %p1853 = scmp.lt.u32.totalorder 1, 8
    %p1854 = pneg %p1853
    // Predicated region
    $region1146: #{skipgram_loss.1} parent=1 // pred_check
      _
    $region1147: #{skipgram_loss.1} parent=1 // pred_check_branch
      %1856 = sbr.rel (%p1853) target = $region1149
    $region1148: #{skipgram_loss.1} parent=1 // pred_region
      %s1871 = sand.u32 1, 7
      %p1872 = scmp.eq.s32.totalorder %s1871, 0
      %p1873 = pneg %p1872
      // Predicated region
      $region1161: #{skipgram_loss.1} parent=1148 // pred_check
        _
      $region1162: #{skipgram_loss.1} parent=1148 // pred_check_branch
        %1875 = sbr.rel (%p1872) target = $region1164
      $region1163: #{skipgram_loss.1} parent=1148 // pred_region
        %s1876 = sand.u32 1, 7
        %s1877 = ssub.s32 1, %s1876
        %s1878 = scalar_lea.vmem %s1850, %s1877
        %s1879 = ssub.s32 1, %s1876
        %s1880 = scalar_lea.vmem %s1851, %s1879 [#allocation4]
        %s1881 = sshllo.u32 0, %s1876
        loop: start=0, step=1, limit=1
        $region1165: #{skipgram_loss.1} parent=1163 // loop_pre_header
          _
        $region1166: #{skipgram_loss.1} parent=1163 // loop_header
          %s1883 = sphi 0, %s1887
          %p1884 = scmp.ge.s32.totalorder %s1883, 1
          %s1888 = sphi %s1878, %s1878
          %s1889 = sphi %s1880, %s1880
        $region1167: #{skipgram_loss.1} parent=1163 // loop_header_branch
          %1886 = sbr.rel (%p1884) target = $region1171
        $region1168: #{skipgram_loss.1} parent=1163 // loop_body
          %v1890 = vld [vmem:[%s1888] sm:%s1881]
          %1891 = vst [vmem:[%s1889] sm:%s1881] %v1890
        $region1169: #{skipgram_loss.1} parent=1163 // loop_footer
          %s1887 = sadd.s32 1, %s1883
        $region1170: #{skipgram_loss.1} parent=1163 // loop_footer_branch
          %1882 = sbr.rel target = $region1166
        $region1171: #{skipgram_loss.1} parent=1163 // loop_exit
          _
      $region1164: #{skipgram_loss.1} parent=1148 // pred_fallthru
        _
    $region1149: #{skipgram_loss.1} parent=1 // pred_fallthru
      _
    // Predicated region
    $region1150: #{skipgram_loss.1} parent=1 // pred_check
      %p1857 = pneg %p1853
    $region1151: #{skipgram_loss.1} parent=1 // pred_check_branch
      %1859 = sbr.rel (%p1857) target = $region1153
    $region1152: #{skipgram_loss.1} parent=1 // pred_region
      %s1860 = sshllo.u32 0, 1
      loop: start=0, step=1, limit=1
      $region1154: #{skipgram_loss.1} parent=1152 // loop_pre_header
        _
      $region1155: #{skipgram_loss.1} parent=1152 // loop_header
        %s1862 = sphi 0, %s1866
        %p1863 = scmp.ge.s32.totalorder %s1862, 1
        %s1867 = sphi %s1850, %s1850
        %s1868 = sphi %s1851, %s1851
      $region1156: #{skipgram_loss.1} parent=1152 // loop_header_branch
        %1865 = sbr.rel (%p1863) target = $region1160
      $region1157: #{skipgram_loss.1} parent=1152 // loop_body
        %v1869 = vld [vmem:[%s1867] sm:%s1860]
        %1870 = vst [vmem:[%s1868] sm:%s1860] %v1869
      $region1158: #{skipgram_loss.1} parent=1152 // loop_footer
        %s1866 = sadd.s32 1, %s1862
      $region1159: #{skipgram_loss.1} parent=1152 // loop_footer_branch
        %1861 = sbr.rel target = $region1155
      $region1160: #{skipgram_loss.1} parent=1152 // loop_exit
        _
    $region1153: #{skipgram_loss.1} parent=1 // pred_fallthru
      _
    // Predicated region
    $region1172: #{skipgram_loss.1} parent=1 // pred_check
      _
    $region1173: #{skipgram_loss.1} parent=1 // pred_check_branch
      %1894 = sbr.rel (0) target = $region1175
    $region1174: #{skipgram_loss.1} parent=1 // pred_region
      %1895 = vsyncadd %s128, 16
    $region1175: #{skipgram_loss.1} parent=1 // pred_fallthru
      _
    %s1896 = sadd.s32 %s1800, 2
    %s1897 = sld [smem:[#allocation9 + %s1896]]
    %s1898 = scalar_lea.vmem %s4, %s1897
    %s1899 = scalar_lea.vmem [#allocation4], 21
    %p1901 = scmp.lt.u32.totalorder 1, 8
    %p1902 = pneg %p1901
    // Predicated region
    $region1176: #{skipgram_loss.1} parent=1 // pred_check
      _
    $region1177: #{skipgram_loss.1} parent=1 // pred_check_branch
      %1904 = sbr.rel (%p1901) target = $region1179
    $region1178: #{skipgram_loss.1} parent=1 // pred_region
      %s1919 = sand.u32 1, 7
      %p1920 = scmp.eq.s32.totalorder %s1919, 0
      %p1921 = pneg %p1920
      // Predicated region
      $region1191: #{skipgram_loss.1} parent=1178 // pred_check
        _
      $region1192: #{skipgram_loss.1} parent=1178 // pred_check_branch
        %1923 = sbr.rel (%p1920) target = $region1194
      $region1193: #{skipgram_loss.1} parent=1178 // pred_region
        %s1924 = sand.u32 1, 7
        %s1925 = ssub.s32 1, %s1924
        %s1926 = scalar_lea.vmem %s1898, %s1925
        %s1927 = ssub.s32 1, %s1924
        %s1928 = scalar_lea.vmem %s1899, %s1927 [#allocation4]
        %s1929 = sshllo.u32 0, %s1924
        loop: start=0, step=1, limit=1
        $region1195: #{skipgram_loss.1} parent=1193 // loop_pre_header
          _
        $region1196: #{skipgram_loss.1} parent=1193 // loop_header
          %s1931 = sphi 0, %s1935
          %p1932 = scmp.ge.s32.totalorder %s1931, 1
          %s1936 = sphi %s1926, %s1926
          %s1937 = sphi %s1928, %s1928
        $region1197: #{skipgram_loss.1} parent=1193 // loop_header_branch
          %1934 = sbr.rel (%p1932) target = $region1201
        $region1198: #{skipgram_loss.1} parent=1193 // loop_body
          %v1938 = vld [vmem:[%s1936] sm:%s1929]
          %1939 = vst [vmem:[%s1937] sm:%s1929] %v1938
        $region1199: #{skipgram_loss.1} parent=1193 // loop_footer
          %s1935 = sadd.s32 1, %s1931
        $region1200: #{skipgram_loss.1} parent=1193 // loop_footer_branch
          %1930 = sbr.rel target = $region1196
        $region1201: #{skipgram_loss.1} parent=1193 // loop_exit
          _
      $region1194: #{skipgram_loss.1} parent=1178 // pred_fallthru
        _
    $region1179: #{skipgram_loss.1} parent=1 // pred_fallthru
      _
    // Predicated region
    $region1180: #{skipgram_loss.1} parent=1 // pred_check
      %p1905 = pneg %p1901
    $region1181: #{skipgram_loss.1} parent=1 // pred_check_branch
      %1907 = sbr.rel (%p1905) target = $region1183
    $region1182: #{skipgram_loss.1} parent=1 // pred_region
      %s1908 = sshllo.u32 0, 1
      loop: start=0, step=1, limit=1
      $region1184: #{skipgram_loss.1} parent=1182 // loop_pre_header
        _
      $region1185: #{skipgram_loss.1} parent=1182 // loop_header
        %s1910 = sphi 0, %s1914
        %p1911 = scmp.ge.s32.totalorder %s1910, 1
        %s1915 = sphi %s1898, %s1898
        %s1916 = sphi %s1899, %s1899
      $region1186: #{skipgram_loss.1} parent=1182 // loop_header_branch
        %1913 = sbr.rel (%p1911) target = $region1190
      $region1187: #{skipgram_loss.1} parent=1182 // loop_body
        %v1917 = vld [vmem:[%s1915] sm:%s1908]
        %1918 = vst [vmem:[%s1916] sm:%s1908] %v1917
      $region1188: #{skipgram_loss.1} parent=1182 // loop_footer
        %s1914 = sadd.s32 1, %s1910
      $region1189: #{skipgram_loss.1} parent=1182 // loop_footer_branch
        %1909 = sbr.rel target = $region1185
      $region1190: #{skipgram_loss.1} parent=1182 // loop_exit
        _
    $region1183: #{skipgram_loss.1} parent=1 // pred_fallthru
      _
    // Predicated region
    $region1202: #{skipgram_loss.1} parent=1 // pred_check
      _
    $region1203: #{skipgram_loss.1} parent=1 // pred_check_branch
      %1942 = sbr.rel (0) target = $region1205
    $region1204: #{skipgram_loss.1} parent=1 // pred_region
      %1943 = vsyncadd %s128, 16
    $region1205: #{skipgram_loss.1} parent=1 // pred_fallthru
      _
    %s1944 = sadd.s32 %s1800, 3
    %s1945 = sld [smem:[#allocation9 + %s1944]]
    %s1946 = scalar_lea.vmem %s4, %s1945
    %s1947 = scalar_lea.vmem [#allocation4], 29
    %p1949 = scmp.lt.u32.totalorder 1, 8
    %p1950 = pneg %p1949
    // Predicated region
    $region1206: #{skipgram_loss.1} parent=1 // pred_check
      _
    $region1207: #{skipgram_loss.1} parent=1 // pred_check_branch
      %1952 = sbr.rel (%p1949) target = $region1209
    $region1208: #{skipgram_loss.1} parent=1 // pred_region
      %s1967 = sand.u32 1, 7
      %p1968 = scmp.eq.s32.totalorder %s1967, 0
      %p1969 = pneg %p1968
      // Predicated region
      $region1221: #{skipgram_loss.1} parent=1208 // pred_check
        _
      $region1222: #{skipgram_loss.1} parent=1208 // pred_check_branch
        %1971 = sbr.rel (%p1968) target = $region1224
      $region1223: #{skipgram_loss.1} parent=1208 // pred_region
        %s1972 = sand.u32 1, 7
        %s1973 = ssub.s32 1, %s1972
        %s1974 = scalar_lea.vmem %s1946, %s1973
        %s1975 = ssub.s32 1, %s1972
        %s1976 = scalar_lea.vmem %s1947, %s1975 [#allocation4]
        %s1977 = sshllo.u32 0, %s1972
        loop: start=0, step=1, limit=1
        $region1225: #{skipgram_loss.1} parent=1223 // loop_pre_header
          _
        $region1226: #{skipgram_loss.1} parent=1223 // loop_header
          %s1979 = sphi 0, %s1983
          %p1980 = scmp.ge.s32.totalorder %s1979, 1
          %s1984 = sphi %s1974, %s1974
          %s1985 = sphi %s1976, %s1976
        $region1227: #{skipgram_loss.1} parent=1223 // loop_header_branch
          %1982 = sbr.rel (%p1980) target = $region1231
        $region1228: #{skipgram_loss.1} parent=1223 // loop_body
          %v1986 = vld [vmem:[%s1984] sm:%s1977]
          %1987 = vst [vmem:[%s1985] sm:%s1977] %v1986
        $region1229: #{skipgram_loss.1} parent=1223 // loop_footer
          %s1983 = sadd.s32 1, %s1979
        $region1230: #{skipgram_loss.1} parent=1223 // loop_footer_branch
          %1978 = sbr.rel target = $region1226
        $region1231: #{skipgram_loss.1} parent=1223 // loop_exit
          _
      $region1224: #{skipgram_loss.1} parent=1208 // pred_fallthru
        _
    $region1209: #{skipgram_loss.1} parent=1 // pred_fallthru
      _
    // Predicated region
    $region1210: #{skipgram_loss.1} parent=1 // pred_check
      %p1953 = pneg %p1949
    $region1211: #{skipgram_loss.1} parent=1 // pred_check_branch
      %1955 = sbr.rel (%p1953) target = $region1213
    $region1212: #{skipgram_loss.1} parent=1 // pred_region
      %s1956 = sshllo.u32 0, 1
      loop: start=0, step=1, limit=1
      $region1214: #{skipgram_loss.1} parent=1212 // loop_pre_header
        _
      $region1215: #{skipgram_loss.1} parent=1212 // loop_header
        %s1958 = sphi 0, %s1962
        %p1959 = scmp.ge.s32.totalorder %s1958, 1
        %s1963 = sphi %s1946, %s1946
        %s1964 = sphi %s1947, %s1947
      $region1216: #{skipgram_loss.1} parent=1212 // loop_header_branch
        %1961 = sbr.rel (%p1959) target = $region1220
      $region1217: #{skipgram_loss.1} parent=1212 // loop_body
        %v1965 = vld [vmem:[%s1963] sm:%s1956]
        %1966 = vst [vmem:[%s1964] sm:%s1956] %v1965
      $region1218: #{skipgram_loss.1} parent=1212 // loop_footer
        %s1962 = sadd.s32 1, %s1958
      $region1219: #{skipgram_loss.1} parent=1212 // loop_footer_branch
        %1957 = sbr.rel target = $region1215
      $region1220: #{skipgram_loss.1} parent=1212 // loop_exit
        _
    $region1213: #{skipgram_loss.1} parent=1 // pred_fallthru
      _
    // Predicated region
    $region1232: #{skipgram_loss.1} parent=1 // pred_check
      _
    $region1233: #{skipgram_loss.1} parent=1 // pred_check_branch
      %1990 = sbr.rel (0) target = $region1235
    $region1234: #{skipgram_loss.1} parent=1 // pred_region
      %1991 = vsyncadd %s128, 16
    $region1235: #{skipgram_loss.1} parent=1 // pred_fallthru
      _
    %s1992 = sadd.s32 %s1800, 4
    %s1993 = sld [smem:[#allocation9 + %s1992]]
    %s1994 = scalar_lea.vmem %s4, %s1993
    %s1995 = scalar_lea.vmem [#allocation4], 37
    %p1997 = scmp.lt.u32.totalorder 1, 8
    %p1998 = pneg %p1997
    // Predicated region
    $region1236: #{skipgram_loss.1} parent=1 // pred_check
      _
    $region1237: #{skipgram_loss.1} parent=1 // pred_check_branch
      %2000 = sbr.rel (%p1997) target = $region1239
    $region1238: #{skipgram_loss.1} parent=1 // pred_region
      %s2015 = sand.u32 1, 7
      %p2016 = scmp.eq.s32.totalorder %s2015, 0
      %p2017 = pneg %p2016
      // Predicated region
      $region1251: #{skipgram_loss.1} parent=1238 // pred_check
        _
      $region1252: #{skipgram_loss.1} parent=1238 // pred_check_branch
        %2019 = sbr.rel (%p2016) target = $region1254
      $region1253: #{skipgram_loss.1} parent=1238 // pred_region
        %s2020 = sand.u32 1, 7
        %s2021 = ssub.s32 1, %s2020
        %s2022 = scalar_lea.vmem %s1994, %s2021
        %s2023 = ssub.s32 1, %s2020
        %s2024 = scalar_lea.vmem %s1995, %s2023 [#allocation4]
        %s2025 = sshllo.u32 0, %s2020
        loop: start=0, step=1, limit=1
        $region1255: #{skipgram_loss.1} parent=1253 // loop_pre_header
          _
        $region1256: #{skipgram_loss.1} parent=1253 // loop_header
          %s2027 = sphi 0, %s2031
          %p2028 = scmp.ge.s32.totalorder %s2027, 1
          %s2032 = sphi %s2022, %s2022
          %s2033 = sphi %s2024, %s2024
        $region1257: #{skipgram_loss.1} parent=1253 // loop_header_branch
          %2030 = sbr.rel (%p2028) target = $region1261
        $region1258: #{skipgram_loss.1} parent=1253 // loop_body
          %v2034 = vld [vmem:[%s2032] sm:%s2025]
          %2035 = vst [vmem:[%s2033] sm:%s2025] %v2034
        $region1259: #{skipgram_loss.1} parent=1253 // loop_footer
          %s2031 = sadd.s32 1, %s2027
        $region1260: #{skipgram_loss.1} parent=1253 // loop_footer_branch
          %2026 = sbr.rel target = $region1256
        $region1261: #{skipgram_loss.1} parent=1253 // loop_exit
          _
      $region1254: #{skipgram_loss.1} parent=1238 // pred_fallthru
        _
    $region1239: #{skipgram_loss.1} parent=1 // pred_fallthru
      _
    // Predicated region
    $region1240: #{skipgram_loss.1} parent=1 // pred_check
      %p2001 = pneg %p1997
    $region1241: #{skipgram_loss.1} parent=1 // pred_check_branch
      %2003 = sbr.rel (%p2001) target = $region1243
    $region1242: #{skipgram_loss.1} parent=1 // pred_region
      %s2004 = sshllo.u32 0, 1
      loop: start=0, step=1, limit=1
      $region1244: #{skipgram_loss.1} parent=1242 // loop_pre_header
        _
      $region1245: #{skipgram_loss.1} parent=1242 // loop_header
        %s2006 = sphi 0, %s2010
        %p2007 = scmp.ge.s32.totalorder %s2006, 1
        %s2011 = sphi %s1994, %s1994
        %s2012 = sphi %s1995, %s1995
      $region1246: #{skipgram_loss.1} parent=1242 // loop_header_branch
        %2009 = sbr.rel (%p2007) target = $region1250
      $region1247: #{skipgram_loss.1} parent=1242 // loop_body
        %v2013 = vld [vmem:[%s2011] sm:%s2004]
        %2014 = vst [vmem:[%s2012] sm:%s2004] %v2013
      $region1248: #{skipgram_loss.1} parent=1242 // loop_footer
        %s2010 = sadd.s32 1, %s2006
      $region1249: #{skipgram_loss.1} parent=1242 // loop_footer_branch
        %2005 = sbr.rel target = $region1245
      $region1250: #{skipgram_loss.1} parent=1242 // loop_exit
        _
    $region1243: #{skipgram_loss.1} parent=1 // pred_fallthru
      _
    // Predicated region
    $region1262: #{skipgram_loss.1} parent=1 // pred_check
      _
    $region1263: #{skipgram_loss.1} parent=1 // pred_check_branch
      %2038 = sbr.rel (0) target = $region1265
    $region1264: #{skipgram_loss.1} parent=1 // pred_region
      %2039 = vsyncadd %s128, 16
    $region1265: #{skipgram_loss.1} parent=1 // pred_fallthru
      _
    %s2040 = sadd.s32 %s25, 6
    %s2041 = sld [smem:[#allocation7 + %s2040]]
    %s2042 = sld [smem:[#allocation8 + %s2040]]
    %s2043 = scalar_lea.vmem %s3, %s2041
    %s2044 = scalar_lea.vmem [#allocation2], 6
    %p2046 = scmp.lt.u32.totalorder 1, 8
    %p2047 = pneg %p2046
    // Predicated region
    $region1266: #{skipgram_loss.1} parent=1 // pred_check
      _
    $region1267: #{skipgram_loss.1} parent=1 // pred_check_branch
      %2049 = sbr.rel (%p2046) target = $region1269
    $region1268: #{skipgram_loss.1} parent=1 // pred_region
      %s2064 = sand.u32 1, 7
      %p2065 = scmp.eq.s32.totalorder %s2064, 0
      %p2066 = pneg %p2065
      // Predicated region
      $region1281: #{skipgram_loss.1} parent=1268 // pred_check
        _
      $region1282: #{skipgram_loss.1} parent=1268 // pred_check_branch
        %2068 = sbr.rel (%p2065) target = $region1284
      $region1283: #{skipgram_loss.1} parent=1268 // pred_region
        %s2069 = sand.u32 1, 7
        %s2070 = ssub.s32 1, %s2069
        %s2071 = scalar_lea.vmem %s2043, %s2070
        %s2072 = ssub.s32 1, %s2069
        %s2073 = scalar_lea.vmem %s2044, %s2072 [#allocation2]
        %s2074 = sshllo.u32 0, %s2069
        loop: start=0, step=1, limit=1
        $region1285: #{skipgram_loss.1} parent=1283 // loop_pre_header
          _
        $region1286: #{skipgram_loss.1} parent=1283 // loop_header
          %s2076 = sphi 0, %s2080
          %p2077 = scmp.ge.s32.totalorder %s2076, 1
          %s2081 = sphi %s2071, %s2071
          %s2082 = sphi %s2073, %s2073
        $region1287: #{skipgram_loss.1} parent=1283 // loop_header_branch
          %2079 = sbr.rel (%p2077) target = $region1291
        $region1288: #{skipgram_loss.1} parent=1283 // loop_body
          %v2083 = vld [vmem:[%s2081] sm:%s2074]
          %2084 = vst [vmem:[%s2082] sm:%s2074] %v2083
        $region1289: #{skipgram_loss.1} parent=1283 // loop_footer
          %s2080 = sadd.s32 1, %s2076
        $region1290: #{skipgram_loss.1} parent=1283 // loop_footer_branch
          %2075 = sbr.rel target = $region1286
        $region1291: #{skipgram_loss.1} parent=1283 // loop_exit
          _
      $region1284: #{skipgram_loss.1} parent=1268 // pred_fallthru
        _
    $region1269: #{skipgram_loss.1} parent=1 // pred_fallthru
      _
    // Predicated region
    $region1270: #{skipgram_loss.1} parent=1 // pred_check
      %p2050 = pneg %p2046
    $region1271: #{skipgram_loss.1} parent=1 // pred_check_branch
      %2052 = sbr.rel (%p2050) target = $region1273
    $region1272: #{skipgram_loss.1} parent=1 // pred_region
      %s2053 = sshllo.u32 0, 1
      loop: start=0, step=1, limit=1
      $region1274: #{skipgram_loss.1} parent=1272 // loop_pre_header
        _
      $region1275: #{skipgram_loss.1} parent=1272 // loop_header
        %s2055 = sphi 0, %s2059
        %p2056 = scmp.ge.s32.totalorder %s2055, 1
        %s2060 = sphi %s2043, %s2043
        %s2061 = sphi %s2044, %s2044
      $region1276: #{skipgram_loss.1} parent=1272 // loop_header_branch
        %2058 = sbr.rel (%p2056) target = $region1280
      $region1277: #{skipgram_loss.1} parent=1272 // loop_body
        %v2062 = vld [vmem:[%s2060] sm:%s2053]
        %2063 = vst [vmem:[%s2061] sm:%s2053] %v2062
      $region1278: #{skipgram_loss.1} parent=1272 // loop_footer
        %s2059 = sadd.s32 1, %s2055
      $region1279: #{skipgram_loss.1} parent=1272 // loop_footer_branch
        %2054 = sbr.rel target = $region1275
      $region1280: #{skipgram_loss.1} parent=1272 // loop_exit
        _
    $region1273: #{skipgram_loss.1} parent=1 // pred_fallthru
      _
    // Predicated region
    $region1292: #{skipgram_loss.1} parent=1 // pred_check
      _
    $region1293: #{skipgram_loss.1} parent=1 // pred_check_branch
      %2087 = sbr.rel (0) target = $region1295
    $region1294: #{skipgram_loss.1} parent=1 // pred_region
      %2088 = vsyncadd [#allocation5], 16
    $region1295: #{skipgram_loss.1} parent=1 // pred_fallthru
      _
    %s2089 = scalar_lea.vmem %s4, %s2042
    %s2090 = scalar_lea.vmem [#allocation3], 6
    %p2092 = scmp.lt.u32.totalorder 1, 8
    %p2093 = pneg %p2092
    // Predicated region
    $region1296: #{skipgram_loss.1} parent=1 // pred_check
      _
    $region1297: #{skipgram_loss.1} parent=1 // pred_check_branch
      %2095 = sbr.rel (%p2092) target = $region1299
    $region1298: #{skipgram_loss.1} parent=1 // pred_region
      %s2110 = sand.u32 1, 7
      %p2111 = scmp.eq.s32.totalorder %s2110, 0
      %p2112 = pneg %p2111
      // Predicated region
      $region1311: #{skipgram_loss.1} parent=1298 // pred_check
        _
      $region1312: #{skipgram_loss.1} parent=1298 // pred_check_branch
        %2114 = sbr.rel (%p2111) target = $region1314
      $region1313: #{skipgram_loss.1} parent=1298 // pred_region
        %s2115 = sand.u32 1, 7
        %s2116 = ssub.s32 1, %s2115
        %s2117 = scalar_lea.vmem %s2089, %s2116
        %s2118 = ssub.s32 1, %s2115
        %s2119 = scalar_lea.vmem %s2090, %s2118 [#allocation3]
        %s2120 = sshllo.u32 0, %s2115
        loop: start=0, step=1, limit=1
        $region1315: #{skipgram_loss.1} parent=1313 // loop_pre_header
          _
        $region1316: #{skipgram_loss.1} parent=1313 // loop_header
          %s2122 = sphi 0, %s2126
          %p2123 = scmp.ge.s32.totalorder %s2122, 1
          %s2127 = sphi %s2117, %s2117
          %s2128 = sphi %s2119, %s2119
        $region1317: #{skipgram_loss.1} parent=1313 // loop_header_branch
          %2125 = sbr.rel (%p2123) target = $region1321
        $region1318: #{skipgram_loss.1} parent=1313 // loop_body
          %v2129 = vld [vmem:[%s2127] sm:%s2120]
          %2130 = vst [vmem:[%s2128] sm:%s2120] %v2129
        $region1319: #{skipgram_loss.1} parent=1313 // loop_footer
          %s2126 = sadd.s32 1, %s2122
        $region1320: #{skipgram_loss.1} parent=1313 // loop_footer_branch
          %2121 = sbr.rel target = $region1316
        $region1321: #{skipgram_loss.1} parent=1313 // loop_exit
          _
      $region1314: #{skipgram_loss.1} parent=1298 // pred_fallthru
        _
    $region1299: #{skipgram_loss.1} parent=1 // pred_fallthru
      _
    // Predicated region
    $region1300: #{skipgram_loss.1} parent=1 // pred_check
      %p2096 = pneg %p2092
    $region1301: #{skipgram_loss.1} parent=1 // pred_check_branch
      %2098 = sbr.rel (%p2096) target = $region1303
    $region1302: #{skipgram_loss.1} parent=1 // pred_region
      %s2099 = sshllo.u32 0, 1
      loop: start=0, step=1, limit=1
      $region1304: #{skipgram_loss.1} parent=1302 // loop_pre_header
        _
      $region1305: #{skipgram_loss.1} parent=1302 // loop_header
        %s2101 = sphi 0, %s2105
        %p2102 = scmp.ge.s32.totalorder %s2101, 1
        %s2106 = sphi %s2089, %s2089
        %s2107 = sphi %s2090, %s2090
      $region1306: #{skipgram_loss.1} parent=1302 // loop_header_branch
        %2104 = sbr.rel (%p2102) target = $region1310
      $region1307: #{skipgram_loss.1} parent=1302 // loop_body
        %v2108 = vld [vmem:[%s2106] sm:%s2099]
        %2109 = vst [vmem:[%s2107] sm:%s2099] %v2108
      $region1308: #{skipgram_loss.1} parent=1302 // loop_footer
        %s2105 = sadd.s32 1, %s2101
      $region1309: #{skipgram_loss.1} parent=1302 // loop_footer_branch
        %2100 = sbr.rel target = $region1305
      $region1310: #{skipgram_loss.1} parent=1302 // loop_exit
        _
    $region1303: #{skipgram_loss.1} parent=1 // pred_fallthru
      _
    // Predicated region
    $region1322: #{skipgram_loss.1} parent=1 // pred_check
      _
    $region1323: #{skipgram_loss.1} parent=1 // pred_check_branch
      %2133 = sbr.rel (0) target = $region1325
    $region1324: #{skipgram_loss.1} parent=1 // pred_region
      %2134 = vsyncadd %s80, 16
    $region1325: #{skipgram_loss.1} parent=1 // pred_fallthru
      _
    %s2135 = smul.u32 %s2040, 5
    %s2136 = sld [smem:[#allocation9 + %s2135]]
    %s2137 = scalar_lea.vmem %s4, %s2136
    %s2138 = scalar_lea.vmem [#allocation4], 6
    %p2140 = scmp.lt.u32.totalorder 1, 8
    %p2141 = pneg %p2140
    // Predicated region
    $region1326: #{skipgram_loss.1} parent=1 // pred_check
      _
    $region1327: #{skipgram_loss.1} parent=1 // pred_check_branch
      %2143 = sbr.rel (%p2140) target = $region1329
    $region1328: #{skipgram_loss.1} parent=1 // pred_region
      %s2158 = sand.u32 1, 7
      %p2159 = scmp.eq.s32.totalorder %s2158, 0
      %p2160 = pneg %p2159
      // Predicated region
      $region1341: #{skipgram_loss.1} parent=1328 // pred_check
        _
      $region1342: #{skipgram_loss.1} parent=1328 // pred_check_branch
        %2162 = sbr.rel (%p2159) target = $region1344
      $region1343: #{skipgram_loss.1} parent=1328 // pred_region
        %s2163 = sand.u32 1, 7
        %s2164 = ssub.s32 1, %s2163
        %s2165 = scalar_lea.vmem %s2137, %s2164
        %s2166 = ssub.s32 1, %s2163
        %s2167 = scalar_lea.vmem %s2138, %s2166 [#allocation4]
        %s2168 = sshllo.u32 0, %s2163
        loop: start=0, step=1, limit=1
        $region1345: #{skipgram_loss.1} parent=1343 // loop_pre_header
          _
        $region1346: #{skipgram_loss.1} parent=1343 // loop_header
          %s2170 = sphi 0, %s2174
          %p2171 = scmp.ge.s32.totalorder %s2170, 1
          %s2175 = sphi %s2165, %s2165
          %s2176 = sphi %s2167, %s2167
        $region1347: #{skipgram_loss.1} parent=1343 // loop_header_branch
          %2173 = sbr.rel (%p2171) target = $region1351
        $region1348: #{skipgram_loss.1} parent=1343 // loop_body
          %v2177 = vld [vmem:[%s2175] sm:%s2168]
          %2178 = vst [vmem:[%s2176] sm:%s2168] %v2177
        $region1349: #{skipgram_loss.1} parent=1343 // loop_footer
          %s2174 = sadd.s32 1, %s2170
        $region1350: #{skipgram_loss.1} parent=1343 // loop_footer_branch
          %2169 = sbr.rel target = $region1346
        $region1351: #{skipgram_loss.1} parent=1343 // loop_exit
          _
      $region1344: #{skipgram_loss.1} parent=1328 // pred_fallthru
        _
    $region1329: #{skipgram_loss.1} parent=1 // pred_fallthru
      _
    // Predicated region
    $region1330: #{skipgram_loss.1} parent=1 // pred_check
      %p2144 = pneg %p2140
    $region1331: #{skipgram_loss.1} parent=1 // pred_check_branch
      %2146 = sbr.rel (%p2144) target = $region1333
    $region1332: #{skipgram_loss.1} parent=1 // pred_region
      %s2147 = sshllo.u32 0, 1
      loop: start=0, step=1, limit=1
      $region1334: #{skipgram_loss.1} parent=1332 // loop_pre_header
        _
      $region1335: #{skipgram_loss.1} parent=1332 // loop_header
        %s2149 = sphi 0, %s2153
        %p2150 = scmp.ge.s32.totalorder %s2149, 1
        %s2154 = sphi %s2137, %s2137
        %s2155 = sphi %s2138, %s2138
      $region1336: #{skipgram_loss.1} parent=1332 // loop_header_branch
        %2152 = sbr.rel (%p2150) target = $region1340
      $region1337: #{skipgram_loss.1} parent=1332 // loop_body
        %v2156 = vld [vmem:[%s2154] sm:%s2147]
        %2157 = vst [vmem:[%s2155] sm:%s2147] %v2156
      $region1338: #{skipgram_loss.1} parent=1332 // loop_footer
        %s2153 = sadd.s32 1, %s2149
      $region1339: #{skipgram_loss.1} parent=1332 // loop_footer_branch
        %2148 = sbr.rel target = $region1335
      $region1340: #{skipgram_loss.1} parent=1332 // loop_exit
        _
    $region1333: #{skipgram_loss.1} parent=1 // pred_fallthru
      _
    // Predicated region
    $region1352: #{skipgram_loss.1} parent=1 // pred_check
      _
    $region1353: #{skipgram_loss.1} parent=1 // pred_check_branch
      %2181 = sbr.rel (0) target = $region1355
    $region1354: #{skipgram_loss.1} parent=1 // pred_region
      %2182 = vsyncadd %s128, 16
    $region1355: #{skipgram_loss.1} parent=1 // pred_fallthru
      _
    %s2183 = sadd.s32 %s2135, 1
    %s2184 = sld [smem:[#allocation9 + %s2183]]
    %s2185 = scalar_lea.vmem %s4, %s2184
    %s2186 = scalar_lea.vmem [#allocation4], 14
    %p2188 = scmp.lt.u32.totalorder 1, 8
    %p2189 = pneg %p2188
    // Predicated region
    $region1356: #{skipgram_loss.1} parent=1 // pred_check
      _
    $region1357: #{skipgram_loss.1} parent=1 // pred_check_branch
      %2191 = sbr.rel (%p2188) target = $region1359
    $region1358: #{skipgram_loss.1} parent=1 // pred_region
      %s2206 = sand.u32 1, 7
      %p2207 = scmp.eq.s32.totalorder %s2206, 0
      %p2208 = pneg %p2207
      // Predicated region
      $region1371: #{skipgram_loss.1} parent=1358 // pred_check
        _
      $region1372: #{skipgram_loss.1} parent=1358 // pred_check_branch
        %2210 = sbr.rel (%p2207) target = $region1374
      $region1373: #{skipgram_loss.1} parent=1358 // pred_region
        %s2211 = sand.u32 1, 7
        %s2212 = ssub.s32 1, %s2211
        %s2213 = scalar_lea.vmem %s2185, %s2212
        %s2214 = ssub.s32 1, %s2211
        %s2215 = scalar_lea.vmem %s2186, %s2214 [#allocation4]
        %s2216 = sshllo.u32 0, %s2211
        loop: start=0, step=1, limit=1
        $region1375: #{skipgram_loss.1} parent=1373 // loop_pre_header
          _
        $region1376: #{skipgram_loss.1} parent=1373 // loop_header
          %s2218 = sphi 0, %s2222
          %p2219 = scmp.ge.s32.totalorder %s2218, 1
          %s2223 = sphi %s2213, %s2213
          %s2224 = sphi %s2215, %s2215
        $region1377: #{skipgram_loss.1} parent=1373 // loop_header_branch
          %2221 = sbr.rel (%p2219) target = $region1381
        $region1378: #{skipgram_loss.1} parent=1373 // loop_body
          %v2225 = vld [vmem:[%s2223] sm:%s2216]
          %2226 = vst [vmem:[%s2224] sm:%s2216] %v2225
        $region1379: #{skipgram_loss.1} parent=1373 // loop_footer
          %s2222 = sadd.s32 1, %s2218
        $region1380: #{skipgram_loss.1} parent=1373 // loop_footer_branch
          %2217 = sbr.rel target = $region1376
        $region1381: #{skipgram_loss.1} parent=1373 // loop_exit
          _
      $region1374: #{skipgram_loss.1} parent=1358 // pred_fallthru
        _
    $region1359: #{skipgram_loss.1} parent=1 // pred_fallthru
      _
    // Predicated region
    $region1360: #{skipgram_loss.1} parent=1 // pred_check
      %p2192 = pneg %p2188
    $region1361: #{skipgram_loss.1} parent=1 // pred_check_branch
      %2194 = sbr.rel (%p2192) target = $region1363
    $region1362: #{skipgram_loss.1} parent=1 // pred_region
      %s2195 = sshllo.u32 0, 1
      loop: start=0, step=1, limit=1
      $region1364: #{skipgram_loss.1} parent=1362 // loop_pre_header
        _
      $region1365: #{skipgram_loss.1} parent=1362 // loop_header
        %s2197 = sphi 0, %s2201
        %p2198 = scmp.ge.s32.totalorder %s2197, 1
        %s2202 = sphi %s2185, %s2185
        %s2203 = sphi %s2186, %s2186
      $region1366: #{skipgram_loss.1} parent=1362 // loop_header_branch
        %2200 = sbr.rel (%p2198) target = $region1370
      $region1367: #{skipgram_loss.1} parent=1362 // loop_body
        %v2204 = vld [vmem:[%s2202] sm:%s2195]
        %2205 = vst [vmem:[%s2203] sm:%s2195] %v2204
      $region1368: #{skipgram_loss.1} parent=1362 // loop_footer
        %s2201 = sadd.s32 1, %s2197
      $region1369: #{skipgram_loss.1} parent=1362 // loop_footer_branch
        %2196 = sbr.rel target = $region1365
      $region1370: #{skipgram_loss.1} parent=1362 // loop_exit
        _
    $region1363: #{skipgram_loss.1} parent=1 // pred_fallthru
      _
    // Predicated region
    $region1382: #{skipgram_loss.1} parent=1 // pred_check
      _
    $region1383: #{skipgram_loss.1} parent=1 // pred_check_branch
      %2229 = sbr.rel (0) target = $region1385
    $region1384: #{skipgram_loss.1} parent=1 // pred_region
      %2230 = vsyncadd %s128, 16
    $region1385: #{skipgram_loss.1} parent=1 // pred_fallthru
      _
    %s2231 = sadd.s32 %s2135, 2
    %s2232 = sld [smem:[#allocation9 + %s2231]]
    %s2233 = scalar_lea.vmem %s4, %s2232
    %s2234 = scalar_lea.vmem [#allocation4], 22
    %p2236 = scmp.lt.u32.totalorder 1, 8
    %p2237 = pneg %p2236
    // Predicated region
    $region1386: #{skipgram_loss.1} parent=1 // pred_check
      _
    $region1387: #{skipgram_loss.1} parent=1 // pred_check_branch
      %2239 = sbr.rel (%p2236) target = $region1389
    $region1388: #{skipgram_loss.1} parent=1 // pred_region
      %s2254 = sand.u32 1, 7
      %p2255 = scmp.eq.s32.totalorder %s2254, 0
      %p2256 = pneg %p2255
      // Predicated region
      $region1401: #{skipgram_loss.1} parent=1388 // pred_check
        _
      $region1402: #{skipgram_loss.1} parent=1388 // pred_check_branch
        %2258 = sbr.rel (%p2255) target = $region1404
      $region1403: #{skipgram_loss.1} parent=1388 // pred_region
        %s2259 = sand.u32 1, 7
        %s2260 = ssub.s32 1, %s2259
        %s2261 = scalar_lea.vmem %s2233, %s2260
        %s2262 = ssub.s32 1, %s2259
        %s2263 = scalar_lea.vmem %s2234, %s2262 [#allocation4]
        %s2264 = sshllo.u32 0, %s2259
        loop: start=0, step=1, limit=1
        $region1405: #{skipgram_loss.1} parent=1403 // loop_pre_header
          _
        $region1406: #{skipgram_loss.1} parent=1403 // loop_header
          %s2266 = sphi 0, %s2270
          %p2267 = scmp.ge.s32.totalorder %s2266, 1
          %s2271 = sphi %s2261, %s2261
          %s2272 = sphi %s2263, %s2263
        $region1407: #{skipgram_loss.1} parent=1403 // loop_header_branch
          %2269 = sbr.rel (%p2267) target = $region1411
        $region1408: #{skipgram_loss.1} parent=1403 // loop_body
          %v2273 = vld [vmem:[%s2271] sm:%s2264]
          %2274 = vst [vmem:[%s2272] sm:%s2264] %v2273
        $region1409: #{skipgram_loss.1} parent=1403 // loop_footer
          %s2270 = sadd.s32 1, %s2266
        $region1410: #{skipgram_loss.1} parent=1403 // loop_footer_branch
          %2265 = sbr.rel target = $region1406
        $region1411: #{skipgram_loss.1} parent=1403 // loop_exit
          _
      $region1404: #{skipgram_loss.1} parent=1388 // pred_fallthru
        _
    $region1389: #{skipgram_loss.1} parent=1 // pred_fallthru
      _
    // Predicated region
    $region1390: #{skipgram_loss.1} parent=1 // pred_check
      %p2240 = pneg %p2236
    $region1391: #{skipgram_loss.1} parent=1 // pred_check_branch
      %2242 = sbr.rel (%p2240) target = $region1393
    $region1392: #{skipgram_loss.1} parent=1 // pred_region
      %s2243 = sshllo.u32 0, 1
      loop: start=0, step=1, limit=1
      $region1394: #{skipgram_loss.1} parent=1392 // loop_pre_header
        _
      $region1395: #{skipgram_loss.1} parent=1392 // loop_header
        %s2245 = sphi 0, %s2249
        %p2246 = scmp.ge.s32.totalorder %s2245, 1
        %s2250 = sphi %s2233, %s2233
        %s2251 = sphi %s2234, %s2234
      $region1396: #{skipgram_loss.1} parent=1392 // loop_header_branch
        %2248 = sbr.rel (%p2246) target = $region1400
      $region1397: #{skipgram_loss.1} parent=1392 // loop_body
        %v2252 = vld [vmem:[%s2250] sm:%s2243]
        %2253 = vst [vmem:[%s2251] sm:%s2243] %v2252
      $region1398: #{skipgram_loss.1} parent=1392 // loop_footer
        %s2249 = sadd.s32 1, %s2245
      $region1399: #{skipgram_loss.1} parent=1392 // loop_footer_branch
        %2244 = sbr.rel target = $region1395
      $region1400: #{skipgram_loss.1} parent=1392 // loop_exit
        _
    $region1393: #{skipgram_loss.1} parent=1 // pred_fallthru
      _
    // Predicated region
    $region1412: #{skipgram_loss.1} parent=1 // pred_check
      _
    $region1413: #{skipgram_loss.1} parent=1 // pred_check_branch
      %2277 = sbr.rel (0) target = $region1415
    $region1414: #{skipgram_loss.1} parent=1 // pred_region
      %2278 = vsyncadd %s128, 16
    $region1415: #{skipgram_loss.1} parent=1 // pred_fallthru
      _
    %s2279 = sadd.s32 %s2135, 3
    %s2280 = sld [smem:[#allocation9 + %s2279]]
    %s2281 = scalar_lea.vmem %s4, %s2280
    %s2282 = scalar_lea.vmem [#allocation4], 30
    %p2284 = scmp.lt.u32.totalorder 1, 8
    %p2285 = pneg %p2284
    // Predicated region
    $region1416: #{skipgram_loss.1} parent=1 // pred_check
      _
    $region1417: #{skipgram_loss.1} parent=1 // pred_check_branch
      %2287 = sbr.rel (%p2284) target = $region1419
    $region1418: #{skipgram_loss.1} parent=1 // pred_region
      %s2302 = sand.u32 1, 7
      %p2303 = scmp.eq.s32.totalorder %s2302, 0
      %p2304 = pneg %p2303
      // Predicated region
      $region1431: #{skipgram_loss.1} parent=1418 // pred_check
        _
      $region1432: #{skipgram_loss.1} parent=1418 // pred_check_branch
        %2306 = sbr.rel (%p2303) target = $region1434
      $region1433: #{skipgram_loss.1} parent=1418 // pred_region
        %s2307 = sand.u32 1, 7
        %s2308 = ssub.s32 1, %s2307
        %s2309 = scalar_lea.vmem %s2281, %s2308
        %s2310 = ssub.s32 1, %s2307
        %s2311 = scalar_lea.vmem %s2282, %s2310 [#allocation4]
        %s2312 = sshllo.u32 0, %s2307
        loop: start=0, step=1, limit=1
        $region1435: #{skipgram_loss.1} parent=1433 // loop_pre_header
          _
        $region1436: #{skipgram_loss.1} parent=1433 // loop_header
          %s2314 = sphi 0, %s2318
          %p2315 = scmp.ge.s32.totalorder %s2314, 1
          %s2319 = sphi %s2309, %s2309
          %s2320 = sphi %s2311, %s2311
        $region1437: #{skipgram_loss.1} parent=1433 // loop_header_branch
          %2317 = sbr.rel (%p2315) target = $region1441
        $region1438: #{skipgram_loss.1} parent=1433 // loop_body
          %v2321 = vld [vmem:[%s2319] sm:%s2312]
          %2322 = vst [vmem:[%s2320] sm:%s2312] %v2321
        $region1439: #{skipgram_loss.1} parent=1433 // loop_footer
          %s2318 = sadd.s32 1, %s2314
        $region1440: #{skipgram_loss.1} parent=1433 // loop_footer_branch
          %2313 = sbr.rel target = $region1436
        $region1441: #{skipgram_loss.1} parent=1433 // loop_exit
          _
      $region1434: #{skipgram_loss.1} parent=1418 // pred_fallthru
        _
    $region1419: #{skipgram_loss.1} parent=1 // pred_fallthru
      _
    // Predicated region
    $region1420: #{skipgram_loss.1} parent=1 // pred_check
      %p2288 = pneg %p2284
    $region1421: #{skipgram_loss.1} parent=1 // pred_check_branch
      %2290 = sbr.rel (%p2288) target = $region1423
    $region1422: #{skipgram_loss.1} parent=1 // pred_region
      %s2291 = sshllo.u32 0, 1
      loop: start=0, step=1, limit=1
      $region1424: #{skipgram_loss.1} parent=1422 // loop_pre_header
        _
      $region1425: #{skipgram_loss.1} parent=1422 // loop_header
        %s2293 = sphi 0, %s2297
        %p2294 = scmp.ge.s32.totalorder %s2293, 1
        %s2298 = sphi %s2281, %s2281
        %s2299 = sphi %s2282, %s2282
      $region1426: #{skipgram_loss.1} parent=1422 // loop_header_branch
        %2296 = sbr.rel (%p2294) target = $region1430
      $region1427: #{skipgram_loss.1} parent=1422 // loop_body
        %v2300 = vld [vmem:[%s2298] sm:%s2291]
        %2301 = vst [vmem:[%s2299] sm:%s2291] %v2300
      $region1428: #{skipgram_loss.1} parent=1422 // loop_footer
        %s2297 = sadd.s32 1, %s2293
      $region1429: #{skipgram_loss.1} parent=1422 // loop_footer_branch
        %2292 = sbr.rel target = $region1425
      $region1430: #{skipgram_loss.1} parent=1422 // loop_exit
        _
    $region1423: #{skipgram_loss.1} parent=1 // pred_fallthru
      _
    // Predicated region
    $region1442: #{skipgram_loss.1} parent=1 // pred_check
      _
    $region1443: #{skipgram_loss.1} parent=1 // pred_check_branch
      %2325 = sbr.rel (0) target = $region1445
    $region1444: #{skipgram_loss.1} parent=1 // pred_region
      %2326 = vsyncadd %s128, 16
    $region1445: #{skipgram_loss.1} parent=1 // pred_fallthru
      _
    %s2327 = sadd.s32 %s2135, 4
    %s2328 = sld [smem:[#allocation9 + %s2327]]
    %s2329 = scalar_lea.vmem %s4, %s2328
    %s2330 = scalar_lea.vmem [#allocation4], 38
    %p2332 = scmp.lt.u32.totalorder 1, 8
    %p2333 = pneg %p2332
    // Predicated region
    $region1446: #{skipgram_loss.1} parent=1 // pred_check
      _
    $region1447: #{skipgram_loss.1} parent=1 // pred_check_branch
      %2335 = sbr.rel (%p2332) target = $region1449
    $region1448: #{skipgram_loss.1} parent=1 // pred_region
      %s2350 = sand.u32 1, 7
      %p2351 = scmp.eq.s32.totalorder %s2350, 0
      %p2352 = pneg %p2351
      // Predicated region
      $region1461: #{skipgram_loss.1} parent=1448 // pred_check
        _
      $region1462: #{skipgram_loss.1} parent=1448 // pred_check_branch
        %2354 = sbr.rel (%p2351) target = $region1464
      $region1463: #{skipgram_loss.1} parent=1448 // pred_region
        %s2355 = sand.u32 1, 7
        %s2356 = ssub.s32 1, %s2355
        %s2357 = scalar_lea.vmem %s2329, %s2356
        %s2358 = ssub.s32 1, %s2355
        %s2359 = scalar_lea.vmem %s2330, %s2358 [#allocation4]
        %s2360 = sshllo.u32 0, %s2355
        loop: start=0, step=1, limit=1
        $region1465: #{skipgram_loss.1} parent=1463 // loop_pre_header
          _
        $region1466: #{skipgram_loss.1} parent=1463 // loop_header
          %s2362 = sphi 0, %s2366
          %p2363 = scmp.ge.s32.totalorder %s2362, 1
          %s2367 = sphi %s2357, %s2357
          %s2368 = sphi %s2359, %s2359
        $region1467: #{skipgram_loss.1} parent=1463 // loop_header_branch
          %2365 = sbr.rel (%p2363) target = $region1471
        $region1468: #{skipgram_loss.1} parent=1463 // loop_body
          %v2369 = vld [vmem:[%s2367] sm:%s2360]
          %2370 = vst [vmem:[%s2368] sm:%s2360] %v2369
        $region1469: #{skipgram_loss.1} parent=1463 // loop_footer
          %s2366 = sadd.s32 1, %s2362
        $region1470: #{skipgram_loss.1} parent=1463 // loop_footer_branch
          %2361 = sbr.rel target = $region1466
        $region1471: #{skipgram_loss.1} parent=1463 // loop_exit
          _
      $region1464: #{skipgram_loss.1} parent=1448 // pred_fallthru
        _
    $region1449: #{skipgram_loss.1} parent=1 // pred_fallthru
      _
    // Predicated region
    $region1450: #{skipgram_loss.1} parent=1 // pred_check
      %p2336 = pneg %p2332
    $region1451: #{skipgram_loss.1} parent=1 // pred_check_branch
      %2338 = sbr.rel (%p2336) target = $region1453
    $region1452: #{skipgram_loss.1} parent=1 // pred_region
      %s2339 = sshllo.u32 0, 1
      loop: start=0, step=1, limit=1
      $region1454: #{skipgram_loss.1} parent=1452 // loop_pre_header
        _
      $region1455: #{skipgram_loss.1} parent=1452 // loop_header
        %s2341 = sphi 0, %s2345
        %p2342 = scmp.ge.s32.totalorder %s2341, 1
        %s2346 = sphi %s2329, %s2329
        %s2347 = sphi %s2330, %s2330
      $region1456: #{skipgram_loss.1} parent=1452 // loop_header_branch
        %2344 = sbr.rel (%p2342) target = $region1460
      $region1457: #{skipgram_loss.1} parent=1452 // loop_body
        %v2348 = vld [vmem:[%s2346] sm:%s2339]
        %2349 = vst [vmem:[%s2347] sm:%s2339] %v2348
      $region1458: #{skipgram_loss.1} parent=1452 // loop_footer
        %s2345 = sadd.s32 1, %s2341
      $region1459: #{skipgram_loss.1} parent=1452 // loop_footer_branch
        %2340 = sbr.rel target = $region1455
      $region1460: #{skipgram_loss.1} parent=1452 // loop_exit
        _
    $region1453: #{skipgram_loss.1} parent=1 // pred_fallthru
      _
    // Predicated region
    $region1472: #{skipgram_loss.1} parent=1 // pred_check
      _
    $region1473: #{skipgram_loss.1} parent=1 // pred_check_branch
      %2373 = sbr.rel (0) target = $region1475
    $region1474: #{skipgram_loss.1} parent=1 // pred_region
      %2374 = vsyncadd %s128, 16
    $region1475: #{skipgram_loss.1} parent=1 // pred_fallthru
      _
    %s2375 = sadd.s32 %s25, 7
    %s2376 = sld [smem:[#allocation7 + %s2375]]
    %s2377 = sld [smem:[#allocation8 + %s2375]]
    %s2378 = scalar_lea.vmem %s3, %s2376
    %s2379 = scalar_lea.vmem [#allocation2], 7
    %p2381 = scmp.lt.u32.totalorder 1, 8
    %p2382 = pneg %p2381
    // Predicated region
    $region1476: #{skipgram_loss.1} parent=1 // pred_check
      _
    $region1477: #{skipgram_loss.1} parent=1 // pred_check_branch
      %2384 = sbr.rel (%p2381) target = $region1479
    $region1478: #{skipgram_loss.1} parent=1 // pred_region
      %s2399 = sand.u32 1, 7
      %p2400 = scmp.eq.s32.totalorder %s2399, 0
      %p2401 = pneg %p2400
      // Predicated region
      $region1491: #{skipgram_loss.1} parent=1478 // pred_check
        _
      $region1492: #{skipgram_loss.1} parent=1478 // pred_check_branch
        %2403 = sbr.rel (%p2400) target = $region1494
      $region1493: #{skipgram_loss.1} parent=1478 // pred_region
        %s2404 = sand.u32 1, 7
        %s2405 = ssub.s32 1, %s2404
        %s2406 = scalar_lea.vmem %s2378, %s2405
        %s2407 = ssub.s32 1, %s2404
        %s2408 = scalar_lea.vmem %s2379, %s2407 [#allocation2]
        %s2409 = sshllo.u32 0, %s2404
        loop: start=0, step=1, limit=1
        $region1495: #{skipgram_loss.1} parent=1493 // loop_pre_header
          _
        $region1496: #{skipgram_loss.1} parent=1493 // loop_header
          %s2411 = sphi 0, %s2415
          %p2412 = scmp.ge.s32.totalorder %s2411, 1
          %s2416 = sphi %s2406, %s2406
          %s2417 = sphi %s2408, %s2408
        $region1497: #{skipgram_loss.1} parent=1493 // loop_header_branch
          %2414 = sbr.rel (%p2412) target = $region1501
        $region1498: #{skipgram_loss.1} parent=1493 // loop_body
          %v2418 = vld [vmem:[%s2416] sm:%s2409]
          %2419 = vst [vmem:[%s2417] sm:%s2409] %v2418
        $region1499: #{skipgram_loss.1} parent=1493 // loop_footer
          %s2415 = sadd.s32 1, %s2411
        $region1500: #{skipgram_loss.1} parent=1493 // loop_footer_branch
          %2410 = sbr.rel target = $region1496
        $region1501: #{skipgram_loss.1} parent=1493 // loop_exit
          _
      $region1494: #{skipgram_loss.1} parent=1478 // pred_fallthru
        _
    $region1479: #{skipgram_loss.1} parent=1 // pred_fallthru
      _
    // Predicated region
    $region1480: #{skipgram_loss.1} parent=1 // pred_check
      %p2385 = pneg %p2381
    $region1481: #{skipgram_loss.1} parent=1 // pred_check_branch
      %2387 = sbr.rel (%p2385) target = $region1483
    $region1482: #{skipgram_loss.1} parent=1 // pred_region
      %s2388 = sshllo.u32 0, 1
      loop: start=0, step=1, limit=1
      $region1484: #{skipgram_loss.1} parent=1482 // loop_pre_header
        _
      $region1485: #{skipgram_loss.1} parent=1482 // loop_header
        %s2390 = sphi 0, %s2394
        %p2391 = scmp.ge.s32.totalorder %s2390, 1
        %s2395 = sphi %s2378, %s2378
        %s2396 = sphi %s2379, %s2379
      $region1486: #{skipgram_loss.1} parent=1482 // loop_header_branch
        %2393 = sbr.rel (%p2391) target = $region1490
      $region1487: #{skipgram_loss.1} parent=1482 // loop_body
        %v2397 = vld [vmem:[%s2395] sm:%s2388]
        %2398 = vst [vmem:[%s2396] sm:%s2388] %v2397
      $region1488: #{skipgram_loss.1} parent=1482 // loop_footer
        %s2394 = sadd.s32 1, %s2390
      $region1489: #{skipgram_loss.1} parent=1482 // loop_footer_branch
        %2389 = sbr.rel target = $region1485
      $region1490: #{skipgram_loss.1} parent=1482 // loop_exit
        _
    $region1483: #{skipgram_loss.1} parent=1 // pred_fallthru
      _
    // Predicated region
    $region1502: #{skipgram_loss.1} parent=1 // pred_check
      _
    $region1503: #{skipgram_loss.1} parent=1 // pred_check_branch
      %2422 = sbr.rel (0) target = $region1505
    $region1504: #{skipgram_loss.1} parent=1 // pred_region
      %2423 = vsyncadd [#allocation5], 16
    $region1505: #{skipgram_loss.1} parent=1 // pred_fallthru
      _
    %s2424 = scalar_lea.vmem %s4, %s2377
    %s2425 = scalar_lea.vmem [#allocation3], 7
    %p2427 = scmp.lt.u32.totalorder 1, 8
    %p2428 = pneg %p2427
    // Predicated region
    $region1506: #{skipgram_loss.1} parent=1 // pred_check
      _
    $region1507: #{skipgram_loss.1} parent=1 // pred_check_branch
      %2430 = sbr.rel (%p2427) target = $region1509
    $region1508: #{skipgram_loss.1} parent=1 // pred_region
      %s2445 = sand.u32 1, 7
      %p2446 = scmp.eq.s32.totalorder %s2445, 0
      %p2447 = pneg %p2446
      // Predicated region
      $region1521: #{skipgram_loss.1} parent=1508 // pred_check
        _
      $region1522: #{skipgram_loss.1} parent=1508 // pred_check_branch
        %2449 = sbr.rel (%p2446) target = $region1524
      $region1523: #{skipgram_loss.1} parent=1508 // pred_region
        %s2450 = sand.u32 1, 7
        %s2451 = ssub.s32 1, %s2450
        %s2452 = scalar_lea.vmem %s2424, %s2451
        %s2453 = ssub.s32 1, %s2450
        %s2454 = scalar_lea.vmem %s2425, %s2453 [#allocation3]
        %s2455 = sshllo.u32 0, %s2450
        loop: start=0, step=1, limit=1
        $region1525: #{skipgram_loss.1} parent=1523 // loop_pre_header
          _
        $region1526: #{skipgram_loss.1} parent=1523 // loop_header
          %s2457 = sphi 0, %s2461
          %p2458 = scmp.ge.s32.totalorder %s2457, 1
          %s2462 = sphi %s2452, %s2452
          %s2463 = sphi %s2454, %s2454
        $region1527: #{skipgram_loss.1} parent=1523 // loop_header_branch
          %2460 = sbr.rel (%p2458) target = $region1531
        $region1528: #{skipgram_loss.1} parent=1523 // loop_body
          %v2464 = vld [vmem:[%s2462] sm:%s2455]
          %2465 = vst [vmem:[%s2463] sm:%s2455] %v2464
        $region1529: #{skipgram_loss.1} parent=1523 // loop_footer
          %s2461 = sadd.s32 1, %s2457
        $region1530: #{skipgram_loss.1} parent=1523 // loop_footer_branch
          %2456 = sbr.rel target = $region1526
        $region1531: #{skipgram_loss.1} parent=1523 // loop_exit
          _
      $region1524: #{skipgram_loss.1} parent=1508 // pred_fallthru
        _
    $region1509: #{skipgram_loss.1} parent=1 // pred_fallthru
      _
    // Predicated region
    $region1510: #{skipgram_loss.1} parent=1 // pred_check
      %p2431 = pneg %p2427
    $region1511: #{skipgram_loss.1} parent=1 // pred_check_branch
      %2433 = sbr.rel (%p2431) target = $region1513
    $region1512: #{skipgram_loss.1} parent=1 // pred_region
      %s2434 = sshllo.u32 0, 1
      loop: start=0, step=1, limit=1
      $region1514: #{skipgram_loss.1} parent=1512 // loop_pre_header
        _
      $region1515: #{skipgram_loss.1} parent=1512 // loop_header
        %s2436 = sphi 0, %s2440
        %p2437 = scmp.ge.s32.totalorder %s2436, 1
        %s2441 = sphi %s2424, %s2424
        %s2442 = sphi %s2425, %s2425
      $region1516: #{skipgram_loss.1} parent=1512 // loop_header_branch
        %2439 = sbr.rel (%p2437) target = $region1520
      $region1517: #{skipgram_loss.1} parent=1512 // loop_body
        %v2443 = vld [vmem:[%s2441] sm:%s2434]
        %2444 = vst [vmem:[%s2442] sm:%s2434] %v2443
      $region1518: #{skipgram_loss.1} parent=1512 // loop_footer
        %s2440 = sadd.s32 1, %s2436
      $region1519: #{skipgram_loss.1} parent=1512 // loop_footer_branch
        %2435 = sbr.rel target = $region1515
      $region1520: #{skipgram_loss.1} parent=1512 // loop_exit
        _
    $region1513: #{skipgram_loss.1} parent=1 // pred_fallthru
      _
    // Predicated region
    $region1532: #{skipgram_loss.1} parent=1 // pred_check
      _
    $region1533: #{skipgram_loss.1} parent=1 // pred_check_branch
      %2468 = sbr.rel (0) target = $region1535
    $region1534: #{skipgram_loss.1} parent=1 // pred_region
      %2469 = vsyncadd %s80, 16
    $region1535: #{skipgram_loss.1} parent=1 // pred_fallthru
      _
    %s2470 = smul.u32 %s2375, 5
    %s2471 = sld [smem:[#allocation9 + %s2470]]
    %s2472 = scalar_lea.vmem %s4, %s2471
    %s2473 = scalar_lea.vmem [#allocation4], 7
    %p2475 = scmp.lt.u32.totalorder 1, 8
    %p2476 = pneg %p2475
    // Predicated region
    $region1536: #{skipgram_loss.1} parent=1 // pred_check
      _
    $region1537: #{skipgram_loss.1} parent=1 // pred_check_branch
      %2478 = sbr.rel (%p2475) target = $region1539
    $region1538: #{skipgram_loss.1} parent=1 // pred_region
      %s2493 = sand.u32 1, 7
      %p2494 = scmp.eq.s32.totalorder %s2493, 0
      %p2495 = pneg %p2494
      // Predicated region
      $region1551: #{skipgram_loss.1} parent=1538 // pred_check
        _
      $region1552: #{skipgram_loss.1} parent=1538 // pred_check_branch
        %2497 = sbr.rel (%p2494) target = $region1554
      $region1553: #{skipgram_loss.1} parent=1538 // pred_region
        %s2498 = sand.u32 1, 7
        %s2499 = ssub.s32 1, %s2498
        %s2500 = scalar_lea.vmem %s2472, %s2499
        %s2501 = ssub.s32 1, %s2498
        %s2502 = scalar_lea.vmem %s2473, %s2501 [#allocation4]
        %s2503 = sshllo.u32 0, %s2498
        loop: start=0, step=1, limit=1
        $region1555: #{skipgram_loss.1} parent=1553 // loop_pre_header
          _
        $region1556: #{skipgram_loss.1} parent=1553 // loop_header
          %s2505 = sphi 0, %s2509
          %p2506 = scmp.ge.s32.totalorder %s2505, 1
          %s2510 = sphi %s2500, %s2500
          %s2511 = sphi %s2502, %s2502
        $region1557: #{skipgram_loss.1} parent=1553 // loop_header_branch
          %2508 = sbr.rel (%p2506) target = $region1561
        $region1558: #{skipgram_loss.1} parent=1553 // loop_body
          %v2512 = vld [vmem:[%s2510] sm:%s2503]
          %2513 = vst [vmem:[%s2511] sm:%s2503] %v2512
        $region1559: #{skipgram_loss.1} parent=1553 // loop_footer
          %s2509 = sadd.s32 1, %s2505
        $region1560: #{skipgram_loss.1} parent=1553 // loop_footer_branch
          %2504 = sbr.rel target = $region1556
        $region1561: #{skipgram_loss.1} parent=1553 // loop_exit
          _
      $region1554: #{skipgram_loss.1} parent=1538 // pred_fallthru
        _
    $region1539: #{skipgram_loss.1} parent=1 // pred_fallthru
      _
    // Predicated region
    $region1540: #{skipgram_loss.1} parent=1 // pred_check
      %p2479 = pneg %p2475
    $region1541: #{skipgram_loss.1} parent=1 // pred_check_branch
      %2481 = sbr.rel (%p2479) target = $region1543
    $region1542: #{skipgram_loss.1} parent=1 // pred_region
      %s2482 = sshllo.u32 0, 1
      loop: start=0, step=1, limit=1
      $region1544: #{skipgram_loss.1} parent=1542 // loop_pre_header
        _
      $region1545: #{skipgram_loss.1} parent=1542 // loop_header
        %s2484 = sphi 0, %s2488
        %p2485 = scmp.ge.s32.totalorder %s2484, 1
        %s2489 = sphi %s2472, %s2472
        %s2490 = sphi %s2473, %s2473
      $region1546: #{skipgram_loss.1} parent=1542 // loop_header_branch
        %2487 = sbr.rel (%p2485) target = $region1550
      $region1547: #{skipgram_loss.1} parent=1542 // loop_body
        %v2491 = vld [vmem:[%s2489] sm:%s2482]
        %2492 = vst [vmem:[%s2490] sm:%s2482] %v2491
      $region1548: #{skipgram_loss.1} parent=1542 // loop_footer
        %s2488 = sadd.s32 1, %s2484
      $region1549: #{skipgram_loss.1} parent=1542 // loop_footer_branch
        %2483 = sbr.rel target = $region1545
      $region1550: #{skipgram_loss.1} parent=1542 // loop_exit
        _
    $region1543: #{skipgram_loss.1} parent=1 // pred_fallthru
      _
    // Predicated region
    $region1562: #{skipgram_loss.1} parent=1 // pred_check
      _
    $region1563: #{skipgram_loss.1} parent=1 // pred_check_branch
      %2516 = sbr.rel (0) target = $region1565
    $region1564: #{skipgram_loss.1} parent=1 // pred_region
      %2517 = vsyncadd %s128, 16
    $region1565: #{skipgram_loss.1} parent=1 // pred_fallthru
      _
    %s2518 = sadd.s32 %s2470, 1
    %s2519 = sld [smem:[#allocation9 + %s2518]]
    %s2520 = scalar_lea.vmem %s4, %s2519
    %s2521 = scalar_lea.vmem [#allocation4], 15
    %p2523 = scmp.lt.u32.totalorder 1, 8
    %p2524 = pneg %p2523
    // Predicated region
    $region1566: #{skipgram_loss.1} parent=1 // pred_check
      _
    $region1567: #{skipgram_loss.1} parent=1 // pred_check_branch
      %2526 = sbr.rel (%p2523) target = $region1569
    $region1568: #{skipgram_loss.1} parent=1 // pred_region
      %s2541 = sand.u32 1, 7
      %p2542 = scmp.eq.s32.totalorder %s2541, 0
      %p2543 = pneg %p2542
      // Predicated region
      $region1581: #{skipgram_loss.1} parent=1568 // pred_check
        _
      $region1582: #{skipgram_loss.1} parent=1568 // pred_check_branch
        %2545 = sbr.rel (%p2542) target = $region1584
      $region1583: #{skipgram_loss.1} parent=1568 // pred_region
        %s2546 = sand.u32 1, 7
        %s2547 = ssub.s32 1, %s2546
        %s2548 = scalar_lea.vmem %s2520, %s2547
        %s2549 = ssub.s32 1, %s2546
        %s2550 = scalar_lea.vmem %s2521, %s2549 [#allocation4]
        %s2551 = sshllo.u32 0, %s2546
        loop: start=0, step=1, limit=1
        $region1585: #{skipgram_loss.1} parent=1583 // loop_pre_header
          _
        $region1586: #{skipgram_loss.1} parent=1583 // loop_header
          %s2553 = sphi 0, %s2557
          %p2554 = scmp.ge.s32.totalorder %s2553, 1
          %s2558 = sphi %s2548, %s2548
          %s2559 = sphi %s2550, %s2550
        $region1587: #{skipgram_loss.1} parent=1583 // loop_header_branch
          %2556 = sbr.rel (%p2554) target = $region1591
        $region1588: #{skipgram_loss.1} parent=1583 // loop_body
          %v2560 = vld [vmem:[%s2558] sm:%s2551]
          %2561 = vst [vmem:[%s2559] sm:%s2551] %v2560
        $region1589: #{skipgram_loss.1} parent=1583 // loop_footer
          %s2557 = sadd.s32 1, %s2553
        $region1590: #{skipgram_loss.1} parent=1583 // loop_footer_branch
          %2552 = sbr.rel target = $region1586
        $region1591: #{skipgram_loss.1} parent=1583 // loop_exit
          _
      $region1584: #{skipgram_loss.1} parent=1568 // pred_fallthru
        _
    $region1569: #{skipgram_loss.1} parent=1 // pred_fallthru
      _
    // Predicated region
    $region1570: #{skipgram_loss.1} parent=1 // pred_check
      %p2527 = pneg %p2523
    $region1571: #{skipgram_loss.1} parent=1 // pred_check_branch
      %2529 = sbr.rel (%p2527) target = $region1573
    $region1572: #{skipgram_loss.1} parent=1 // pred_region
      %s2530 = sshllo.u32 0, 1
      loop: start=0, step=1, limit=1
      $region1574: #{skipgram_loss.1} parent=1572 // loop_pre_header
        _
      $region1575: #{skipgram_loss.1} parent=1572 // loop_header
        %s2532 = sphi 0, %s2536
        %p2533 = scmp.ge.s32.totalorder %s2532, 1
        %s2537 = sphi %s2520, %s2520
        %s2538 = sphi %s2521, %s2521
      $region1576: #{skipgram_loss.1} parent=1572 // loop_header_branch
        %2535 = sbr.rel (%p2533) target = $region1580
      $region1577: #{skipgram_loss.1} parent=1572 // loop_body
        %v2539 = vld [vmem:[%s2537] sm:%s2530]
        %2540 = vst [vmem:[%s2538] sm:%s2530] %v2539
      $region1578: #{skipgram_loss.1} parent=1572 // loop_footer
        %s2536 = sadd.s32 1, %s2532
      $region1579: #{skipgram_loss.1} parent=1572 // loop_footer_branch
        %2531 = sbr.rel target = $region1575
      $region1580: #{skipgram_loss.1} parent=1572 // loop_exit
        _
    $region1573: #{skipgram_loss.1} parent=1 // pred_fallthru
      _
    // Predicated region
    $region1592: #{skipgram_loss.1} parent=1 // pred_check
      _
    $region1593: #{skipgram_loss.1} parent=1 // pred_check_branch
      %2564 = sbr.rel (0) target = $region1595
    $region1594: #{skipgram_loss.1} parent=1 // pred_region
      %2565 = vsyncadd %s128, 16
    $region1595: #{skipgram_loss.1} parent=1 // pred_fallthru
      _
    %s2566 = sadd.s32 %s2470, 2
    %s2567 = sld [smem:[#allocation9 + %s2566]]
    %s2568 = scalar_lea.vmem %s4, %s2567
    %s2569 = scalar_lea.vmem [#allocation4], 23
    %p2571 = scmp.lt.u32.totalorder 1, 8
    %p2572 = pneg %p2571
    // Predicated region
    $region1596: #{skipgram_loss.1} parent=1 // pred_check
      _
    $region1597: #{skipgram_loss.1} parent=1 // pred_check_branch
      %2574 = sbr.rel (%p2571) target = $region1599
    $region1598: #{skipgram_loss.1} parent=1 // pred_region
      %s2589 = sand.u32 1, 7
      %p2590 = scmp.eq.s32.totalorder %s2589, 0
      %p2591 = pneg %p2590
      // Predicated region
      $region1611: #{skipgram_loss.1} parent=1598 // pred_check
        _
      $region1612: #{skipgram_loss.1} parent=1598 // pred_check_branch
        %2593 = sbr.rel (%p2590) target = $region1614
      $region1613: #{skipgram_loss.1} parent=1598 // pred_region
        %s2594 = sand.u32 1, 7
        %s2595 = ssub.s32 1, %s2594
        %s2596 = scalar_lea.vmem %s2568, %s2595
        %s2597 = ssub.s32 1, %s2594
        %s2598 = scalar_lea.vmem %s2569, %s2597 [#allocation4]
        %s2599 = sshllo.u32 0, %s2594
        loop: start=0, step=1, limit=1
        $region1615: #{skipgram_loss.1} parent=1613 // loop_pre_header
          _
        $region1616: #{skipgram_loss.1} parent=1613 // loop_header
          %s2601 = sphi 0, %s2605
          %p2602 = scmp.ge.s32.totalorder %s2601, 1
          %s2606 = sphi %s2596, %s2596
          %s2607 = sphi %s2598, %s2598
        $region1617: #{skipgram_loss.1} parent=1613 // loop_header_branch
          %2604 = sbr.rel (%p2602) target = $region1621
        $region1618: #{skipgram_loss.1} parent=1613 // loop_body
          %v2608 = vld [vmem:[%s2606] sm:%s2599]
          %2609 = vst [vmem:[%s2607] sm:%s2599] %v2608
        $region1619: #{skipgram_loss.1} parent=1613 // loop_footer
          %s2605 = sadd.s32 1, %s2601
        $region1620: #{skipgram_loss.1} parent=1613 // loop_footer_branch
          %2600 = sbr.rel target = $region1616
        $region1621: #{skipgram_loss.1} parent=1613 // loop_exit
          _
      $region1614: #{skipgram_loss.1} parent=1598 // pred_fallthru
        _
    $region1599: #{skipgram_loss.1} parent=1 // pred_fallthru
      _
    // Predicated region
    $region1600: #{skipgram_loss.1} parent=1 // pred_check
      %p2575 = pneg %p2571
    $region1601: #{skipgram_loss.1} parent=1 // pred_check_branch
      %2577 = sbr.rel (%p2575) target = $region1603
    $region1602: #{skipgram_loss.1} parent=1 // pred_region
      %s2578 = sshllo.u32 0, 1
      loop: start=0, step=1, limit=1
      $region1604: #{skipgram_loss.1} parent=1602 // loop_pre_header
        _
      $region1605: #{skipgram_loss.1} parent=1602 // loop_header
        %s2580 = sphi 0, %s2584
        %p2581 = scmp.ge.s32.totalorder %s2580, 1
        %s2585 = sphi %s2568, %s2568
        %s2586 = sphi %s2569, %s2569
      $region1606: #{skipgram_loss.1} parent=1602 // loop_header_branch
        %2583 = sbr.rel (%p2581) target = $region1610
      $region1607: #{skipgram_loss.1} parent=1602 // loop_body
        %v2587 = vld [vmem:[%s2585] sm:%s2578]
        %2588 = vst [vmem:[%s2586] sm:%s2578] %v2587
      $region1608: #{skipgram_loss.1} parent=1602 // loop_footer
        %s2584 = sadd.s32 1, %s2580
      $region1609: #{skipgram_loss.1} parent=1602 // loop_footer_branch
        %2579 = sbr.rel target = $region1605
      $region1610: #{skipgram_loss.1} parent=1602 // loop_exit
        _
    $region1603: #{skipgram_loss.1} parent=1 // pred_fallthru
      _
    // Predicated region
    $region1622: #{skipgram_loss.1} parent=1 // pred_check
      _
    $region1623: #{skipgram_loss.1} parent=1 // pred_check_branch
      %2612 = sbr.rel (0) target = $region1625
    $region1624: #{skipgram_loss.1} parent=1 // pred_region
      %2613 = vsyncadd %s128, 16
    $region1625: #{skipgram_loss.1} parent=1 // pred_fallthru
      _
    %s2614 = sadd.s32 %s2470, 3
    %s2615 = sld [smem:[#allocation9 + %s2614]]
    %s2616 = scalar_lea.vmem %s4, %s2615
    %s2617 = scalar_lea.vmem [#allocation4], 31
    %p2619 = scmp.lt.u32.totalorder 1, 8
    %p2620 = pneg %p2619
    // Predicated region
    $region1626: #{skipgram_loss.1} parent=1 // pred_check
      _
    $region1627: #{skipgram_loss.1} parent=1 // pred_check_branch
      %2622 = sbr.rel (%p2619) target = $region1629
    $region1628: #{skipgram_loss.1} parent=1 // pred_region
      %s2637 = sand.u32 1, 7
      %p2638 = scmp.eq.s32.totalorder %s2637, 0
      %p2639 = pneg %p2638
      // Predicated region
      $region1641: #{skipgram_loss.1} parent=1628 // pred_check
        _
      $region1642: #{skipgram_loss.1} parent=1628 // pred_check_branch
        %2641 = sbr.rel (%p2638) target = $region1644
      $region1643: #{skipgram_loss.1} parent=1628 // pred_region
        %s2642 = sand.u32 1, 7
        %s2643 = ssub.s32 1, %s2642
        %s2644 = scalar_lea.vmem %s2616, %s2643
        %s2645 = ssub.s32 1, %s2642
        %s2646 = scalar_lea.vmem %s2617, %s2645 [#allocation4]
        %s2647 = sshllo.u32 0, %s2642
        loop: start=0, step=1, limit=1
        $region1645: #{skipgram_loss.1} parent=1643 // loop_pre_header
          _
        $region1646: #{skipgram_loss.1} parent=1643 // loop_header
          %s2649 = sphi 0, %s2653
          %p2650 = scmp.ge.s32.totalorder %s2649, 1
          %s2654 = sphi %s2644, %s2644
          %s2655 = sphi %s2646, %s2646
        $region1647: #{skipgram_loss.1} parent=1643 // loop_header_branch
          %2652 = sbr.rel (%p2650) target = $region1651
        $region1648: #{skipgram_loss.1} parent=1643 // loop_body
          %v2656 = vld [vmem:[%s2654] sm:%s2647]
          %2657 = vst [vmem:[%s2655] sm:%s2647] %v2656
        $region1649: #{skipgram_loss.1} parent=1643 // loop_footer
          %s2653 = sadd.s32 1, %s2649
        $region1650: #{skipgram_loss.1} parent=1643 // loop_footer_branch
          %2648 = sbr.rel target = $region1646
        $region1651: #{skipgram_loss.1} parent=1643 // loop_exit
          _
      $region1644: #{skipgram_loss.1} parent=1628 // pred_fallthru
        _
    $region1629: #{skipgram_loss.1} parent=1 // pred_fallthru
      _
    // Predicated region
    $region1630: #{skipgram_loss.1} parent=1 // pred_check
      %p2623 = pneg %p2619
    $region1631: #{skipgram_loss.1} parent=1 // pred_check_branch
      %2625 = sbr.rel (%p2623) target = $region1633
    $region1632: #{skipgram_loss.1} parent=1 // pred_region
      %s2626 = sshllo.u32 0, 1
      loop: start=0, step=1, limit=1
      $region1634: #{skipgram_loss.1} parent=1632 // loop_pre_header
        _
      $region1635: #{skipgram_loss.1} parent=1632 // loop_header
        %s2628 = sphi 0, %s2632
        %p2629 = scmp.ge.s32.totalorder %s2628, 1
        %s2633 = sphi %s2616, %s2616
        %s2634 = sphi %s2617, %s2617
      $region1636: #{skipgram_loss.1} parent=1632 // loop_header_branch
        %2631 = sbr.rel (%p2629) target = $region1640
      $region1637: #{skipgram_loss.1} parent=1632 // loop_body
        %v2635 = vld [vmem:[%s2633] sm:%s2626]
        %2636 = vst [vmem:[%s2634] sm:%s2626] %v2635
      $region1638: #{skipgram_loss.1} parent=1632 // loop_footer
        %s2632 = sadd.s32 1, %s2628
      $region1639: #{skipgram_loss.1} parent=1632 // loop_footer_branch
        %2627 = sbr.rel target = $region1635
      $region1640: #{skipgram_loss.1} parent=1632 // loop_exit
        _
    $region1633: #{skipgram_loss.1} parent=1 // pred_fallthru
      _
    // Predicated region
    $region1652: #{skipgram_loss.1} parent=1 // pred_check
      _
    $region1653: #{skipgram_loss.1} parent=1 // pred_check_branch
      %2660 = sbr.rel (0) target = $region1655
    $region1654: #{skipgram_loss.1} parent=1 // pred_region
      %2661 = vsyncadd %s128, 16
    $region1655: #{skipgram_loss.1} parent=1 // pred_fallthru
      _
    %s2662 = sadd.s32 %s2470, 4
    %s2663 = sld [smem:[#allocation9 + %s2662]]
    %s2664 = scalar_lea.vmem %s4, %s2663
    %s2665 = scalar_lea.vmem [#allocation4], 39
    %p2667 = scmp.lt.u32.totalorder 1, 8
    %p2668 = pneg %p2667
    // Predicated region
    $region1656: #{skipgram_loss.1} parent=1 // pred_check
      _
    $region1657: #{skipgram_loss.1} parent=1 // pred_check_branch
      %2670 = sbr.rel (%p2667) target = $region1659
    $region1658: #{skipgram_loss.1} parent=1 // pred_region
      %s2685 = sand.u32 1, 7
      %p2686 = scmp.eq.s32.totalorder %s2685, 0
      %p2687 = pneg %p2686
      // Predicated region
      $region1671: #{skipgram_loss.1} parent=1658 // pred_check
        _
      $region1672: #{skipgram_loss.1} parent=1658 // pred_check_branch
        %2689 = sbr.rel (%p2686) target = $region1674
      $region1673: #{skipgram_loss.1} parent=1658 // pred_region
        %s2690 = sand.u32 1, 7
        %s2691 = ssub.s32 1, %s2690
        %s2692 = scalar_lea.vmem %s2664, %s2691
        %s2693 = ssub.s32 1, %s2690
        %s2694 = scalar_lea.vmem %s2665, %s2693 [#allocation4]
        %s2695 = sshllo.u32 0, %s2690
        loop: start=0, step=1, limit=1
        $region1675: #{skipgram_loss.1} parent=1673 // loop_pre_header
          _
        $region1676: #{skipgram_loss.1} parent=1673 // loop_header
          %s2697 = sphi 0, %s2701
          %p2698 = scmp.ge.s32.totalorder %s2697, 1
          %s2702 = sphi %s2692, %s2692
          %s2703 = sphi %s2694, %s2694
        $region1677: #{skipgram_loss.1} parent=1673 // loop_header_branch
          %2700 = sbr.rel (%p2698) target = $region1681
        $region1678: #{skipgram_loss.1} parent=1673 // loop_body
          %v2704 = vld [vmem:[%s2702] sm:%s2695]
          %2705 = vst [vmem:[%s2703] sm:%s2695] %v2704
        $region1679: #{skipgram_loss.1} parent=1673 // loop_footer
          %s2701 = sadd.s32 1, %s2697
        $region1680: #{skipgram_loss.1} parent=1673 // loop_footer_branch
          %2696 = sbr.rel target = $region1676
        $region1681: #{skipgram_loss.1} parent=1673 // loop_exit
          _
      $region1674: #{skipgram_loss.1} parent=1658 // pred_fallthru
        _
    $region1659: #{skipgram_loss.1} parent=1 // pred_fallthru
      _
    // Predicated region
    $region1660: #{skipgram_loss.1} parent=1 // pred_check
      %p2671 = pneg %p2667
    $region1661: #{skipgram_loss.1} parent=1 // pred_check_branch
      %2673 = sbr.rel (%p2671) target = $region1663
    $region1662: #{skipgram_loss.1} parent=1 // pred_region
      %s2674 = sshllo.u32 0, 1
      loop: start=0, step=1, limit=1
      $region1664: #{skipgram_loss.1} parent=1662 // loop_pre_header
        _
      $region1665: #{skipgram_loss.1} parent=1662 // loop_header
        %s2676 = sphi 0, %s2680
        %p2677 = scmp.ge.s32.totalorder %s2676, 1
        %s2681 = sphi %s2664, %s2664
        %s2682 = sphi %s2665, %s2665
      $region1666: #{skipgram_loss.1} parent=1662 // loop_header_branch
        %2679 = sbr.rel (%p2677) target = $region1670
      $region1667: #{skipgram_loss.1} parent=1662 // loop_body
        %v2683 = vld [vmem:[%s2681] sm:%s2674]
        %2684 = vst [vmem:[%s2682] sm:%s2674] %v2683
      $region1668: #{skipgram_loss.1} parent=1662 // loop_footer
        %s2680 = sadd.s32 1, %s2676
      $region1669: #{skipgram_loss.1} parent=1662 // loop_footer_branch
        %2675 = sbr.rel target = $region1665
      $region1670: #{skipgram_loss.1} parent=1662 // loop_exit
        _
    $region1663: #{skipgram_loss.1} parent=1 // pred_fallthru
      _
    // Predicated region
    $region1682: #{skipgram_loss.1} parent=1 // pred_check
      _
    $region1683: #{skipgram_loss.1} parent=1 // pred_check_branch
      %2708 = sbr.rel (0) target = $region1685
    $region1684: #{skipgram_loss.1} parent=1 // pred_region
      %2709 = vsyncadd %s128, 16
    $region1685: #{skipgram_loss.1} parent=1 // pred_fallthru
      _
    %s2710 = smul.u32 1, 1
    %s2711 = sshll.u32 %s2710, 4
    %2712 = dma.done [#allocation5], %s2711
    %s2713 = sshll.u32 %s2710, 4
    %2714 = dma.done %s80, %s2713
    %s2715 = sshll.u32 %s2710, 4
    %2716 = dma.done %s128, %s2715
    %s2717 = sshll.u32 %s2710, 4
    %2718 = dma.done %s128, %s2717
    %s2719 = sshll.u32 %s2710, 4
    %2720 = dma.done %s128, %s2719
    %s2721 = sshll.u32 %s2710, 4
    %2722 = dma.done %s128, %s2721
    %s2723 = sshll.u32 %s2710, 4
    %2724 = dma.done %s128, %s2723
    %s2725 = sshll.u32 %s2710, 4
    %2726 = dma.done [#allocation5], %s2725
    %s2727 = sshll.u32 %s2710, 4
    %2728 = dma.done %s80, %s2727
    %s2729 = sshll.u32 %s2710, 4
    %2730 = dma.done %s128, %s2729
    %s2731 = sshll.u32 %s2710, 4
    %2732 = dma.done %s128, %s2731
    %s2733 = sshll.u32 %s2710, 4
    %2734 = dma.done %s128, %s2733
    %s2735 = sshll.u32 %s2710, 4
    %2736 = dma.done %s128, %s2735
    %s2737 = sshll.u32 %s2710, 4
    %2738 = dma.done %s128, %s2737
    %s2739 = sshll.u32 %s2710, 4
    %2740 = dma.done [#allocation5], %s2739
    %s2741 = sshll.u32 %s2710, 4
    %2742 = dma.done %s80, %s2741
    %s2743 = sshll.u32 %s2710, 4
    %2744 = dma.done %s128, %s2743
    %s2745 = sshll.u32 %s2710, 4
    %2746 = dma.done %s128, %s2745
    %s2747 = sshll.u32 %s2710, 4
    %2748 = dma.done %s128, %s2747
    %s2749 = sshll.u32 %s2710, 4
    %2750 = dma.done %s128, %s2749
    %s2751 = sshll.u32 %s2710, 4
    %2752 = dma.done %s128, %s2751
    %s2753 = sshll.u32 %s2710, 4
    %2754 = dma.done [#allocation5], %s2753
    %s2755 = sshll.u32 %s2710, 4
    %2756 = dma.done %s80, %s2755
    %s2757 = sshll.u32 %s2710, 4
    %2758 = dma.done %s128, %s2757
    %s2759 = sshll.u32 %s2710, 4
    %2760 = dma.done %s128, %s2759
    %s2761 = sshll.u32 %s2710, 4
    %2762 = dma.done %s128, %s2761
    %s2763 = sshll.u32 %s2710, 4
    %2764 = dma.done %s128, %s2763
    %s2765 = sshll.u32 %s2710, 4
    %2766 = dma.done %s128, %s2765
    %s2767 = sshll.u32 %s2710, 4
    %2768 = dma.done [#allocation5], %s2767
    %s2769 = sshll.u32 %s2710, 4
    %2770 = dma.done %s80, %s2769
    %s2771 = sshll.u32 %s2710, 4
    %2772 = dma.done %s128, %s2771
    %s2773 = sshll.u32 %s2710, 4
    %2774 = dma.done %s128, %s2773
    %s2775 = sshll.u32 %s2710, 4
    %2776 = dma.done %s128, %s2775
    %s2777 = sshll.u32 %s2710, 4
    %2778 = dma.done %s128, %s2777
    %s2779 = sshll.u32 %s2710, 4
    %2780 = dma.done %s128, %s2779
    %s2781 = sshll.u32 %s2710, 4
    %2782 = dma.done [#allocation5], %s2781
    %s2783 = sshll.u32 %s2710, 4
    %2784 = dma.done %s80, %s2783
    %s2785 = sshll.u32 %s2710, 4
    %2786 = dma.done %s128, %s2785
    %s2787 = sshll.u32 %s2710, 4
    %2788 = dma.done %s128, %s2787
    %s2789 = sshll.u32 %s2710, 4
    %2790 = dma.done %s128, %s2789
    %s2791 = sshll.u32 %s2710, 4
    %2792 = dma.done %s128, %s2791
    %s2793 = sshll.u32 %s2710, 4
    %2794 = dma.done %s128, %s2793
    %s2795 = sshll.u32 %s2710, 4
    %2796 = dma.done [#allocation5], %s2795
    %s2797 = sshll.u32 %s2710, 4
    %2798 = dma.done %s80, %s2797
    %s2799 = sshll.u32 %s2710, 4
    %2800 = dma.done %s128, %s2799
    %s2801 = sshll.u32 %s2710, 4
    %2802 = dma.done %s128, %s2801
    %s2803 = sshll.u32 %s2710, 4
    %2804 = dma.done %s128, %s2803
    %s2805 = sshll.u32 %s2710, 4
    %2806 = dma.done %s128, %s2805
    %s2807 = sshll.u32 %s2710, 4
    %2808 = dma.done %s128, %s2807
    %s2809 = sshll.u32 %s2710, 4
    %2810 = dma.done [#allocation5], %s2809
    %s2811 = sshll.u32 %s2710, 4
    %2812 = dma.done %s80, %s2811
    %s2813 = sshll.u32 %s2710, 4
    %2814 = dma.done %s128, %s2813
    %s2815 = sshll.u32 %s2710, 4
    %2816 = dma.done %s128, %s2815
    %s2817 = sshll.u32 %s2710, 4
    %2818 = dma.done %s128, %s2817
    %s2819 = sshll.u32 %s2710, 4
    %2820 = dma.done %s128, %s2819
    %s2821 = sshll.u32 %s2710, 4
    %2822 = dma.done %s128, %s2821
    %v2823 = vld [vmem:[#allocation2] sm:$0xff]
    %v2824 = vld [vmem:[#allocation3] sm:$0xff]
    %v2825 = vld [vmem:[#allocation4] sm:$0xff]
    %v2826 = vld [vmem:[#allocation4 + $0x8] sm:$0xff]
    %v2827 = vld [vmem:[#allocation4 + $0x10] sm:$0xff]
    %v2828 = vld [vmem:[#allocation4 + $0x18] sm:$0xff]
    %v2829 = vld [vmem:[#allocation4 + $0x20] sm:$0xff]
    %v2830 = vadd.f32 %v2825, 0.0
    %v2831 = vadd.f32 %v2830, %v2826
    %v2832 = vadd.f32 %v2831, %v2827
    %v2833 = vadd.f32 %v2832, %v2828
    %v2834 = vadd.f32 %v2833, %v2829
    %v2835 = vmul.f32 %v2824, %v2823
    %vm2836 = vcmask 261120
    %v2837 = vsel %vm2836, %v2835, 0.0
    %2838 = vadd.xlane.f32.xlu0 %v2837
    %v2839 = vpop.xlane.xlu0 %2838
    %v2840 = vmul.f32 %v2823, %v2834
    %v2841 = vsel %vm2836, %v2840, 0.0
    %2842 = vadd.xlane.f32.xlu0 %v2841
    %v2843 = vpop.xlane.xlu0 %2842
    %v2844 = vmin.f32 %v2839, 0.0
    %v2845 = vand.u32 2147483647, %v2839
    %v2846 = vsub.f32 0.0, %v2845
    %v2847 = vmul.f32 %v2846, 1.442695
    %v2848 = vpow.pop %v2847
    %v2849 = vadd.f32 %v2848, 1.0
    %v2850 = vlog2.pop %v2849
    %v2851 = vmul.f32 %v2850, 0.6931472
    %v2852 = vsub.f32 %v2844, %v2851
    %v2853 = vsub.f32 0.0, %v2843
    %v2854 = vmin.f32 %v2853, 0.0
    %v2855 = vand.u32 2147483647, %v2853
    %v2856 = vsub.f32 0.0, %v2855
    %v2857 = vmul.f32 %v2856, 1.442695
    %v2858 = vpow.pop %v2857
    %v2859 = vadd.f32 %v2858, 1.0
    %v2860 = vlog2.pop %v2859
    %v2861 = vmul.f32 %v2860, 0.6931472
    %v2862 = vsub.f32 %v2854, %v2861
    %v2863 = vadd.f32 %v2852, %v2862
    %v2864 = vlaneseq
    %v2865 = vshrl.u32 %v2864, 7
    %v2866 = vstv %s25
    %v2867 = vadd.s32 %v2866, %v2865
    %vm2868 = vcmp.lt.s32.totalorder %v2867, 8
    %v2869 = vsel %vm2868, %v2863, 0.0
    %v2870 = vld [vmem:[#allocation10] sm:$0x1]
    %v2871 = vrot.slane %v2869, 4
    %v2872 = vadd.f32 %v2869, %v2871
    %v2873 = vrot.slane %v2872, 2
    %v2874 = vadd.f32 %v2872, %v2873
    %v2875 = vrot.slane %v2874, 1
    %v2876 = vadd.f32 %v2874, %v2875
    %v2877 = vadd.f32 %v2870, %v2876
    %vm2878 = vcmask 0
    %2879 = vst.msk [vmem:[#allocation10] sm:$0x1] %vm2878, %v2877
    // Predicated region
    $region1686: #{skipgram_loss.1} parent=1 // pred_check
      %p2880 = pneg %p26
    $region1687: #{skipgram_loss.1} parent=1 // pred_check_branch
      %2882 = sbr.rel (%p2880) target = $region1689
    $region1688: #{skipgram_loss.1} parent=1 // pred_region
      %v2883 = vld [vmem:[#allocation10] sm:$0x1]
      %v2884 = vmul.f32 %v2883, -0.125
      %2885 = vst.msk [vmem:[#allocation10] sm:$0x1] %vm2878, %v2884
    $region1689: #{skipgram_loss.1} parent=1 // pred_fallthru
      _
    // Predicated region
    $region1690: #{skipgram_loss.1} parent=1 // pred_check
      _
    $region1691: #{skipgram_loss.1} parent=1 // pred_check_branch
      %2887 = sbr.rel (0) target = $region1693
    $region1692: #{skipgram_loss.1} parent=1 // pred_region
      %s2889 = ssub.s32 16, 16
      %2890 = vsyncadd [#allocation11], %s2889
      %s2892 = sshll.u32 [#allocation10], 4
      %s2893 = int_to_ptr.vmem [resolvable:$true] %s2892
      %2895 = dma.vmem_to_hbm [thread:$0]  %s2893, 16, %s5, [#allocation11]
    $region1693: #{skipgram_loss.1} parent=1 // pred_fallthru
      _
    // Predicated region
    $region1694: #{skipgram_loss.1} parent=1 // pred_check
      _
    $region1695: #{skipgram_loss.1} parent=1 // pred_check_branch
      %2897 = sbr.rel (0) target = $region1697
    $region1696: #{skipgram_loss.1} parent=1 // pred_region
      %2898 = dma.done [#allocation11], 16
    $region1697: #{skipgram_loss.1} parent=1 // pred_fallthru
      _
    %2899 = vsyncpa [#allocation11], 1
  %2900 = vsyncmov [#allocation5]
  %s2901 = vpop.sfrf %2900
  %p2902 = scmp.eq.s32.totalorder %s2901, 0
  %p2903 = pneg %p2902
  %2905 = shalt.err (%p2903)
  %s2906 = scalar_lea.sflag [#allocation5], 1
  %2907 = vsyncmov %s2906
  %s2908 = vpop.sfrf %2907
  %p2909 = scmp.eq.s32.totalorder %s2908, 0
  %p2910 = pneg %p2909
  %2912 = shalt.err (%p2910)
  %s2913 = scalar_lea.sflag [#allocation5], 2
  %2914 = vsyncmov %s2913
  %s2915 = vpop.sfrf %2914
  %p2916 = scmp.eq.s32.totalorder %s2915, 0
  %p2917 = pneg %p2916
  %2919 = shalt.err (%p2917)

</llo_original>
